<compile_context>
chip_gen: v7x
topology: tpu7x:2x2x1
jax: 0.10.0
libtpu: 0.0.40
codegen_flags: <defaults>
</compile_context>

<pallas_src>
import functools

import jax
import jax.numpy as jnp
from jax.experimental import pallas as pl
from jax.experimental.pallas import tpu as pltpu


def _round_up(x, m):
    return (x + m - 1) // m * m


# --------------------------------------------------------------------------
# Pallas kernels
# --------------------------------------------------------------------------
def _conv_bn_kernel(x_ref, w_ref, scale_ref, bias_ref, o_ref, *, apply_relu):
    """One MXU matmul over the folded (K*K*Cin) contraction + BN (+ReLU)."""
    acc = jnp.dot(x_ref[...], w_ref[...], preferred_element_type=jnp.float32)
    y = acc * scale_ref[...] + bias_ref[...]
    if apply_relu:
        y = jnp.maximum(y, 0.0)
    o_ref[...] = y


def _conv_bn_res_kernel(x_ref, w_ref, scale_ref, bias_ref, res_ref, o_ref, *,
                        apply_relu):
    """Same as above, plus a residual add in the f32 epilogue."""
    acc = jnp.dot(x_ref[...], w_ref[...], preferred_element_type=jnp.float32)
    y = acc * scale_ref[...] + bias_ref[...] + res_ref[...]
    if apply_relu:
        y = jnp.maximum(y, 0.0)
    o_ref[...] = y


def _head_kernel(x_ref, scale_ref, bias_ref, w_ref, b_ref, pred_ref):
    """Fused: global avg-pool + BN1d + ReLU + Linear + log_softmax + argmax."""
    emb = jnp.mean(x_ref[...], axis=1)                        # (N, C)
    h = jnp.maximum(emb * scale_ref[...] + bias_ref[...], 0.0)
    logits = jnp.dot(h, w_ref[...], preferred_element_type=jnp.float32)
    logits = logits + b_ref[...]
    m = jnp.max(logits, axis=-1, keepdims=True)
    lse = m + jnp.log(jnp.sum(jnp.exp(logits - m), axis=-1, keepdims=True))
    lsm = logits - lse                                        # log_softmax
    idx = jax.lax.broadcasted_iota(jnp.int32, lsm.shape, 1)
    row_max = jnp.max(lsm, axis=-1, keepdims=True)
    fill = jnp.int32(lsm.shape[-1])
    pred = jnp.min(jnp.where(lsm >= row_max, idx, fill), axis=-1,
                   keepdims=True)                             # first argmax
    pred_ref[...] = pred


# --------------------------------------------------------------------------
# Wrappers (plain-JAX glue + pallas_call)
# --------------------------------------------------------------------------
_TM_MAX = 512          # M-tile; biggest block that comfortably fits VMEM
_VMEM_LIMIT = 32 * 1024 * 1024   # safe on v5e / v6e / v7x


def conv_bn(x_nhwc, w_hwio, scale, bias, *, stride=1, pad=0, residual=None,
            relu=True):
    """Conv2d(bias=False) + folded BatchNorm [+ residual add] [+ ReLU]."""
    N, H, W, Cin = x_nhwc.shape
    K = w_hwio.shape[0]
    Cout = w_hwio.shape[-1]
    Hout = (H + 2 * pad - K) // stride + 1
    Wout = (W + 2 * pad - K) // stride + 1
    M = N * Hout * Wout
    KKC = K * K * Cin

    # im2col: single (M, K*K*Cin) slab, tap-major along the last axis, cast to
    # bf16 so the HBM slab and the MXU inputs are half-width.
    # TODO(synk): a halo-tiled in-kernel tap loop would avoid the K^2 HBM
    # blow-up of im2col entirely; for these shapes the single-contraction
    # layout (streamed once per output tile) is the chosen trade-off.
    xp = jnp.pad(x_nhwc, ((0, 0), (pad, pad), (pad, pad), (0, 0)))
    taps = []
    for ky in range(K):
        for kx in range(K):
            patch = xp[:, ky:ky + Hout * stride:stride,
                       kx:kx + Wout * stride:stride, :]
            taps.append(patch.reshape(M, Cin))
    x_im2col = jnp.concatenate(taps, axis=-1).astype(jnp.bfloat16)  # (M, KKC)
    w_mat = w_hwio.reshape(KKC, Cout).astype(jnp.bfloat16)          # (KKC, Cout)

    # M tiling (grid axis, "parallel" for megacore sharding on v7x).
    TM = min(_TM_MAX, _round_up(M, 16))
    M_pad = _round_up(M, TM)
    if M_pad != M:
        x_im2col = jnp.pad(x_im2col, ((0, M_pad - M), (0, 0)))
    grid = (M_pad // TM,)

    scale2 = scale.reshape(1, Cout).astype(jnp.float32)
    bias2 = bias.reshape(1, Cout).astype(jnp.float32)

    in_specs = [
        pl.BlockSpec((TM, KKC), lambda i: (i, 0)),
        pl.BlockSpec((KKC, Cout), lambda i: (0, 0)),
        pl.BlockSpec((1, Cout), lambda i: (0, 0)),
        pl.BlockSpec((1, Cout), lambda i: (0, 0)),
    ]
    out_spec = pl.BlockSpec((TM, Cout), lambda i: (i, 0))
    cparams = pltpu.CompilerParams(
        dimension_semantics=("parallel",),
        vmem_limit_bytes=_VMEM_LIMIT)

    if residual is None:
        out = pl.pallas_call(
            functools.partial(_conv_bn_kernel, apply_relu=relu),
            out_shape=jax.ShapeDtypeStruct((M_pad, Cout), jnp.float32),
            grid=grid,
            in_specs=in_specs,
            out_specs=out_spec,
            compiler_params=cparams,
        )(x_im2col, w_mat, scale2, bias2)
    else:
        res = residual.reshape(M, Cout).astype(jnp.float32)
        if M_pad != M:
            res = jnp.pad(res, ((0, M_pad - M), (0, 0)))
        out = pl.pallas_call(
            functools.partial(_conv_bn_res_kernel, apply_relu=relu),
            out_shape=jax.ShapeDtypeStruct((M_pad, Cout), jnp.float32),
            grid=grid,
            in_specs=in_specs + [pl.BlockSpec((TM, Cout), lambda i: (i, 0))],
            out_specs=out_spec,
            compiler_params=cparams,
        )(x_im2col, w_mat, scale2, bias2, res)

    if M_pad != M:
        out = out[:M]
    return out.reshape(N, Hout, Wout, Cout)


def head(x_nhwc, scale, bias, w, b):
    """Fused AdaptiveAvgPool2d((1,1)) + BN1d + ReLU + Linear + argmax(lsm)."""
    N, H, W, C = x_nhwc.shape
    num_class = w.shape[1]
    x = x_nhwc.reshape(N, H * W, C)
    pred = pl.pallas_call(
        _head_kernel,
        out_shape=jax.ShapeDtypeStruct((N, 1), jnp.int32),
        compiler_params=pltpu.CompilerParams(vmem_limit_bytes=_VMEM_LIMIT),
    )(x, scale.reshape(1, C), bias.reshape(1, C), w,
      b.reshape(1, num_class))
    # TODO(synk): PyTorch argmax returns int64; JAX default is int32.
    return pred.reshape(N)


# --------------------------------------------------------------------------
# Model forward (mirrors CNN.forward with flatten=False)
# --------------------------------------------------------------------------
def residual_block(x, p, stride):
    out = conv_bn(x, p['conv1_w'], *p['bn1'], stride=stride, pad=1, relu=True)
    if 'down_w' in p:
        residual = conv_bn(x, p['down_w'], *p['down_bn'], stride=stride,
                           pad=0, relu=False)
    else:
        residual = x
    out = conv_bn(out, p['conv2_w'], *p['bn2'], stride=1, pad=1,
                  residual=residual, relu=True)
    return out


def cnn_forward(x_nchw, params):
    x = jnp.transpose(x_nchw, (0, 2, 3, 1))          # NCHW -> NHWC
    # stem: Conv2d(3, 64, k=5, s=1, p=2, bias=False) + BN + ReLU
    x = conv_bn(x, params['stem_w'], *params['stem_bn'], stride=1, pad=2,
                relu=True)
    # layer 1: ResidualBlock(64 -> 64, stride=1), no downsample
    x = residual_block(x, params['block1'], stride=1)
    # layer 2: ResidualBlock(64 -> 128, stride=2), with 1x1 downsample
    x = residual_block(x, params['block2'], stride=2)
    # AdaptiveAvgPool2d((1,1)) + BN1d + ReLU + Linear + argmax(log_softmax)
    pred = head(x, *params['cls_bn'], params['cls_w'], params['cls_b'])
    return pred


# --------------------------------------------------------------------------
# Deterministic parameter initialization
# --------------------------------------------------------------------------
def _fold_bn(gamma, beta, mean, var, eps=1e-5):
    scale = gamma / jnp.sqrt(var + eps)
    bias = beta - mean * scale
    return scale, bias


def _make_conv_w(key, K, cin, cout):
    fan_in = K * K * cin
    return jax.random.normal(key, (K, K, cin, cout), jnp.float32) / \
        jnp.sqrt(jnp.float32(fan_in))


def _make_bn(key, c):
    k1, k2, k3, k4 = jax.random.split(key, 4)
    gamma = 1.0 + 0.1 * jax.random.normal(k1, (c,), jnp.float32)
    beta = 0.1 * jax.random.normal(k2, (c,), jnp.float32)
    mean = 0.1 * jax.random.normal(k3, (c,), jnp.float32)
    var = 1.0 + 0.1 * jax.random.uniform(k4, (c,), jnp.float32)
    return _fold_bn(gamma, beta, mean, var)


def init_params(key):
    ks = jax.random.split(key, 15)
    p = {
        'stem_w': _make_conv_w(ks[0], 5, 3, 64),
        'stem_bn': _make_bn(ks[1], 64),
        'block1': {
            'conv1_w': _make_conv_w(ks[2], 3, 64, 64),
            'bn1': _make_bn(ks[3], 64),
            'conv2_w': _make_conv_w(ks[4], 3, 64, 64),
            'bn2': _make_bn(ks[5], 64),
        },
        'block2': {
            'conv1_w': _make_conv_w(ks[6], 3, 64, 128),
            'bn1': _make_bn(ks[7], 128),
            'conv2_w': _make_conv_w(ks[8], 3, 128, 128),
            'bn2': _make_bn(ks[9], 128),
            'down_w': _make_conv_w(ks[10], 1, 64, 128),
            'down_bn': _make_bn(ks[11], 128),
        },
        'cls_bn': _make_bn(ks[12], 128),
        'cls_w': jax.random.normal(ks[13], (128, 10), jnp.float32) / jnp.sqrt(128.0),
        'cls_b': 0.1 * jax.random.normal(ks[14], (10,), jnp.float32),
    }
    return p


# --------------------------------------------------------------------------
if __name__ == "__main__":
    key = jax.random.PRNGKey(0)
    kx, kp = jax.random.split(key)
    # PyTorch-convention input: NCHW, batch=2, 3 channels, 16x16 spatial.
    x = jax.random.normal(kx, (2, 3, 16, 16), jnp.float32)
    params = init_params(kp)

    y_pred = jax.jit(cnn_forward)(x, params)
    jax.block_until_ready(y_pred)
    assert y_pred.shape == (2,)
    print("KERNEL_OK")
</pallas_src>

<mosaic_0001>
module attributes {stable_mosaic.version = 11 : i64} {
  func.func @_conv_bn_kernel(%arg0: i32, %arg1: memref<512x75xbf16, #tpu.memory_space<vmem>>, %arg2: memref<75x64xbf16, #tpu.memory_space<vmem>>, %arg3: memref<1x64xf32, #tpu.memory_space<vmem>>, %arg4: memref<1x64xf32, #tpu.memory_space<vmem>>, %arg5: memref<512x64xf32, #tpu.memory_space<vmem>>) attributes {dimension_semantics = [#tpu.dimension_semantics<parallel>], iteration_bounds = array<i64: 1>, scalar_prefetch = 0 : i64, scratch_operands = 0 : i64, tpu.core_type = #tpu.core_type<tc>, window_params = [{transform_indices = @transform_0, window_bounds = array<i64: 512, 75>}, {pipeline_mode = #tpu.pipeline_mode<synchronous>, transform_indices = @transform_1, window_bounds = array<i64: 75, 64>}, {pipeline_mode = #tpu.pipeline_mode<synchronous>, transform_indices = @transform_2, window_bounds = array<i64: 1, 64>}, {pipeline_mode = #tpu.pipeline_mode<synchronous>, transform_indices = @transform_3, window_bounds = array<i64: 1, 64>}, {transform_indices = @transform_4, window_bounds = array<i64: 512, 64>}]} {
    %c0 = arith.constant 0 : index
    %c0_0 = arith.constant 0 : index
    %0 = vector.load %arg1[%c0, %c0_0] : memref<512x75xbf16, #tpu.memory_space<vmem>>, vector<512x75xbf16>
    %c0_1 = arith.constant 0 : index
    %c0_2 = arith.constant 0 : index
    %1 = vector.load %arg2[%c0_1, %c0_2] : memref<75x64xbf16, #tpu.memory_space<vmem>>, vector<75x64xbf16>
    %cst = arith.constant dense<0.000000e+00> : vector<512x64xf32>
    %2 = tpu.matmul %0, %1, %cst {dimension_numbers = #tpu.dot_dimension_numbers<[1], [0], [0], [1], [0, 0, 1, 1], [], []>} : vector<512x75xbf16>, vector<75x64xbf16>, vector<512x64xf32> -> vector<512x64xf32>
    %c0_3 = arith.constant 0 : index
    %c0_4 = arith.constant 0 : index
    %3 = vector.load %arg3[%c0_3, %c0_4] : memref<1x64xf32, #tpu.memory_space<vmem>>, vector<1x64xf32>
    %4 = vector.broadcast %3 : vector<1x64xf32> to vector<512x64xf32>
    %5 = arith.mulf %2, %4 : vector<512x64xf32>
    %c0_5 = arith.constant 0 : index
    %c0_6 = arith.constant 0 : index
    %6 = vector.load %arg4[%c0_5, %c0_6] : memref<1x64xf32, #tpu.memory_space<vmem>>, vector<1x64xf32>
    %7 = vector.broadcast %6 : vector<1x64xf32> to vector<512x64xf32>
    %8 = arith.addf %5, %7 : vector<512x64xf32>
    %cst_7 = arith.constant 0.000000e+00 : f32
    %9 = vector.broadcast %cst_7 : f32 to vector<512x64xf32>
    %10 = arith.maximumf %8, %9 : vector<512x64xf32>
    %c0_8 = arith.constant 0 : index
    %c0_9 = arith.constant 0 : index
    %11 = vector.load %arg5[%c0_8, %c0_9] : memref<512x64xf32, #tpu.memory_space<vmem>>, vector<512x64xf32>
    tpu.vector_store %arg5[%c0_8, %c0_9], %10 {strides = array<i32>} : memref<512x64xf32, #tpu.memory_space<vmem>>, vector<512x64xf32>,
    return
  }
  func.func @transform_0(%arg0: i32) -> (i32, i32) {
    %c0_i32 = arith.constant 0 : i32
    %c0_i32_0 = arith.constant 0 : i32
    return %arg0, %c0_i32 : i32, i32
  }
  func.func @transform_1(%arg0: i32) -> (i32, i32) {
    %c0_i32 = arith.constant 0 : i32
    %c0_i32_0 = arith.constant 0 : i32
    %c0_i32_1 = arith.constant 0 : i32
    return %c0_i32, %c0_i32_0 : i32, i32
  }
  func.func @transform_2(%arg0: i32) -> (i32, i32) {
    %c0_i32 = arith.constant 0 : i32
    %c0_i32_0 = arith.constant 0 : i32
    %c0_i32_1 = arith.constant 0 : i32
    return %c0_i32, %c0_i32_0 : i32, i32
  }
  func.func @transform_3(%arg0: i32) -> (i32, i32) {
    %c0_i32 = arith.constant 0 : i32
    %c0_i32_0 = arith.constant 0 : i32
    %c0_i32_1 = arith.constant 0 : i32
    return %c0_i32, %c0_i32_0 : i32, i32
  }
  func.func @transform_4(%arg0: i32) -> (i32, i32) {
    %c0_i32 = arith.constant 0 : i32
    %c0_i32_0 = arith.constant 0 : i32
    return %arg0, %c0_i32 : i32, i32
  }
}

module attributes {stable_mosaic.version = 11 : i64} {
  func.func @_conv_bn_kernel(%arg0: i32, %arg1: memref<512x576xbf16, #tpu.memory_space<vmem>>, %arg2: memref<576x64xbf16, #tpu.memory_space<vmem>>, %arg3: memref<1x64xf32, #tpu.memory_space<vmem>>, %arg4: memref<1x64xf32, #tpu.memory_space<vmem>>, %arg5: memref<512x64xf32, #tpu.memory_space<vmem>>) attributes {dimension_semantics = [#tpu.dimension_semantics<parallel>], iteration_bounds = array<i64: 1>, scalar_prefetch = 0 : i64, scratch_operands = 0 : i64, tpu.core_type = #tpu.core_type<tc>, window_params = [{transform_indices = @transform_0, window_bounds = array<i64: 512, 576>}, {pipeline_mode = #tpu.pipeline_mode<synchronous>, transform_indices = @transform_1, window_bounds = array<i64: 576, 64>}, {pipeline_mode = #tpu.pipeline_mode<synchronous>, transform_indices = @transform_2, window_bounds = array<i64: 1, 64>}, {pipeline_mode = #tpu.pipeline_mode<synchronous>, transform_indices = @transform_3, window_bounds = array<i64: 1, 64>}, {transform_indices = @transform_4, window_bounds = array<i64: 512, 64>}]} {
    %c0 = arith.constant 0 : index
    %c0_0 = arith.constant 0 : index
    %0 = vector.load %arg1[%c0, %c0_0] : memref<512x576xbf16, #tpu.memory_space<vmem>>, vector<512x576xbf16>
    %c0_1 = arith.constant 0 : index
    %c0_2 = arith.constant 0 : index
    %1 = vector.load %arg2[%c0_1, %c0_2] : memref<576x64xbf16, #tpu.memory_space<vmem>>, vector<576x64xbf16>
    %cst = arith.constant dense<0.000000e+00> : vector<512x64xf32>
    %2 = tpu.matmul %0, %1, %cst {dimension_numbers = #tpu.dot_dimension_numbers<[1], [0], [0], [1], [0, 0, 1, 1], [], []>} : vector<512x576xbf16>, vector<576x64xbf16>, vector<512x64xf32> -> vector<512x64xf32>
    %c0_3 = arith.constant 0 : index
    %c0_4 = arith.constant 0 : index
    %3 = vector.load %arg3[%c0_3, %c0_4] : memref<1x64xf32, #tpu.memory_space<vmem>>, vector<1x64xf32>
    %4 = vector.broadcast %3 : vector<1x64xf32> to vector<512x64xf32>
    %5 = arith.mulf %2, %4 : vector<512x64xf32>
    %c0_5 = arith.constant 0 : index
    %c0_6 = arith.constant 0 : index
    %6 = vector.load %arg4[%c0_5, %c0_6] : memref<1x64xf32, #tpu.memory_space<vmem>>, vector<1x64xf32>
    %7 = vector.broadcast %6 : vector<1x64xf32> to vector<512x64xf32>
    %8 = arith.addf %5, %7 : vector<512x64xf32>
    %cst_7 = arith.constant 0.000000e+00 : f32
    %9 = vector.broadcast %cst_7 : f32 to vector<512x64xf32>
    %10 = arith.maximumf %8, %9 : vector<512x64xf32>
    %c0_8 = arith.constant 0 : index
    %c0_9 = arith.constant 0 : index
    %11 = vector.load %arg5[%c0_8, %c0_9] : memref<512x64xf32, #tpu.memory_space<vmem>>, vector<512x64xf32>
    tpu.vector_store %arg5[%c0_8, %c0_9], %10 {strides = array<i32>} : memref<512x64xf32, #tpu.memory_space<vmem>>, vector<512x64xf32>,
    return
  }
  func.func @transform_0(%arg0: i32) -> (i32, i32) {
    %c0_i32 = arith.constant 0 : i32
    %c0_i32_0 = arith.constant 0 : i32
    return %arg0, %c0_i32 : i32, i32
  }
  func.func @transform_1(%arg0: i32) -> (i32, i32) {
    %c0_i32 = arith.constant 0 : i32
    %c0_i32_0 = arith.constant 0 : i32
    %c0_i32_1 = arith.constant 0 : i32
    return %c0_i32, %c0_i32_0 : i32, i32
  }
  func.func @transform_2(%arg0: i32) -> (i32, i32) {
    %c0_i32 = arith.constant 0 : i32
    %c0_i32_0 = arith.constant 0 : i32
    %c0_i32_1 = arith.constant 0 : i32
    return %c0_i32, %c0_i32_0 : i32, i32
  }
  func.func @transform_3(%arg0: i32) -> (i32, i32) {
    %c0_i32 = arith.constant 0 : i32
    %c0_i32_0 = arith.constant 0 : i32
    %c0_i32_1 = arith.constant 0 : i32
    return %c0_i32, %c0_i32_0 : i32, i32
  }
  func.func @transform_4(%arg0: i32) -> (i32, i32) {
    %c0_i32 = arith.constant 0 : i32
    %c0_i32_0 = arith.constant 0 : i32
    return %arg0, %c0_i32 : i32, i32
  }
}

module attributes {stable_mosaic.version = 11 : i64} {
  func.func @_conv_bn_res_kernel(%arg0: i32, %arg1: memref<512x576xbf16, #tpu.memory_space<vmem>>, %arg2: memref<576x64xbf16, #tpu.memory_space<vmem>>, %arg3: memref<1x64xf32, #tpu.memory_space<vmem>>, %arg4: memref<1x64xf32, #tpu.memory_space<vmem>>, %arg5: memref<512x64xf32, #tpu.memory_space<vmem>>, %arg6: memref<512x64xf32, #tpu.memory_space<vmem>>) attributes {dimension_semantics = [#tpu.dimension_semantics<parallel>], iteration_bounds = array<i64: 1>, scalar_prefetch = 0 : i64, scratch_operands = 0 : i64, tpu.core_type = #tpu.core_type<tc>, window_params = [{transform_indices = @transform_0, window_bounds = array<i64: 512, 576>}, {pipeline_mode = #tpu.pipeline_mode<synchronous>, transform_indices = @transform_1, window_bounds = array<i64: 576, 64>}, {pipeline_mode = #tpu.pipeline_mode<synchronous>, transform_indices = @transform_2, window_bounds = array<i64: 1, 64>}, {pipeline_mode = #tpu.pipeline_mode<synchronous>, transform_indices = @transform_3, window_bounds = array<i64: 1, 64>}, {transform_indices = @transform_4, window_bounds = array<i64: 512, 64>}, {transform_indices = @transform_5, window_bounds = array<i64: 512, 64>}]} {
    %c0 = arith.constant 0 : index
    %c0_0 = arith.constant 0 : index
    %0 = vector.load %arg1[%c0, %c0_0] : memref<512x576xbf16, #tpu.memory_space<vmem>>, vector<512x576xbf16>
    %c0_1 = arith.constant 0 : index
    %c0_2 = arith.constant 0 : index
    %1 = vector.load %arg2[%c0_1, %c0_2] : memref<576x64xbf16, #tpu.memory_space<vmem>>, vector<576x64xbf16>
    %cst = arith.constant dense<0.000000e+00> : vector<512x64xf32>
    %2 = tpu.matmul %0, %1, %cst {dimension_numbers = #tpu.dot_dimension_numbers<[1], [0], [0], [1], [0, 0, 1, 1], [], []>} : vector<512x576xbf16>, vector<576x64xbf16>, vector<512x64xf32> -> vector<512x64xf32>
    %c0_3 = arith.constant 0 : index
    %c0_4 = arith.constant 0 : index
    %3 = vector.load %arg3[%c0_3, %c0_4] : memref<1x64xf32, #tpu.memory_space<vmem>>, vector<1x64xf32>
    %4 = vector.broadcast %3 : vector<1x64xf32> to vector<512x64xf32>
    %5 = arith.mulf %2, %4 : vector<512x64xf32>
    %c0_5 = arith.constant 0 : index
    %c0_6 = arith.constant 0 : index
    %6 = vector.load %arg4[%c0_5, %c0_6] : memref<1x64xf32, #tpu.memory_space<vmem>>, vector<1x64xf32>
    %7 = vector.broadcast %6 : vector<1x64xf32> to vector<512x64xf32>
    %8 = arith.addf %5, %7 : vector<512x64xf32>
    %c0_7 = arith.constant 0 : index
    %c0_8 = arith.constant 0 : index
    %9 = vector.load %arg5[%c0_7, %c0_8] : memref<512x64xf32, #tpu.memory_space<vmem>>, vector<512x64xf32>
    %10 = arith.addf %8, %9 : vector<512x64xf32>
    %cst_9 = arith.constant 0.000000e+00 : f32
    %11 = vector.broadcast %cst_9 : f32 to vector<512x64xf32>
    %12 = arith.maximumf %10, %11 : vector<512x64xf32>
    %c0_10 = arith.constant 0 : index
    %c0_11 = arith.constant 0 : index
    %13 = vector.load %arg6[%c0_10, %c0_11] : memref<512x64xf32, #tpu.memory_space<vmem>>, vector<512x64xf32>
    tpu.vector_store %arg6[%c0_10, %c0_11], %12 {strides = array<i32>} : memref<512x64xf32, #tpu.memory_space<vmem>>, vector<512x64xf32>,
    return
  }
  func.func @transform_0(%arg0: i32) -> (i32, i32) {
    %c0_i32 = arith.constant 0 : i32
    %c0_i32_0 = arith.constant 0 : i32
    return %arg0, %c0_i32 : i32, i32
  }
  func.func @transform_1(%arg0: i32) -> (i32, i32) {
    %c0_i32 = arith.constant 0 : i32
    %c0_i32_0 = arith.constant 0 : i32
    %c0_i32_1 = arith.constant 0 : i32
    return %c0_i32, %c0_i32_0 : i32, i32
  }
  func.func @transform_2(%arg0: i32) -> (i32, i32) {
    %c0_i32 = arith.constant 0 : i32
    %c0_i32_0 = arith.constant 0 : i32
    %c0_i32_1 = arith.constant 0 : i32
    return %c0_i32, %c0_i32_0 : i32, i32
  }
  func.func @transform_3(%arg0: i32) -> (i32, i32) {
    %c0_i32 = arith.constant 0 : i32
    %c0_i32_0 = arith.constant 0 : i32
    %c0_i32_1 = arith.constant 0 : i32
    return %c0_i32, %c0_i32_0 : i32, i32
  }
  func.func @transform_4(%arg0: i32) -> (i32, i32) {
    %c0_i32 = arith.constant 0 : i32
    %c0_i32_0 = arith.constant 0 : i32
    return %arg0, %c0_i32 : i32, i32
  }
  func.func @transform_5(%arg0: i32) -> (i32, i32) {
    %c0_i32 = arith.constant 0 : i32
    %c0_i32_0 = arith.constant 0 : i32
    return %arg0, %c0_i32 : i32, i32
  }
}

module attributes {stable_mosaic.version = 11 : i64} {
  func.func @_conv_bn_kernel(%arg0: i32, %arg1: memref<128x576xbf16, #tpu.memory_space<vmem>>, %arg2: memref<576x128xbf16, #tpu.memory_space<vmem>>, %arg3: memref<1x128xf32, #tpu.memory_space<vmem>>, %arg4: memref<1x128xf32, #tpu.memory_space<vmem>>, %arg5: memref<128x128xf32, #tpu.memory_space<vmem>>) attributes {dimension_semantics = [#tpu.dimension_semantics<parallel>], iteration_bounds = array<i64: 1>, scalar_prefetch = 0 : i64, scratch_operands = 0 : i64, tpu.core_type = #tpu.core_type<tc>, window_params = [{transform_indices = @transform_0, window_bounds = array<i64: 128, 576>}, {pipeline_mode = #tpu.pipeline_mode<synchronous>, transform_indices = @transform_1, window_bounds = array<i64: 576, 128>}, {pipeline_mode = #tpu.pipeline_mode<synchronous>, transform_indices = @transform_2, window_bounds = array<i64: 1, 128>}, {pipeline_mode = #tpu.pipeline_mode<synchronous>, transform_indices = @transform_3, window_bounds = array<i64: 1, 128>}, {transform_indices = @transform_4, window_bounds = array<i64: 128, 128>}]} {
    %c0 = arith.constant 0 : index
    %c0_0 = arith.constant 0 : index
    %0 = vector.load %arg1[%c0, %c0_0] : memref<128x576xbf16, #tpu.memory_space<vmem>>, vector<128x576xbf16>
    %c0_1 = arith.constant 0 : index
    %c0_2 = arith.constant 0 : index
    %1 = vector.load %arg2[%c0_1, %c0_2] : memref<576x128xbf16, #tpu.memory_space<vmem>>, vector<576x128xbf16>
    %cst = arith.constant dense<0.000000e+00> : vector<128x128xf32>
    %2 = tpu.matmul %0, %1, %cst {dimension_numbers = #tpu.dot_dimension_numbers<[1], [0], [0], [1], [0, 0, 1, 1], [], []>} : vector<128x576xbf16>, vector<576x128xbf16>, vector<128x128xf32> -> vector<128x128xf32>
    %c0_3 = arith.constant 0 : index
    %c0_4 = arith.constant 0 : index
    %3 = vector.load %arg3[%c0_3, %c0_4] : memref<1x128xf32, #tpu.memory_space<vmem>>, vector<1x128xf32>
    %4 = vector.broadcast %3 : vector<1x128xf32> to vector<128x128xf32>
    %5 = arith.mulf %2, %4 : vector<128x128xf32>
    %c0_5 = arith.constant 0 : index
    %c0_6 = arith.constant 0 : index
    %6 = vector.load %arg4[%c0_5, %c0_6] : memref<1x128xf32, #tpu.memory_space<vmem>>, vector<1x128xf32>
    %7 = vector.broadcast %6 : vector<1x128xf32> to vector<128x128xf32>
    %8 = arith.addf %5, %7 : vector<128x128xf32>
    %cst_7 = arith.constant 0.000000e+00 : f32
    %9 = vector.broadcast %cst_7 : f32 to vector<128x128xf32>
    %10 = arith.maximumf %8, %9 : vector<128x128xf32>
    %c0_8 = arith.constant 0 : index
    %c0_9 = arith.constant 0 : index
    %11 = vector.load %arg5[%c0_8, %c0_9] : memref<128x128xf32, #tpu.memory_space<vmem>>, vector<128x128xf32>
    tpu.vector_store %arg5[%c0_8, %c0_9], %10 {strides = array<i32>} : memref<128x128xf32, #tpu.memory_space<vmem>>, vector<128x128xf32>,
    return
  }
  func.func @transform_0(%arg0: i32) -> (i32, i32) {
    %c0_i32 = arith.constant 0 : i32
    %c0_i32_0 = arith.constant 0 : i32
    return %arg0, %c0_i32 : i32, i32
  }
  func.func @transform_1(%arg0: i32) -> (i32, i32) {
    %c0_i32 = arith.constant 0 : i32
    %c0_i32_0 = arith.constant 0 : i32
    %c0_i32_1 = arith.constant 0 : i32
    return %c0_i32, %c0_i32_0 : i32, i32
  }
  func.func @transform_2(%arg0: i32) -> (i32, i32) {
    %c0_i32 = arith.constant 0 : i32
    %c0_i32_0 = arith.constant 0 : i32
    %c0_i32_1 = arith.constant 0 : i32
    return %c0_i32, %c0_i32_0 : i32, i32
  }
  func.func @transform_3(%arg0: i32) -> (i32, i32) {
    %c0_i32 = arith.constant 0 : i32
    %c0_i32_0 = arith.constant 0 : i32
    %c0_i32_1 = arith.constant 0 : i32
    return %c0_i32, %c0_i32_0 : i32, i32
  }
  func.func @transform_4(%arg0: i32) -> (i32, i32) {
    %c0_i32 = arith.constant 0 : i32
    %c0_i32_0 = arith.constant 0 : i32
    return %arg0, %c0_i32 : i32, i32
  }
}

module attributes {stable_mosaic.version = 11 : i64} {
  func.func @_conv_bn_kernel(%arg0: i32, %arg1: memref<128x64xbf16, #tpu.memory_space<vmem>>, %arg2: memref<64x128xbf16, #tpu.memory_space<vmem>>, %arg3: memref<1x128xf32, #tpu.memory_space<vmem>>, %arg4: memref<1x128xf32, #tpu.memory_space<vmem>>, %arg5: memref<128x128xf32, #tpu.memory_space<vmem>>) attributes {dimension_semantics = [#tpu.dimension_semantics<parallel>], iteration_bounds = array<i64: 1>, scalar_prefetch = 0 : i64, scratch_operands = 0 : i64, tpu.core_type = #tpu.core_type<tc>, window_params = [{transform_indices = @transform_0, window_bounds = array<i64: 128, 64>}, {pipeline_mode = #tpu.pipeline_mode<synchronous>, transform_indices = @transform_1, window_bounds = array<i64: 64, 128>}, {pipeline_mode = #tpu.pipeline_mode<synchronous>, transform_indices = @transform_2, window_bounds = array<i64: 1, 128>}, {pipeline_mode = #tpu.pipeline_mode<synchronous>, transform_indices = @transform_3, window_bounds = array<i64: 1, 128>}, {transform_indices = @transform_4, window_bounds = array<i64: 128, 128>}]} {
    %c0 = arith.constant 0 : index
    %c0_0 = arith.constant 0 : index
    %0 = vector.load %arg1[%c0, %c0_0] : memref<128x64xbf16, #tpu.memory_space<vmem>>, vector<128x64xbf16>
    %c0_1 = arith.constant 0 : index
    %c0_2 = arith.constant 0 : index
    %1 = vector.load %arg2[%c0_1, %c0_2] : memref<64x128xbf16, #tpu.memory_space<vmem>>, vector<64x128xbf16>
    %cst = arith.constant dense<0.000000e+00> : vector<128x128xf32>
    %2 = tpu.matmul %0, %1, %cst {dimension_numbers = #tpu.dot_dimension_numbers<[1], [0], [0], [1], [0, 0, 1, 1], [], []>} : vector<128x64xbf16>, vector<64x128xbf16>, vector<128x128xf32> -> vector<128x128xf32>
    %c0_3 = arith.constant 0 : index
    %c0_4 = arith.constant 0 : index
    %3 = vector.load %arg3[%c0_3, %c0_4] : memref<1x128xf32, #tpu.memory_space<vmem>>, vector<1x128xf32>
    %4 = vector.broadcast %3 : vector<1x128xf32> to vector<128x128xf32>
    %5 = arith.mulf %2, %4 : vector<128x128xf32>
    %c0_5 = arith.constant 0 : index
    %c0_6 = arith.constant 0 : index
    %6 = vector.load %arg4[%c0_5, %c0_6] : memref<1x128xf32, #tpu.memory_space<vmem>>, vector<1x128xf32>
    %7 = vector.broadcast %6 : vector<1x128xf32> to vector<128x128xf32>
    %8 = arith.addf %5, %7 : vector<128x128xf32>
    %c0_7 = arith.constant 0 : index
    %c0_8 = arith.constant 0 : index
    %9 = vector.load %arg5[%c0_7, %c0_8] : memref<128x128xf32, #tpu.memory_space<vmem>>, vector<128x128xf32>
    tpu.vector_store %arg5[%c0_7, %c0_8], %8 {strides = array<i32>} : memref<128x128xf32, #tpu.memory_space<vmem>>, vector<128x128xf32>,
    return
  }
  func.func @transform_0(%arg0: i32) -> (i32, i32) {
    %c0_i32 = arith.constant 0 : i32
    %c0_i32_0 = arith.constant 0 : i32
    return %arg0, %c0_i32 : i32, i32
  }
  func.func @transform_1(%arg0: i32) -> (i32, i32) {
    %c0_i32 = arith.constant 0 : i32
    %c0_i32_0 = arith.constant 0 : i32
    %c0_i32_1 = arith.constant 0 : i32
    return %c0_i32, %c0_i32_0 : i32, i32
  }
  func.func @transform_2(%arg0: i32) -> (i32, i32) {
    %c0_i32 = arith.constant 0 : i32
    %c0_i32_0 = arith.constant 0 : i32
    %c0_i32_1 = arith.constant 0 : i32
    return %c0_i32, %c0_i32_0 : i32, i32
  }
  func.func @transform_3(%arg0: i32) -> (i32, i32) {
    %c0_i32 = arith.constant 0 : i32
    %c0_i32_0 = arith.constant 0 : i32
    %c0_i32_1 = arith.constant 0 : i32
    return %c0_i32, %c0_i32_0 : i32, i32
  }
  func.func @transform_4(%arg0: i32) -> (i32, i32) {
    %c0_i32 = arith.constant 0 : i32
    %c0_i32_0 = arith.constant 0 : i32
    return %arg0, %c0_i32 : i32, i32
  }
}

module attributes {stable_mosaic.version = 11 : i64} {
  func.func @_conv_bn_res_kernel(%arg0: i32, %arg1: memref<128x1152xbf16, #tpu.memory_space<vmem>>, %arg2: memref<1152x128xbf16, #tpu.memory_space<vmem>>, %arg3: memref<1x128xf32, #tpu.memory_space<vmem>>, %arg4: memref<1x128xf32, #tpu.memory_space<vmem>>, %arg5: memref<128x128xf32, #tpu.memory_space<vmem>>, %arg6: memref<128x128xf32, #tpu.memory_space<vmem>>) attributes {dimension_semantics = [#tpu.dimension_semantics<parallel>], iteration_bounds = array<i64: 1>, scalar_prefetch = 0 : i64, scratch_operands = 0 : i64, tpu.core_type = #tpu.core_type<tc>, window_params = [{transform_indices = @transform_0, window_bounds = array<i64: 128, 1152>}, {pipeline_mode = #tpu.pipeline_mode<synchronous>, transform_indices = @transform_1, window_bounds = array<i64: 1152, 128>}, {pipeline_mode = #tpu.pipeline_mode<synchronous>, transform_indices = @transform_2, window_bounds = array<i64: 1, 128>}, {pipeline_mode = #tpu.pipeline_mode<synchronous>, transform_indices = @transform_3, window_bounds = array<i64: 1, 128>}, {transform_indices = @transform_4, window_bounds = array<i64: 128, 128>}, {transform_indices = @transform_5, window_bounds = array<i64: 128, 128>}]} {
    %c0 = arith.constant 0 : index
    %c0_0 = arith.constant 0 : index
    %0 = vector.load %arg1[%c0, %c0_0] : memref<128x1152xbf16, #tpu.memory_space<vmem>>, vector<128x1152xbf16>
    %c0_1 = arith.constant 0 : index
    %c0_2 = arith.constant 0 : index
    %1 = vector.load %arg2[%c0_1, %c0_2] : memref<1152x128xbf16, #tpu.memory_space<vmem>>, vector<1152x128xbf16>
    %cst = arith.constant dense<0.000000e+00> : vector<128x128xf32>
    %2 = tpu.matmul %0, %1, %cst {dimension_numbers = #tpu.dot_dimension_numbers<[1], [0], [0], [1], [0, 0, 1, 1], [], []>} : vector<128x1152xbf16>, vector<1152x128xbf16>, vector<128x128xf32> -> vector<128x128xf32>
    %c0_3 = arith.constant 0 : index
    %c0_4 = arith.constant 0 : index
    %3 = vector.load %arg3[%c0_3, %c0_4] : memref<1x128xf32, #tpu.memory_space<vmem>>, vector<1x128xf32>
    %4 = vector.broadcast %3 : vector<1x128xf32> to vector<128x128xf32>
    %5 = arith.mulf %2, %4 : vector<128x128xf32>
    %c0_5 = arith.constant 0 : index
    %c0_6 = arith.constant 0 : index
    %6 = vector.load %arg4[%c0_5, %c0_6] : memref<1x128xf32, #tpu.memory_space<vmem>>, vector<1x128xf32>
    %7 = vector.broadcast %6 : vector<1x128xf32> to vector<128x128xf32>
    %8 = arith.addf %5, %7 : vector<128x128xf32>
    %c0_7 = arith.constant 0 : index
    %c0_8 = arith.constant 0 : index
    %9 = vector.load %arg5[%c0_7, %c0_8] : memref<128x128xf32, #tpu.memory_space<vmem>>, vector<128x128xf32>
    %10 = arith.addf %8, %9 : vector<128x128xf32>
    %cst_9 = arith.constant 0.000000e+00 : f32
    %11 = vector.broadcast %cst_9 : f32 to vector<128x128xf32>
    %12 = arith.maximumf %10, %11 : vector<128x128xf32>
    %c0_10 = arith.constant 0 : index
    %c0_11 = arith.constant 0 : index
    %13 = vector.load %arg6[%c0_10, %c0_11] : memref<128x128xf32, #tpu.memory_space<vmem>>, vector<128x128xf32>
    tpu.vector_store %arg6[%c0_10, %c0_11], %12 {strides = array<i32>} : memref<128x128xf32, #tpu.memory_space<vmem>>, vector<128x128xf32>,
    return
  }
  func.func @transform_0(%arg0: i32) -> (i32, i32) {
    %c0_i32 = arith.constant 0 : i32
    %c0_i32_0 = arith.constant 0 : i32
    return %arg0, %c0_i32 : i32, i32
  }
  func.func @transform_1(%arg0: i32) -> (i32, i32) {
    %c0_i32 = arith.constant 0 : i32
    %c0_i32_0 = arith.constant 0 : i32
    %c0_i32_1 = arith.constant 0 : i32
    return %c0_i32, %c0_i32_0 : i32, i32
  }
  func.func @transform_2(%arg0: i32) -> (i32, i32) {
    %c0_i32 = arith.constant 0 : i32
    %c0_i32_0 = arith.constant 0 : i32
    %c0_i32_1 = arith.constant 0 : i32
    return %c0_i32, %c0_i32_0 : i32, i32
  }
  func.func @transform_3(%arg0: i32) -> (i32, i32) {
    %c0_i32 = arith.constant 0 : i32
    %c0_i32_0 = arith.constant 0 : i32
    %c0_i32_1 = arith.constant 0 : i32
    return %c0_i32, %c0_i32_0 : i32, i32
  }
  func.func @transform_4(%arg0: i32) -> (i32, i32) {
    %c0_i32 = arith.constant 0 : i32
    %c0_i32_0 = arith.constant 0 : i32
    return %arg0, %c0_i32 : i32, i32
  }
  func.func @transform_5(%arg0: i32) -> (i32, i32) {
    %c0_i32 = arith.constant 0 : i32
    %c0_i32_0 = arith.constant 0 : i32
    return %arg0, %c0_i32 : i32, i32
  }
}

module attributes {stable_mosaic.version = 11 : i64} {
  func.func @_head_kernel(%arg0: memref<2x64x128xf32, #tpu.memory_space<vmem>>, %arg1: memref<1x128xf32, #tpu.memory_space<vmem>>, %arg2: memref<1x128xf32, #tpu.memory_space<vmem>>, %arg3: memref<128x10xf32, #tpu.memory_space<vmem>>, %arg4: memref<1x10xf32, #tpu.memory_space<vmem>>, %arg5: memref<2x1xi32, #tpu.memory_space<vmem>>) attributes {dimension_semantics = [], scalar_prefetch = 0 : i64, scratch_operands = 0 : i64, tpu.core_type = #tpu.core_type<tc>} {
    %c0 = arith.constant 0 : index
    %c0_0 = arith.constant 0 : index
    %c0_1 = arith.constant 0 : index
    %0 = vector.load %arg0[%c0, %c0_0, %c0_1] : memref<2x64x128xf32, #tpu.memory_space<vmem>>, vector<2x64x128xf32>
    %cst = arith.constant dense<0.000000e+00> : vector<2x128xf32>
    %1 = vector.multi_reduction <add>, %0, %cst [1] : vector<2x64x128xf32> to vector<2x128xf32>
    %cst_2 = arith.constant 6.400000e+01 : f32
    %2 = vector.broadcast %cst_2 : f32 to vector<2x128xf32>
    %3 = arith.divf %1, %2 : vector<2x128xf32>
    %c0_3 = arith.constant 0 : index
    %c0_4 = arith.constant 0 : index
    %4 = vector.load %arg1[%c0_3, %c0_4] : memref<1x128xf32, #tpu.memory_space<vmem>>, vector<1x128xf32>
    %5 = vector.broadcast %4 : vector<1x128xf32> to vector<2x128xf32>
    %6 = arith.mulf %3, %5 : vector<2x128xf32>
    %c0_5 = arith.constant 0 : index
    %c0_6 = arith.constant 0 : index
    %7 = vector.load %arg2[%c0_5, %c0_6] : memref<1x128xf32, #tpu.memory_space<vmem>>, vector<1x128xf32>
    %8 = vector.broadcast %7 : vector<1x128xf32> to vector<2x128xf32>
    %9 = arith.addf %6, %8 : vector<2x128xf32>
    %cst_7 = arith.constant 0.000000e+00 : f32
    %10 = vector.broadcast %cst_7 : f32 to vector<2x128xf32>
    %11 = arith.maximumf %9, %10 : vector<2x128xf32>
    %c0_8 = arith.constant 0 : index
    %c0_9 = arith.constant 0 : index
    %12 = vector.load %arg3[%c0_8, %c0_9] : memref<128x10xf32, #tpu.memory_space<vmem>>, vector<128x10xf32>
    %cst_10 = arith.constant dense<0.000000e+00> : vector<2x10xf32>
    %13 = tpu.matmul %11, %12, %cst_10 {dimension_numbers = #tpu.dot_dimension_numbers<[1], [0], [0], [1], [0, 0, 1, 1], [], []>} : vector<2x128xf32>, vector<128x10xf32>, vector<2x10xf32> -> vector<2x10xf32>
    %c0_11 = arith.constant 0 : index
    %c0_12 = arith.constant 0 : index
    %14 = vector.load %arg4[%c0_11, %c0_12] : memref<1x10xf32, #tpu.memory_space<vmem>>, vector<1x10xf32>
    %15 = vector.broadcast %14 : vector<1x10xf32> to vector<2x10xf32>
    %16 = arith.addf %13, %15 : vector<2x10xf32>
    %cst_13 = arith.constant dense<0xFF800000> : vector<2xf32>
    %17 = vector.multi_reduction <maximumf>, %16, %cst_13 [1] : vector<2x10xf32> to vector<2xf32>
    %18 = vector.shape_cast %17 : vector<2xf32> to vector<2x1xf32>
    %19 = vector.broadcast %18 : vector<2x1xf32> to vector<2x10xf32>
    %20 = arith.subf %16, %19 : vector<2x10xf32>
    %21 = math.exp %20 : vector<2x10xf32>
    %cst_14 = arith.constant dense<0.000000e+00> : vector<2xf32>
    %22 = vector.multi_reduction <add>, %21, %cst_14 [1] : vector<2x10xf32> to vector<2xf32>
    %23 = vector.shape_cast %22 : vector<2xf32> to vector<2x1xf32>
    %24 = math.log %23 : vector<2x1xf32>
    %25 = arith.addf %18, %24 : vector<2x1xf32>
    %26 = vector.broadcast %25 : vector<2x1xf32> to vector<2x10xf32>
    %27 = arith.subf %16, %26 : vector<2x10xf32>
    %28 = tpu.iota {dimensions = array<i32: 1>} : vector<2x10xi32>
    %cst_15 = arith.constant dense<0xFF800000> : vector<2xf32>
    %29 = vector.multi_reduction <maximumf>, %27, %cst_15 [1] : vector<2x10xf32> to vector<2xf32>
    %30 = vector.shape_cast %29 : vector<2xf32> to vector<2x1xf32>
    %31 = vector.broadcast %30 : vector<2x1xf32> to vector<2x10xf32>
    %32 = arith.cmpf oge, %27, %31 : vector<2x10xf32>
    %c10_i32 = arith.constant 10 : i32
    %33 = vector.broadcast %c10_i32 : i32 to vector<2x10xi32>
    %34 = arith.select %32, %28, %33 : vector<2x10xi1>, vector<2x10xi32>
    %cst_16 = arith.constant dense<2147483647> : vector<2xi32>
    %35 = vector.multi_reduction <minsi>, %34, %cst_16 [1] : vector<2x10xi32> to vector<2xi32>
    %36 = vector.shape_cast %35 : vector<2xi32> to vector<2x1xi32>
    %c0_17 = arith.constant 0 : index
    %c0_18 = arith.constant 0 : index
    %37 = vector.load %arg5[%c0_17, %c0_18] : memref<2x1xi32, #tpu.memory_space<vmem>>, vector<2x1xi32>
    tpu.vector_store %arg5[%c0_17, %c0_18], %36 {strides = array<i32>} : memref<2x1xi32, #tpu.memory_space<vmem>>, vector<2x1xi32>,
    return
  }
}

</mosaic_0001>

<llo_original>
// kernel: cnn_forward.7
$region0: #{cnn_forward.7}
  #allocation0 [shape = 'u32[]', space=smem, size = 0x4, offset = 0x4, fixed_abs, tag = 'smem constant byte address 0x4 - core index']
  #allocation1 [shape = 'u32[144,128]{1,0:T(1,128)}', space=vmem, size = 0x12000, scoped, tag = 'internal scratch']
  %s0 = inlined_call_operand.vmem [shape: bf16[512,75], index: 0, kind: input, shape index: {}]
  %s1 = inlined_call_operand.vmem [shape: bf16[75,64], index: 1, kind: input, shape index: {}]
  %s2 = inlined_call_operand.vmem [shape: f32[1,64], index: 2, kind: input, shape index: {}]
  %s3 = inlined_call_operand.vmem [shape: f32[1,64], index: 3, kind: input, shape index: {}]
  %s4 = inlined_call_operand.vmem [shape: f32[512,64], index: 4, kind: output, shape index: {}]
  %s5 = sld [smem:[#allocation0]]
  $region26: #{cnn_forward.7} parent=0
    _
  %s7 = ssub.s32 1, %s5
  %s8 = scalar_select 0, %s7, %s5
  // Predicated region
  $region2: #{cnn_forward.7} parent=0 // pred_check
    _
  $region3: #{cnn_forward.7} parent=0 // pred_check_branch
    %10 = sbr.rel (0) target = $region5
  $region4: #{cnn_forward.7} parent=0 // pred_region
    _
  $region5: #{cnn_forward.7} parent=0 // pred_fallthru
    _
  // Predicated region
  $region6: #{cnn_forward.7} parent=0 // pred_check
    _
  $region7: #{cnn_forward.7} parent=0 // pred_check_branch
    %12 = sbr.rel (0) target = $region9
  $region8: #{cnn_forward.7} parent=0 // pred_region
    _
  $region9: #{cnn_forward.7} parent=0 // pred_fallthru
    _
  // Predicated region
  $region10: #{cnn_forward.7} parent=0 // pred_check
    _
  $region11: #{cnn_forward.7} parent=0 // pred_check_branch
    %14 = sbr.rel (0) target = $region13
  $region12: #{cnn_forward.7} parent=0 // pred_region
    _
  $region13: #{cnn_forward.7} parent=0 // pred_fallthru
    _
  // Predicated region
  $region14: #{cnn_forward.7} parent=0 // pred_check
    _
  $region15: #{cnn_forward.7} parent=0 // pred_check_branch
    %16 = sbr.rel (0) target = $region17
  $region16: #{cnn_forward.7} parent=0 // pred_region
    _
  $region17: #{cnn_forward.7} parent=0 // pred_fallthru
    _
  %v18 = vld [vmem:[%s0] sm:$0xf]
  %v19 = vld [vmem:[%s0 + $0x4] sm:$0xf]
  %v20 = vld [vmem:[%s0 + $0x8] sm:$0xf]
  %v21 = vld [vmem:[%s0 + $0xc] sm:$0xf]
  %v22 = vld [vmem:[%s0 + $0x10] sm:$0xf]
  %v23 = vld [vmem:[%s0 + $0x14] sm:$0xf]
  %v24 = vld [vmem:[%s0 + $0x18] sm:$0xf]
  %v25 = vld [vmem:[%s0 + $0x1c] sm:$0xf]
  %v26 = vld [vmem:[%s0 + $0x20] sm:$0xf]
  %v27 = vld [vmem:[%s0 + $0x24] sm:$0xf]
  %v28 = vld [vmem:[%s0 + $0x28] sm:$0xf]
  %v29 = vld [vmem:[%s0 + $0x2c] sm:$0xf]
  %v30 = vld [vmem:[%s0 + $0x30] sm:$0xf]
  %v31 = vld [vmem:[%s0 + $0x34] sm:$0xf]
  %v32 = vld [vmem:[%s0 + $0x38] sm:$0xf]
  %v33 = vld [vmem:[%s0 + $0x3c] sm:$0xf]
  %v34 = vld [vmem:[%s0 + $0x40] sm:$0xf]
  %v35 = vld [vmem:[%s0 + $0x44] sm:$0xf]
  %v36 = vld [vmem:[%s0 + $0x48] sm:$0xf]
  %v37 = vld [vmem:[%s0 + $0x4c] sm:$0xf]
  %v38 = vld [vmem:[%s0 + $0x50] sm:$0xf]
  %v39 = vld [vmem:[%s0 + $0x54] sm:$0xf]
  %v40 = vld [vmem:[%s0 + $0x58] sm:$0xf]
  %v41 = vld [vmem:[%s0 + $0x5c] sm:$0xf]
  %v42 = vld [vmem:[%s0 + $0x60] sm:$0xf]
  %v43 = vld [vmem:[%s0 + $0x64] sm:$0xf]
  %v44 = vld [vmem:[%s0 + $0x68] sm:$0xf]
  %v45 = vld [vmem:[%s0 + $0x6c] sm:$0xf]
  %v46 = vld [vmem:[%s0 + $0x70] sm:$0xf]
  %v47 = vld [vmem:[%s0 + $0x74] sm:$0xf]
  %v48 = vld [vmem:[%s0 + $0x78] sm:$0xf]
  %v49 = vld [vmem:[%s0 + $0x7c] sm:$0xf]
  %v50 = vld [vmem:[%s0 + $0x80] sm:$0xf]
  %v51 = vld [vmem:[%s0 + $0x84] sm:$0xf]
  %v52 = vld [vmem:[%s0 + $0x88] sm:$0xf]
  %v53 = vld [vmem:[%s0 + $0x8c] sm:$0xf]
  %v54 = vld [vmem:[%s0 + $0x90] sm:$0xf]
  %v55 = vld [vmem:[%s0 + $0x94] sm:$0xf]
  %v56 = vld [vmem:[%s0 + $0x98] sm:$0xf]
  %v57 = vld [vmem:[%s0 + $0x9c] sm:$0xf]
  %v58 = vld [vmem:[%s0 + $0xa0] sm:$0xf]
  %v59 = vld [vmem:[%s0 + $0xa4] sm:$0xf]
  %v60 = vld [vmem:[%s0 + $0xa8] sm:$0xf]
  %v61 = vld [vmem:[%s0 + $0xac] sm:$0xf]
  %v62 = vld [vmem:[%s0 + $0xb0] sm:$0xf]
  %v63 = vld [vmem:[%s0 + $0xb4] sm:$0xf]
  %v64 = vld [vmem:[%s0 + $0xb8] sm:$0xf]
  %v65 = vld [vmem:[%s0 + $0xbc] sm:$0xf]
  %v66 = vld [vmem:[%s0 + $0xc0] sm:$0xf]
  %v67 = vld [vmem:[%s0 + $0xc4] sm:$0xf]
  %v68 = vld [vmem:[%s0 + $0xc8] sm:$0xf]
  %v69 = vld [vmem:[%s0 + $0xcc] sm:$0xf]
  %v70 = vld [vmem:[%s0 + $0xd0] sm:$0xf]
  %v71 = vld [vmem:[%s0 + $0xd4] sm:$0xf]
  %v72 = vld [vmem:[%s0 + $0xd8] sm:$0xf]
  %v73 = vld [vmem:[%s0 + $0xdc] sm:$0xf]
  %v74 = vld [vmem:[%s0 + $0xe0] sm:$0xf]
  %v75 = vld [vmem:[%s0 + $0xe4] sm:$0xf]
  %v76 = vld [vmem:[%s0 + $0xe8] sm:$0xf]
  %v77 = vld [vmem:[%s0 + $0xec] sm:$0xf]
  %v78 = vld [vmem:[%s0 + $0xf0] sm:$0xf]
  %v79 = vld [vmem:[%s0 + $0xf4] sm:$0xf]
  %v80 = vld [vmem:[%s0 + $0xf8] sm:$0xf]
  %v81 = vld [vmem:[%s0 + $0xfc] sm:$0xf]
  %v82 = vld [vmem:[%s1] sm:$0xf]
  %v83 = vld [vmem:[%s1 + $0x4] sm:$0xf]
  %v84 = vld [vmem:[%s1 + $0x8] sm:$0xf]
  %v85 = vld [vmem:[%s1 + $0xc] sm:$0xf]
  %v86 = vld [vmem:[%s1 + $0x10] sm:$0xf]
  %v87 = vld [vmem:[%s1 + $0x14] sm:$0xf]
  %v88 = vld [vmem:[%s1 + $0x18] sm:$0xf]
  %v89 = vld [vmem:[%s1 + $0x1c] sm:$0xf]
  %v90 = vld [vmem:[%s1 + $0x20] sm:$0xf]
  %v91 = vld [vmem:[%s1 + $0x24] sm:$0x3]
  %v156 = vunpack.c.l.b16 %v18
  %v157 = vunpack.c.l.b16 %v19
  %v158 = vunpack.c.l.b16 %v20
  %v159 = vunpack.c.l.b16 %v21
  %v160 = vunpack.c.l.b16 %v22
  %v161 = vunpack.c.l.b16 %v23
  %v162 = vunpack.c.l.b16 %v24
  %v163 = vunpack.c.l.b16 %v25
  %v164 = vunpack.c.l.b16 %v26
  %v165 = vunpack.c.l.b16 %v27
  %v166 = vunpack.c.l.b16 %v28
  %v167 = vunpack.c.l.b16 %v29
  %v168 = vunpack.c.l.b16 %v30
  %v169 = vunpack.c.l.b16 %v31
  %v170 = vunpack.c.l.b16 %v32
  %v171 = vunpack.c.l.b16 %v33
  %v172 = vunpack.c.l.b16 %v34
  %v173 = vunpack.c.l.b16 %v35
  %v174 = vunpack.c.l.b16 %v36
  %v175 = vunpack.c.l.b16 %v37
  %v176 = vunpack.c.l.b16 %v38
  %v177 = vunpack.c.l.b16 %v39
  %v178 = vunpack.c.l.b16 %v40
  %v179 = vunpack.c.l.b16 %v41
  %v180 = vunpack.c.l.b16 %v42
  %v181 = vunpack.c.l.b16 %v43
  %v182 = vunpack.c.l.b16 %v44
  %v183 = vunpack.c.l.b16 %v45
  %v184 = vunpack.c.l.b16 %v46
  %v185 = vunpack.c.l.b16 %v47
  %v186 = vunpack.c.l.b16 %v48
  %v187 = vunpack.c.l.b16 %v49
  %v188 = vunpack.c.l.b16 %v50
  %v189 = vunpack.c.l.b16 %v51
  %v190 = vunpack.c.l.b16 %v52
  %v191 = vunpack.c.l.b16 %v53
  %v192 = vunpack.c.l.b16 %v54
  %v193 = vunpack.c.l.b16 %v55
  %v194 = vunpack.c.l.b16 %v56
  %v195 = vunpack.c.l.b16 %v57
  %v196 = vunpack.c.l.b16 %v58
  %v197 = vunpack.c.l.b16 %v59
  %v198 = vunpack.c.l.b16 %v60
  %v199 = vunpack.c.l.b16 %v61
  %v200 = vunpack.c.l.b16 %v62
  %v201 = vunpack.c.l.b16 %v63
  %v202 = vunpack.c.l.b16 %v64
  %v203 = vunpack.c.l.b16 %v65
  %v204 = vunpack.c.l.b16 %v66
  %v205 = vunpack.c.l.b16 %v67
  %v206 = vunpack.c.l.b16 %v68
  %v207 = vunpack.c.l.b16 %v69
  %v208 = vunpack.c.l.b16 %v70
  %v209 = vunpack.c.l.b16 %v71
  %v210 = vunpack.c.l.b16 %v72
  %v211 = vunpack.c.l.b16 %v73
  %v212 = vunpack.c.l.b16 %v74
  %v213 = vunpack.c.l.b16 %v75
  %v214 = vunpack.c.l.b16 %v76
  %v215 = vunpack.c.l.b16 %v77
  %v216 = vunpack.c.l.b16 %v78
  %v217 = vunpack.c.l.b16 %v79
  %v218 = vunpack.c.l.b16 %v80
  %v219 = vunpack.c.l.b16 %v81
  %v220 = vpack.c.b16 %v157, %v156
  %v221 = vpack.c.b16 %v159, %v158
  %v222 = vpack.c.b16 %v161, %v160
  %v223 = vpack.c.b16 %v163, %v162
  %v224 = vpack.c.b16 %v165, %v164
  %v225 = vpack.c.b16 %v167, %v166
  %v226 = vpack.c.b16 %v169, %v168
  %v227 = vpack.c.b16 %v171, %v170
  %v228 = vpack.c.b16 %v173, %v172
  %v229 = vpack.c.b16 %v175, %v174
  %v230 = vpack.c.b16 %v177, %v176
  %v231 = vpack.c.b16 %v179, %v178
  %v232 = vpack.c.b16 %v181, %v180
  %v233 = vpack.c.b16 %v183, %v182
  %v234 = vpack.c.b16 %v185, %v184
  %v235 = vpack.c.b16 %v187, %v186
  %v236 = vpack.c.b16 %v189, %v188
  %v237 = vpack.c.b16 %v191, %v190
  %v238 = vpack.c.b16 %v193, %v192
  %v239 = vpack.c.b16 %v195, %v194
  %v240 = vpack.c.b16 %v197, %v196
  %v241 = vpack.c.b16 %v199, %v198
  %v242 = vpack.c.b16 %v201, %v200
  %v243 = vpack.c.b16 %v203, %v202
  %v244 = vpack.c.b16 %v205, %v204
  %v245 = vpack.c.b16 %v207, %v206
  %v246 = vpack.c.b16 %v209, %v208
  %v247 = vpack.c.b16 %v211, %v210
  %v248 = vpack.c.b16 %v213, %v212
  %v249 = vpack.c.b16 %v215, %v214
  %v250 = vpack.c.b16 %v217, %v216
  %v251 = vpack.c.b16 %v219, %v218
  %v262 = vunpack.c.l.b16 %v82
  %v263 = vunpack.c.l.b16 %v83
  %v264 = vunpack.c.l.b16 %v84
  %v265 = vunpack.c.l.b16 %v85
  %v266 = vunpack.c.l.b16 %v86
  %v267 = vunpack.c.l.b16 %v87
  %v268 = vunpack.c.l.b16 %v88
  %v269 = vunpack.c.l.b16 %v89
  %v270 = vunpack.c.l.b16 %v90
  %v271 = vunpack.c.l.b16 %v91
  %v272 = vpack.c.b16 %v263, %v262
  %v273 = vpack.c.b16 %v265, %v264
  %v274 = vpack.c.b16 %v267, %v266
  %v275 = vpack.c.b16 %v269, %v268
  %v276 = vpack.c.b16 %v271, %v270
  %vm281 = vcmask 613376
  %v283 = vsel %vm281, %v220, 0
  %v286 = vsel %vm281, %v221, 0
  %v289 = vsel %vm281, %v222, 0
  %v292 = vsel %vm281, %v223, 0
  %v295 = vsel %vm281, %v224, 0
  %v298 = vsel %vm281, %v225, 0
  %v301 = vsel %vm281, %v226, 0
  %v304 = vsel %vm281, %v227, 0
  %v307 = vsel %vm281, %v228, 0
  %v310 = vsel %vm281, %v229, 0
  %v313 = vsel %vm281, %v230, 0
  %v316 = vsel %vm281, %v231, 0
  %v319 = vsel %vm281, %v232, 0
  %v322 = vsel %vm281, %v233, 0
  %v325 = vsel %vm281, %v234, 0
  %v328 = vsel %vm281, %v235, 0
  %v331 = vsel %vm281, %v236, 0
  %v334 = vsel %vm281, %v237, 0
  %v337 = vsel %vm281, %v238, 0
  %v340 = vsel %vm281, %v239, 0
  %v343 = vsel %vm281, %v240, 0
  %v346 = vsel %vm281, %v241, 0
  %v349 = vsel %vm281, %v242, 0
  %v352 = vsel %vm281, %v243, 0
  %v355 = vsel %vm281, %v244, 0
  %v358 = vsel %vm281, %v245, 0
  %v361 = vsel %vm281, %v246, 0
  %v364 = vsel %vm281, %v247, 0
  %v367 = vsel %vm281, %v248, 0
  %v370 = vsel %vm281, %v249, 0
  %v373 = vsel %vm281, %v250, 0
  %v376 = vsel %vm281, %v251, 0
  %vm378 = vcmask 1044480
  %vm379 = vcmask 1045504
  %v380 = vsel %vm378, 4294967295, 65535
  %v381 = vsel %vm379, %v380, 0
  %v383 = vand.u32 %v276, %v381
  %385 = vmatprep.subr.bf16.mxu0 0
  %386 = vmatpush1.bf16.msra.mxu0 %v272
  %387 = vmatprep.subr.bf16.mxu0 0
  %388 = vmatpush1.bf16.msra.mxu0 %v273
  %389 = vmatprep.subr.bf16.mxu0 0
  %390 = vmatpush1.bf16.msra.mxu0 %v274
  %391 = vmatprep.subr.bf16.mxu0 0
  %392 = vmatpush1.bf16.msra.mxu0 %v275
  %393 = vmatprep.subr.bf16.mxu0 0
  %394 = vmatpush1.bf16.msra.mxu0 %v383
  %395 = vmatprep.subr.bf16.mxu0 0
  %396 = vmatpush1.bf16.msra.mxu0 0
  %397 = vmatprep.subr.bf16.mxu0 0
  %398 = vmatpush1.bf16.msra.mxu0 0
  %399 = vmatprep.subr.bf16.mxu0 0
  %400 = vmatpush1.bf16.msra.mxu0 0
  %401 = vmatprep.subr.bf16.mxu0 0
  %402 = vmatpush1.bf16.msra.mxu0 0
  %403 = vmatprep.subr.bf16.mxu0 0
  %404 = vmatpush1.bf16.msra.mxu0 0
  %405 = vmatprep.subr.bf16.mxu0 0
  %406 = vmatpush1.bf16.msra.mxu0 0
  %407 = vmatprep.subr.bf16.mxu0 0
  %408 = vmatpush1.bf16.msra.mxu0 0
  %409 = vmatprep.subr.bf16.mxu0 0
  %410 = vmatpush1.bf16.msra.mxu0 0
  %411 = vmatprep.subr.bf16.mxu0 0
  %412 = vmatpush1.bf16.msra.mxu0 0
  %413 = vmatprep.subr.bf16.mxu0 0
  %414 = vmatpush1.bf16.msra.mxu0 0
  %415 = vmatprep.subr.bf16.mxu0 0
  %416 = vmatpush1.bf16.msra.mxu0 0
  %417 = vmatprep.mubr.bf16.mxu0 0
  %418 = vmatmul.mubr.bf16.gmra.mrb[0].mxu0 %v283
  %v419 = vpop.f32.mrb[0].mxu0
  %v420 = vadd.f32 0.0, %v419
  %v421 = vpop.f32.mrb[0].mxu0
  %v422 = vpop.f32.mrb[0].mxu0
  %v423 = vadd.f32 0.0, %v422
  %v424 = vpop.f32.mrb[0].mxu0
  %425 = vmatprep.mubr.bf16.mxu0 0
  %426 = vmatmul.mubr.bf16.gmra.mrb[0].mxu0 %v286
  %v427 = vpop.f32.mrb[0].mxu0
  %v428 = vadd.f32 0.0, %v427
  %v429 = vpop.f32.mrb[0].mxu0
  %v430 = vpop.f32.mrb[0].mxu0
  %v431 = vadd.f32 0.0, %v430
  %v432 = vpop.f32.mrb[0].mxu0
  %433 = vmatprep.mubr.bf16.mxu0 0
  %434 = vmatmul.mubr.bf16.gmra.mrb[0].mxu0 %v289
  %v435 = vpop.f32.mrb[0].mxu0
  %v436 = vadd.f32 0.0, %v435
  %v437 = vpop.f32.mrb[0].mxu0
  %v438 = vpop.f32.mrb[0].mxu0
  %v439 = vadd.f32 0.0, %v438
  %v440 = vpop.f32.mrb[0].mxu0
  %441 = vmatprep.mubr.bf16.mxu0 0
  %442 = vmatmul.mubr.bf16.gmra.mrb[0].mxu0 %v292
  %v443 = vpop.f32.mrb[0].mxu0
  %v444 = vadd.f32 0.0, %v443
  %v445 = vpop.f32.mrb[0].mxu0
  %v446 = vpop.f32.mrb[0].mxu0
  %v447 = vadd.f32 0.0, %v446
  %v448 = vpop.f32.mrb[0].mxu0
  %449 = vmatprep.mubr.bf16.mxu0 0
  %450 = vmatmul.mubr.bf16.gmra.mrb[0].mxu0 %v295
  %v451 = vpop.f32.mrb[0].mxu0
  %v452 = vadd.f32 0.0, %v451
  %v453 = vpop.f32.mrb[0].mxu0
  %v454 = vpop.f32.mrb[0].mxu0
  %v455 = vadd.f32 0.0, %v454
  %v456 = vpop.f32.mrb[0].mxu0
  %457 = vmatprep.mubr.bf16.mxu0 0
  %458 = vmatmul.mubr.bf16.gmra.mrb[0].mxu0 %v298
  %v459 = vpop.f32.mrb[0].mxu0
  %v460 = vadd.f32 0.0, %v459
  %v461 = vpop.f32.mrb[0].mxu0
  %v462 = vpop.f32.mrb[0].mxu0
  %v463 = vadd.f32 0.0, %v462
  %v464 = vpop.f32.mrb[0].mxu0
  %465 = vmatprep.mubr.bf16.mxu0 0
  %466 = vmatmul.mubr.bf16.gmra.mrb[0].mxu0 %v301
  %v467 = vpop.f32.mrb[0].mxu0
  %v468 = vadd.f32 0.0, %v467
  %v469 = vpop.f32.mrb[0].mxu0
  %v470 = vpop.f32.mrb[0].mxu0
  %v471 = vadd.f32 0.0, %v470
  %v472 = vpop.f32.mrb[0].mxu0
  %473 = vmatprep.mubr.bf16.mxu0 0
  %474 = vmatmul.mubr.bf16.gmra.mrb[0].mxu0 %v304
  %v475 = vpop.f32.mrb[0].mxu0
  %v476 = vadd.f32 0.0, %v475
  %v477 = vpop.f32.mrb[0].mxu0
  %v478 = vpop.f32.mrb[0].mxu0
  %v479 = vadd.f32 0.0, %v478
  %v480 = vpop.f32.mrb[0].mxu0
  %481 = vmatprep.mubr.bf16.mxu0 0
  %482 = vmatmul.mubr.bf16.gmra.mrb[0].mxu0 %v307
  %v483 = vpop.f32.mrb[0].mxu0
  %v484 = vadd.f32 0.0, %v483
  %v485 = vpop.f32.mrb[0].mxu0
  %v486 = vpop.f32.mrb[0].mxu0
  %v487 = vadd.f32 0.0, %v486
  %v488 = vpop.f32.mrb[0].mxu0
  %489 = vmatprep.mubr.bf16.mxu0 0
  %490 = vmatmul.mubr.bf16.gmra.mrb[0].mxu0 %v310
  %v491 = vpop.f32.mrb[0].mxu0
  %v492 = vadd.f32 0.0, %v491
  %v493 = vpop.f32.mrb[0].mxu0
  %v494 = vpop.f32.mrb[0].mxu0
  %v495 = vadd.f32 0.0, %v494
  %v496 = vpop.f32.mrb[0].mxu0
  %497 = vmatprep.mubr.bf16.mxu0 0
  %498 = vmatmul.mubr.bf16.gmra.mrb[0].mxu0 %v313
  %v499 = vpop.f32.mrb[0].mxu0
  %v500 = vadd.f32 0.0, %v499
  %v501 = vpop.f32.mrb[0].mxu0
  %v502 = vpop.f32.mrb[0].mxu0
  %v503 = vadd.f32 0.0, %v502
  %v504 = vpop.f32.mrb[0].mxu0
  %505 = vmatprep.mubr.bf16.mxu0 0
  %506 = vmatmul.mubr.bf16.gmra.mrb[0].mxu0 %v316
  %v507 = vpop.f32.mrb[0].mxu0
  %v508 = vadd.f32 0.0, %v507
  %v509 = vpop.f32.mrb[0].mxu0
  %v510 = vpop.f32.mrb[0].mxu0
  %v511 = vadd.f32 0.0, %v510
  %v512 = vpop.f32.mrb[0].mxu0
  %513 = vmatprep.mubr.bf16.mxu0 0
  %514 = vmatmul.mubr.bf16.gmra.mrb[0].mxu0 %v319
  %v515 = vpop.f32.mrb[0].mxu0
  %v516 = vadd.f32 0.0, %v515
  %v517 = vpop.f32.mrb[0].mxu0
  %v518 = vpop.f32.mrb[0].mxu0
  %v519 = vadd.f32 0.0, %v518
  %v520 = vpop.f32.mrb[0].mxu0
  %521 = vmatprep.mubr.bf16.mxu0 0
  %522 = vmatmul.mubr.bf16.gmra.mrb[0].mxu0 %v322
  %v523 = vpop.f32.mrb[0].mxu0
  %v524 = vadd.f32 0.0, %v523
  %v525 = vpop.f32.mrb[0].mxu0
  %v526 = vpop.f32.mrb[0].mxu0
  %v527 = vadd.f32 0.0, %v526
  %v528 = vpop.f32.mrb[0].mxu0
  %529 = vmatprep.mubr.bf16.mxu0 0
  %530 = vmatmul.mubr.bf16.gmra.mrb[0].mxu0 %v325
  %v531 = vpop.f32.mrb[0].mxu0
  %v532 = vadd.f32 0.0, %v531
  %v533 = vpop.f32.mrb[0].mxu0
  %v534 = vpop.f32.mrb[0].mxu0
  %v535 = vadd.f32 0.0, %v534
  %v536 = vpop.f32.mrb[0].mxu0
  %537 = vmatprep.mubr.bf16.mxu0 0
  %538 = vmatmul.mubr.bf16.gmra.mrb[0].mxu0 %v328
  %v539 = vpop.f32.mrb[0].mxu0
  %v540 = vadd.f32 0.0, %v539
  %v541 = vpop.f32.mrb[0].mxu0
  %v542 = vpop.f32.mrb[0].mxu0
  %v543 = vadd.f32 0.0, %v542
  %v544 = vpop.f32.mrb[0].mxu0
  %545 = vmatprep.mubr.bf16.mxu0 0
  %546 = vmatmul.mubr.bf16.gmra.mrb[0].mxu0 %v331
  %v547 = vpop.f32.mrb[0].mxu0
  %v548 = vadd.f32 0.0, %v547
  %v549 = vpop.f32.mrb[0].mxu0
  %v550 = vpop.f32.mrb[0].mxu0
  %v551 = vadd.f32 0.0, %v550
  %v552 = vpop.f32.mrb[0].mxu0
  %553 = vmatprep.mubr.bf16.mxu0 0
  %554 = vmatmul.mubr.bf16.gmra.mrb[0].mxu0 %v334
  %v555 = vpop.f32.mrb[0].mxu0
  %v556 = vadd.f32 0.0, %v555
  %v557 = vpop.f32.mrb[0].mxu0
  %v558 = vpop.f32.mrb[0].mxu0
  %v559 = vadd.f32 0.0, %v558
  %v560 = vpop.f32.mrb[0].mxu0
  %561 = vmatprep.mubr.bf16.mxu0 0
  %562 = vmatmul.mubr.bf16.gmra.mrb[0].mxu0 %v337
  %v563 = vpop.f32.mrb[0].mxu0
  %v564 = vadd.f32 0.0, %v563
  %v565 = vpop.f32.mrb[0].mxu0
  %v566 = vpop.f32.mrb[0].mxu0
  %v567 = vadd.f32 0.0, %v566
  %v568 = vpop.f32.mrb[0].mxu0
  %569 = vmatprep.mubr.bf16.mxu0 0
  %570 = vmatmul.mubr.bf16.gmra.mrb[0].mxu0 %v340
  %v571 = vpop.f32.mrb[0].mxu0
  %v572 = vadd.f32 0.0, %v571
  %v573 = vpop.f32.mrb[0].mxu0
  %v574 = vpop.f32.mrb[0].mxu0
  %v575 = vadd.f32 0.0, %v574
  %v576 = vpop.f32.mrb[0].mxu0
  %577 = vmatprep.mubr.bf16.mxu0 0
  %578 = vmatmul.mubr.bf16.gmra.mrb[0].mxu0 %v343
  %v579 = vpop.f32.mrb[0].mxu0
  %v580 = vadd.f32 0.0, %v579
  %v581 = vpop.f32.mrb[0].mxu0
  %v582 = vpop.f32.mrb[0].mxu0
  %v583 = vadd.f32 0.0, %v582
  %v584 = vpop.f32.mrb[0].mxu0
  %585 = vmatprep.mubr.bf16.mxu0 0
  %586 = vmatmul.mubr.bf16.gmra.mrb[0].mxu0 %v346
  %v587 = vpop.f32.mrb[0].mxu0
  %v588 = vadd.f32 0.0, %v587
  %v589 = vpop.f32.mrb[0].mxu0
  %v590 = vpop.f32.mrb[0].mxu0
  %v591 = vadd.f32 0.0, %v590
  %v592 = vpop.f32.mrb[0].mxu0
  %593 = vmatprep.mubr.bf16.mxu0 0
  %594 = vmatmul.mubr.bf16.gmra.mrb[0].mxu0 %v349
  %v595 = vpop.f32.mrb[0].mxu0
  %v596 = vadd.f32 0.0, %v595
  %v597 = vpop.f32.mrb[0].mxu0
  %v598 = vpop.f32.mrb[0].mxu0
  %v599 = vadd.f32 0.0, %v598
  %v600 = vpop.f32.mrb[0].mxu0
  %601 = vmatprep.mubr.bf16.mxu0 0
  %602 = vmatmul.mubr.bf16.gmra.mrb[0].mxu0 %v352
  %v603 = vpop.f32.mrb[0].mxu0
  %v604 = vadd.f32 0.0, %v603
  %v605 = vpop.f32.mrb[0].mxu0
  %v606 = vpop.f32.mrb[0].mxu0
  %v607 = vadd.f32 0.0, %v606
  %v608 = vpop.f32.mrb[0].mxu0
  %609 = vmatprep.mubr.bf16.mxu0 0
  %610 = vmatmul.mubr.bf16.gmra.mrb[0].mxu0 %v355
  %v611 = vpop.f32.mrb[0].mxu0
  %v612 = vadd.f32 0.0, %v611
  %v613 = vpop.f32.mrb[0].mxu0
  %v614 = vpop.f32.mrb[0].mxu0
  %v615 = vadd.f32 0.0, %v614
  %v616 = vpop.f32.mrb[0].mxu0
  %617 = vmatprep.mubr.bf16.mxu0 0
  %618 = vmatmul.mubr.bf16.gmra.mrb[0].mxu0 %v358
  %v619 = vpop.f32.mrb[0].mxu0
  %v620 = vadd.f32 0.0, %v619
  %v621 = vpop.f32.mrb[0].mxu0
  %v622 = vpop.f32.mrb[0].mxu0
  %v623 = vadd.f32 0.0, %v622
  %v624 = vpop.f32.mrb[0].mxu0
  %625 = vmatprep.mubr.bf16.mxu0 0
  %626 = vmatmul.mubr.bf16.gmra.mrb[0].mxu0 %v361
  %v627 = vpop.f32.mrb[0].mxu0
  %v628 = vadd.f32 0.0, %v627
  %v629 = vpop.f32.mrb[0].mxu0
  %v630 = vpop.f32.mrb[0].mxu0
  %v631 = vadd.f32 0.0, %v630
  %v632 = vpop.f32.mrb[0].mxu0
  %633 = vmatprep.mubr.bf16.mxu0 0
  %634 = vmatmul.mubr.bf16.gmra.mrb[0].mxu0 %v364
  %v635 = vpop.f32.mrb[0].mxu0
  %v636 = vadd.f32 0.0, %v635
  %v637 = vpop.f32.mrb[0].mxu0
  %v638 = vpop.f32.mrb[0].mxu0
  %v639 = vadd.f32 0.0, %v638
  %v640 = vpop.f32.mrb[0].mxu0
  %641 = vmatprep.mubr.bf16.mxu0 0
  %642 = vmatmul.mubr.bf16.gmra.mrb[0].mxu0 %v367
  %v643 = vpop.f32.mrb[0].mxu0
  %v644 = vadd.f32 0.0, %v643
  %v645 = vpop.f32.mrb[0].mxu0
  %v646 = vpop.f32.mrb[0].mxu0
  %v647 = vadd.f32 0.0, %v646
  %v648 = vpop.f32.mrb[0].mxu0
  %649 = vmatprep.mubr.bf16.mxu0 0
  %650 = vmatmul.mubr.bf16.gmra.mrb[0].mxu0 %v370
  %v651 = vpop.f32.mrb[0].mxu0
  %v652 = vadd.f32 0.0, %v651
  %v653 = vpop.f32.mrb[0].mxu0
  %v654 = vpop.f32.mrb[0].mxu0
  %v655 = vadd.f32 0.0, %v654
  %v656 = vpop.f32.mrb[0].mxu0
  %657 = vmatprep.mubr.bf16.mxu0 0
  %658 = vmatmul.mubr.bf16.gmra.mrb[0].mxu0 %v373
  %v659 = vpop.f32.mrb[0].mxu0
  %v660 = vadd.f32 0.0, %v659
  %v661 = vpop.f32.mrb[0].mxu0
  %v662 = vpop.f32.mrb[0].mxu0
  %v663 = vadd.f32 0.0, %v662
  %v664 = vpop.f32.mrb[0].mxu0
  %665 = vmatprep.mubr.bf16.mxu0 0
  %666 = vmatmul.mubr.bf16.gmra.mrb[0].mxu0 %v376
  %v667 = vpop.f32.mrb[0].mxu0
  %v668 = vadd.f32 0.0, %v667
  %v669 = vpop.f32.mrb[0].mxu0
  %v670 = vpop.f32.mrb[0].mxu0
  %v671 = vadd.f32 0.0, %v670
  %v672 = vpop.f32.mrb[0].mxu0
  %673 = vdwg.mxu0
  %v674 = vld [vmem:[%s2] sm:$0x1]
  %v676 = vlaneseq
  %v677 = vshrl.u32 %v676, 7
  %v678 = vsub.s32 0, %v677
  %v679 = vrot.slane %v674, %v678
  %v681 = vmul.f32 %v420, %v679
  %v682 = vmul.f32 %v423, %v679
  %v683 = vmul.f32 %v428, %v679
  %v684 = vmul.f32 %v431, %v679
  %v685 = vmul.f32 %v436, %v679
  %v686 = vmul.f32 %v439, %v679
  %v687 = vmul.f32 %v444, %v679
  %v688 = vmul.f32 %v447, %v679
  %v689 = vmul.f32 %v452, %v679
  %v690 = vmul.f32 %v455, %v679
  %v691 = vmul.f32 %v460, %v679
  %v692 = vmul.f32 %v463, %v679
  %v693 = vmul.f32 %v468, %v679
  %v694 = vmul.f32 %v471, %v679
  %v695 = vmul.f32 %v476, %v679
  %v696 = vmul.f32 %v479, %v679
  %v697 = vmul.f32 %v484, %v679
  %v698 = vmul.f32 %v487, %v679
  %v699 = vmul.f32 %v492, %v679
  %v700 = vmul.f32 %v495, %v679
  %v701 = vmul.f32 %v500, %v679
  %v702 = vmul.f32 %v503, %v679
  %v703 = vmul.f32 %v508, %v679
  %v704 = vmul.f32 %v511, %v679
  %v705 = vmul.f32 %v516, %v679
  %v706 = vmul.f32 %v519, %v679
  %v707 = vmul.f32 %v524, %v679
  %v708 = vmul.f32 %v527, %v679
  %v709 = vmul.f32 %v532, %v679
  %v710 = vmul.f32 %v535, %v679
  %v711 = vmul.f32 %v540, %v679
  %v712 = vmul.f32 %v543, %v679
  %v713 = vmul.f32 %v548, %v679
  %v714 = vmul.f32 %v551, %v679
  %v715 = vmul.f32 %v556, %v679
  %v716 = vmul.f32 %v559, %v679
  %v717 = vmul.f32 %v564, %v679
  %v718 = vmul.f32 %v567, %v679
  %v719 = vmul.f32 %v572, %v679
  %v720 = vmul.f32 %v575, %v679
  %v721 = vmul.f32 %v580, %v679
  %v722 = vmul.f32 %v583, %v679
  %v723 = vmul.f32 %v588, %v679
  %v724 = vmul.f32 %v591, %v679
  %v725 = vmul.f32 %v596, %v679
  %v726 = vmul.f32 %v599, %v679
  %v727 = vmul.f32 %v604, %v679
  %v728 = vmul.f32 %v607, %v679
  %v729 = vmul.f32 %v612, %v679
  %v730 = vmul.f32 %v615, %v679
  %v731 = vmul.f32 %v620, %v679
  %v732 = vmul.f32 %v623, %v679
  %v733 = vmul.f32 %v628, %v679
  %v734 = vmul.f32 %v631, %v679
  %v735 = vmul.f32 %v636, %v679
  %v736 = vmul.f32 %v639, %v679
  %v737 = vmul.f32 %v644, %v679
  %v738 = vmul.f32 %v647, %v679
  %v739 = vmul.f32 %v652, %v679
  %v740 = vmul.f32 %v655, %v679
  %v741 = vmul.f32 %v660, %v679
  %v742 = vmul.f32 %v663, %v679
  %v743 = vmul.f32 %v668, %v679
  %v744 = vmul.f32 %v671, %v679
  %v745 = vld [vmem:[%s3] sm:$0x1]
  %v747 = vlaneseq
  %v748 = vshrl.u32 %v747, 7
  %v749 = vsub.s32 0, %v748
  %v750 = vrot.slane %v745, %v749
  %v752 = vadd.f32 %v681, %v750
  %v753 = vadd.f32 %v682, %v750
  %v754 = vadd.f32 %v683, %v750
  %v755 = vadd.f32 %v684, %v750
  %v756 = vadd.f32 %v685, %v750
  %v757 = vadd.f32 %v686, %v750
  %v758 = vadd.f32 %v687, %v750
  %v759 = vadd.f32 %v688, %v750
  %v760 = vadd.f32 %v689, %v750
  %v761 = vadd.f32 %v690, %v750
  %v762 = vadd.f32 %v691, %v750
  %v763 = vadd.f32 %v692, %v750
  %v764 = vadd.f32 %v693, %v750
  %v765 = vadd.f32 %v694, %v750
  %v766 = vadd.f32 %v695, %v750
  %v767 = vadd.f32 %v696, %v750
  %v768 = vadd.f32 %v697, %v750
  %v769 = vadd.f32 %v698, %v750
  %v770 = vadd.f32 %v699, %v750
  %v771 = vadd.f32 %v700, %v750
  %v772 = vadd.f32 %v701, %v750
  %v773 = vadd.f32 %v702, %v750
  %v774 = vadd.f32 %v703, %v750
  %v775 = vadd.f32 %v704, %v750
  %v776 = vadd.f32 %v705, %v750
  %v777 = vadd.f32 %v706, %v750
  %v778 = vadd.f32 %v707, %v750
  %v779 = vadd.f32 %v708, %v750
  %v780 = vadd.f32 %v709, %v750
  %v781 = vadd.f32 %v710, %v750
  %v782 = vadd.f32 %v711, %v750
  %v783 = vadd.f32 %v712, %v750
  %v784 = vadd.f32 %v713, %v750
  %v785 = vadd.f32 %v714, %v750
  %v786 = vadd.f32 %v715, %v750
  %v787 = vadd.f32 %v716, %v750
  %v788 = vadd.f32 %v717, %v750
  %v789 = vadd.f32 %v718, %v750
  %v790 = vadd.f32 %v719, %v750
  %v791 = vadd.f32 %v720, %v750
  %v792 = vadd.f32 %v721, %v750
  %v793 = vadd.f32 %v722, %v750
  %v794 = vadd.f32 %v723, %v750
  %v795 = vadd.f32 %v724, %v750
  %v796 = vadd.f32 %v725, %v750
  %v797 = vadd.f32 %v726, %v750
  %v798 = vadd.f32 %v727, %v750
  %v799 = vadd.f32 %v728, %v750
  %v800 = vadd.f32 %v729, %v750
  %v801 = vadd.f32 %v730, %v750
  %v802 = vadd.f32 %v731, %v750
  %v803 = vadd.f32 %v732, %v750
  %v804 = vadd.f32 %v733, %v750
  %v805 = vadd.f32 %v734, %v750
  %v806 = vadd.f32 %v735, %v750
  %v807 = vadd.f32 %v736, %v750
  %v808 = vadd.f32 %v737, %v750
  %v809 = vadd.f32 %v738, %v750
  %v810 = vadd.f32 %v739, %v750
  %v811 = vadd.f32 %v740, %v750
  %v812 = vadd.f32 %v741, %v750
  %v813 = vadd.f32 %v742, %v750
  %v814 = vadd.f32 %v743, %v750
  %v815 = vadd.f32 %v744, %v750
  %v816 = vmax.f32 %v752, 0.0
  %v817 = vmax.f32 %v753, 0.0
  %v818 = vmax.f32 %v754, 0.0
  %v819 = vmax.f32 %v755, 0.0
  %v820 = vmax.f32 %v756, 0.0
  %v821 = vmax.f32 %v757, 0.0
  %v822 = vmax.f32 %v758, 0.0
  %v823 = vmax.f32 %v759, 0.0
  %v824 = vmax.f32 %v760, 0.0
  %v825 = vmax.f32 %v761, 0.0
  %v826 = vmax.f32 %v762, 0.0
  %v827 = vmax.f32 %v763, 0.0
  %v828 = vmax.f32 %v764, 0.0
  %v829 = vmax.f32 %v765, 0.0
  %v830 = vmax.f32 %v766, 0.0
  %v831 = vmax.f32 %v767, 0.0
  %v832 = vmax.f32 %v768, 0.0
  %v833 = vmax.f32 %v769, 0.0
  %v834 = vmax.f32 %v770, 0.0
  %v835 = vmax.f32 %v771, 0.0
  %v836 = vmax.f32 %v772, 0.0
  %v837 = vmax.f32 %v773, 0.0
  %v838 = vmax.f32 %v774, 0.0
  %v839 = vmax.f32 %v775, 0.0
  %v840 = vmax.f32 %v776, 0.0
  %v841 = vmax.f32 %v777, 0.0
  %v842 = vmax.f32 %v778, 0.0
  %v843 = vmax.f32 %v779, 0.0
  %v844 = vmax.f32 %v780, 0.0
  %v845 = vmax.f32 %v781, 0.0
  %v846 = vmax.f32 %v782, 0.0
  %v847 = vmax.f32 %v783, 0.0
  %v848 = vmax.f32 %v784, 0.0
  %v849 = vmax.f32 %v785, 0.0
  %v850 = vmax.f32 %v786, 0.0
  %v851 = vmax.f32 %v787, 0.0
  %v852 = vmax.f32 %v788, 0.0
  %v853 = vmax.f32 %v789, 0.0
  %v854 = vmax.f32 %v790, 0.0
  %v855 = vmax.f32 %v791, 0.0
  %v856 = vmax.f32 %v792, 0.0
  %v857 = vmax.f32 %v793, 0.0
  %v858 = vmax.f32 %v794, 0.0
  %v859 = vmax.f32 %v795, 0.0
  %v860 = vmax.f32 %v796, 0.0
  %v861 = vmax.f32 %v797, 0.0
  %v862 = vmax.f32 %v798, 0.0
  %v863 = vmax.f32 %v799, 0.0
  %v864 = vmax.f32 %v800, 0.0
  %v865 = vmax.f32 %v801, 0.0
  %v866 = vmax.f32 %v802, 0.0
  %v867 = vmax.f32 %v803, 0.0
  %v868 = vmax.f32 %v804, 0.0
  %v869 = vmax.f32 %v805, 0.0
  %v870 = vmax.f32 %v806, 0.0
  %v871 = vmax.f32 %v807, 0.0
  %v872 = vmax.f32 %v808, 0.0
  %v873 = vmax.f32 %v809, 0.0
  %v874 = vmax.f32 %v810, 0.0
  %v875 = vmax.f32 %v811, 0.0
  %v876 = vmax.f32 %v812, 0.0
  %v877 = vmax.f32 %v813, 0.0
  %v878 = vmax.f32 %v814, 0.0
  %v879 = vmax.f32 %v815, 0.0
  %vm880 = vcmask 523264
  %881 = vst.msk [vmem:[%s4] sm:$0xff] %vm880, %v816
  %882 = vst.msk [vmem:[%s4 + $0x8] sm:$0xff] %vm880, %v817
  %883 = vst.msk [vmem:[%s4 + $0x10] sm:$0xff] %vm880, %v818
  %884 = vst.msk [vmem:[%s4 + $0x18] sm:$0xff] %vm880, %v819
  %885 = vst.msk [vmem:[%s4 + $0x20] sm:$0xff] %vm880, %v820
  %886 = vst.msk [vmem:[%s4 + $0x28] sm:$0xff] %vm880, %v821
  %887 = vst.msk [vmem:[%s4 + $0x30] sm:$0xff] %vm880, %v822
  %888 = vst.msk [vmem:[%s4 + $0x38] sm:$0xff] %vm880, %v823
  %889 = vst.msk [vmem:[%s4 + $0x40] sm:$0xff] %vm880, %v824
  %890 = vst.msk [vmem:[%s4 + $0x48] sm:$0xff] %vm880, %v825
  %891 = vst.msk [vmem:[%s4 + $0x50] sm:$0xff] %vm880, %v826
  %892 = vst.msk [vmem:[%s4 + $0x58] sm:$0xff] %vm880, %v827
  %893 = vst.msk [vmem:[%s4 + $0x60] sm:$0xff] %vm880, %v828
  %894 = vst.msk [vmem:[%s4 + $0x68] sm:$0xff] %vm880, %v829
  %895 = vst.msk [vmem:[%s4 + $0x70] sm:$0xff] %vm880, %v830
  %896 = vst.msk [vmem:[%s4 + $0x78] sm:$0xff] %vm880, %v831
  %897 = vst.msk [vmem:[%s4 + $0x80] sm:$0xff] %vm880, %v832
  %898 = vst.msk [vmem:[%s4 + $0x88] sm:$0xff] %vm880, %v833
  %899 = vst.msk [vmem:[%s4 + $0x90] sm:$0xff] %vm880, %v834
  %900 = vst.msk [vmem:[%s4 + $0x98] sm:$0xff] %vm880, %v835
  %901 = vst.msk [vmem:[%s4 + $0xa0] sm:$0xff] %vm880, %v836
  %902 = vst.msk [vmem:[%s4 + $0xa8] sm:$0xff] %vm880, %v837
  %903 = vst.msk [vmem:[%s4 + $0xb0] sm:$0xff] %vm880, %v838
  %904 = vst.msk [vmem:[%s4 + $0xb8] sm:$0xff] %vm880, %v839
  %905 = vst.msk [vmem:[%s4 + $0xc0] sm:$0xff] %vm880, %v840
  %906 = vst.msk [vmem:[%s4 + $0xc8] sm:$0xff] %vm880, %v841
  %907 = vst.msk [vmem:[%s4 + $0xd0] sm:$0xff] %vm880, %v842
  %908 = vst.msk [vmem:[%s4 + $0xd8] sm:$0xff] %vm880, %v843
  %909 = vst.msk [vmem:[%s4 + $0xe0] sm:$0xff] %vm880, %v844
  %910 = vst.msk [vmem:[%s4 + $0xe8] sm:$0xff] %vm880, %v845
  %911 = vst.msk [vmem:[%s4 + $0xf0] sm:$0xff] %vm880, %v846
  %912 = vst.msk [vmem:[%s4 + $0xf8] sm:$0xff] %vm880, %v847
  %913 = vst.msk [vmem:[%s4 + $0x100] sm:$0xff] %vm880, %v848
  %914 = vst.msk [vmem:[%s4 + $0x108] sm:$0xff] %vm880, %v849
  %915 = vst.msk [vmem:[%s4 + $0x110] sm:$0xff] %vm880, %v850
  %916 = vst.msk [vmem:[%s4 + $0x118] sm:$0xff] %vm880, %v851
  %917 = vst.msk [vmem:[%s4 + $0x120] sm:$0xff] %vm880, %v852
  %918 = vst.msk [vmem:[%s4 + $0x128] sm:$0xff] %vm880, %v853
  %919 = vst.msk [vmem:[%s4 + $0x130] sm:$0xff] %vm880, %v854
  %920 = vst.msk [vmem:[%s4 + $0x138] sm:$0xff] %vm880, %v855
  %921 = vst.msk [vmem:[%s4 + $0x140] sm:$0xff] %vm880, %v856
  %922 = vst.msk [vmem:[%s4 + $0x148] sm:$0xff] %vm880, %v857
  %923 = vst.msk [vmem:[%s4 + $0x150] sm:$0xff] %vm880, %v858
  %924 = vst.msk [vmem:[%s4 + $0x158] sm:$0xff] %vm880, %v859
  %925 = vst.msk [vmem:[%s4 + $0x160] sm:$0xff] %vm880, %v860
  %926 = vst.msk [vmem:[%s4 + $0x168] sm:$0xff] %vm880, %v861
  %927 = vst.msk [vmem:[%s4 + $0x170] sm:$0xff] %vm880, %v862
  %928 = vst.msk [vmem:[%s4 + $0x178] sm:$0xff] %vm880, %v863
  %929 = vst.msk [vmem:[%s4 + $0x180] sm:$0xff] %vm880, %v864
  %930 = vst.msk [vmem:[%s4 + $0x188] sm:$0xff] %vm880, %v865
  %931 = vst.msk [vmem:[%s4 + $0x190] sm:$0xff] %vm880, %v866
  %932 = vst.msk [vmem:[%s4 + $0x198] sm:$0xff] %vm880, %v867
  %933 = vst.msk [vmem:[%s4 + $0x1a0] sm:$0xff] %vm880, %v868
  %934 = vst.msk [vmem:[%s4 + $0x1a8] sm:$0xff] %vm880, %v869
  %935 = vst.msk [vmem:[%s4 + $0x1b0] sm:$0xff] %vm880, %v870
  %936 = vst.msk [vmem:[%s4 + $0x1b8] sm:$0xff] %vm880, %v871
  %937 = vst.msk [vmem:[%s4 + $0x1c0] sm:$0xff] %vm880, %v872
  %938 = vst.msk [vmem:[%s4 + $0x1c8] sm:$0xff] %vm880, %v873
  %939 = vst.msk [vmem:[%s4 + $0x1d0] sm:$0xff] %vm880, %v874
  %940 = vst.msk [vmem:[%s4 + $0x1d8] sm:$0xff] %vm880, %v875
  %941 = vst.msk [vmem:[%s4 + $0x1e0] sm:$0xff] %vm880, %v876
  %942 = vst.msk [vmem:[%s4 + $0x1e8] sm:$0xff] %vm880, %v877
  %943 = vst.msk [vmem:[%s4 + $0x1f0] sm:$0xff] %vm880, %v878
  %944 = vst.msk [vmem:[%s4 + $0x1f8] sm:$0xff] %vm880, %v879
  // Predicated region
  $region18: #{cnn_forward.7} parent=0 // pred_check
    _
  $region19: #{cnn_forward.7} parent=0 // pred_check_branch
    %946 = sbr.rel (0) target = $region21
  $region20: #{cnn_forward.7} parent=0 // pred_region
    _
  $region21: #{cnn_forward.7} parent=0 // pred_fallthru
    _
  // Predicated region
  $region22: #{cnn_forward.7} parent=0 // pred_check
    _
  $region23: #{cnn_forward.7} parent=0 // pred_check_branch
    %948 = sbr.rel (0) target = $region25
  $region24: #{cnn_forward.7} parent=0 // pred_region
    _
  $region25: #{cnn_forward.7} parent=0 // pred_fallthru
    _

// kernel: cnn_forward.8
$region0: #{cnn_forward.8}
  #allocation0 [shape = 'u32[]', space=smem, size = 0x4, offset = 0x4, fixed_abs, tag = 'smem constant byte address 0x4 - core index']
  #allocation1 [shape = 'u32[144,128]{1,0:T(1,128)}', space=vmem, size = 0x12000, scoped, tag = 'internal scratch']
  %s0 = inlined_call_operand.vmem [shape: bf16[512,576], index: 0, kind: input, shape index: {}]
  %s1 = inlined_call_operand.vmem [shape: bf16[576,64], index: 1, kind: input, shape index: {}]
  %s2 = inlined_call_operand.vmem [shape: f32[1,64], index: 2, kind: input, shape index: {}]
  %s3 = inlined_call_operand.vmem [shape: f32[1,64], index: 3, kind: input, shape index: {}]
  %s4 = inlined_call_operand.vmem [shape: f32[512,64], index: 4, kind: output, shape index: {}]
  %s5 = sld [smem:[#allocation0]]
  $region26: #{cnn_forward.8} parent=0
    _
  %s7 = ssub.s32 1, %s5
  %s8 = scalar_select 0, %s7, %s5
  // Predicated region
  $region2: #{cnn_forward.8} parent=0 // pred_check
    _
  $region3: #{cnn_forward.8} parent=0 // pred_check_branch
    %10 = sbr.rel (0) target = $region5
  $region4: #{cnn_forward.8} parent=0 // pred_region
    _
  $region5: #{cnn_forward.8} parent=0 // pred_fallthru
    _
  // Predicated region
  $region6: #{cnn_forward.8} parent=0 // pred_check
    _
  $region7: #{cnn_forward.8} parent=0 // pred_check_branch
    %12 = sbr.rel (0) target = $region9
  $region8: #{cnn_forward.8} parent=0 // pred_region
    _
  $region9: #{cnn_forward.8} parent=0 // pred_fallthru
    _
  // Predicated region
  $region10: #{cnn_forward.8} parent=0 // pred_check
    _
  $region11: #{cnn_forward.8} parent=0 // pred_check_branch
    %14 = sbr.rel (0) target = $region13
  $region12: #{cnn_forward.8} parent=0 // pred_region
    _
  $region13: #{cnn_forward.8} parent=0 // pred_fallthru
    _
  // Predicated region
  $region14: #{cnn_forward.8} parent=0 // pred_check
    _
  $region15: #{cnn_forward.8} parent=0 // pred_check_branch
    %16 = sbr.rel (0) target = $region17
  $region16: #{cnn_forward.8} parent=0 // pred_region
    _
  $region17: #{cnn_forward.8} parent=0 // pred_fallthru
    _
  %v18 = vld [vmem:[%s0] sm:$0xff]
  %v19 = vld [vmem:[%s0 + $0x8] sm:$0xff]
  %v20 = vld [vmem:[%s0 + $0x10] sm:$0xf]
  %v21 = vld [vmem:[%s0 + $0x14] sm:$0xff]
  %v22 = vld [vmem:[%s0 + $0x1c] sm:$0xff]
  %v23 = vld [vmem:[%s0 + $0x24] sm:$0xf]
  %v24 = vld [vmem:[%s0 + $0x28] sm:$0xff]
  %v25 = vld [vmem:[%s0 + $0x30] sm:$0xff]
  %v26 = vld [vmem:[%s0 + $0x38] sm:$0xf]
  %v27 = vld [vmem:[%s0 + $0x3c] sm:$0xff]
  %v28 = vld [vmem:[%s0 + $0x44] sm:$0xff]
  %v29 = vld [vmem:[%s0 + $0x4c] sm:$0xf]
  %v30 = vld [vmem:[%s0 + $0x50] sm:$0xff]
  %v31 = vld [vmem:[%s0 + $0x58] sm:$0xff]
  %v32 = vld [vmem:[%s0 + $0x60] sm:$0xf]
  %v33 = vld [vmem:[%s0 + $0x64] sm:$0xff]
  %v34 = vld [vmem:[%s0 + $0x6c] sm:$0xff]
  %v35 = vld [vmem:[%s0 + $0x74] sm:$0xf]
  %v36 = vld [vmem:[%s0 + $0x78] sm:$0xff]
  %v37 = vld [vmem:[%s0 + $0x80] sm:$0xff]
  %v38 = vld [vmem:[%s0 + $0x88] sm:$0xf]
  %v39 = vld [vmem:[%s0 + $0x8c] sm:$0xff]
  %v40 = vld [vmem:[%s0 + $0x94] sm:$0xff]
  %v41 = vld [vmem:[%s0 + $0x9c] sm:$0xf]
  %v42 = vld [vmem:[%s0 + $0xa0] sm:$0xff]
  %v43 = vld [vmem:[%s0 + $0xa8] sm:$0xff]
  %v44 = vld [vmem:[%s0 + $0xb0] sm:$0xf]
  %v45 = vld [vmem:[%s0 + $0xb4] sm:$0xff]
  %v46 = vld [vmem:[%s0 + $0xbc] sm:$0xff]
  %v47 = vld [vmem:[%s0 + $0xc4] sm:$0xf]
  %v48 = vld [vmem:[%s0 + $0xc8] sm:$0xff]
  %v49 = vld [vmem:[%s0 + $0xd0] sm:$0xff]
  %v50 = vld [vmem:[%s0 + $0xd8] sm:$0xf]
  %v51 = vld [vmem:[%s0 + $0xdc] sm:$0xff]
  %v52 = vld [vmem:[%s0 + $0xe4] sm:$0xff]
  %v53 = vld [vmem:[%s0 + $0xec] sm:$0xf]
  %v54 = vld [vmem:[%s0 + $0xf0] sm:$0xff]
  %v55 = vld [vmem:[%s0 + $0xf8] sm:$0xff]
  %v56 = vld [vmem:[%s0 + $0x100] sm:$0xf]
  %v57 = vld [vmem:[%s0 + $0x104] sm:$0xff]
  %v58 = vld [vmem:[%s0 + $0x10c] sm:$0xff]
  %v59 = vld [vmem:[%s0 + $0x114] sm:$0xf]
  %v60 = vld [vmem:[%s0 + $0x118] sm:$0xff]
  %v61 = vld [vmem:[%s0 + $0x120] sm:$0xff]
  %v62 = vld [vmem:[%s0 + $0x128] sm:$0xf]
  %v63 = vld [vmem:[%s0 + $0x12c] sm:$0xff]
  %v64 = vld [vmem:[%s0 + $0x134] sm:$0xff]
  %v65 = vld [vmem:[%s0 + $0x13c] sm:$0xf]
  %v66 = vld [vmem:[%s0 + $0x140] sm:$0xff]
  %v67 = vld [vmem:[%s0 + $0x148] sm:$0xff]
  %v68 = vld [vmem:[%s0 + $0x150] sm:$0xf]
  %v69 = vld [vmem:[%s0 + $0x154] sm:$0xff]
  %v70 = vld [vmem:[%s0 + $0x15c] sm:$0xff]
  %v71 = vld [vmem:[%s0 + $0x164] sm:$0xf]
  %v72 = vld [vmem:[%s0 + $0x168] sm:$0xff]
  %v73 = vld [vmem:[%s0 + $0x170] sm:$0xff]
  %v74 = vld [vmem:[%s0 + $0x178] sm:$0xf]
  %v75 = vld [vmem:[%s0 + $0x17c] sm:$0xff]
  %v76 = vld [vmem:[%s0 + $0x184] sm:$0xff]
  %v77 = vld [vmem:[%s0 + $0x18c] sm:$0xf]
  %v78 = vld [vmem:[%s0 + $0x190] sm:$0xff]
  %v79 = vld [vmem:[%s0 + $0x198] sm:$0xff]
  %v80 = vld [vmem:[%s0 + $0x1a0] sm:$0xf]
  %v81 = vld [vmem:[%s0 + $0x1a4] sm:$0xff]
  %v82 = vld [vmem:[%s0 + $0x1ac] sm:$0xff]
  %v83 = vld [vmem:[%s0 + $0x1b4] sm:$0xf]
  %v84 = vld [vmem:[%s0 + $0x1b8] sm:$0xff]
  %v85 = vld [vmem:[%s0 + $0x1c0] sm:$0xff]
  %v86 = vld [vmem:[%s0 + $0x1c8] sm:$0xf]
  %v87 = vld [vmem:[%s0 + $0x1cc] sm:$0xff]
  %v88 = vld [vmem:[%s0 + $0x1d4] sm:$0xff]
  %v89 = vld [vmem:[%s0 + $0x1dc] sm:$0xf]
  %v90 = vld [vmem:[%s0 + $0x1e0] sm:$0xff]
  %v91 = vld [vmem:[%s0 + $0x1e8] sm:$0xff]
  %v92 = vld [vmem:[%s0 + $0x1f0] sm:$0xf]
  %v93 = vld [vmem:[%s0 + $0x1f4] sm:$0xff]
  %v94 = vld [vmem:[%s0 + $0x1fc] sm:$0xff]
  %v95 = vld [vmem:[%s0 + $0x204] sm:$0xf]
  %v96 = vld [vmem:[%s0 + $0x208] sm:$0xff]
  %v97 = vld [vmem:[%s0 + $0x210] sm:$0xff]
  %v98 = vld [vmem:[%s0 + $0x218] sm:$0xf]
  %v99 = vld [vmem:[%s0 + $0x21c] sm:$0xff]
  %v100 = vld [vmem:[%s0 + $0x224] sm:$0xff]
  %v101 = vld [vmem:[%s0 + $0x22c] sm:$0xf]
  %v102 = vld [vmem:[%s0 + $0x230] sm:$0xff]
  %v103 = vld [vmem:[%s0 + $0x238] sm:$0xff]
  %v104 = vld [vmem:[%s0 + $0x240] sm:$0xf]
  %v105 = vld [vmem:[%s0 + $0x244] sm:$0xff]
  %v106 = vld [vmem:[%s0 + $0x24c] sm:$0xff]
  %v107 = vld [vmem:[%s0 + $0x254] sm:$0xf]
  %v108 = vld [vmem:[%s0 + $0x258] sm:$0xff]
  %v109 = vld [vmem:[%s0 + $0x260] sm:$0xff]
  %v110 = vld [vmem:[%s0 + $0x268] sm:$0xf]
  %v111 = vld [vmem:[%s0 + $0x26c] sm:$0xff]
  %v112 = vld [vmem:[%s0 + $0x274] sm:$0xff]
  %v113 = vld [vmem:[%s0 + $0x27c] sm:$0xf]
  %v114 = vld [vmem:[%s0 + $0x280] sm:$0xff]
  %v115 = vld [vmem:[%s0 + $0x288] sm:$0xff]
  %v116 = vld [vmem:[%s0 + $0x290] sm:$0xf]
  %v117 = vld [vmem:[%s0 + $0x294] sm:$0xff]
  %v118 = vld [vmem:[%s0 + $0x29c] sm:$0xff]
  %v119 = vld [vmem:[%s0 + $0x2a4] sm:$0xf]
  %v120 = vld [vmem:[%s0 + $0x2a8] sm:$0xff]
  %v121 = vld [vmem:[%s0 + $0x2b0] sm:$0xff]
  %v122 = vld [vmem:[%s0 + $0x2b8] sm:$0xf]
  %v123 = vld [vmem:[%s0 + $0x2bc] sm:$0xff]
  %v124 = vld [vmem:[%s0 + $0x2c4] sm:$0xff]
  %v125 = vld [vmem:[%s0 + $0x2cc] sm:$0xf]
  %v126 = vld [vmem:[%s0 + $0x2d0] sm:$0xff]
  %v127 = vld [vmem:[%s0 + $0x2d8] sm:$0xff]
  %v128 = vld [vmem:[%s0 + $0x2e0] sm:$0xf]
  %v129 = vld [vmem:[%s0 + $0x2e4] sm:$0xff]
  %v130 = vld [vmem:[%s0 + $0x2ec] sm:$0xff]
  %v131 = vld [vmem:[%s0 + $0x2f4] sm:$0xf]
  %v132 = vld [vmem:[%s0 + $0x2f8] sm:$0xff]
  %v133 = vld [vmem:[%s0 + $0x300] sm:$0xff]
  %v134 = vld [vmem:[%s0 + $0x308] sm:$0xf]
  %v135 = vld [vmem:[%s0 + $0x30c] sm:$0xff]
  %v136 = vld [vmem:[%s0 + $0x314] sm:$0xff]
  %v137 = vld [vmem:[%s0 + $0x31c] sm:$0xf]
  %v138 = vld [vmem:[%s0 + $0x320] sm:$0xff]
  %v139 = vld [vmem:[%s0 + $0x328] sm:$0xff]
  %v140 = vld [vmem:[%s0 + $0x330] sm:$0xf]
  %v141 = vld [vmem:[%s0 + $0x334] sm:$0xff]
  %v142 = vld [vmem:[%s0 + $0x33c] sm:$0xff]
  %v143 = vld [vmem:[%s0 + $0x344] sm:$0xf]
  %v144 = vld [vmem:[%s0 + $0x348] sm:$0xff]
  %v145 = vld [vmem:[%s0 + $0x350] sm:$0xff]
  %v146 = vld [vmem:[%s0 + $0x358] sm:$0xf]
  %v147 = vld [vmem:[%s0 + $0x35c] sm:$0xff]
  %v148 = vld [vmem:[%s0 + $0x364] sm:$0xff]
  %v149 = vld [vmem:[%s0 + $0x36c] sm:$0xf]
  %v150 = vld [vmem:[%s0 + $0x370] sm:$0xff]
  %v151 = vld [vmem:[%s0 + $0x378] sm:$0xff]
  %v152 = vld [vmem:[%s0 + $0x380] sm:$0xf]
  %v153 = vld [vmem:[%s0 + $0x384] sm:$0xff]
  %v154 = vld [vmem:[%s0 + $0x38c] sm:$0xff]
  %v155 = vld [vmem:[%s0 + $0x394] sm:$0xf]
  %v156 = vld [vmem:[%s0 + $0x398] sm:$0xff]
  %v157 = vld [vmem:[%s0 + $0x3a0] sm:$0xff]
  %v158 = vld [vmem:[%s0 + $0x3a8] sm:$0xf]
  %v159 = vld [vmem:[%s0 + $0x3ac] sm:$0xff]
  %v160 = vld [vmem:[%s0 + $0x3b4] sm:$0xff]
  %v161 = vld [vmem:[%s0 + $0x3bc] sm:$0xf]
  %v162 = vld [vmem:[%s0 + $0x3c0] sm:$0xff]
  %v163 = vld [vmem:[%s0 + $0x3c8] sm:$0xff]
  %v164 = vld [vmem:[%s0 + $0x3d0] sm:$0xf]
  %v165 = vld [vmem:[%s0 + $0x3d4] sm:$0xff]
  %v166 = vld [vmem:[%s0 + $0x3dc] sm:$0xff]
  %v167 = vld [vmem:[%s0 + $0x3e4] sm:$0xf]
  %v168 = vld [vmem:[%s0 + $0x3e8] sm:$0xff]
  %v169 = vld [vmem:[%s0 + $0x3f0] sm:$0xff]
  %v170 = vld [vmem:[%s0 + $0x3f8] sm:$0xf]
  %v171 = vld [vmem:[%s0 + $0x3fc] sm:$0xff]
  %v172 = vld [vmem:[%s0 + $0x404] sm:$0xff]
  %v173 = vld [vmem:[%s0 + $0x40c] sm:$0xf]
  %v174 = vld [vmem:[%s0 + $0x410] sm:$0xff]
  %v175 = vld [vmem:[%s0 + $0x418] sm:$0xff]
  %v176 = vld [vmem:[%s0 + $0x420] sm:$0xf]
  %v177 = vld [vmem:[%s0 + $0x424] sm:$0xff]
  %v178 = vld [vmem:[%s0 + $0x42c] sm:$0xff]
  %v179 = vld [vmem:[%s0 + $0x434] sm:$0xf]
  %v180 = vld [vmem:[%s0 + $0x438] sm:$0xff]
  %v181 = vld [vmem:[%s0 + $0x440] sm:$0xff]
  %v182 = vld [vmem:[%s0 + $0x448] sm:$0xf]
  %v183 = vld [vmem:[%s0 + $0x44c] sm:$0xff]
  %v184 = vld [vmem:[%s0 + $0x454] sm:$0xff]
  %v185 = vld [vmem:[%s0 + $0x45c] sm:$0xf]
  %v186 = vld [vmem:[%s0 + $0x460] sm:$0xff]
  %v187 = vld [vmem:[%s0 + $0x468] sm:$0xff]
  %v188 = vld [vmem:[%s0 + $0x470] sm:$0xf]
  %v189 = vld [vmem:[%s0 + $0x474] sm:$0xff]
  %v190 = vld [vmem:[%s0 + $0x47c] sm:$0xff]
  %v191 = vld [vmem:[%s0 + $0x484] sm:$0xf]
  %v192 = vld [vmem:[%s0 + $0x488] sm:$0xff]
  %v193 = vld [vmem:[%s0 + $0x490] sm:$0xff]
  %v194 = vld [vmem:[%s0 + $0x498] sm:$0xf]
  %v195 = vld [vmem:[%s0 + $0x49c] sm:$0xff]
  %v196 = vld [vmem:[%s0 + $0x4a4] sm:$0xff]
  %v197 = vld [vmem:[%s0 + $0x4ac] sm:$0xf]
  %v198 = vld [vmem:[%s0 + $0x4b0] sm:$0xff]
  %v199 = vld [vmem:[%s0 + $0x4b8] sm:$0xff]
  %v200 = vld [vmem:[%s0 + $0x4c0] sm:$0xf]
  %v201 = vld [vmem:[%s0 + $0x4c4] sm:$0xff]
  %v202 = vld [vmem:[%s0 + $0x4cc] sm:$0xff]
  %v203 = vld [vmem:[%s0 + $0x4d4] sm:$0xf]
  %v204 = vld [vmem:[%s0 + $0x4d8] sm:$0xff]
  %v205 = vld [vmem:[%s0 + $0x4e0] sm:$0xff]
  %v206 = vld [vmem:[%s0 + $0x4e8] sm:$0xf]
  %v207 = vld [vmem:[%s0 + $0x4ec] sm:$0xff]
  %v208 = vld [vmem:[%s0 + $0x4f4] sm:$0xff]
  %v209 = vld [vmem:[%s0 + $0x4fc] sm:$0xf]
  %v210 = vld [vmem:[%s1] sm:$0xf]
  %v211 = vld [vmem:[%s1 + $0x4] sm:$0xf]
  %v212 = vld [vmem:[%s1 + $0x8] sm:$0xf]
  %v213 = vld [vmem:[%s1 + $0xc] sm:$0xf]
  %v214 = vld [vmem:[%s1 + $0x10] sm:$0xf]
  %v215 = vld [vmem:[%s1 + $0x14] sm:$0xf]
  %v216 = vld [vmem:[%s1 + $0x18] sm:$0xf]
  %v217 = vld [vmem:[%s1 + $0x1c] sm:$0xf]
  %v218 = vld [vmem:[%s1 + $0x20] sm:$0xf]
  %v219 = vld [vmem:[%s1 + $0x24] sm:$0xf]
  %v220 = vld [vmem:[%s1 + $0x28] sm:$0xf]
  %v221 = vld [vmem:[%s1 + $0x2c] sm:$0xf]
  %v222 = vld [vmem:[%s1 + $0x30] sm:$0xf]
  %v223 = vld [vmem:[%s1 + $0x34] sm:$0xf]
  %v224 = vld [vmem:[%s1 + $0x38] sm:$0xf]
  %v225 = vld [vmem:[%s1 + $0x3c] sm:$0xf]
  %v226 = vld [vmem:[%s1 + $0x40] sm:$0xf]
  %v227 = vld [vmem:[%s1 + $0x44] sm:$0xf]
  %v228 = vld [vmem:[%s1 + $0x48] sm:$0xf]
  %v229 = vld [vmem:[%s1 + $0x4c] sm:$0xf]
  %v230 = vld [vmem:[%s1 + $0x50] sm:$0xf]
  %v231 = vld [vmem:[%s1 + $0x54] sm:$0xf]
  %v232 = vld [vmem:[%s1 + $0x58] sm:$0xf]
  %v233 = vld [vmem:[%s1 + $0x5c] sm:$0xf]
  %v234 = vld [vmem:[%s1 + $0x60] sm:$0xf]
  %v235 = vld [vmem:[%s1 + $0x64] sm:$0xf]
  %v236 = vld [vmem:[%s1 + $0x68] sm:$0xf]
  %v237 = vld [vmem:[%s1 + $0x6c] sm:$0xf]
  %v238 = vld [vmem:[%s1 + $0x70] sm:$0xf]
  %v239 = vld [vmem:[%s1 + $0x74] sm:$0xf]
  %v240 = vld [vmem:[%s1 + $0x78] sm:$0xf]
  %v241 = vld [vmem:[%s1 + $0x7c] sm:$0xf]
  %v242 = vld [vmem:[%s1 + $0x80] sm:$0xf]
  %v243 = vld [vmem:[%s1 + $0x84] sm:$0xf]
  %v244 = vld [vmem:[%s1 + $0x88] sm:$0xf]
  %v245 = vld [vmem:[%s1 + $0x8c] sm:$0xf]
  %v246 = vld [vmem:[%s1 + $0x90] sm:$0xf]
  %v247 = vld [vmem:[%s1 + $0x94] sm:$0xf]
  %v248 = vld [vmem:[%s1 + $0x98] sm:$0xf]
  %v249 = vld [vmem:[%s1 + $0x9c] sm:$0xf]
  %v250 = vld [vmem:[%s1 + $0xa0] sm:$0xf]
  %v251 = vld [vmem:[%s1 + $0xa4] sm:$0xf]
  %v252 = vld [vmem:[%s1 + $0xa8] sm:$0xf]
  %v253 = vld [vmem:[%s1 + $0xac] sm:$0xf]
  %v254 = vld [vmem:[%s1 + $0xb0] sm:$0xf]
  %v255 = vld [vmem:[%s1 + $0xb4] sm:$0xf]
  %v256 = vld [vmem:[%s1 + $0xb8] sm:$0xf]
  %v257 = vld [vmem:[%s1 + $0xbc] sm:$0xf]
  %v258 = vld [vmem:[%s1 + $0xc0] sm:$0xf]
  %v259 = vld [vmem:[%s1 + $0xc4] sm:$0xf]
  %v260 = vld [vmem:[%s1 + $0xc8] sm:$0xf]
  %v261 = vld [vmem:[%s1 + $0xcc] sm:$0xf]
  %v262 = vld [vmem:[%s1 + $0xd0] sm:$0xf]
  %v263 = vld [vmem:[%s1 + $0xd4] sm:$0xf]
  %v264 = vld [vmem:[%s1 + $0xd8] sm:$0xf]
  %v265 = vld [vmem:[%s1 + $0xdc] sm:$0xf]
  %v266 = vld [vmem:[%s1 + $0xe0] sm:$0xf]
  %v267 = vld [vmem:[%s1 + $0xe4] sm:$0xf]
  %v268 = vld [vmem:[%s1 + $0xe8] sm:$0xf]
  %v269 = vld [vmem:[%s1 + $0xec] sm:$0xf]
  %v270 = vld [vmem:[%s1 + $0xf0] sm:$0xf]
  %v271 = vld [vmem:[%s1 + $0xf4] sm:$0xf]
  %v272 = vld [vmem:[%s1 + $0xf8] sm:$0xf]
  %v273 = vld [vmem:[%s1 + $0xfc] sm:$0xf]
  %v274 = vld [vmem:[%s1 + $0x100] sm:$0xf]
  %v275 = vld [vmem:[%s1 + $0x104] sm:$0xf]
  %v276 = vld [vmem:[%s1 + $0x108] sm:$0xf]
  %v277 = vld [vmem:[%s1 + $0x10c] sm:$0xf]
  %v278 = vld [vmem:[%s1 + $0x110] sm:$0xf]
  %v279 = vld [vmem:[%s1 + $0x114] sm:$0xf]
  %v280 = vld [vmem:[%s1 + $0x118] sm:$0xf]
  %v281 = vld [vmem:[%s1 + $0x11c] sm:$0xf]
  %v474 = vunpack.c.l.b16 %v18
  %v475 = vunpack.c.h.b16 %v18
  %v476 = vunpack.c.l.b16 %v19
  %v477 = vunpack.c.h.b16 %v19
  %v478 = vunpack.c.l.b16 %v20
  %v479 = vunpack.c.l.b16 %v21
  %v480 = vunpack.c.h.b16 %v21
  %v481 = vunpack.c.l.b16 %v22
  %v482 = vunpack.c.h.b16 %v22
  %v483 = vunpack.c.l.b16 %v23
  %v484 = vunpack.c.l.b16 %v24
  %v485 = vunpack.c.h.b16 %v24
  %v486 = vunpack.c.l.b16 %v25
  %v487 = vunpack.c.h.b16 %v25
  %v488 = vunpack.c.l.b16 %v26
  %v489 = vunpack.c.l.b16 %v27
  %v490 = vunpack.c.h.b16 %v27
  %v491 = vunpack.c.l.b16 %v28
  %v492 = vunpack.c.h.b16 %v28
  %v493 = vunpack.c.l.b16 %v29
  %v494 = vunpack.c.l.b16 %v30
  %v495 = vunpack.c.h.b16 %v30
  %v496 = vunpack.c.l.b16 %v31
  %v497 = vunpack.c.h.b16 %v31
  %v498 = vunpack.c.l.b16 %v32
  %v499 = vunpack.c.l.b16 %v33
  %v500 = vunpack.c.h.b16 %v33
  %v501 = vunpack.c.l.b16 %v34
  %v502 = vunpack.c.h.b16 %v34
  %v503 = vunpack.c.l.b16 %v35
  %v504 = vunpack.c.l.b16 %v36
  %v505 = vunpack.c.h.b16 %v36
  %v506 = vunpack.c.l.b16 %v37
  %v507 = vunpack.c.h.b16 %v37
  %v508 = vunpack.c.l.b16 %v38
  %v509 = vunpack.c.l.b16 %v39
  %v510 = vunpack.c.h.b16 %v39
  %v511 = vunpack.c.l.b16 %v40
  %v512 = vunpack.c.h.b16 %v40
  %v513 = vunpack.c.l.b16 %v41
  %v514 = vunpack.c.l.b16 %v42
  %v515 = vunpack.c.h.b16 %v42
  %v516 = vunpack.c.l.b16 %v43
  %v517 = vunpack.c.h.b16 %v43
  %v518 = vunpack.c.l.b16 %v44
  %v519 = vunpack.c.l.b16 %v45
  %v520 = vunpack.c.h.b16 %v45
  %v521 = vunpack.c.l.b16 %v46
  %v522 = vunpack.c.h.b16 %v46
  %v523 = vunpack.c.l.b16 %v47
  %v524 = vunpack.c.l.b16 %v48
  %v525 = vunpack.c.h.b16 %v48
  %v526 = vunpack.c.l.b16 %v49
  %v527 = vunpack.c.h.b16 %v49
  %v528 = vunpack.c.l.b16 %v50
  %v529 = vunpack.c.l.b16 %v51
  %v530 = vunpack.c.h.b16 %v51
  %v531 = vunpack.c.l.b16 %v52
  %v532 = vunpack.c.h.b16 %v52
  %v533 = vunpack.c.l.b16 %v53
  %v534 = vunpack.c.l.b16 %v54
  %v535 = vunpack.c.h.b16 %v54
  %v536 = vunpack.c.l.b16 %v55
  %v537 = vunpack.c.h.b16 %v55
  %v538 = vunpack.c.l.b16 %v56
  %v539 = vunpack.c.l.b16 %v57
  %v540 = vunpack.c.h.b16 %v57
  %v541 = vunpack.c.l.b16 %v58
  %v542 = vunpack.c.h.b16 %v58
  %v543 = vunpack.c.l.b16 %v59
  %v544 = vunpack.c.l.b16 %v60
  %v545 = vunpack.c.h.b16 %v60
  %v546 = vunpack.c.l.b16 %v61
  %v547 = vunpack.c.h.b16 %v61
  %v548 = vunpack.c.l.b16 %v62
  %v549 = vunpack.c.l.b16 %v63
  %v550 = vunpack.c.h.b16 %v63
  %v551 = vunpack.c.l.b16 %v64
  %v552 = vunpack.c.h.b16 %v64
  %v553 = vunpack.c.l.b16 %v65
  %v554 = vunpack.c.l.b16 %v66
  %v555 = vunpack.c.h.b16 %v66
  %v556 = vunpack.c.l.b16 %v67
  %v557 = vunpack.c.h.b16 %v67
  %v558 = vunpack.c.l.b16 %v68
  %v559 = vunpack.c.l.b16 %v69
  %v560 = vunpack.c.h.b16 %v69
  %v561 = vunpack.c.l.b16 %v70
  %v562 = vunpack.c.h.b16 %v70
  %v563 = vunpack.c.l.b16 %v71
  %v564 = vunpack.c.l.b16 %v72
  %v565 = vunpack.c.h.b16 %v72
  %v566 = vunpack.c.l.b16 %v73
  %v567 = vunpack.c.h.b16 %v73
  %v568 = vunpack.c.l.b16 %v74
  %v569 = vunpack.c.l.b16 %v75
  %v570 = vunpack.c.h.b16 %v75
  %v571 = vunpack.c.l.b16 %v76
  %v572 = vunpack.c.h.b16 %v76
  %v573 = vunpack.c.l.b16 %v77
  %v574 = vunpack.c.l.b16 %v78
  %v575 = vunpack.c.h.b16 %v78
  %v576 = vunpack.c.l.b16 %v79
  %v577 = vunpack.c.h.b16 %v79
  %v578 = vunpack.c.l.b16 %v80
  %v579 = vunpack.c.l.b16 %v81
  %v580 = vunpack.c.h.b16 %v81
  %v581 = vunpack.c.l.b16 %v82
  %v582 = vunpack.c.h.b16 %v82
  %v583 = vunpack.c.l.b16 %v83
  %v584 = vunpack.c.l.b16 %v84
  %v585 = vunpack.c.h.b16 %v84
  %v586 = vunpack.c.l.b16 %v85
  %v587 = vunpack.c.h.b16 %v85
  %v588 = vunpack.c.l.b16 %v86
  %v589 = vunpack.c.l.b16 %v87
  %v590 = vunpack.c.h.b16 %v87
  %v591 = vunpack.c.l.b16 %v88
  %v592 = vunpack.c.h.b16 %v88
  %v593 = vunpack.c.l.b16 %v89
  %v594 = vunpack.c.l.b16 %v90
  %v595 = vunpack.c.h.b16 %v90
  %v596 = vunpack.c.l.b16 %v91
  %v597 = vunpack.c.h.b16 %v91
  %v598 = vunpack.c.l.b16 %v92
  %v599 = vunpack.c.l.b16 %v93
  %v600 = vunpack.c.h.b16 %v93
  %v601 = vunpack.c.l.b16 %v94
  %v602 = vunpack.c.h.b16 %v94
  %v603 = vunpack.c.l.b16 %v95
  %v604 = vunpack.c.l.b16 %v96
  %v605 = vunpack.c.h.b16 %v96
  %v606 = vunpack.c.l.b16 %v97
  %v607 = vunpack.c.h.b16 %v97
  %v608 = vunpack.c.l.b16 %v98
  %v609 = vunpack.c.l.b16 %v99
  %v610 = vunpack.c.h.b16 %v99
  %v611 = vunpack.c.l.b16 %v100
  %v612 = vunpack.c.h.b16 %v100
  %v613 = vunpack.c.l.b16 %v101
  %v614 = vunpack.c.l.b16 %v102
  %v615 = vunpack.c.h.b16 %v102
  %v616 = vunpack.c.l.b16 %v103
  %v617 = vunpack.c.h.b16 %v103
  %v618 = vunpack.c.l.b16 %v104
  %v619 = vunpack.c.l.b16 %v105
  %v620 = vunpack.c.h.b16 %v105
  %v621 = vunpack.c.l.b16 %v106
  %v622 = vunpack.c.h.b16 %v106
  %v623 = vunpack.c.l.b16 %v107
  %v624 = vunpack.c.l.b16 %v108
  %v625 = vunpack.c.h.b16 %v108
  %v626 = vunpack.c.l.b16 %v109
  %v627 = vunpack.c.h.b16 %v109
  %v628 = vunpack.c.l.b16 %v110
  %v629 = vunpack.c.l.b16 %v111
  %v630 = vunpack.c.h.b16 %v111
  %v631 = vunpack.c.l.b16 %v112
  %v632 = vunpack.c.h.b16 %v112
  %v633 = vunpack.c.l.b16 %v113
  %v634 = vunpack.c.l.b16 %v114
  %v635 = vunpack.c.h.b16 %v114
  %v636 = vunpack.c.l.b16 %v115
  %v637 = vunpack.c.h.b16 %v115
  %v638 = vunpack.c.l.b16 %v116
  %v639 = vunpack.c.l.b16 %v117
  %v640 = vunpack.c.h.b16 %v117
  %v641 = vunpack.c.l.b16 %v118
  %v642 = vunpack.c.h.b16 %v118
  %v643 = vunpack.c.l.b16 %v119
  %v644 = vunpack.c.l.b16 %v120
  %v645 = vunpack.c.h.b16 %v120
  %v646 = vunpack.c.l.b16 %v121
  %v647 = vunpack.c.h.b16 %v121
  %v648 = vunpack.c.l.b16 %v122
  %v649 = vunpack.c.l.b16 %v123
  %v650 = vunpack.c.h.b16 %v123
  %v651 = vunpack.c.l.b16 %v124
  %v652 = vunpack.c.h.b16 %v124
  %v653 = vunpack.c.l.b16 %v125
  %v654 = vunpack.c.l.b16 %v126
  %v655 = vunpack.c.h.b16 %v126
  %v656 = vunpack.c.l.b16 %v127
  %v657 = vunpack.c.h.b16 %v127
  %v658 = vunpack.c.l.b16 %v128
  %v659 = vunpack.c.l.b16 %v129
  %v660 = vunpack.c.h.b16 %v129
  %v661 = vunpack.c.l.b16 %v130
  %v662 = vunpack.c.h.b16 %v130
  %v663 = vunpack.c.l.b16 %v131
  %v664 = vunpack.c.l.b16 %v132
  %v665 = vunpack.c.h.b16 %v132
  %v666 = vunpack.c.l.b16 %v133
  %v667 = vunpack.c.h.b16 %v133
  %v668 = vunpack.c.l.b16 %v134
  %v669 = vunpack.c.l.b16 %v135
  %v670 = vunpack.c.h.b16 %v135
  %v671 = vunpack.c.l.b16 %v136
  %v672 = vunpack.c.h.b16 %v136
  %v673 = vunpack.c.l.b16 %v137
  %v674 = vunpack.c.l.b16 %v138
  %v675 = vunpack.c.h.b16 %v138
  %v676 = vunpack.c.l.b16 %v139
  %v677 = vunpack.c.h.b16 %v139
  %v678 = vunpack.c.l.b16 %v140
  %v679 = vunpack.c.l.b16 %v141
  %v680 = vunpack.c.h.b16 %v141
  %v681 = vunpack.c.l.b16 %v142
  %v682 = vunpack.c.h.b16 %v142
  %v683 = vunpack.c.l.b16 %v143
  %v684 = vunpack.c.l.b16 %v144
  %v685 = vunpack.c.h.b16 %v144
  %v686 = vunpack.c.l.b16 %v145
  %v687 = vunpack.c.h.b16 %v145
  %v688 = vunpack.c.l.b16 %v146
  %v689 = vunpack.c.l.b16 %v147
  %v690 = vunpack.c.h.b16 %v147
  %v691 = vunpack.c.l.b16 %v148
  %v692 = vunpack.c.h.b16 %v148
  %v693 = vunpack.c.l.b16 %v149
  %v694 = vunpack.c.l.b16 %v150
  %v695 = vunpack.c.h.b16 %v150
  %v696 = vunpack.c.l.b16 %v151
  %v697 = vunpack.c.h.b16 %v151
  %v698 = vunpack.c.l.b16 %v152
  %v699 = vunpack.c.l.b16 %v153
  %v700 = vunpack.c.h.b16 %v153
  %v701 = vunpack.c.l.b16 %v154
  %v702 = vunpack.c.h.b16 %v154
  %v703 = vunpack.c.l.b16 %v155
  %v704 = vunpack.c.l.b16 %v156
  %v705 = vunpack.c.h.b16 %v156
  %v706 = vunpack.c.l.b16 %v157
  %v707 = vunpack.c.h.b16 %v157
  %v708 = vunpack.c.l.b16 %v158
  %v709 = vunpack.c.l.b16 %v159
  %v710 = vunpack.c.h.b16 %v159
  %v711 = vunpack.c.l.b16 %v160
  %v712 = vunpack.c.h.b16 %v160
  %v713 = vunpack.c.l.b16 %v161
  %v714 = vunpack.c.l.b16 %v162
  %v715 = vunpack.c.h.b16 %v162
  %v716 = vunpack.c.l.b16 %v163
  %v717 = vunpack.c.h.b16 %v163
  %v718 = vunpack.c.l.b16 %v164
  %v719 = vunpack.c.l.b16 %v165
  %v720 = vunpack.c.h.b16 %v165
  %v721 = vunpack.c.l.b16 %v166
  %v722 = vunpack.c.h.b16 %v166
  %v723 = vunpack.c.l.b16 %v167
  %v724 = vunpack.c.l.b16 %v168
  %v725 = vunpack.c.h.b16 %v168
  %v726 = vunpack.c.l.b16 %v169
  %v727 = vunpack.c.h.b16 %v169
  %v728 = vunpack.c.l.b16 %v170
  %v729 = vunpack.c.l.b16 %v171
  %v730 = vunpack.c.h.b16 %v171
  %v731 = vunpack.c.l.b16 %v172
  %v732 = vunpack.c.h.b16 %v172
  %v733 = vunpack.c.l.b16 %v173
  %v734 = vunpack.c.l.b16 %v174
  %v735 = vunpack.c.h.b16 %v174
  %v736 = vunpack.c.l.b16 %v175
  %v737 = vunpack.c.h.b16 %v175
  %v738 = vunpack.c.l.b16 %v176
  %v739 = vunpack.c.l.b16 %v177
  %v740 = vunpack.c.h.b16 %v177
  %v741 = vunpack.c.l.b16 %v178
  %v742 = vunpack.c.h.b16 %v178
  %v743 = vunpack.c.l.b16 %v179
  %v744 = vunpack.c.l.b16 %v180
  %v745 = vunpack.c.h.b16 %v180
  %v746 = vunpack.c.l.b16 %v181
  %v747 = vunpack.c.h.b16 %v181
  %v748 = vunpack.c.l.b16 %v182
  %v749 = vunpack.c.l.b16 %v183
  %v750 = vunpack.c.h.b16 %v183
  %v751 = vunpack.c.l.b16 %v184
  %v752 = vunpack.c.h.b16 %v184
  %v753 = vunpack.c.l.b16 %v185
  %v754 = vunpack.c.l.b16 %v186
  %v755 = vunpack.c.h.b16 %v186
  %v756 = vunpack.c.l.b16 %v187
  %v757 = vunpack.c.h.b16 %v187
  %v758 = vunpack.c.l.b16 %v188
  %v759 = vunpack.c.l.b16 %v189
  %v760 = vunpack.c.h.b16 %v189
  %v761 = vunpack.c.l.b16 %v190
  %v762 = vunpack.c.h.b16 %v190
  %v763 = vunpack.c.l.b16 %v191
  %v764 = vunpack.c.l.b16 %v192
  %v765 = vunpack.c.h.b16 %v192
  %v766 = vunpack.c.l.b16 %v193
  %v767 = vunpack.c.h.b16 %v193
  %v768 = vunpack.c.l.b16 %v194
  %v769 = vunpack.c.l.b16 %v195
  %v770 = vunpack.c.h.b16 %v195
  %v771 = vunpack.c.l.b16 %v196
  %v772 = vunpack.c.h.b16 %v196
  %v773 = vunpack.c.l.b16 %v197
  %v774 = vunpack.c.l.b16 %v198
  %v775 = vunpack.c.h.b16 %v198
  %v776 = vunpack.c.l.b16 %v199
  %v777 = vunpack.c.h.b16 %v199
  %v778 = vunpack.c.l.b16 %v200
  %v779 = vunpack.c.l.b16 %v201
  %v780 = vunpack.c.h.b16 %v201
  %v781 = vunpack.c.l.b16 %v202
  %v782 = vunpack.c.h.b16 %v202
  %v783 = vunpack.c.l.b16 %v203
  %v784 = vunpack.c.l.b16 %v204
  %v785 = vunpack.c.h.b16 %v204
  %v786 = vunpack.c.l.b16 %v205
  %v787 = vunpack.c.h.b16 %v205
  %v788 = vunpack.c.l.b16 %v206
  %v789 = vunpack.c.l.b16 %v207
  %v790 = vunpack.c.h.b16 %v207
  %v791 = vunpack.c.l.b16 %v208
  %v792 = vunpack.c.h.b16 %v208
  %v793 = vunpack.c.l.b16 %v209
  %v794 = vpack.c.b16 %v479, %v474
  %v795 = vpack.c.b16 %v480, %v475
  %v796 = vpack.c.b16 %v481, %v476
  %v797 = vpack.c.b16 %v482, %v477
  %v798 = vpack.c.b16 %v483, %v478
  %v799 = vpack.c.b16 %v489, %v484
  %v800 = vpack.c.b16 %v490, %v485
  %v801 = vpack.c.b16 %v491, %v486
  %v802 = vpack.c.b16 %v492, %v487
  %v803 = vpack.c.b16 %v493, %v488
  %v804 = vpack.c.b16 %v499, %v494
  %v805 = vpack.c.b16 %v500, %v495
  %v806 = vpack.c.b16 %v501, %v496
  %v807 = vpack.c.b16 %v502, %v497
  %v808 = vpack.c.b16 %v503, %v498
  %v809 = vpack.c.b16 %v509, %v504
  %v810 = vpack.c.b16 %v510, %v505
  %v811 = vpack.c.b16 %v511, %v506
  %v812 = vpack.c.b16 %v512, %v507
  %v813 = vpack.c.b16 %v513, %v508
  %v814 = vpack.c.b16 %v519, %v514
  %v815 = vpack.c.b16 %v520, %v515
  %v816 = vpack.c.b16 %v521, %v516
  %v817 = vpack.c.b16 %v522, %v517
  %v818 = vpack.c.b16 %v523, %v518
  %v819 = vpack.c.b16 %v529, %v524
  %v820 = vpack.c.b16 %v530, %v525
  %v821 = vpack.c.b16 %v531, %v526
  %v822 = vpack.c.b16 %v532, %v527
  %v823 = vpack.c.b16 %v533, %v528
  %v824 = vpack.c.b16 %v539, %v534
  %v825 = vpack.c.b16 %v540, %v535
  %v826 = vpack.c.b16 %v541, %v536
  %v827 = vpack.c.b16 %v542, %v537
  %v828 = vpack.c.b16 %v543, %v538
  %v829 = vpack.c.b16 %v549, %v544
  %v830 = vpack.c.b16 %v550, %v545
  %v831 = vpack.c.b16 %v551, %v546
  %v832 = vpack.c.b16 %v552, %v547
  %v833 = vpack.c.b16 %v553, %v548
  %v834 = vpack.c.b16 %v559, %v554
  %v835 = vpack.c.b16 %v560, %v555
  %v836 = vpack.c.b16 %v561, %v556
  %v837 = vpack.c.b16 %v562, %v557
  %v838 = vpack.c.b16 %v563, %v558
  %v839 = vpack.c.b16 %v569, %v564
  %v840 = vpack.c.b16 %v570, %v565
  %v841 = vpack.c.b16 %v571, %v566
  %v842 = vpack.c.b16 %v572, %v567
  %v843 = vpack.c.b16 %v573, %v568
  %v844 = vpack.c.b16 %v579, %v574
  %v845 = vpack.c.b16 %v580, %v575
  %v846 = vpack.c.b16 %v581, %v576
  %v847 = vpack.c.b16 %v582, %v577
  %v848 = vpack.c.b16 %v583, %v578
  %v849 = vpack.c.b16 %v589, %v584
  %v850 = vpack.c.b16 %v590, %v585
  %v851 = vpack.c.b16 %v591, %v586
  %v852 = vpack.c.b16 %v592, %v587
  %v853 = vpack.c.b16 %v593, %v588
  %v854 = vpack.c.b16 %v599, %v594
  %v855 = vpack.c.b16 %v600, %v595
  %v856 = vpack.c.b16 %v601, %v596
  %v857 = vpack.c.b16 %v602, %v597
  %v858 = vpack.c.b16 %v603, %v598
  %v859 = vpack.c.b16 %v609, %v604
  %v860 = vpack.c.b16 %v610, %v605
  %v861 = vpack.c.b16 %v611, %v606
  %v862 = vpack.c.b16 %v612, %v607
  %v863 = vpack.c.b16 %v613, %v608
  %v864 = vpack.c.b16 %v619, %v614
  %v865 = vpack.c.b16 %v620, %v615
  %v866 = vpack.c.b16 %v621, %v616
  %v867 = vpack.c.b16 %v622, %v617
  %v868 = vpack.c.b16 %v623, %v618
  %v869 = vpack.c.b16 %v629, %v624
  %v870 = vpack.c.b16 %v630, %v625
  %v871 = vpack.c.b16 %v631, %v626
  %v872 = vpack.c.b16 %v632, %v627
  %v873 = vpack.c.b16 %v633, %v628
  %v874 = vpack.c.b16 %v639, %v634
  %v875 = vpack.c.b16 %v640, %v635
  %v876 = vpack.c.b16 %v641, %v636
  %v877 = vpack.c.b16 %v642, %v637
  %v878 = vpack.c.b16 %v643, %v638
  %v879 = vpack.c.b16 %v649, %v644
  %v880 = vpack.c.b16 %v650, %v645
  %v881 = vpack.c.b16 %v651, %v646
  %v882 = vpack.c.b16 %v652, %v647
  %v883 = vpack.c.b16 %v653, %v648
  %v884 = vpack.c.b16 %v659, %v654
  %v885 = vpack.c.b16 %v660, %v655
  %v886 = vpack.c.b16 %v661, %v656
  %v887 = vpack.c.b16 %v662, %v657
  %v888 = vpack.c.b16 %v663, %v658
  %v889 = vpack.c.b16 %v669, %v664
  %v890 = vpack.c.b16 %v670, %v665
  %v891 = vpack.c.b16 %v671, %v666
  %v892 = vpack.c.b16 %v672, %v667
  %v893 = vpack.c.b16 %v673, %v668
  %v894 = vpack.c.b16 %v679, %v674
  %v895 = vpack.c.b16 %v680, %v675
  %v896 = vpack.c.b16 %v681, %v676
  %v897 = vpack.c.b16 %v682, %v677
  %v898 = vpack.c.b16 %v683, %v678
  %v899 = vpack.c.b16 %v689, %v684
  %v900 = vpack.c.b16 %v690, %v685
  %v901 = vpack.c.b16 %v691, %v686
  %v902 = vpack.c.b16 %v692, %v687
  %v903 = vpack.c.b16 %v693, %v688
  %v904 = vpack.c.b16 %v699, %v694
  %v905 = vpack.c.b16 %v700, %v695
  %v906 = vpack.c.b16 %v701, %v696
  %v907 = vpack.c.b16 %v702, %v697
  %v908 = vpack.c.b16 %v703, %v698
  %v909 = vpack.c.b16 %v709, %v704
  %v910 = vpack.c.b16 %v710, %v705
  %v911 = vpack.c.b16 %v711, %v706
  %v912 = vpack.c.b16 %v712, %v707
  %v913 = vpack.c.b16 %v713, %v708
  %v914 = vpack.c.b16 %v719, %v714
  %v915 = vpack.c.b16 %v720, %v715
  %v916 = vpack.c.b16 %v721, %v716
  %v917 = vpack.c.b16 %v722, %v717
  %v918 = vpack.c.b16 %v723, %v718
  %v919 = vpack.c.b16 %v729, %v724
  %v920 = vpack.c.b16 %v730, %v725
  %v921 = vpack.c.b16 %v731, %v726
  %v922 = vpack.c.b16 %v732, %v727
  %v923 = vpack.c.b16 %v733, %v728
  %v924 = vpack.c.b16 %v739, %v734
  %v925 = vpack.c.b16 %v740, %v735
  %v926 = vpack.c.b16 %v741, %v736
  %v927 = vpack.c.b16 %v742, %v737
  %v928 = vpack.c.b16 %v743, %v738
  %v929 = vpack.c.b16 %v749, %v744
  %v930 = vpack.c.b16 %v750, %v745
  %v931 = vpack.c.b16 %v751, %v746
  %v932 = vpack.c.b16 %v752, %v747
  %v933 = vpack.c.b16 %v753, %v748
  %v934 = vpack.c.b16 %v759, %v754
  %v935 = vpack.c.b16 %v760, %v755
  %v936 = vpack.c.b16 %v761, %v756
  %v937 = vpack.c.b16 %v762, %v757
  %v938 = vpack.c.b16 %v763, %v758
  %v939 = vpack.c.b16 %v769, %v764
  %v940 = vpack.c.b16 %v770, %v765
  %v941 = vpack.c.b16 %v771, %v766
  %v942 = vpack.c.b16 %v772, %v767
  %v943 = vpack.c.b16 %v773, %v768
  %v944 = vpack.c.b16 %v779, %v774
  %v945 = vpack.c.b16 %v780, %v775
  %v946 = vpack.c.b16 %v781, %v776
  %v947 = vpack.c.b16 %v782, %v777
  %v948 = vpack.c.b16 %v783, %v778
  %v949 = vpack.c.b16 %v789, %v784
  %v950 = vpack.c.b16 %v790, %v785
  %v951 = vpack.c.b16 %v791, %v786
  %v952 = vpack.c.b16 %v792, %v787
  %v953 = vpack.c.b16 %v793, %v788
  %v1154 = vunpack.c.l.b16 %v210
  %v1155 = vunpack.c.l.b16 %v211
  %v1156 = vunpack.c.l.b16 %v212
  %v1157 = vunpack.c.l.b16 %v213
  %v1158 = vunpack.c.l.b16 %v214
  %v1159 = vunpack.c.l.b16 %v215
  %v1160 = vunpack.c.l.b16 %v216
  %v1161 = vunpack.c.l.b16 %v217
  %v1162 = vunpack.c.l.b16 %v218
  %v1163 = vunpack.c.l.b16 %v219
  %v1164 = vunpack.c.l.b16 %v220
  %v1165 = vunpack.c.l.b16 %v221
  %v1166 = vunpack.c.l.b16 %v222
  %v1167 = vunpack.c.l.b16 %v223
  %v1168 = vunpack.c.l.b16 %v224
  %v1169 = vunpack.c.l.b16 %v225
  %v1170 = vunpack.c.l.b16 %v226
  %v1171 = vunpack.c.l.b16 %v227
  %v1172 = vunpack.c.l.b16 %v228
  %v1173 = vunpack.c.l.b16 %v229
  %v1174 = vunpack.c.l.b16 %v230
  %v1175 = vunpack.c.l.b16 %v231
  %v1176 = vunpack.c.l.b16 %v232
  %v1177 = vunpack.c.l.b16 %v233
  %v1178 = vunpack.c.l.b16 %v234
  %v1179 = vunpack.c.l.b16 %v235
  %v1180 = vunpack.c.l.b16 %v236
  %v1181 = vunpack.c.l.b16 %v237
  %v1182 = vunpack.c.l.b16 %v238
  %v1183 = vunpack.c.l.b16 %v239
  %v1184 = vunpack.c.l.b16 %v240
  %v1185 = vunpack.c.l.b16 %v241
  %v1186 = vunpack.c.l.b16 %v242
  %v1187 = vunpack.c.l.b16 %v243
  %v1188 = vunpack.c.l.b16 %v244
  %v1189 = vunpack.c.l.b16 %v245
  %v1190 = vunpack.c.l.b16 %v246
  %v1191 = vunpack.c.l.b16 %v247
  %v1192 = vunpack.c.l.b16 %v248
  %v1193 = vunpack.c.l.b16 %v249
  %v1194 = vunpack.c.l.b16 %v250
  %v1195 = vunpack.c.l.b16 %v251
  %v1196 = vunpack.c.l.b16 %v252
  %v1197 = vunpack.c.l.b16 %v253
  %v1198 = vunpack.c.l.b16 %v254
  %v1199 = vunpack.c.l.b16 %v255
  %v1200 = vunpack.c.l.b16 %v256
  %v1201 = vunpack.c.l.b16 %v257
  %v1202 = vunpack.c.l.b16 %v258
  %v1203 = vunpack.c.l.b16 %v259
  %v1204 = vunpack.c.l.b16 %v260
  %v1205 = vunpack.c.l.b16 %v261
  %v1206 = vunpack.c.l.b16 %v262
  %v1207 = vunpack.c.l.b16 %v263
  %v1208 = vunpack.c.l.b16 %v264
  %v1209 = vunpack.c.l.b16 %v265
  %v1210 = vunpack.c.l.b16 %v266
  %v1211 = vunpack.c.l.b16 %v267
  %v1212 = vunpack.c.l.b16 %v268
  %v1213 = vunpack.c.l.b16 %v269
  %v1214 = vunpack.c.l.b16 %v270
  %v1215 = vunpack.c.l.b16 %v271
  %v1216 = vunpack.c.l.b16 %v272
  %v1217 = vunpack.c.l.b16 %v273
  %v1218 = vunpack.c.l.b16 %v274
  %v1219 = vunpack.c.l.b16 %v275
  %v1220 = vunpack.c.l.b16 %v276
  %v1221 = vunpack.c.l.b16 %v277
  %v1222 = vunpack.c.l.b16 %v278
  %v1223 = vunpack.c.l.b16 %v279
  %v1224 = vunpack.c.l.b16 %v280
  %v1225 = vunpack.c.l.b16 %v281
  %v1226 = vpack.c.b16 %v1155, %v1154
  %v1227 = vpack.c.b16 %v1157, %v1156
  %v1228 = vpack.c.b16 %v1159, %v1158
  %v1229 = vpack.c.b16 %v1161, %v1160
  %v1230 = vpack.c.b16 %v1163, %v1162
  %v1231 = vpack.c.b16 %v1165, %v1164
  %v1232 = vpack.c.b16 %v1167, %v1166
  %v1233 = vpack.c.b16 %v1169, %v1168
  %v1234 = vpack.c.b16 %v1171, %v1170
  %v1235 = vpack.c.b16 %v1173, %v1172
  %v1236 = vpack.c.b16 %v1175, %v1174
  %v1237 = vpack.c.b16 %v1177, %v1176
  %v1238 = vpack.c.b16 %v1179, %v1178
  %v1239 = vpack.c.b16 %v1181, %v1180
  %v1240 = vpack.c.b16 %v1183, %v1182
  %v1241 = vpack.c.b16 %v1185, %v1184
  %v1242 = vpack.c.b16 %v1187, %v1186
  %v1243 = vpack.c.b16 %v1189, %v1188
  %v1244 = vpack.c.b16 %v1191, %v1190
  %v1245 = vpack.c.b16 %v1193, %v1192
  %v1246 = vpack.c.b16 %v1195, %v1194
  %v1247 = vpack.c.b16 %v1197, %v1196
  %v1248 = vpack.c.b16 %v1199, %v1198
  %v1249 = vpack.c.b16 %v1201, %v1200
  %v1250 = vpack.c.b16 %v1203, %v1202
  %v1251 = vpack.c.b16 %v1205, %v1204
  %v1252 = vpack.c.b16 %v1207, %v1206
  %v1253 = vpack.c.b16 %v1209, %v1208
  %v1254 = vpack.c.b16 %v1211, %v1210
  %v1255 = vpack.c.b16 %v1213, %v1212
  %v1256 = vpack.c.b16 %v1215, %v1214
  %v1257 = vpack.c.b16 %v1217, %v1216
  %v1258 = vpack.c.b16 %v1219, %v1218
  %v1259 = vpack.c.b16 %v1221, %v1220
  %v1260 = vpack.c.b16 %v1223, %v1222
  %v1261 = vpack.c.b16 %v1225, %v1224
  %vm1298 = vcmask 523264
  %v1300 = vsel %vm1298, %v798, 0
  %v1303 = vsel %vm1298, %v803, 0
  %v1306 = vsel %vm1298, %v808, 0
  %v1309 = vsel %vm1298, %v813, 0
  %v1312 = vsel %vm1298, %v818, 0
  %v1315 = vsel %vm1298, %v823, 0
  %v1318 = vsel %vm1298, %v828, 0
  %v1321 = vsel %vm1298, %v833, 0
  %v1324 = vsel %vm1298, %v838, 0
  %v1327 = vsel %vm1298, %v843, 0
  %v1330 = vsel %vm1298, %v848, 0
  %v1333 = vsel %vm1298, %v853, 0
  %v1336 = vsel %vm1298, %v858, 0
  %v1339 = vsel %vm1298, %v863, 0
  %v1342 = vsel %vm1298, %v868, 0
  %v1345 = vsel %vm1298, %v873, 0
  %v1348 = vsel %vm1298, %v878, 0
  %v1351 = vsel %vm1298, %v883, 0
  %v1354 = vsel %vm1298, %v888, 0
  %v1357 = vsel %vm1298, %v893, 0
  %v1360 = vsel %vm1298, %v898, 0
  %v1363 = vsel %vm1298, %v903, 0
  %v1366 = vsel %vm1298, %v908, 0
  %v1369 = vsel %vm1298, %v913, 0
  %v1372 = vsel %vm1298, %v918, 0
  %v1375 = vsel %vm1298, %v923, 0
  %v1378 = vsel %vm1298, %v928, 0
  %v1381 = vsel %vm1298, %v933, 0
  %v1384 = vsel %vm1298, %v938, 0
  %v1387 = vsel %vm1298, %v943, 0
  %v1390 = vsel %vm1298, %v948, 0
  %v1393 = vsel %vm1298, %v953, 0
  %1395 = vmatprep.subr.bf16.mxu0 0
  %1396 = vmatpush1.bf16.msra.mxu0 %v1226
  %1397 = vmatprep.subr.bf16.mxu0 0
  %1398 = vmatpush1.bf16.msra.mxu0 %v1227
  %1399 = vmatprep.subr.bf16.mxu0 0
  %1400 = vmatpush1.bf16.msra.mxu0 %v1228
  %1401 = vmatprep.subr.bf16.mxu0 0
  %1402 = vmatpush1.bf16.msra.mxu0 %v1229
  %1403 = vmatprep.subr.bf16.mxu0 0
  %1404 = vmatpush1.bf16.msra.mxu0 %v1230
  %1405 = vmatprep.subr.bf16.mxu0 0
  %1406 = vmatpush1.bf16.msra.mxu0 %v1231
  %1407 = vmatprep.subr.bf16.mxu0 0
  %1408 = vmatpush1.bf16.msra.mxu0 %v1232
  %1409 = vmatprep.subr.bf16.mxu0 0
  %1410 = vmatpush1.bf16.msra.mxu0 %v1233
  %1411 = vmatprep.subr.bf16.mxu0 0
  %1412 = vmatpush1.bf16.msra.mxu0 %v1234
  %1413 = vmatprep.subr.bf16.mxu0 0
  %1414 = vmatpush1.bf16.msra.mxu0 %v1235
  %1415 = vmatprep.subr.bf16.mxu0 0
  %1416 = vmatpush1.bf16.msra.mxu0 %v1236
  %1417 = vmatprep.subr.bf16.mxu0 0
  %1418 = vmatpush1.bf16.msra.mxu0 %v1237
  %1419 = vmatprep.subr.bf16.mxu0 0
  %1420 = vmatpush1.bf16.msra.mxu0 %v1238
  %1421 = vmatprep.subr.bf16.mxu0 0
  %1422 = vmatpush1.bf16.msra.mxu0 %v1239
  %1423 = vmatprep.subr.bf16.mxu0 0
  %1424 = vmatpush1.bf16.msra.mxu0 %v1240
  %1425 = vmatprep.subr.bf16.mxu0 0
  %1426 = vmatpush1.bf16.msra.mxu0 %v1241
  %1427 = vmatprep.mubr.bf16.mxu0 %v795
  %1428 = vmatmul.mubr.bf16.gmra.mrb[0].mxu0 %v794
  %v1429 = vpop.f32.mrb[0].mxu0
  %v1430 = vadd.f32 0.0, %v1429
  %v1431 = vpop.f32.mrb[0].mxu0
  %v1432 = vpop.f32.mrb[0].mxu0
  %v1433 = vadd.f32 0.0, %v1432
  %v1434 = vpop.f32.mrb[0].mxu0
  %1435 = vmatprep.mubr.bf16.mxu0 %v800
  %1436 = vmatmul.mubr.bf16.gmra.mrb[0].mxu0 %v799
  %v1437 = vpop.f32.mrb[0].mxu0
  %v1438 = vadd.f32 0.0, %v1437
  %v1439 = vpop.f32.mrb[0].mxu0
  %v1440 = vpop.f32.mrb[0].mxu0
  %v1441 = vadd.f32 0.0, %v1440
  %v1442 = vpop.f32.mrb[0].mxu0
  %1443 = vmatprep.mubr.bf16.mxu0 %v805
  %1444 = vmatmul.mubr.bf16.gmra.mrb[0].mxu0 %v804
  %v1445 = vpop.f32.mrb[0].mxu0
  %v1446 = vadd.f32 0.0, %v1445
  %v1447 = vpop.f32.mrb[0].mxu0
  %v1448 = vpop.f32.mrb[0].mxu0
  %v1449 = vadd.f32 0.0, %v1448
  %v1450 = vpop.f32.mrb[0].mxu0
  %1451 = vmatprep.mubr.bf16.mxu0 %v810
  %1452 = vmatmul.mubr.bf16.gmra.mrb[0].mxu0 %v809
  %v1453 = vpop.f32.mrb[0].mxu0
  %v1454 = vadd.f32 0.0, %v1453
  %v1455 = vpop.f32.mrb[0].mxu0
  %v1456 = vpop.f32.mrb[0].mxu0
  %v1457 = vadd.f32 0.0, %v1456
  %v1458 = vpop.f32.mrb[0].mxu0
  %1459 = vmatprep.mubr.bf16.mxu0 %v815
  %1460 = vmatmul.mubr.bf16.gmra.mrb[0].mxu0 %v814
  %v1461 = vpop.f32.mrb[0].mxu0
  %v1462 = vadd.f32 0.0, %v1461
  %v1463 = vpop.f32.mrb[0].mxu0
  %v1464 = vpop.f32.mrb[0].mxu0
  %v1465 = vadd.f32 0.0, %v1464
  %v1466 = vpop.f32.mrb[0].mxu0
  %1467 = vmatprep.mubr.bf16.mxu0 %v820
  %1468 = vmatmul.mubr.bf16.gmra.mrb[0].mxu0 %v819
  %v1469 = vpop.f32.mrb[0].mxu0
  %v1470 = vadd.f32 0.0, %v1469
  %v1471 = vpop.f32.mrb[0].mxu0
  %v1472 = vpop.f32.mrb[0].mxu0
  %v1473 = vadd.f32 0.0, %v1472
  %v1474 = vpop.f32.mrb[0].mxu0
  %1475 = vmatprep.mubr.bf16.mxu0 %v825
  %1476 = vmatmul.mubr.bf16.gmra.mrb[0].mxu0 %v824
  %v1477 = vpop.f32.mrb[0].mxu0
  %v1478 = vadd.f32 0.0, %v1477
  %v1479 = vpop.f32.mrb[0].mxu0
  %v1480 = vpop.f32.mrb[0].mxu0
  %v1481 = vadd.f32 0.0, %v1480
  %v1482 = vpop.f32.mrb[0].mxu0
  %1483 = vmatprep.mubr.bf16.mxu0 %v830
  %1484 = vmatmul.mubr.bf16.gmra.mrb[0].mxu0 %v829
  %v1485 = vpop.f32.mrb[0].mxu0
  %v1486 = vadd.f32 0.0, %v1485
  %v1487 = vpop.f32.mrb[0].mxu0
  %v1488 = vpop.f32.mrb[0].mxu0
  %v1489 = vadd.f32 0.0, %v1488
  %v1490 = vpop.f32.mrb[0].mxu0
  %1491 = vmatprep.mubr.bf16.mxu0 %v835
  %1492 = vmatmul.mubr.bf16.gmra.mrb[0].mxu0 %v834
  %v1493 = vpop.f32.mrb[0].mxu0
  %v1494 = vadd.f32 0.0, %v1493
  %v1495 = vpop.f32.mrb[0].mxu0
  %v1496 = vpop.f32.mrb[0].mxu0
  %v1497 = vadd.f32 0.0, %v1496
  %v1498 = vpop.f32.mrb[0].mxu0
  %1499 = vmatprep.mubr.bf16.mxu0 %v840
  %1500 = vmatmul.mubr.bf16.gmra.mrb[0].mxu0 %v839
  %v1501 = vpop.f32.mrb[0].mxu0
  %v1502 = vadd.f32 0.0, %v1501
  %v1503 = vpop.f32.mrb[0].mxu0
  %v1504 = vpop.f32.mrb[0].mxu0
  %v1505 = vadd.f32 0.0, %v1504
  %v1506 = vpop.f32.mrb[0].mxu0
  %1507 = vmatprep.mubr.bf16.mxu0 %v845
  %1508 = vmatmul.mubr.bf16.gmra.mrb[0].mxu0 %v844
  %v1509 = vpop.f32.mrb[0].mxu0
  %v1510 = vadd.f32 0.0, %v1509
  %v1511 = vpop.f32.mrb[0].mxu0
  %v1512 = vpop.f32.mrb[0].mxu0
  %v1513 = vadd.f32 0.0, %v1512
  %v1514 = vpop.f32.mrb[0].mxu0
  %1515 = vmatprep.mubr.bf16.mxu0 %v850
  %1516 = vmatmul.mubr.bf16.gmra.mrb[0].mxu0 %v849
  %v1517 = vpop.f32.mrb[0].mxu0
  %v1518 = vadd.f32 0.0, %v1517
  %v1519 = vpop.f32.mrb[0].mxu0
  %v1520 = vpop.f32.mrb[0].mxu0
  %v1521 = vadd.f32 0.0, %v1520
  %v1522 = vpop.f32.mrb[0].mxu0
  %1523 = vmatprep.mubr.bf16.mxu0 %v855
  %1524 = vmatmul.mubr.bf16.gmra.mrb[0].mxu0 %v854
  %v1525 = vpop.f32.mrb[0].mxu0
  %v1526 = vadd.f32 0.0, %v1525
  %v1527 = vpop.f32.mrb[0].mxu0
  %v1528 = vpop.f32.mrb[0].mxu0
  %v1529 = vadd.f32 0.0, %v1528
  %v1530 = vpop.f32.mrb[0].mxu0
  %1531 = vmatprep.mubr.bf16.mxu0 %v860
  %1532 = vmatmul.mubr.bf16.gmra.mrb[0].mxu0 %v859
  %v1533 = vpop.f32.mrb[0].mxu0
  %v1534 = vadd.f32 0.0, %v1533
  %v1535 = vpop.f32.mrb[0].mxu0
  %v1536 = vpop.f32.mrb[0].mxu0
  %v1537 = vadd.f32 0.0, %v1536
  %v1538 = vpop.f32.mrb[0].mxu0
  %1539 = vmatprep.mubr.bf16.mxu0 %v865
  %1540 = vmatmul.mubr.bf16.gmra.mrb[0].mxu0 %v864
  %v1541 = vpop.f32.mrb[0].mxu0
  %v1542 = vadd.f32 0.0, %v1541
  %v1543 = vpop.f32.mrb[0].mxu0
  %v1544 = vpop.f32.mrb[0].mxu0
  %v1545 = vadd.f32 0.0, %v1544
  %v1546 = vpop.f32.mrb[0].mxu0
  %1547 = vmatprep.mubr.bf16.mxu0 %v870
  %1548 = vmatmul.mubr.bf16.gmra.mrb[0].mxu0 %v869
  %v1549 = vpop.f32.mrb[0].mxu0
  %v1550 = vadd.f32 0.0, %v1549
  %v1551 = vpop.f32.mrb[0].mxu0
  %v1552 = vpop.f32.mrb[0].mxu0
  %v1553 = vadd.f32 0.0, %v1552
  %v1554 = vpop.f32.mrb[0].mxu0
  %1555 = vmatprep.mubr.bf16.mxu0 %v875
  %1556 = vmatmul.mubr.bf16.gmra.mrb[0].mxu0 %v874
  %v1557 = vpop.f32.mrb[0].mxu0
  %v1558 = vadd.f32 0.0, %v1557
  %v1559 = vpop.f32.mrb[0].mxu0
  %v1560 = vpop.f32.mrb[0].mxu0
  %v1561 = vadd.f32 0.0, %v1560
  %v1562 = vpop.f32.mrb[0].mxu0
  %1563 = vmatprep.mubr.bf16.mxu0 %v880
  %1564 = vmatmul.mubr.bf16.gmra.mrb[0].mxu0 %v879
  %v1565 = vpop.f32.mrb[0].mxu0
  %v1566 = vadd.f32 0.0, %v1565
  %v1567 = vpop.f32.mrb[0].mxu0
  %v1568 = vpop.f32.mrb[0].mxu0
  %v1569 = vadd.f32 0.0, %v1568
  %v1570 = vpop.f32.mrb[0].mxu0
  %1571 = vmatprep.mubr.bf16.mxu0 %v885
  %1572 = vmatmul.mubr.bf16.gmra.mrb[0].mxu0 %v884
  %v1573 = vpop.f32.mrb[0].mxu0
  %v1574 = vadd.f32 0.0, %v1573
  %v1575 = vpop.f32.mrb[0].mxu0
  %v1576 = vpop.f32.mrb[0].mxu0
  %v1577 = vadd.f32 0.0, %v1576
  %v1578 = vpop.f32.mrb[0].mxu0
  %1579 = vmatprep.mubr.bf16.mxu0 %v890
  %1580 = vmatmul.mubr.bf16.gmra.mrb[0].mxu0 %v889
  %v1581 = vpop.f32.mrb[0].mxu0
  %v1582 = vadd.f32 0.0, %v1581
  %v1583 = vpop.f32.mrb[0].mxu0
  %v1584 = vpop.f32.mrb[0].mxu0
  %v1585 = vadd.f32 0.0, %v1584
  %v1586 = vpop.f32.mrb[0].mxu0
  %1587 = vmatprep.mubr.bf16.mxu0 %v895
  %1588 = vmatmul.mubr.bf16.gmra.mrb[0].mxu0 %v894
  %v1589 = vpop.f32.mrb[0].mxu0
  %v1590 = vadd.f32 0.0, %v1589
  %v1591 = vpop.f32.mrb[0].mxu0
  %v1592 = vpop.f32.mrb[0].mxu0
  %v1593 = vadd.f32 0.0, %v1592
  %v1594 = vpop.f32.mrb[0].mxu0
  %1595 = vmatprep.mubr.bf16.mxu0 %v900
  %1596 = vmatmul.mubr.bf16.gmra.mrb[0].mxu0 %v899
  %v1597 = vpop.f32.mrb[0].mxu0
  %v1598 = vadd.f32 0.0, %v1597
  %v1599 = vpop.f32.mrb[0].mxu0
  %v1600 = vpop.f32.mrb[0].mxu0
  %v1601 = vadd.f32 0.0, %v1600
  %v1602 = vpop.f32.mrb[0].mxu0
  %1603 = vmatprep.mubr.bf16.mxu0 %v905
  %1604 = vmatmul.mubr.bf16.gmra.mrb[0].mxu0 %v904
  %v1605 = vpop.f32.mrb[0].mxu0
  %v1606 = vadd.f32 0.0, %v1605
  %v1607 = vpop.f32.mrb[0].mxu0
  %v1608 = vpop.f32.mrb[0].mxu0
  %v1609 = vadd.f32 0.0, %v1608
  %v1610 = vpop.f32.mrb[0].mxu0
  %1611 = vmatprep.mubr.bf16.mxu0 %v910
  %1612 = vmatmul.mubr.bf16.gmra.mrb[0].mxu0 %v909
  %v1613 = vpop.f32.mrb[0].mxu0
  %v1614 = vadd.f32 0.0, %v1613
  %v1615 = vpop.f32.mrb[0].mxu0
  %v1616 = vpop.f32.mrb[0].mxu0
  %v1617 = vadd.f32 0.0, %v1616
  %v1618 = vpop.f32.mrb[0].mxu0
  %1619 = vmatprep.mubr.bf16.mxu0 %v915
  %1620 = vmatmul.mubr.bf16.gmra.mrb[0].mxu0 %v914
  %v1621 = vpop.f32.mrb[0].mxu0
  %v1622 = vadd.f32 0.0, %v1621
  %v1623 = vpop.f32.mrb[0].mxu0
  %v1624 = vpop.f32.mrb[0].mxu0
  %v1625 = vadd.f32 0.0, %v1624
  %v1626 = vpop.f32.mrb[0].mxu0
  %1627 = vmatprep.mubr.bf16.mxu0 %v920
  %1628 = vmatmul.mubr.bf16.gmra.mrb[0].mxu0 %v919
  %v1629 = vpop.f32.mrb[0].mxu0
  %v1630 = vadd.f32 0.0, %v1629
  %v1631 = vpop.f32.mrb[0].mxu0
  %v1632 = vpop.f32.mrb[0].mxu0
  %v1633 = vadd.f32 0.0, %v1632
  %v1634 = vpop.f32.mrb[0].mxu0
  %1635 = vmatprep.mubr.bf16.mxu0 %v925
  %1636 = vmatmul.mubr.bf16.gmra.mrb[0].mxu0 %v924
  %v1637 = vpop.f32.mrb[0].mxu0
  %v1638 = vadd.f32 0.0, %v1637
  %v1639 = vpop.f32.mrb[0].mxu0
  %v1640 = vpop.f32.mrb[0].mxu0
  %v1641 = vadd.f32 0.0, %v1640
  %v1642 = vpop.f32.mrb[0].mxu0
  %1643 = vmatprep.mubr.bf16.mxu0 %v930
  %1644 = vmatmul.mubr.bf16.gmra.mrb[0].mxu0 %v929
  %v1645 = vpop.f32.mrb[0].mxu0
  %v1646 = vadd.f32 0.0, %v1645
  %v1647 = vpop.f32.mrb[0].mxu0
  %v1648 = vpop.f32.mrb[0].mxu0
  %v1649 = vadd.f32 0.0, %v1648
  %v1650 = vpop.f32.mrb[0].mxu0
  %1651 = vmatprep.mubr.bf16.mxu0 %v935
  %1652 = vmatmul.mubr.bf16.gmra.mrb[0].mxu0 %v934
  %v1653 = vpop.f32.mrb[0].mxu0
  %v1654 = vadd.f32 0.0, %v1653
  %v1655 = vpop.f32.mrb[0].mxu0
  %v1656 = vpop.f32.mrb[0].mxu0
  %v1657 = vadd.f32 0.0, %v1656
  %v1658 = vpop.f32.mrb[0].mxu0
  %1659 = vmatprep.mubr.bf16.mxu0 %v940
  %1660 = vmatmul.mubr.bf16.gmra.mrb[0].mxu0 %v939
  %v1661 = vpop.f32.mrb[0].mxu0
  %v1662 = vadd.f32 0.0, %v1661
  %v1663 = vpop.f32.mrb[0].mxu0
  %v1664 = vpop.f32.mrb[0].mxu0
  %v1665 = vadd.f32 0.0, %v1664
  %v1666 = vpop.f32.mrb[0].mxu0
  %1667 = vmatprep.mubr.bf16.mxu0 %v945
  %1668 = vmatmul.mubr.bf16.gmra.mrb[0].mxu0 %v944
  %v1669 = vpop.f32.mrb[0].mxu0
  %v1670 = vadd.f32 0.0, %v1669
  %v1671 = vpop.f32.mrb[0].mxu0
  %v1672 = vpop.f32.mrb[0].mxu0
  %v1673 = vadd.f32 0.0, %v1672
  %v1674 = vpop.f32.mrb[0].mxu0
  %1675 = vmatprep.mubr.bf16.mxu0 %v950
  %1676 = vmatmul.mubr.bf16.gmra.mrb[0].mxu0 %v949
  %v1677 = vpop.f32.mrb[0].mxu0
  %v1678 = vadd.f32 0.0, %v1677
  %v1679 = vpop.f32.mrb[0].mxu0
  %v1680 = vpop.f32.mrb[0].mxu0
  %v1681 = vadd.f32 0.0, %v1680
  %v1682 = vpop.f32.mrb[0].mxu0
  %1683 = vdwg.mxu0
  %1684 = vmatprep.subr.bf16.mxu0 0
  %1685 = vmatpush1.bf16.msra.mxu0 %v1242
  %1686 = vmatprep.subr.bf16.mxu0 0
  %1687 = vmatpush1.bf16.msra.mxu0 %v1243
  %1688 = vmatprep.subr.bf16.mxu0 0
  %1689 = vmatpush1.bf16.msra.mxu0 %v1244
  %1690 = vmatprep.subr.bf16.mxu0 0
  %1691 = vmatpush1.bf16.msra.mxu0 %v1245
  %1692 = vmatprep.subr.bf16.mxu0 0
  %1693 = vmatpush1.bf16.msra.mxu0 %v1246
  %1694 = vmatprep.subr.bf16.mxu0 0
  %1695 = vmatpush1.bf16.msra.mxu0 %v1247
  %1696 = vmatprep.subr.bf16.mxu0 0
  %1697 = vmatpush1.bf16.msra.mxu0 %v1248
  %1698 = vmatprep.subr.bf16.mxu0 0
  %1699 = vmatpush1.bf16.msra.mxu0 %v1249
  %1700 = vmatprep.subr.bf16.mxu0 0
  %1701 = vmatpush1.bf16.msra.mxu0 %v1250
  %1702 = vmatprep.subr.bf16.mxu0 0
  %1703 = vmatpush1.bf16.msra.mxu0 %v1251
  %1704 = vmatprep.subr.bf16.mxu0 0
  %1705 = vmatpush1.bf16.msra.mxu0 %v1252
  %1706 = vmatprep.subr.bf16.mxu0 0
  %1707 = vmatpush1.bf16.msra.mxu0 %v1253
  %1708 = vmatprep.subr.bf16.mxu0 0
  %1709 = vmatpush1.bf16.msra.mxu0 %v1254
  %1710 = vmatprep.subr.bf16.mxu0 0
  %1711 = vmatpush1.bf16.msra.mxu0 %v1255
  %1712 = vmatprep.subr.bf16.mxu0 0
  %1713 = vmatpush1.bf16.msra.mxu0 %v1256
  %1714 = vmatprep.subr.bf16.mxu0 0
  %1715 = vmatpush1.bf16.msra.mxu0 %v1257
  %1716 = vmatprep.mubr.bf16.mxu0 %v797
  %1717 = vmatmul.mubr.bf16.gmra.mrb[0].mxu0 %v796
  %v1718 = vpop.f32.mrb[0].mxu0
  %v1719 = vadd.f32 %v1430, %v1718
  %v1720 = vpop.f32.mrb[0].mxu0
  %v1721 = vpop.f32.mrb[0].mxu0
  %v1722 = vadd.f32 %v1433, %v1721
  %v1723 = vpop.f32.mrb[0].mxu0
  %1724 = vmatprep.mubr.bf16.mxu0 %v802
  %1725 = vmatmul.mubr.bf16.gmra.mrb[0].mxu0 %v801
  %v1726 = vpop.f32.mrb[0].mxu0
  %v1727 = vadd.f32 %v1438, %v1726
  %v1728 = vpop.f32.mrb[0].mxu0
  %v1729 = vpop.f32.mrb[0].mxu0
  %v1730 = vadd.f32 %v1441, %v1729
  %v1731 = vpop.f32.mrb[0].mxu0
  %1732 = vmatprep.mubr.bf16.mxu0 %v807
  %1733 = vmatmul.mubr.bf16.gmra.mrb[0].mxu0 %v806
  %v1734 = vpop.f32.mrb[0].mxu0
  %v1735 = vadd.f32 %v1446, %v1734
  %v1736 = vpop.f32.mrb[0].mxu0
  %v1737 = vpop.f32.mrb[0].mxu0
  %v1738 = vadd.f32 %v1449, %v1737
  %v1739 = vpop.f32.mrb[0].mxu0
  %1740 = vmatprep.mubr.bf16.mxu0 %v812
  %1741 = vmatmul.mubr.bf16.gmra.mrb[0].mxu0 %v811
  %v1742 = vpop.f32.mrb[0].mxu0
  %v1743 = vadd.f32 %v1454, %v1742
  %v1744 = vpop.f32.mrb[0].mxu0
  %v1745 = vpop.f32.mrb[0].mxu0
  %v1746 = vadd.f32 %v1457, %v1745
  %v1747 = vpop.f32.mrb[0].mxu0
  %1748 = vmatprep.mubr.bf16.mxu0 %v817
  %1749 = vmatmul.mubr.bf16.gmra.mrb[0].mxu0 %v816
  %v1750 = vpop.f32.mrb[0].mxu0
  %v1751 = vadd.f32 %v1462, %v1750
  %v1752 = vpop.f32.mrb[0].mxu0
  %v1753 = vpop.f32.mrb[0].mxu0
  %v1754 = vadd.f32 %v1465, %v1753
  %v1755 = vpop.f32.mrb[0].mxu0
  %1756 = vmatprep.mubr.bf16.mxu0 %v822
  %1757 = vmatmul.mubr.bf16.gmra.mrb[0].mxu0 %v821
  %v1758 = vpop.f32.mrb[0].mxu0
  %v1759 = vadd.f32 %v1470, %v1758
  %v1760 = vpop.f32.mrb[0].mxu0
  %v1761 = vpop.f32.mrb[0].mxu0
  %v1762 = vadd.f32 %v1473, %v1761
  %v1763 = vpop.f32.mrb[0].mxu0
  %1764 = vmatprep.mubr.bf16.mxu0 %v827
  %1765 = vmatmul.mubr.bf16.gmra.mrb[0].mxu0 %v826
  %v1766 = vpop.f32.mrb[0].mxu0
  %v1767 = vadd.f32 %v1478, %v1766
  %v1768 = vpop.f32.mrb[0].mxu0
  %v1769 = vpop.f32.mrb[0].mxu0
  %v1770 = vadd.f32 %v1481, %v1769
  %v1771 = vpop.f32.mrb[0].mxu0
  %1772 = vmatprep.mubr.bf16.mxu0 %v832
  %1773 = vmatmul.mubr.bf16.gmra.mrb[0].mxu0 %v831
  %v1774 = vpop.f32.mrb[0].mxu0
  %v1775 = vadd.f32 %v1486, %v1774
  %v1776 = vpop.f32.mrb[0].mxu0
  %v1777 = vpop.f32.mrb[0].mxu0
  %v1778 = vadd.f32 %v1489, %v1777
  %v1779 = vpop.f32.mrb[0].mxu0
  %1780 = vmatprep.mubr.bf16.mxu0 %v837
  %1781 = vmatmul.mubr.bf16.gmra.mrb[0].mxu0 %v836
  %v1782 = vpop.f32.mrb[0].mxu0
  %v1783 = vadd.f32 %v1494, %v1782
  %v1784 = vpop.f32.mrb[0].mxu0
  %v1785 = vpop.f32.mrb[0].mxu0
  %v1786 = vadd.f32 %v1497, %v1785
  %v1787 = vpop.f32.mrb[0].mxu0
  %1788 = vmatprep.mubr.bf16.mxu0 %v842
  %1789 = vmatmul.mubr.bf16.gmra.mrb[0].mxu0 %v841
  %v1790 = vpop.f32.mrb[0].mxu0
  %v1791 = vadd.f32 %v1502, %v1790
  %v1792 = vpop.f32.mrb[0].mxu0
  %v1793 = vpop.f32.mrb[0].mxu0
  %v1794 = vadd.f32 %v1505, %v1793
  %v1795 = vpop.f32.mrb[0].mxu0
  %1796 = vmatprep.mubr.bf16.mxu0 %v847
  %1797 = vmatmul.mubr.bf16.gmra.mrb[0].mxu0 %v846
  %v1798 = vpop.f32.mrb[0].mxu0
  %v1799 = vadd.f32 %v1510, %v1798
  %v1800 = vpop.f32.mrb[0].mxu0
  %v1801 = vpop.f32.mrb[0].mxu0
  %v1802 = vadd.f32 %v1513, %v1801
  %v1803 = vpop.f32.mrb[0].mxu0
  %1804 = vmatprep.mubr.bf16.mxu0 %v852
  %1805 = vmatmul.mubr.bf16.gmra.mrb[0].mxu0 %v851
  %v1806 = vpop.f32.mrb[0].mxu0
  %v1807 = vadd.f32 %v1518, %v1806
  %v1808 = vpop.f32.mrb[0].mxu0
  %v1809 = vpop.f32.mrb[0].mxu0
  %v1810 = vadd.f32 %v1521, %v1809
  %v1811 = vpop.f32.mrb[0].mxu0
  %1812 = vmatprep.mubr.bf16.mxu0 %v857
  %1813 = vmatmul.mubr.bf16.gmra.mrb[0].mxu0 %v856
  %v1814 = vpop.f32.mrb[0].mxu0
  %v1815 = vadd.f32 %v1526, %v1814
  %v1816 = vpop.f32.mrb[0].mxu0
  %v1817 = vpop.f32.mrb[0].mxu0
  %v1818 = vadd.f32 %v1529, %v1817
  %v1819 = vpop.f32.mrb[0].mxu0
  %1820 = vmatprep.mubr.bf16.mxu0 %v862
  %1821 = vmatmul.mubr.bf16.gmra.mrb[0].mxu0 %v861
  %v1822 = vpop.f32.mrb[0].mxu0
  %v1823 = vadd.f32 %v1534, %v1822
  %v1824 = vpop.f32.mrb[0].mxu0
  %v1825 = vpop.f32.mrb[0].mxu0
  %v1826 = vadd.f32 %v1537, %v1825
  %v1827 = vpop.f32.mrb[0].mxu0
  %1828 = vmatprep.mubr.bf16.mxu0 %v867
  %1829 = vmatmul.mubr.bf16.gmra.mrb[0].mxu0 %v866
  %v1830 = vpop.f32.mrb[0].mxu0
  %v1831 = vadd.f32 %v1542, %v1830
  %v1832 = vpop.f32.mrb[0].mxu0
  %v1833 = vpop.f32.mrb[0].mxu0
  %v1834 = vadd.f32 %v1545, %v1833
  %v1835 = vpop.f32.mrb[0].mxu0
  %1836 = vmatprep.mubr.bf16.mxu0 %v872
  %1837 = vmatmul.mubr.bf16.gmra.mrb[0].mxu0 %v871
  %v1838 = vpop.f32.mrb[0].mxu0
  %v1839 = vadd.f32 %v1550, %v1838
  %v1840 = vpop.f32.mrb[0].mxu0
  %v1841 = vpop.f32.mrb[0].mxu0
  %v1842 = vadd.f32 %v1553, %v1841
  %v1843 = vpop.f32.mrb[0].mxu0
  %1844 = vmatprep.mubr.bf16.mxu0 %v877
  %1845 = vmatmul.mubr.bf16.gmra.mrb[0].mxu0 %v876
  %v1846 = vpop.f32.mrb[0].mxu0
  %v1847 = vadd.f32 %v1558, %v1846
  %v1848 = vpop.f32.mrb[0].mxu0
  %v1849 = vpop.f32.mrb[0].mxu0
  %v1850 = vadd.f32 %v1561, %v1849
  %v1851 = vpop.f32.mrb[0].mxu0
  %1852 = vmatprep.mubr.bf16.mxu0 %v882
  %1853 = vmatmul.mubr.bf16.gmra.mrb[0].mxu0 %v881
  %v1854 = vpop.f32.mrb[0].mxu0
  %v1855 = vadd.f32 %v1566, %v1854
  %v1856 = vpop.f32.mrb[0].mxu0
  %v1857 = vpop.f32.mrb[0].mxu0
  %v1858 = vadd.f32 %v1569, %v1857
  %v1859 = vpop.f32.mrb[0].mxu0
  %1860 = vmatprep.mubr.bf16.mxu0 %v887
  %1861 = vmatmul.mubr.bf16.gmra.mrb[0].mxu0 %v886
  %v1862 = vpop.f32.mrb[0].mxu0
  %v1863 = vadd.f32 %v1574, %v1862
  %v1864 = vpop.f32.mrb[0].mxu0
  %v1865 = vpop.f32.mrb[0].mxu0
  %v1866 = vadd.f32 %v1577, %v1865
  %v1867 = vpop.f32.mrb[0].mxu0
  %1868 = vmatprep.mubr.bf16.mxu0 %v892
  %1869 = vmatmul.mubr.bf16.gmra.mrb[0].mxu0 %v891
  %v1870 = vpop.f32.mrb[0].mxu0
  %v1871 = vadd.f32 %v1582, %v1870
  %v1872 = vpop.f32.mrb[0].mxu0
  %v1873 = vpop.f32.mrb[0].mxu0
  %v1874 = vadd.f32 %v1585, %v1873
  %v1875 = vpop.f32.mrb[0].mxu0
  %1876 = vmatprep.mubr.bf16.mxu0 %v897
  %1877 = vmatmul.mubr.bf16.gmra.mrb[0].mxu0 %v896
  %v1878 = vpop.f32.mrb[0].mxu0
  %v1879 = vadd.f32 %v1590, %v1878
  %v1880 = vpop.f32.mrb[0].mxu0
  %v1881 = vpop.f32.mrb[0].mxu0
  %v1882 = vadd.f32 %v1593, %v1881
  %v1883 = vpop.f32.mrb[0].mxu0
  %1884 = vmatprep.mubr.bf16.mxu0 %v902
  %1885 = vmatmul.mubr.bf16.gmra.mrb[0].mxu0 %v901
  %v1886 = vpop.f32.mrb[0].mxu0
  %v1887 = vadd.f32 %v1598, %v1886
  %v1888 = vpop.f32.mrb[0].mxu0
  %v1889 = vpop.f32.mrb[0].mxu0
  %v1890 = vadd.f32 %v1601, %v1889
  %v1891 = vpop.f32.mrb[0].mxu0
  %1892 = vmatprep.mubr.bf16.mxu0 %v907
  %1893 = vmatmul.mubr.bf16.gmra.mrb[0].mxu0 %v906
  %v1894 = vpop.f32.mrb[0].mxu0
  %v1895 = vadd.f32 %v1606, %v1894
  %v1896 = vpop.f32.mrb[0].mxu0
  %v1897 = vpop.f32.mrb[0].mxu0
  %v1898 = vadd.f32 %v1609, %v1897
  %v1899 = vpop.f32.mrb[0].mxu0
  %1900 = vmatprep.mubr.bf16.mxu0 %v912
  %1901 = vmatmul.mubr.bf16.gmra.mrb[0].mxu0 %v911
  %v1902 = vpop.f32.mrb[0].mxu0
  %v1903 = vadd.f32 %v1614, %v1902
  %v1904 = vpop.f32.mrb[0].mxu0
  %v1905 = vpop.f32.mrb[0].mxu0
  %v1906 = vadd.f32 %v1617, %v1905
  %v1907 = vpop.f32.mrb[0].mxu0
  %1908 = vmatprep.mubr.bf16.mxu0 %v917
  %1909 = vmatmul.mubr.bf16.gmra.mrb[0].mxu0 %v916
  %v1910 = vpop.f32.mrb[0].mxu0
  %v1911 = vadd.f32 %v1622, %v1910
  %v1912 = vpop.f32.mrb[0].mxu0
  %v1913 = vpop.f32.mrb[0].mxu0
  %v1914 = vadd.f32 %v1625, %v1913
  %v1915 = vpop.f32.mrb[0].mxu0
  %1916 = vmatprep.mubr.bf16.mxu0 %v922
  %1917 = vmatmul.mubr.bf16.gmra.mrb[0].mxu0 %v921
  %v1918 = vpop.f32.mrb[0].mxu0
  %v1919 = vadd.f32 %v1630, %v1918
  %v1920 = vpop.f32.mrb[0].mxu0
  %v1921 = vpop.f32.mrb[0].mxu0
  %v1922 = vadd.f32 %v1633, %v1921
  %v1923 = vpop.f32.mrb[0].mxu0
  %1924 = vmatprep.mubr.bf16.mxu0 %v927
  %1925 = vmatmul.mubr.bf16.gmra.mrb[0].mxu0 %v926
  %v1926 = vpop.f32.mrb[0].mxu0
  %v1927 = vadd.f32 %v1638, %v1926
  %v1928 = vpop.f32.mrb[0].mxu0
  %v1929 = vpop.f32.mrb[0].mxu0
  %v1930 = vadd.f32 %v1641, %v1929
  %v1931 = vpop.f32.mrb[0].mxu0
  %1932 = vmatprep.mubr.bf16.mxu0 %v932
  %1933 = vmatmul.mubr.bf16.gmra.mrb[0].mxu0 %v931
  %v1934 = vpop.f32.mrb[0].mxu0
  %v1935 = vadd.f32 %v1646, %v1934
  %v1936 = vpop.f32.mrb[0].mxu0
  %v1937 = vpop.f32.mrb[0].mxu0
  %v1938 = vadd.f32 %v1649, %v1937
  %v1939 = vpop.f32.mrb[0].mxu0
  %1940 = vmatprep.mubr.bf16.mxu0 %v937
  %1941 = vmatmul.mubr.bf16.gmra.mrb[0].mxu0 %v936
  %v1942 = vpop.f32.mrb[0].mxu0
  %v1943 = vadd.f32 %v1654, %v1942
  %v1944 = vpop.f32.mrb[0].mxu0
  %v1945 = vpop.f32.mrb[0].mxu0
  %v1946 = vadd.f32 %v1657, %v1945
  %v1947 = vpop.f32.mrb[0].mxu0
  %1948 = vmatprep.mubr.bf16.mxu0 %v942
  %1949 = vmatmul.mubr.bf16.gmra.mrb[0].mxu0 %v941
  %v1950 = vpop.f32.mrb[0].mxu0
  %v1951 = vadd.f32 %v1662, %v1950
  %v1952 = vpop.f32.mrb[0].mxu0
  %v1953 = vpop.f32.mrb[0].mxu0
  %v1954 = vadd.f32 %v1665, %v1953
  %v1955 = vpop.f32.mrb[0].mxu0
  %1956 = vmatprep.mubr.bf16.mxu0 %v947
  %1957 = vmatmul.mubr.bf16.gmra.mrb[0].mxu0 %v946
  %v1958 = vpop.f32.mrb[0].mxu0
  %v1959 = vadd.f32 %v1670, %v1958
  %v1960 = vpop.f32.mrb[0].mxu0
  %v1961 = vpop.f32.mrb[0].mxu0
  %v1962 = vadd.f32 %v1673, %v1961
  %v1963 = vpop.f32.mrb[0].mxu0
  %1964 = vmatprep.mubr.bf16.mxu0 %v952
  %1965 = vmatmul.mubr.bf16.gmra.mrb[0].mxu0 %v951
  %v1966 = vpop.f32.mrb[0].mxu0
  %v1967 = vadd.f32 %v1678, %v1966
  %v1968 = vpop.f32.mrb[0].mxu0
  %v1969 = vpop.f32.mrb[0].mxu0
  %v1970 = vadd.f32 %v1681, %v1969
  %v1971 = vpop.f32.mrb[0].mxu0
  %1972 = vdwg.mxu0
  %1973 = vmatprep.subr.bf16.mxu0 0
  %1974 = vmatpush1.bf16.msra.mxu0 %v1258
  %1975 = vmatprep.subr.bf16.mxu0 0
  %1976 = vmatpush1.bf16.msra.mxu0 %v1259
  %1977 = vmatprep.subr.bf16.mxu0 0
  %1978 = vmatpush1.bf16.msra.mxu0 %v1260
  %1979 = vmatprep.subr.bf16.mxu0 0
  %1980 = vmatpush1.bf16.msra.mxu0 %v1261
  %1981 = vmatprep.subr.bf16.mxu0 0
  %1982 = vmatpush1.bf16.msra.mxu0 0
  %1983 = vmatprep.subr.bf16.mxu0 0
  %1984 = vmatpush1.bf16.msra.mxu0 0
  %1985 = vmatprep.subr.bf16.mxu0 0
  %1986 = vmatpush1.bf16.msra.mxu0 0
  %1987 = vmatprep.subr.bf16.mxu0 0
  %1988 = vmatpush1.bf16.msra.mxu0 0
  %1989 = vmatprep.subr.bf16.mxu0 0
  %1990 = vmatpush1.bf16.msra.mxu0 0
  %1991 = vmatprep.subr.bf16.mxu0 0
  %1992 = vmatpush1.bf16.msra.mxu0 0
  %1993 = vmatprep.subr.bf16.mxu0 0
  %1994 = vmatpush1.bf16.msra.mxu0 0
  %1995 = vmatprep.subr.bf16.mxu0 0
  %1996 = vmatpush1.bf16.msra.mxu0 0
  %1997 = vmatprep.subr.bf16.mxu0 0
  %1998 = vmatpush1.bf16.msra.mxu0 0
  %1999 = vmatprep.subr.bf16.mxu0 0
  %2000 = vmatpush1.bf16.msra.mxu0 0
  %2001 = vmatprep.subr.bf16.mxu0 0
  %2002 = vmatpush1.bf16.msra.mxu0 0
  %2003 = vmatprep.subr.bf16.mxu0 0
  %2004 = vmatpush1.bf16.msra.mxu0 0
  %2005 = vmatprep.mubr.bf16.mxu0 0
  %2006 = vmatmul.mubr.bf16.gmra.mrb[0].mxu0 %v1300
  %v2007 = vpop.f32.mrb[0].mxu0
  %v2008 = vadd.f32 %v1719, %v2007
  %v2009 = vpop.f32.mrb[0].mxu0
  %v2010 = vpop.f32.mrb[0].mxu0
  %v2011 = vadd.f32 %v1722, %v2010
  %v2012 = vpop.f32.mrb[0].mxu0
  %2013 = vmatprep.mubr.bf16.mxu0 0
  %2014 = vmatmul.mubr.bf16.gmra.mrb[0].mxu0 %v1303
  %v2015 = vpop.f32.mrb[0].mxu0
  %v2016 = vadd.f32 %v1727, %v2015
  %v2017 = vpop.f32.mrb[0].mxu0
  %v2018 = vpop.f32.mrb[0].mxu0
  %v2019 = vadd.f32 %v1730, %v2018
  %v2020 = vpop.f32.mrb[0].mxu0
  %2021 = vmatprep.mubr.bf16.mxu0 0
  %2022 = vmatmul.mubr.bf16.gmra.mrb[0].mxu0 %v1306
  %v2023 = vpop.f32.mrb[0].mxu0
  %v2024 = vadd.f32 %v1735, %v2023
  %v2025 = vpop.f32.mrb[0].mxu0
  %v2026 = vpop.f32.mrb[0].mxu0
  %v2027 = vadd.f32 %v1738, %v2026
  %v2028 = vpop.f32.mrb[0].mxu0
  %2029 = vmatprep.mubr.bf16.mxu0 0
  %2030 = vmatmul.mubr.bf16.gmra.mrb[0].mxu0 %v1309
  %v2031 = vpop.f32.mrb[0].mxu0
  %v2032 = vadd.f32 %v1743, %v2031
  %v2033 = vpop.f32.mrb[0].mxu0
  %v2034 = vpop.f32.mrb[0].mxu0
  %v2035 = vadd.f32 %v1746, %v2034
  %v2036 = vpop.f32.mrb[0].mxu0
  %2037 = vmatprep.mubr.bf16.mxu0 0
  %2038 = vmatmul.mubr.bf16.gmra.mrb[0].mxu0 %v1312
  %v2039 = vpop.f32.mrb[0].mxu0
  %v2040 = vadd.f32 %v1751, %v2039
  %v2041 = vpop.f32.mrb[0].mxu0
  %v2042 = vpop.f32.mrb[0].mxu0
  %v2043 = vadd.f32 %v1754, %v2042
  %v2044 = vpop.f32.mrb[0].mxu0
  %2045 = vmatprep.mubr.bf16.mxu0 0
  %2046 = vmatmul.mubr.bf16.gmra.mrb[0].mxu0 %v1315
  %v2047 = vpop.f32.mrb[0].mxu0
  %v2048 = vadd.f32 %v1759, %v2047
  %v2049 = vpop.f32.mrb[0].mxu0
  %v2050 = vpop.f32.mrb[0].mxu0
  %v2051 = vadd.f32 %v1762, %v2050
  %v2052 = vpop.f32.mrb[0].mxu0
  %2053 = vmatprep.mubr.bf16.mxu0 0
  %2054 = vmatmul.mubr.bf16.gmra.mrb[0].mxu0 %v1318
  %v2055 = vpop.f32.mrb[0].mxu0
  %v2056 = vadd.f32 %v1767, %v2055
  %v2057 = vpop.f32.mrb[0].mxu0
  %v2058 = vpop.f32.mrb[0].mxu0
  %v2059 = vadd.f32 %v1770, %v2058
  %v2060 = vpop.f32.mrb[0].mxu0
  %2061 = vmatprep.mubr.bf16.mxu0 0
  %2062 = vmatmul.mubr.bf16.gmra.mrb[0].mxu0 %v1321
  %v2063 = vpop.f32.mrb[0].mxu0
  %v2064 = vadd.f32 %v1775, %v2063
  %v2065 = vpop.f32.mrb[0].mxu0
  %v2066 = vpop.f32.mrb[0].mxu0
  %v2067 = vadd.f32 %v1778, %v2066
  %v2068 = vpop.f32.mrb[0].mxu0
  %2069 = vmatprep.mubr.bf16.mxu0 0
  %2070 = vmatmul.mubr.bf16.gmra.mrb[0].mxu0 %v1324
  %v2071 = vpop.f32.mrb[0].mxu0
  %v2072 = vadd.f32 %v1783, %v2071
  %v2073 = vpop.f32.mrb[0].mxu0
  %v2074 = vpop.f32.mrb[0].mxu0
  %v2075 = vadd.f32 %v1786, %v2074
  %v2076 = vpop.f32.mrb[0].mxu0
  %2077 = vmatprep.mubr.bf16.mxu0 0
  %2078 = vmatmul.mubr.bf16.gmra.mrb[0].mxu0 %v1327
  %v2079 = vpop.f32.mrb[0].mxu0
  %v2080 = vadd.f32 %v1791, %v2079
  %v2081 = vpop.f32.mrb[0].mxu0
  %v2082 = vpop.f32.mrb[0].mxu0
  %v2083 = vadd.f32 %v1794, %v2082
  %v2084 = vpop.f32.mrb[0].mxu0
  %2085 = vmatprep.mubr.bf16.mxu0 0
  %2086 = vmatmul.mubr.bf16.gmra.mrb[0].mxu0 %v1330
  %v2087 = vpop.f32.mrb[0].mxu0
  %v2088 = vadd.f32 %v1799, %v2087
  %v2089 = vpop.f32.mrb[0].mxu0
  %v2090 = vpop.f32.mrb[0].mxu0
  %v2091 = vadd.f32 %v1802, %v2090
  %v2092 = vpop.f32.mrb[0].mxu0
  %2093 = vmatprep.mubr.bf16.mxu0 0
  %2094 = vmatmul.mubr.bf16.gmra.mrb[0].mxu0 %v1333
  %v2095 = vpop.f32.mrb[0].mxu0
  %v2096 = vadd.f32 %v1807, %v2095
  %v2097 = vpop.f32.mrb[0].mxu0
  %v2098 = vpop.f32.mrb[0].mxu0
  %v2099 = vadd.f32 %v1810, %v2098
  %v2100 = vpop.f32.mrb[0].mxu0
  %2101 = vmatprep.mubr.bf16.mxu0 0
  %2102 = vmatmul.mubr.bf16.gmra.mrb[0].mxu0 %v1336
  %v2103 = vpop.f32.mrb[0].mxu0
  %v2104 = vadd.f32 %v1815, %v2103
  %v2105 = vpop.f32.mrb[0].mxu0
  %v2106 = vpop.f32.mrb[0].mxu0
  %v2107 = vadd.f32 %v1818, %v2106
  %v2108 = vpop.f32.mrb[0].mxu0
  %2109 = vmatprep.mubr.bf16.mxu0 0
  %2110 = vmatmul.mubr.bf16.gmra.mrb[0].mxu0 %v1339
  %v2111 = vpop.f32.mrb[0].mxu0
  %v2112 = vadd.f32 %v1823, %v2111
  %v2113 = vpop.f32.mrb[0].mxu0
  %v2114 = vpop.f32.mrb[0].mxu0
  %v2115 = vadd.f32 %v1826, %v2114
  %v2116 = vpop.f32.mrb[0].mxu0
  %2117 = vmatprep.mubr.bf16.mxu0 0
  %2118 = vmatmul.mubr.bf16.gmra.mrb[0].mxu0 %v1342
  %v2119 = vpop.f32.mrb[0].mxu0
  %v2120 = vadd.f32 %v1831, %v2119
  %v2121 = vpop.f32.mrb[0].mxu0
  %v2122 = vpop.f32.mrb[0].mxu0
  %v2123 = vadd.f32 %v1834, %v2122
  %v2124 = vpop.f32.mrb[0].mxu0
  %2125 = vmatprep.mubr.bf16.mxu0 0
  %2126 = vmatmul.mubr.bf16.gmra.mrb[0].mxu0 %v1345
  %v2127 = vpop.f32.mrb[0].mxu0
  %v2128 = vadd.f32 %v1839, %v2127
  %v2129 = vpop.f32.mrb[0].mxu0
  %v2130 = vpop.f32.mrb[0].mxu0
  %v2131 = vadd.f32 %v1842, %v2130
  %v2132 = vpop.f32.mrb[0].mxu0
  %2133 = vmatprep.mubr.bf16.mxu0 0
  %2134 = vmatmul.mubr.bf16.gmra.mrb[0].mxu0 %v1348
  %v2135 = vpop.f32.mrb[0].mxu0
  %v2136 = vadd.f32 %v1847, %v2135
  %v2137 = vpop.f32.mrb[0].mxu0
  %v2138 = vpop.f32.mrb[0].mxu0
  %v2139 = vadd.f32 %v1850, %v2138
  %v2140 = vpop.f32.mrb[0].mxu0
  %2141 = vmatprep.mubr.bf16.mxu0 0
  %2142 = vmatmul.mubr.bf16.gmra.mrb[0].mxu0 %v1351
  %v2143 = vpop.f32.mrb[0].mxu0
  %v2144 = vadd.f32 %v1855, %v2143
  %v2145 = vpop.f32.mrb[0].mxu0
  %v2146 = vpop.f32.mrb[0].mxu0
  %v2147 = vadd.f32 %v1858, %v2146
  %v2148 = vpop.f32.mrb[0].mxu0
  %2149 = vmatprep.mubr.bf16.mxu0 0
  %2150 = vmatmul.mubr.bf16.gmra.mrb[0].mxu0 %v1354
  %v2151 = vpop.f32.mrb[0].mxu0
  %v2152 = vadd.f32 %v1863, %v2151
  %v2153 = vpop.f32.mrb[0].mxu0
  %v2154 = vpop.f32.mrb[0].mxu0
  %v2155 = vadd.f32 %v1866, %v2154
  %v2156 = vpop.f32.mrb[0].mxu0
  %2157 = vmatprep.mubr.bf16.mxu0 0
  %2158 = vmatmul.mubr.bf16.gmra.mrb[0].mxu0 %v1357
  %v2159 = vpop.f32.mrb[0].mxu0
  %v2160 = vadd.f32 %v1871, %v2159
  %v2161 = vpop.f32.mrb[0].mxu0
  %v2162 = vpop.f32.mrb[0].mxu0
  %v2163 = vadd.f32 %v1874, %v2162
  %v2164 = vpop.f32.mrb[0].mxu0
  %2165 = vmatprep.mubr.bf16.mxu0 0
  %2166 = vmatmul.mubr.bf16.gmra.mrb[0].mxu0 %v1360
  %v2167 = vpop.f32.mrb[0].mxu0
  %v2168 = vadd.f32 %v1879, %v2167
  %v2169 = vpop.f32.mrb[0].mxu0
  %v2170 = vpop.f32.mrb[0].mxu0
  %v2171 = vadd.f32 %v1882, %v2170
  %v2172 = vpop.f32.mrb[0].mxu0
  %2173 = vmatprep.mubr.bf16.mxu0 0
  %2174 = vmatmul.mubr.bf16.gmra.mrb[0].mxu0 %v1363
  %v2175 = vpop.f32.mrb[0].mxu0
  %v2176 = vadd.f32 %v1887, %v2175
  %v2177 = vpop.f32.mrb[0].mxu0
  %v2178 = vpop.f32.mrb[0].mxu0
  %v2179 = vadd.f32 %v1890, %v2178
  %v2180 = vpop.f32.mrb[0].mxu0
  %2181 = vmatprep.mubr.bf16.mxu0 0
  %2182 = vmatmul.mubr.bf16.gmra.mrb[0].mxu0 %v1366
  %v2183 = vpop.f32.mrb[0].mxu0
  %v2184 = vadd.f32 %v1895, %v2183
  %v2185 = vpop.f32.mrb[0].mxu0
  %v2186 = vpop.f32.mrb[0].mxu0
  %v2187 = vadd.f32 %v1898, %v2186
  %v2188 = vpop.f32.mrb[0].mxu0
  %2189 = vmatprep.mubr.bf16.mxu0 0
  %2190 = vmatmul.mubr.bf16.gmra.mrb[0].mxu0 %v1369
  %v2191 = vpop.f32.mrb[0].mxu0
  %v2192 = vadd.f32 %v1903, %v2191
  %v2193 = vpop.f32.mrb[0].mxu0
  %v2194 = vpop.f32.mrb[0].mxu0
  %v2195 = vadd.f32 %v1906, %v2194
  %v2196 = vpop.f32.mrb[0].mxu0
  %2197 = vmatprep.mubr.bf16.mxu0 0
  %2198 = vmatmul.mubr.bf16.gmra.mrb[0].mxu0 %v1372
  %v2199 = vpop.f32.mrb[0].mxu0
  %v2200 = vadd.f32 %v1911, %v2199
  %v2201 = vpop.f32.mrb[0].mxu0
  %v2202 = vpop.f32.mrb[0].mxu0
  %v2203 = vadd.f32 %v1914, %v2202
  %v2204 = vpop.f32.mrb[0].mxu0
  %2205 = vmatprep.mubr.bf16.mxu0 0
  %2206 = vmatmul.mubr.bf16.gmra.mrb[0].mxu0 %v1375
  %v2207 = vpop.f32.mrb[0].mxu0
  %v2208 = vadd.f32 %v1919, %v2207
  %v2209 = vpop.f32.mrb[0].mxu0
  %v2210 = vpop.f32.mrb[0].mxu0
  %v2211 = vadd.f32 %v1922, %v2210
  %v2212 = vpop.f32.mrb[0].mxu0
  %2213 = vmatprep.mubr.bf16.mxu0 0
  %2214 = vmatmul.mubr.bf16.gmra.mrb[0].mxu0 %v1378
  %v2215 = vpop.f32.mrb[0].mxu0
  %v2216 = vadd.f32 %v1927, %v2215
  %v2217 = vpop.f32.mrb[0].mxu0
  %v2218 = vpop.f32.mrb[0].mxu0
  %v2219 = vadd.f32 %v1930, %v2218
  %v2220 = vpop.f32.mrb[0].mxu0
  %2221 = vmatprep.mubr.bf16.mxu0 0
  %2222 = vmatmul.mubr.bf16.gmra.mrb[0].mxu0 %v1381
  %v2223 = vpop.f32.mrb[0].mxu0
  %v2224 = vadd.f32 %v1935, %v2223
  %v2225 = vpop.f32.mrb[0].mxu0
  %v2226 = vpop.f32.mrb[0].mxu0
  %v2227 = vadd.f32 %v1938, %v2226
  %v2228 = vpop.f32.mrb[0].mxu0
  %2229 = vmatprep.mubr.bf16.mxu0 0
  %2230 = vmatmul.mubr.bf16.gmra.mrb[0].mxu0 %v1384
  %v2231 = vpop.f32.mrb[0].mxu0
  %v2232 = vadd.f32 %v1943, %v2231
  %v2233 = vpop.f32.mrb[0].mxu0
  %v2234 = vpop.f32.mrb[0].mxu0
  %v2235 = vadd.f32 %v1946, %v2234
  %v2236 = vpop.f32.mrb[0].mxu0
  %2237 = vmatprep.mubr.bf16.mxu0 0
  %2238 = vmatmul.mubr.bf16.gmra.mrb[0].mxu0 %v1387
  %v2239 = vpop.f32.mrb[0].mxu0
  %v2240 = vadd.f32 %v1951, %v2239
  %v2241 = vpop.f32.mrb[0].mxu0
  %v2242 = vpop.f32.mrb[0].mxu0
  %v2243 = vadd.f32 %v1954, %v2242
  %v2244 = vpop.f32.mrb[0].mxu0
  %2245 = vmatprep.mubr.bf16.mxu0 0
  %2246 = vmatmul.mubr.bf16.gmra.mrb[0].mxu0 %v1390
  %v2247 = vpop.f32.mrb[0].mxu0
  %v2248 = vadd.f32 %v1959, %v2247
  %v2249 = vpop.f32.mrb[0].mxu0
  %v2250 = vpop.f32.mrb[0].mxu0
  %v2251 = vadd.f32 %v1962, %v2250
  %v2252 = vpop.f32.mrb[0].mxu0
  %2253 = vmatprep.mubr.bf16.mxu0 0
  %2254 = vmatmul.mubr.bf16.gmra.mrb[0].mxu0 %v1393
  %v2255 = vpop.f32.mrb[0].mxu0
  %v2256 = vadd.f32 %v1967, %v2255
  %v2257 = vpop.f32.mrb[0].mxu0
  %v2258 = vpop.f32.mrb[0].mxu0
  %v2259 = vadd.f32 %v1970, %v2258
  %v2260 = vpop.f32.mrb[0].mxu0
  %2261 = vdwg.mxu0
  %v2262 = vld [vmem:[%s2] sm:$0x1]
  %v2264 = vlaneseq
  %v2265 = vshrl.u32 %v2264, 7
  %v2266 = vsub.s32 0, %v2265
  %v2267 = vrot.slane %v2262, %v2266
  %v2269 = vmul.f32 %v2008, %v2267
  %v2270 = vmul.f32 %v2011, %v2267
  %v2271 = vmul.f32 %v2016, %v2267
  %v2272 = vmul.f32 %v2019, %v2267
  %v2273 = vmul.f32 %v2024, %v2267
  %v2274 = vmul.f32 %v2027, %v2267
  %v2275 = vmul.f32 %v2032, %v2267
  %v2276 = vmul.f32 %v2035, %v2267
  %v2277 = vmul.f32 %v2040, %v2267
  %v2278 = vmul.f32 %v2043, %v2267
  %v2279 = vmul.f32 %v2048, %v2267
  %v2280 = vmul.f32 %v2051, %v2267
  %v2281 = vmul.f32 %v2056, %v2267
  %v2282 = vmul.f32 %v2059, %v2267
  %v2283 = vmul.f32 %v2064, %v2267
  %v2284 = vmul.f32 %v2067, %v2267
  %v2285 = vmul.f32 %v2072, %v2267
  %v2286 = vmul.f32 %v2075, %v2267
  %v2287 = vmul.f32 %v2080, %v2267
  %v2288 = vmul.f32 %v2083, %v2267
  %v2289 = vmul.f32 %v2088, %v2267
  %v2290 = vmul.f32 %v2091, %v2267
  %v2291 = vmul.f32 %v2096, %v2267
  %v2292 = vmul.f32 %v2099, %v2267
  %v2293 = vmul.f32 %v2104, %v2267
  %v2294 = vmul.f32 %v2107, %v2267
  %v2295 = vmul.f32 %v2112, %v2267
  %v2296 = vmul.f32 %v2115, %v2267
  %v2297 = vmul.f32 %v2120, %v2267
  %v2298 = vmul.f32 %v2123, %v2267
  %v2299 = vmul.f32 %v2128, %v2267
  %v2300 = vmul.f32 %v2131, %v2267
  %v2301 = vmul.f32 %v2136, %v2267
  %v2302 = vmul.f32 %v2139, %v2267
  %v2303 = vmul.f32 %v2144, %v2267
  %v2304 = vmul.f32 %v2147, %v2267
  %v2305 = vmul.f32 %v2152, %v2267
  %v2306 = vmul.f32 %v2155, %v2267
  %v2307 = vmul.f32 %v2160, %v2267
  %v2308 = vmul.f32 %v2163, %v2267
  %v2309 = vmul.f32 %v2168, %v2267
  %v2310 = vmul.f32 %v2171, %v2267
  %v2311 = vmul.f32 %v2176, %v2267
  %v2312 = vmul.f32 %v2179, %v2267
  %v2313 = vmul.f32 %v2184, %v2267
  %v2314 = vmul.f32 %v2187, %v2267
  %v2315 = vmul.f32 %v2192, %v2267
  %v2316 = vmul.f32 %v2195, %v2267
  %v2317 = vmul.f32 %v2200, %v2267
  %v2318 = vmul.f32 %v2203, %v2267
  %v2319 = vmul.f32 %v2208, %v2267
  %v2320 = vmul.f32 %v2211, %v2267
  %v2321 = vmul.f32 %v2216, %v2267
  %v2322 = vmul.f32 %v2219, %v2267
  %v2323 = vmul.f32 %v2224, %v2267
  %v2324 = vmul.f32 %v2227, %v2267
  %v2325 = vmul.f32 %v2232, %v2267
  %v2326 = vmul.f32 %v2235, %v2267
  %v2327 = vmul.f32 %v2240, %v2267
  %v2328 = vmul.f32 %v2243, %v2267
  %v2329 = vmul.f32 %v2248, %v2267
  %v2330 = vmul.f32 %v2251, %v2267
  %v2331 = vmul.f32 %v2256, %v2267
  %v2332 = vmul.f32 %v2259, %v2267
  %v2333 = vld [vmem:[%s3] sm:$0x1]
  %v2335 = vlaneseq
  %v2336 = vshrl.u32 %v2335, 7
  %v2337 = vsub.s32 0, %v2336
  %v2338 = vrot.slane %v2333, %v2337
  %v2340 = vadd.f32 %v2269, %v2338
  %v2341 = vadd.f32 %v2270, %v2338
  %v2342 = vadd.f32 %v2271, %v2338
  %v2343 = vadd.f32 %v2272, %v2338
  %v2344 = vadd.f32 %v2273, %v2338
  %v2345 = vadd.f32 %v2274, %v2338
  %v2346 = vadd.f32 %v2275, %v2338
  %v2347 = vadd.f32 %v2276, %v2338
  %v2348 = vadd.f32 %v2277, %v2338
  %v2349 = vadd.f32 %v2278, %v2338
  %v2350 = vadd.f32 %v2279, %v2338
  %v2351 = vadd.f32 %v2280, %v2338
  %v2352 = vadd.f32 %v2281, %v2338
  %v2353 = vadd.f32 %v2282, %v2338
  %v2354 = vadd.f32 %v2283, %v2338
  %v2355 = vadd.f32 %v2284, %v2338
  %v2356 = vadd.f32 %v2285, %v2338
  %v2357 = vadd.f32 %v2286, %v2338
  %v2358 = vadd.f32 %v2287, %v2338
  %v2359 = vadd.f32 %v2288, %v2338
  %v2360 = vadd.f32 %v2289, %v2338
  %v2361 = vadd.f32 %v2290, %v2338
  %v2362 = vadd.f32 %v2291, %v2338
  %v2363 = vadd.f32 %v2292, %v2338
  %v2364 = vadd.f32 %v2293, %v2338
  %v2365 = vadd.f32 %v2294, %v2338
  %v2366 = vadd.f32 %v2295, %v2338
  %v2367 = vadd.f32 %v2296, %v2338
  %v2368 = vadd.f32 %v2297, %v2338
  %v2369 = vadd.f32 %v2298, %v2338
  %v2370 = vadd.f32 %v2299, %v2338
  %v2371 = vadd.f32 %v2300, %v2338
  %v2372 = vadd.f32 %v2301, %v2338
  %v2373 = vadd.f32 %v2302, %v2338
  %v2374 = vadd.f32 %v2303, %v2338
  %v2375 = vadd.f32 %v2304, %v2338
  %v2376 = vadd.f32 %v2305, %v2338
  %v2377 = vadd.f32 %v2306, %v2338
  %v2378 = vadd.f32 %v2307, %v2338
  %v2379 = vadd.f32 %v2308, %v2338
  %v2380 = vadd.f32 %v2309, %v2338
  %v2381 = vadd.f32 %v2310, %v2338
  %v2382 = vadd.f32 %v2311, %v2338
  %v2383 = vadd.f32 %v2312, %v2338
  %v2384 = vadd.f32 %v2313, %v2338
  %v2385 = vadd.f32 %v2314, %v2338
  %v2386 = vadd.f32 %v2315, %v2338
  %v2387 = vadd.f32 %v2316, %v2338
  %v2388 = vadd.f32 %v2317, %v2338
  %v2389 = vadd.f32 %v2318, %v2338
  %v2390 = vadd.f32 %v2319, %v2338
  %v2391 = vadd.f32 %v2320, %v2338
  %v2392 = vadd.f32 %v2321, %v2338
  %v2393 = vadd.f32 %v2322, %v2338
  %v2394 = vadd.f32 %v2323, %v2338
  %v2395 = vadd.f32 %v2324, %v2338
  %v2396 = vadd.f32 %v2325, %v2338
  %v2397 = vadd.f32 %v2326, %v2338
  %v2398 = vadd.f32 %v2327, %v2338
  %v2399 = vadd.f32 %v2328, %v2338
  %v2400 = vadd.f32 %v2329, %v2338
  %v2401 = vadd.f32 %v2330, %v2338
  %v2402 = vadd.f32 %v2331, %v2338
  %v2403 = vadd.f32 %v2332, %v2338
  %v2404 = vmax.f32 %v2340, 0.0
  %v2405 = vmax.f32 %v2341, 0.0
  %v2406 = vmax.f32 %v2342, 0.0
  %v2407 = vmax.f32 %v2343, 0.0
  %v2408 = vmax.f32 %v2344, 0.0
  %v2409 = vmax.f32 %v2345, 0.0
  %v2410 = vmax.f32 %v2346, 0.0
  %v2411 = vmax.f32 %v2347, 0.0
  %v2412 = vmax.f32 %v2348, 0.0
  %v2413 = vmax.f32 %v2349, 0.0
  %v2414 = vmax.f32 %v2350, 0.0
  %v2415 = vmax.f32 %v2351, 0.0
  %v2416 = vmax.f32 %v2352, 0.0
  %v2417 = vmax.f32 %v2353, 0.0
  %v2418 = vmax.f32 %v2354, 0.0
  %v2419 = vmax.f32 %v2355, 0.0
  %v2420 = vmax.f32 %v2356, 0.0
  %v2421 = vmax.f32 %v2357, 0.0
  %v2422 = vmax.f32 %v2358, 0.0
  %v2423 = vmax.f32 %v2359, 0.0
  %v2424 = vmax.f32 %v2360, 0.0
  %v2425 = vmax.f32 %v2361, 0.0
  %v2426 = vmax.f32 %v2362, 0.0
  %v2427 = vmax.f32 %v2363, 0.0
  %v2428 = vmax.f32 %v2364, 0.0
  %v2429 = vmax.f32 %v2365, 0.0
  %v2430 = vmax.f32 %v2366, 0.0
  %v2431 = vmax.f32 %v2367, 0.0
  %v2432 = vmax.f32 %v2368, 0.0
  %v2433 = vmax.f32 %v2369, 0.0
  %v2434 = vmax.f32 %v2370, 0.0
  %v2435 = vmax.f32 %v2371, 0.0
  %v2436 = vmax.f32 %v2372, 0.0
  %v2437 = vmax.f32 %v2373, 0.0
  %v2438 = vmax.f32 %v2374, 0.0
  %v2439 = vmax.f32 %v2375, 0.0
  %v2440 = vmax.f32 %v2376, 0.0
  %v2441 = vmax.f32 %v2377, 0.0
  %v2442 = vmax.f32 %v2378, 0.0
  %v2443 = vmax.f32 %v2379, 0.0
  %v2444 = vmax.f32 %v2380, 0.0
  %v2445 = vmax.f32 %v2381, 0.0
  %v2446 = vmax.f32 %v2382, 0.0
  %v2447 = vmax.f32 %v2383, 0.0
  %v2448 = vmax.f32 %v2384, 0.0
  %v2449 = vmax.f32 %v2385, 0.0
  %v2450 = vmax.f32 %v2386, 0.0
  %v2451 = vmax.f32 %v2387, 0.0
  %v2452 = vmax.f32 %v2388, 0.0
  %v2453 = vmax.f32 %v2389, 0.0
  %v2454 = vmax.f32 %v2390, 0.0
  %v2455 = vmax.f32 %v2391, 0.0
  %v2456 = vmax.f32 %v2392, 0.0
  %v2457 = vmax.f32 %v2393, 0.0
  %v2458 = vmax.f32 %v2394, 0.0
  %v2459 = vmax.f32 %v2395, 0.0
  %v2460 = vmax.f32 %v2396, 0.0
  %v2461 = vmax.f32 %v2397, 0.0
  %v2462 = vmax.f32 %v2398, 0.0
  %v2463 = vmax.f32 %v2399, 0.0
  %v2464 = vmax.f32 %v2400, 0.0
  %v2465 = vmax.f32 %v2401, 0.0
  %v2466 = vmax.f32 %v2402, 0.0
  %v2467 = vmax.f32 %v2403, 0.0
  %2468 = vst.msk [vmem:[%s4] sm:$0xff] %vm1298, %v2404
  %2469 = vst.msk [vmem:[%s4 + $0x8] sm:$0xff] %vm1298, %v2405
  %2470 = vst.msk [vmem:[%s4 + $0x10] sm:$0xff] %vm1298, %v2406
  %2471 = vst.msk [vmem:[%s4 + $0x18] sm:$0xff] %vm1298, %v2407
  %2472 = vst.msk [vmem:[%s4 + $0x20] sm:$0xff] %vm1298, %v2408
  %2473 = vst.msk [vmem:[%s4 + $0x28] sm:$0xff] %vm1298, %v2409
  %2474 = vst.msk [vmem:[%s4 + $0x30] sm:$0xff] %vm1298, %v2410
  %2475 = vst.msk [vmem:[%s4 + $0x38] sm:$0xff] %vm1298, %v2411
  %2476 = vst.msk [vmem:[%s4 + $0x40] sm:$0xff] %vm1298, %v2412
  %2477 = vst.msk [vmem:[%s4 + $0x48] sm:$0xff] %vm1298, %v2413
  %2478 = vst.msk [vmem:[%s4 + $0x50] sm:$0xff] %vm1298, %v2414
  %2479 = vst.msk [vmem:[%s4 + $0x58] sm:$0xff] %vm1298, %v2415
  %2480 = vst.msk [vmem:[%s4 + $0x60] sm:$0xff] %vm1298, %v2416
  %2481 = vst.msk [vmem:[%s4 + $0x68] sm:$0xff] %vm1298, %v2417
  %2482 = vst.msk [vmem:[%s4 + $0x70] sm:$0xff] %vm1298, %v2418
  %2483 = vst.msk [vmem:[%s4 + $0x78] sm:$0xff] %vm1298, %v2419
  %2484 = vst.msk [vmem:[%s4 + $0x80] sm:$0xff] %vm1298, %v2420
  %2485 = vst.msk [vmem:[%s4 + $0x88] sm:$0xff] %vm1298, %v2421
  %2486 = vst.msk [vmem:[%s4 + $0x90] sm:$0xff] %vm1298, %v2422
  %2487 = vst.msk [vmem:[%s4 + $0x98] sm:$0xff] %vm1298, %v2423
  %2488 = vst.msk [vmem:[%s4 + $0xa0] sm:$0xff] %vm1298, %v2424
  %2489 = vst.msk [vmem:[%s4 + $0xa8] sm:$0xff] %vm1298, %v2425
  %2490 = vst.msk [vmem:[%s4 + $0xb0] sm:$0xff] %vm1298, %v2426
  %2491 = vst.msk [vmem:[%s4 + $0xb8] sm:$0xff] %vm1298, %v2427
  %2492 = vst.msk [vmem:[%s4 + $0xc0] sm:$0xff] %vm1298, %v2428
  %2493 = vst.msk [vmem:[%s4 + $0xc8] sm:$0xff] %vm1298, %v2429
  %2494 = vst.msk [vmem:[%s4 + $0xd0] sm:$0xff] %vm1298, %v2430
  %2495 = vst.msk [vmem:[%s4 + $0xd8] sm:$0xff] %vm1298, %v2431
  %2496 = vst.msk [vmem:[%s4 + $0xe0] sm:$0xff] %vm1298, %v2432
  %2497 = vst.msk [vmem:[%s4 + $0xe8] sm:$0xff] %vm1298, %v2433
  %2498 = vst.msk [vmem:[%s4 + $0xf0] sm:$0xff] %vm1298, %v2434
  %2499 = vst.msk [vmem:[%s4 + $0xf8] sm:$0xff] %vm1298, %v2435
  %2500 = vst.msk [vmem:[%s4 + $0x100] sm:$0xff] %vm1298, %v2436
  %2501 = vst.msk [vmem:[%s4 + $0x108] sm:$0xff] %vm1298, %v2437
  %2502 = vst.msk [vmem:[%s4 + $0x110] sm:$0xff] %vm1298, %v2438
  %2503 = vst.msk [vmem:[%s4 + $0x118] sm:$0xff] %vm1298, %v2439
  %2504 = vst.msk [vmem:[%s4 + $0x120] sm:$0xff] %vm1298, %v2440
  %2505 = vst.msk [vmem:[%s4 + $0x128] sm:$0xff] %vm1298, %v2441
  %2506 = vst.msk [vmem:[%s4 + $0x130] sm:$0xff] %vm1298, %v2442
  %2507 = vst.msk [vmem:[%s4 + $0x138] sm:$0xff] %vm1298, %v2443
  %2508 = vst.msk [vmem:[%s4 + $0x140] sm:$0xff] %vm1298, %v2444
  %2509 = vst.msk [vmem:[%s4 + $0x148] sm:$0xff] %vm1298, %v2445
  %2510 = vst.msk [vmem:[%s4 + $0x150] sm:$0xff] %vm1298, %v2446
  %2511 = vst.msk [vmem:[%s4 + $0x158] sm:$0xff] %vm1298, %v2447
  %2512 = vst.msk [vmem:[%s4 + $0x160] sm:$0xff] %vm1298, %v2448
  %2513 = vst.msk [vmem:[%s4 + $0x168] sm:$0xff] %vm1298, %v2449
  %2514 = vst.msk [vmem:[%s4 + $0x170] sm:$0xff] %vm1298, %v2450
  %2515 = vst.msk [vmem:[%s4 + $0x178] sm:$0xff] %vm1298, %v2451
  %2516 = vst.msk [vmem:[%s4 + $0x180] sm:$0xff] %vm1298, %v2452
  %2517 = vst.msk [vmem:[%s4 + $0x188] sm:$0xff] %vm1298, %v2453
  %2518 = vst.msk [vmem:[%s4 + $0x190] sm:$0xff] %vm1298, %v2454
  %2519 = vst.msk [vmem:[%s4 + $0x198] sm:$0xff] %vm1298, %v2455
  %2520 = vst.msk [vmem:[%s4 + $0x1a0] sm:$0xff] %vm1298, %v2456
  %2521 = vst.msk [vmem:[%s4 + $0x1a8] sm:$0xff] %vm1298, %v2457
  %2522 = vst.msk [vmem:[%s4 + $0x1b0] sm:$0xff] %vm1298, %v2458
  %2523 = vst.msk [vmem:[%s4 + $0x1b8] sm:$0xff] %vm1298, %v2459
  %2524 = vst.msk [vmem:[%s4 + $0x1c0] sm:$0xff] %vm1298, %v2460
  %2525 = vst.msk [vmem:[%s4 + $0x1c8] sm:$0xff] %vm1298, %v2461
  %2526 = vst.msk [vmem:[%s4 + $0x1d0] sm:$0xff] %vm1298, %v2462
  %2527 = vst.msk [vmem:[%s4 + $0x1d8] sm:$0xff] %vm1298, %v2463
  %2528 = vst.msk [vmem:[%s4 + $0x1e0] sm:$0xff] %vm1298, %v2464
  %2529 = vst.msk [vmem:[%s4 + $0x1e8] sm:$0xff] %vm1298, %v2465
  %2530 = vst.msk [vmem:[%s4 + $0x1f0] sm:$0xff] %vm1298, %v2466
  %2531 = vst.msk [vmem:[%s4 + $0x1f8] sm:$0xff] %vm1298, %v2467
  // Predicated region
  $region18: #{cnn_forward.8} parent=0 // pred_check
    _
  $region19: #{cnn_forward.8} parent=0 // pred_check_branch
    %2533 = sbr.rel (0) target = $region21
  $region20: #{cnn_forward.8} parent=0 // pred_region
    _
  $region21: #{cnn_forward.8} parent=0 // pred_fallthru
    _
  // Predicated region
  $region22: #{cnn_forward.8} parent=0 // pred_check
    _
  $region23: #{cnn_forward.8} parent=0 // pred_check_branch
    %2535 = sbr.rel (0) target = $region25
  $region24: #{cnn_forward.8} parent=0 // pred_region
    _
  $region25: #{cnn_forward.8} parent=0 // pred_fallthru
    _

// kernel: cnn_forward.9
$region0: #{cnn_forward.9}
  #allocation0 [shape = 'u32[]', space=smem, size = 0x4, offset = 0x4, fixed_abs, tag = 'smem constant byte address 0x4 - core index']
  #allocation1 [shape = 'u32[144,128]{1,0:T(1,128)}', space=vmem, size = 0x12000, scoped, tag = 'internal scratch']
  %s0 = inlined_call_operand.vmem [shape: bf16[512,576], index: 0, kind: input, shape index: {}]
  %s1 = inlined_call_operand.vmem [shape: bf16[576,64], index: 1, kind: input, shape index: {}]
  %s2 = inlined_call_operand.vmem [shape: f32[1,64], index: 2, kind: input, shape index: {}]
  %s3 = inlined_call_operand.vmem [shape: f32[1,64], index: 3, kind: input, shape index: {}]
  %s4 = inlined_call_operand.vmem [shape: f32[512,64], index: 4, kind: input, shape index: {}]
  %s5 = inlined_call_operand.vmem [shape: f32[512,64], index: 5, kind: output, shape index: {}]
  %s6 = sld [smem:[#allocation0]]
  $region30: #{cnn_forward.9} parent=0
    _
  %s8 = ssub.s32 1, %s6
  %s9 = scalar_select 0, %s8, %s6
  // Predicated region
  $region2: #{cnn_forward.9} parent=0 // pred_check
    _
  $region3: #{cnn_forward.9} parent=0 // pred_check_branch
    %11 = sbr.rel (0) target = $region5
  $region4: #{cnn_forward.9} parent=0 // pred_region
    _
  $region5: #{cnn_forward.9} parent=0 // pred_fallthru
    _
  // Predicated region
  $region6: #{cnn_forward.9} parent=0 // pred_check
    _
  $region7: #{cnn_forward.9} parent=0 // pred_check_branch
    %13 = sbr.rel (0) target = $region9
  $region8: #{cnn_forward.9} parent=0 // pred_region
    _
  $region9: #{cnn_forward.9} parent=0 // pred_fallthru
    _
  // Predicated region
  $region10: #{cnn_forward.9} parent=0 // pred_check
    _
  $region11: #{cnn_forward.9} parent=0 // pred_check_branch
    %15 = sbr.rel (0) target = $region13
  $region12: #{cnn_forward.9} parent=0 // pred_region
    _
  $region13: #{cnn_forward.9} parent=0 // pred_fallthru
    _
  // Predicated region
  $region14: #{cnn_forward.9} parent=0 // pred_check
    _
  $region15: #{cnn_forward.9} parent=0 // pred_check_branch
    %17 = sbr.rel (0) target = $region17
  $region16: #{cnn_forward.9} parent=0 // pred_region
    _
  $region17: #{cnn_forward.9} parent=0 // pred_fallthru
    _
  // Predicated region
  $region18: #{cnn_forward.9} parent=0 // pred_check
    _
  $region19: #{cnn_forward.9} parent=0 // pred_check_branch
    %19 = sbr.rel (0) target = $region21
  $region20: #{cnn_forward.9} parent=0 // pred_region
    _
  $region21: #{cnn_forward.9} parent=0 // pred_fallthru
    _
  %v21 = vld [vmem:[%s0] sm:$0xff]
  %v22 = vld [vmem:[%s0 + $0x8] sm:$0xff]
  %v23 = vld [vmem:[%s0 + $0x10] sm:$0xf]
  %v24 = vld [vmem:[%s0 + $0x14] sm:$0xff]
  %v25 = vld [vmem:[%s0 + $0x1c] sm:$0xff]
  %v26 = vld [vmem:[%s0 + $0x24] sm:$0xf]
  %v27 = vld [vmem:[%s0 + $0x28] sm:$0xff]
  %v28 = vld [vmem:[%s0 + $0x30] sm:$0xff]
  %v29 = vld [vmem:[%s0 + $0x38] sm:$0xf]
  %v30 = vld [vmem:[%s0 + $0x3c] sm:$0xff]
  %v31 = vld [vmem:[%s0 + $0x44] sm:$0xff]
  %v32 = vld [vmem:[%s0 + $0x4c] sm:$0xf]
  %v33 = vld [vmem:[%s0 + $0x50] sm:$0xff]
  %v34 = vld [vmem:[%s0 + $0x58] sm:$0xff]
  %v35 = vld [vmem:[%s0 + $0x60] sm:$0xf]
  %v36 = vld [vmem:[%s0 + $0x64] sm:$0xff]
  %v37 = vld [vmem:[%s0 + $0x6c] sm:$0xff]
  %v38 = vld [vmem:[%s0 + $0x74] sm:$0xf]
  %v39 = vld [vmem:[%s0 + $0x78] sm:$0xff]
  %v40 = vld [vmem:[%s0 + $0x80] sm:$0xff]
  %v41 = vld [vmem:[%s0 + $0x88] sm:$0xf]
  %v42 = vld [vmem:[%s0 + $0x8c] sm:$0xff]
  %v43 = vld [vmem:[%s0 + $0x94] sm:$0xff]
  %v44 = vld [vmem:[%s0 + $0x9c] sm:$0xf]
  %v45 = vld [vmem:[%s0 + $0xa0] sm:$0xff]
  %v46 = vld [vmem:[%s0 + $0xa8] sm:$0xff]
  %v47 = vld [vmem:[%s0 + $0xb0] sm:$0xf]
  %v48 = vld [vmem:[%s0 + $0xb4] sm:$0xff]
  %v49 = vld [vmem:[%s0 + $0xbc] sm:$0xff]
  %v50 = vld [vmem:[%s0 + $0xc4] sm:$0xf]
  %v51 = vld [vmem:[%s0 + $0xc8] sm:$0xff]
  %v52 = vld [vmem:[%s0 + $0xd0] sm:$0xff]
  %v53 = vld [vmem:[%s0 + $0xd8] sm:$0xf]
  %v54 = vld [vmem:[%s0 + $0xdc] sm:$0xff]
  %v55 = vld [vmem:[%s0 + $0xe4] sm:$0xff]
  %v56 = vld [vmem:[%s0 + $0xec] sm:$0xf]
  %v57 = vld [vmem:[%s0 + $0xf0] sm:$0xff]
  %v58 = vld [vmem:[%s0 + $0xf8] sm:$0xff]
  %v59 = vld [vmem:[%s0 + $0x100] sm:$0xf]
  %v60 = vld [vmem:[%s0 + $0x104] sm:$0xff]
  %v61 = vld [vmem:[%s0 + $0x10c] sm:$0xff]
  %v62 = vld [vmem:[%s0 + $0x114] sm:$0xf]
  %v63 = vld [vmem:[%s0 + $0x118] sm:$0xff]
  %v64 = vld [vmem:[%s0 + $0x120] sm:$0xff]
  %v65 = vld [vmem:[%s0 + $0x128] sm:$0xf]
  %v66 = vld [vmem:[%s0 + $0x12c] sm:$0xff]
  %v67 = vld [vmem:[%s0 + $0x134] sm:$0xff]
  %v68 = vld [vmem:[%s0 + $0x13c] sm:$0xf]
  %v69 = vld [vmem:[%s0 + $0x140] sm:$0xff]
  %v70 = vld [vmem:[%s0 + $0x148] sm:$0xff]
  %v71 = vld [vmem:[%s0 + $0x150] sm:$0xf]
  %v72 = vld [vmem:[%s0 + $0x154] sm:$0xff]
  %v73 = vld [vmem:[%s0 + $0x15c] sm:$0xff]
  %v74 = vld [vmem:[%s0 + $0x164] sm:$0xf]
  %v75 = vld [vmem:[%s0 + $0x168] sm:$0xff]
  %v76 = vld [vmem:[%s0 + $0x170] sm:$0xff]
  %v77 = vld [vmem:[%s0 + $0x178] sm:$0xf]
  %v78 = vld [vmem:[%s0 + $0x17c] sm:$0xff]
  %v79 = vld [vmem:[%s0 + $0x184] sm:$0xff]
  %v80 = vld [vmem:[%s0 + $0x18c] sm:$0xf]
  %v81 = vld [vmem:[%s0 + $0x190] sm:$0xff]
  %v82 = vld [vmem:[%s0 + $0x198] sm:$0xff]
  %v83 = vld [vmem:[%s0 + $0x1a0] sm:$0xf]
  %v84 = vld [vmem:[%s0 + $0x1a4] sm:$0xff]
  %v85 = vld [vmem:[%s0 + $0x1ac] sm:$0xff]
  %v86 = vld [vmem:[%s0 + $0x1b4] sm:$0xf]
  %v87 = vld [vmem:[%s0 + $0x1b8] sm:$0xff]
  %v88 = vld [vmem:[%s0 + $0x1c0] sm:$0xff]
  %v89 = vld [vmem:[%s0 + $0x1c8] sm:$0xf]
  %v90 = vld [vmem:[%s0 + $0x1cc] sm:$0xff]
  %v91 = vld [vmem:[%s0 + $0x1d4] sm:$0xff]
  %v92 = vld [vmem:[%s0 + $0x1dc] sm:$0xf]
  %v93 = vld [vmem:[%s0 + $0x1e0] sm:$0xff]
  %v94 = vld [vmem:[%s0 + $0x1e8] sm:$0xff]
  %v95 = vld [vmem:[%s0 + $0x1f0] sm:$0xf]
  %v96 = vld [vmem:[%s0 + $0x1f4] sm:$0xff]
  %v97 = vld [vmem:[%s0 + $0x1fc] sm:$0xff]
  %v98 = vld [vmem:[%s0 + $0x204] sm:$0xf]
  %v99 = vld [vmem:[%s0 + $0x208] sm:$0xff]
  %v100 = vld [vmem:[%s0 + $0x210] sm:$0xff]
  %v101 = vld [vmem:[%s0 + $0x218] sm:$0xf]
  %v102 = vld [vmem:[%s0 + $0x21c] sm:$0xff]
  %v103 = vld [vmem:[%s0 + $0x224] sm:$0xff]
  %v104 = vld [vmem:[%s0 + $0x22c] sm:$0xf]
  %v105 = vld [vmem:[%s0 + $0x230] sm:$0xff]
  %v106 = vld [vmem:[%s0 + $0x238] sm:$0xff]
  %v107 = vld [vmem:[%s0 + $0x240] sm:$0xf]
  %v108 = vld [vmem:[%s0 + $0x244] sm:$0xff]
  %v109 = vld [vmem:[%s0 + $0x24c] sm:$0xff]
  %v110 = vld [vmem:[%s0 + $0x254] sm:$0xf]
  %v111 = vld [vmem:[%s0 + $0x258] sm:$0xff]
  %v112 = vld [vmem:[%s0 + $0x260] sm:$0xff]
  %v113 = vld [vmem:[%s0 + $0x268] sm:$0xf]
  %v114 = vld [vmem:[%s0 + $0x26c] sm:$0xff]
  %v115 = vld [vmem:[%s0 + $0x274] sm:$0xff]
  %v116 = vld [vmem:[%s0 + $0x27c] sm:$0xf]
  %v117 = vld [vmem:[%s0 + $0x280] sm:$0xff]
  %v118 = vld [vmem:[%s0 + $0x288] sm:$0xff]
  %v119 = vld [vmem:[%s0 + $0x290] sm:$0xf]
  %v120 = vld [vmem:[%s0 + $0x294] sm:$0xff]
  %v121 = vld [vmem:[%s0 + $0x29c] sm:$0xff]
  %v122 = vld [vmem:[%s0 + $0x2a4] sm:$0xf]
  %v123 = vld [vmem:[%s0 + $0x2a8] sm:$0xff]
  %v124 = vld [vmem:[%s0 + $0x2b0] sm:$0xff]
  %v125 = vld [vmem:[%s0 + $0x2b8] sm:$0xf]
  %v126 = vld [vmem:[%s0 + $0x2bc] sm:$0xff]
  %v127 = vld [vmem:[%s0 + $0x2c4] sm:$0xff]
  %v128 = vld [vmem:[%s0 + $0x2cc] sm:$0xf]
  %v129 = vld [vmem:[%s0 + $0x2d0] sm:$0xff]
  %v130 = vld [vmem:[%s0 + $0x2d8] sm:$0xff]
  %v131 = vld [vmem:[%s0 + $0x2e0] sm:$0xf]
  %v132 = vld [vmem:[%s0 + $0x2e4] sm:$0xff]
  %v133 = vld [vmem:[%s0 + $0x2ec] sm:$0xff]
  %v134 = vld [vmem:[%s0 + $0x2f4] sm:$0xf]
  %v135 = vld [vmem:[%s0 + $0x2f8] sm:$0xff]
  %v136 = vld [vmem:[%s0 + $0x300] sm:$0xff]
  %v137 = vld [vmem:[%s0 + $0x308] sm:$0xf]
  %v138 = vld [vmem:[%s0 + $0x30c] sm:$0xff]
  %v139 = vld [vmem:[%s0 + $0x314] sm:$0xff]
  %v140 = vld [vmem:[%s0 + $0x31c] sm:$0xf]
  %v141 = vld [vmem:[%s0 + $0x320] sm:$0xff]
  %v142 = vld [vmem:[%s0 + $0x328] sm:$0xff]
  %v143 = vld [vmem:[%s0 + $0x330] sm:$0xf]
  %v144 = vld [vmem:[%s0 + $0x334] sm:$0xff]
  %v145 = vld [vmem:[%s0 + $0x33c] sm:$0xff]
  %v146 = vld [vmem:[%s0 + $0x344] sm:$0xf]
  %v147 = vld [vmem:[%s0 + $0x348] sm:$0xff]
  %v148 = vld [vmem:[%s0 + $0x350] sm:$0xff]
  %v149 = vld [vmem:[%s0 + $0x358] sm:$0xf]
  %v150 = vld [vmem:[%s0 + $0x35c] sm:$0xff]
  %v151 = vld [vmem:[%s0 + $0x364] sm:$0xff]
  %v152 = vld [vmem:[%s0 + $0x36c] sm:$0xf]
  %v153 = vld [vmem:[%s0 + $0x370] sm:$0xff]
  %v154 = vld [vmem:[%s0 + $0x378] sm:$0xff]
  %v155 = vld [vmem:[%s0 + $0x380] sm:$0xf]
  %v156 = vld [vmem:[%s0 + $0x384] sm:$0xff]
  %v157 = vld [vmem:[%s0 + $0x38c] sm:$0xff]
  %v158 = vld [vmem:[%s0 + $0x394] sm:$0xf]
  %v159 = vld [vmem:[%s0 + $0x398] sm:$0xff]
  %v160 = vld [vmem:[%s0 + $0x3a0] sm:$0xff]
  %v161 = vld [vmem:[%s0 + $0x3a8] sm:$0xf]
  %v162 = vld [vmem:[%s0 + $0x3ac] sm:$0xff]
  %v163 = vld [vmem:[%s0 + $0x3b4] sm:$0xff]
  %v164 = vld [vmem:[%s0 + $0x3bc] sm:$0xf]
  %v165 = vld [vmem:[%s0 + $0x3c0] sm:$0xff]
  %v166 = vld [vmem:[%s0 + $0x3c8] sm:$0xff]
  %v167 = vld [vmem:[%s0 + $0x3d0] sm:$0xf]
  %v168 = vld [vmem:[%s0 + $0x3d4] sm:$0xff]
  %v169 = vld [vmem:[%s0 + $0x3dc] sm:$0xff]
  %v170 = vld [vmem:[%s0 + $0x3e4] sm:$0xf]
  %v171 = vld [vmem:[%s0 + $0x3e8] sm:$0xff]
  %v172 = vld [vmem:[%s0 + $0x3f0] sm:$0xff]
  %v173 = vld [vmem:[%s0 + $0x3f8] sm:$0xf]
  %v174 = vld [vmem:[%s0 + $0x3fc] sm:$0xff]
  %v175 = vld [vmem:[%s0 + $0x404] sm:$0xff]
  %v176 = vld [vmem:[%s0 + $0x40c] sm:$0xf]
  %v177 = vld [vmem:[%s0 + $0x410] sm:$0xff]
  %v178 = vld [vmem:[%s0 + $0x418] sm:$0xff]
  %v179 = vld [vmem:[%s0 + $0x420] sm:$0xf]
  %v180 = vld [vmem:[%s0 + $0x424] sm:$0xff]
  %v181 = vld [vmem:[%s0 + $0x42c] sm:$0xff]
  %v182 = vld [vmem:[%s0 + $0x434] sm:$0xf]
  %v183 = vld [vmem:[%s0 + $0x438] sm:$0xff]
  %v184 = vld [vmem:[%s0 + $0x440] sm:$0xff]
  %v185 = vld [vmem:[%s0 + $0x448] sm:$0xf]
  %v186 = vld [vmem:[%s0 + $0x44c] sm:$0xff]
  %v187 = vld [vmem:[%s0 + $0x454] sm:$0xff]
  %v188 = vld [vmem:[%s0 + $0x45c] sm:$0xf]
  %v189 = vld [vmem:[%s0 + $0x460] sm:$0xff]
  %v190 = vld [vmem:[%s0 + $0x468] sm:$0xff]
  %v191 = vld [vmem:[%s0 + $0x470] sm:$0xf]
  %v192 = vld [vmem:[%s0 + $0x474] sm:$0xff]
  %v193 = vld [vmem:[%s0 + $0x47c] sm:$0xff]
  %v194 = vld [vmem:[%s0 + $0x484] sm:$0xf]
  %v195 = vld [vmem:[%s0 + $0x488] sm:$0xff]
  %v196 = vld [vmem:[%s0 + $0x490] sm:$0xff]
  %v197 = vld [vmem:[%s0 + $0x498] sm:$0xf]
  %v198 = vld [vmem:[%s0 + $0x49c] sm:$0xff]
  %v199 = vld [vmem:[%s0 + $0x4a4] sm:$0xff]
  %v200 = vld [vmem:[%s0 + $0x4ac] sm:$0xf]
  %v201 = vld [vmem:[%s0 + $0x4b0] sm:$0xff]
  %v202 = vld [vmem:[%s0 + $0x4b8] sm:$0xff]
  %v203 = vld [vmem:[%s0 + $0x4c0] sm:$0xf]
  %v204 = vld [vmem:[%s0 + $0x4c4] sm:$0xff]
  %v205 = vld [vmem:[%s0 + $0x4cc] sm:$0xff]
  %v206 = vld [vmem:[%s0 + $0x4d4] sm:$0xf]
  %v207 = vld [vmem:[%s0 + $0x4d8] sm:$0xff]
  %v208 = vld [vmem:[%s0 + $0x4e0] sm:$0xff]
  %v209 = vld [vmem:[%s0 + $0x4e8] sm:$0xf]
  %v210 = vld [vmem:[%s0 + $0x4ec] sm:$0xff]
  %v211 = vld [vmem:[%s0 + $0x4f4] sm:$0xff]
  %v212 = vld [vmem:[%s0 + $0x4fc] sm:$0xf]
  %v213 = vld [vmem:[%s1] sm:$0xf]
  %v214 = vld [vmem:[%s1 + $0x4] sm:$0xf]
  %v215 = vld [vmem:[%s1 + $0x8] sm:$0xf]
  %v216 = vld [vmem:[%s1 + $0xc] sm:$0xf]
  %v217 = vld [vmem:[%s1 + $0x10] sm:$0xf]
  %v218 = vld [vmem:[%s1 + $0x14] sm:$0xf]
  %v219 = vld [vmem:[%s1 + $0x18] sm:$0xf]
  %v220 = vld [vmem:[%s1 + $0x1c] sm:$0xf]
  %v221 = vld [vmem:[%s1 + $0x20] sm:$0xf]
  %v222 = vld [vmem:[%s1 + $0x24] sm:$0xf]
  %v223 = vld [vmem:[%s1 + $0x28] sm:$0xf]
  %v224 = vld [vmem:[%s1 + $0x2c] sm:$0xf]
  %v225 = vld [vmem:[%s1 + $0x30] sm:$0xf]
  %v226 = vld [vmem:[%s1 + $0x34] sm:$0xf]
  %v227 = vld [vmem:[%s1 + $0x38] sm:$0xf]
  %v228 = vld [vmem:[%s1 + $0x3c] sm:$0xf]
  %v229 = vld [vmem:[%s1 + $0x40] sm:$0xf]
  %v230 = vld [vmem:[%s1 + $0x44] sm:$0xf]
  %v231 = vld [vmem:[%s1 + $0x48] sm:$0xf]
  %v232 = vld [vmem:[%s1 + $0x4c] sm:$0xf]
  %v233 = vld [vmem:[%s1 + $0x50] sm:$0xf]
  %v234 = vld [vmem:[%s1 + $0x54] sm:$0xf]
  %v235 = vld [vmem:[%s1 + $0x58] sm:$0xf]
  %v236 = vld [vmem:[%s1 + $0x5c] sm:$0xf]
  %v237 = vld [vmem:[%s1 + $0x60] sm:$0xf]
  %v238 = vld [vmem:[%s1 + $0x64] sm:$0xf]
  %v239 = vld [vmem:[%s1 + $0x68] sm:$0xf]
  %v240 = vld [vmem:[%s1 + $0x6c] sm:$0xf]
  %v241 = vld [vmem:[%s1 + $0x70] sm:$0xf]
  %v242 = vld [vmem:[%s1 + $0x74] sm:$0xf]
  %v243 = vld [vmem:[%s1 + $0x78] sm:$0xf]
  %v244 = vld [vmem:[%s1 + $0x7c] sm:$0xf]
  %v245 = vld [vmem:[%s1 + $0x80] sm:$0xf]
  %v246 = vld [vmem:[%s1 + $0x84] sm:$0xf]
  %v247 = vld [vmem:[%s1 + $0x88] sm:$0xf]
  %v248 = vld [vmem:[%s1 + $0x8c] sm:$0xf]
  %v249 = vld [vmem:[%s1 + $0x90] sm:$0xf]
  %v250 = vld [vmem:[%s1 + $0x94] sm:$0xf]
  %v251 = vld [vmem:[%s1 + $0x98] sm:$0xf]
  %v252 = vld [vmem:[%s1 + $0x9c] sm:$0xf]
  %v253 = vld [vmem:[%s1 + $0xa0] sm:$0xf]
  %v254 = vld [vmem:[%s1 + $0xa4] sm:$0xf]
  %v255 = vld [vmem:[%s1 + $0xa8] sm:$0xf]
  %v256 = vld [vmem:[%s1 + $0xac] sm:$0xf]
  %v257 = vld [vmem:[%s1 + $0xb0] sm:$0xf]
  %v258 = vld [vmem:[%s1 + $0xb4] sm:$0xf]
  %v259 = vld [vmem:[%s1 + $0xb8] sm:$0xf]
  %v260 = vld [vmem:[%s1 + $0xbc] sm:$0xf]
  %v261 = vld [vmem:[%s1 + $0xc0] sm:$0xf]
  %v262 = vld [vmem:[%s1 + $0xc4] sm:$0xf]
  %v263 = vld [vmem:[%s1 + $0xc8] sm:$0xf]
  %v264 = vld [vmem:[%s1 + $0xcc] sm:$0xf]
  %v265 = vld [vmem:[%s1 + $0xd0] sm:$0xf]
  %v266 = vld [vmem:[%s1 + $0xd4] sm:$0xf]
  %v267 = vld [vmem:[%s1 + $0xd8] sm:$0xf]
  %v268 = vld [vmem:[%s1 + $0xdc] sm:$0xf]
  %v269 = vld [vmem:[%s1 + $0xe0] sm:$0xf]
  %v270 = vld [vmem:[%s1 + $0xe4] sm:$0xf]
  %v271 = vld [vmem:[%s1 + $0xe8] sm:$0xf]
  %v272 = vld [vmem:[%s1 + $0xec] sm:$0xf]
  %v273 = vld [vmem:[%s1 + $0xf0] sm:$0xf]
  %v274 = vld [vmem:[%s1 + $0xf4] sm:$0xf]
  %v275 = vld [vmem:[%s1 + $0xf8] sm:$0xf]
  %v276 = vld [vmem:[%s1 + $0xfc] sm:$0xf]
  %v277 = vld [vmem:[%s1 + $0x100] sm:$0xf]
  %v278 = vld [vmem:[%s1 + $0x104] sm:$0xf]
  %v279 = vld [vmem:[%s1 + $0x108] sm:$0xf]
  %v280 = vld [vmem:[%s1 + $0x10c] sm:$0xf]
  %v281 = vld [vmem:[%s1 + $0x110] sm:$0xf]
  %v282 = vld [vmem:[%s1 + $0x114] sm:$0xf]
  %v283 = vld [vmem:[%s1 + $0x118] sm:$0xf]
  %v284 = vld [vmem:[%s1 + $0x11c] sm:$0xf]
  %v477 = vunpack.c.l.b16 %v21
  %v478 = vunpack.c.h.b16 %v21
  %v479 = vunpack.c.l.b16 %v22
  %v480 = vunpack.c.h.b16 %v22
  %v481 = vunpack.c.l.b16 %v23
  %v482 = vunpack.c.l.b16 %v24
  %v483 = vunpack.c.h.b16 %v24
  %v484 = vunpack.c.l.b16 %v25
  %v485 = vunpack.c.h.b16 %v25
  %v486 = vunpack.c.l.b16 %v26
  %v487 = vunpack.c.l.b16 %v27
  %v488 = vunpack.c.h.b16 %v27
  %v489 = vunpack.c.l.b16 %v28
  %v490 = vunpack.c.h.b16 %v28
  %v491 = vunpack.c.l.b16 %v29
  %v492 = vunpack.c.l.b16 %v30
  %v493 = vunpack.c.h.b16 %v30
  %v494 = vunpack.c.l.b16 %v31
  %v495 = vunpack.c.h.b16 %v31
  %v496 = vunpack.c.l.b16 %v32
  %v497 = vunpack.c.l.b16 %v33
  %v498 = vunpack.c.h.b16 %v33
  %v499 = vunpack.c.l.b16 %v34
  %v500 = vunpack.c.h.b16 %v34
  %v501 = vunpack.c.l.b16 %v35
  %v502 = vunpack.c.l.b16 %v36
  %v503 = vunpack.c.h.b16 %v36
  %v504 = vunpack.c.l.b16 %v37
  %v505 = vunpack.c.h.b16 %v37
  %v506 = vunpack.c.l.b16 %v38
  %v507 = vunpack.c.l.b16 %v39
  %v508 = vunpack.c.h.b16 %v39
  %v509 = vunpack.c.l.b16 %v40
  %v510 = vunpack.c.h.b16 %v40
  %v511 = vunpack.c.l.b16 %v41
  %v512 = vunpack.c.l.b16 %v42
  %v513 = vunpack.c.h.b16 %v42
  %v514 = vunpack.c.l.b16 %v43
  %v515 = vunpack.c.h.b16 %v43
  %v516 = vunpack.c.l.b16 %v44
  %v517 = vunpack.c.l.b16 %v45
  %v518 = vunpack.c.h.b16 %v45
  %v519 = vunpack.c.l.b16 %v46
  %v520 = vunpack.c.h.b16 %v46
  %v521 = vunpack.c.l.b16 %v47
  %v522 = vunpack.c.l.b16 %v48
  %v523 = vunpack.c.h.b16 %v48
  %v524 = vunpack.c.l.b16 %v49
  %v525 = vunpack.c.h.b16 %v49
  %v526 = vunpack.c.l.b16 %v50
  %v527 = vunpack.c.l.b16 %v51
  %v528 = vunpack.c.h.b16 %v51
  %v529 = vunpack.c.l.b16 %v52
  %v530 = vunpack.c.h.b16 %v52
  %v531 = vunpack.c.l.b16 %v53
  %v532 = vunpack.c.l.b16 %v54
  %v533 = vunpack.c.h.b16 %v54
  %v534 = vunpack.c.l.b16 %v55
  %v535 = vunpack.c.h.b16 %v55
  %v536 = vunpack.c.l.b16 %v56
  %v537 = vunpack.c.l.b16 %v57
  %v538 = vunpack.c.h.b16 %v57
  %v539 = vunpack.c.l.b16 %v58
  %v540 = vunpack.c.h.b16 %v58
  %v541 = vunpack.c.l.b16 %v59
  %v542 = vunpack.c.l.b16 %v60
  %v543 = vunpack.c.h.b16 %v60
  %v544 = vunpack.c.l.b16 %v61
  %v545 = vunpack.c.h.b16 %v61
  %v546 = vunpack.c.l.b16 %v62
  %v547 = vunpack.c.l.b16 %v63
  %v548 = vunpack.c.h.b16 %v63
  %v549 = vunpack.c.l.b16 %v64
  %v550 = vunpack.c.h.b16 %v64
  %v551 = vunpack.c.l.b16 %v65
  %v552 = vunpack.c.l.b16 %v66
  %v553 = vunpack.c.h.b16 %v66
  %v554 = vunpack.c.l.b16 %v67
  %v555 = vunpack.c.h.b16 %v67
  %v556 = vunpack.c.l.b16 %v68
  %v557 = vunpack.c.l.b16 %v69
  %v558 = vunpack.c.h.b16 %v69
  %v559 = vunpack.c.l.b16 %v70
  %v560 = vunpack.c.h.b16 %v70
  %v561 = vunpack.c.l.b16 %v71
  %v562 = vunpack.c.l.b16 %v72
  %v563 = vunpack.c.h.b16 %v72
  %v564 = vunpack.c.l.b16 %v73
  %v565 = vunpack.c.h.b16 %v73
  %v566 = vunpack.c.l.b16 %v74
  %v567 = vunpack.c.l.b16 %v75
  %v568 = vunpack.c.h.b16 %v75
  %v569 = vunpack.c.l.b16 %v76
  %v570 = vunpack.c.h.b16 %v76
  %v571 = vunpack.c.l.b16 %v77
  %v572 = vunpack.c.l.b16 %v78
  %v573 = vunpack.c.h.b16 %v78
  %v574 = vunpack.c.l.b16 %v79
  %v575 = vunpack.c.h.b16 %v79
  %v576 = vunpack.c.l.b16 %v80
  %v577 = vunpack.c.l.b16 %v81
  %v578 = vunpack.c.h.b16 %v81
  %v579 = vunpack.c.l.b16 %v82
  %v580 = vunpack.c.h.b16 %v82
  %v581 = vunpack.c.l.b16 %v83
  %v582 = vunpack.c.l.b16 %v84
  %v583 = vunpack.c.h.b16 %v84
  %v584 = vunpack.c.l.b16 %v85
  %v585 = vunpack.c.h.b16 %v85
  %v586 = vunpack.c.l.b16 %v86
  %v587 = vunpack.c.l.b16 %v87
  %v588 = vunpack.c.h.b16 %v87
  %v589 = vunpack.c.l.b16 %v88
  %v590 = vunpack.c.h.b16 %v88
  %v591 = vunpack.c.l.b16 %v89
  %v592 = vunpack.c.l.b16 %v90
  %v593 = vunpack.c.h.b16 %v90
  %v594 = vunpack.c.l.b16 %v91
  %v595 = vunpack.c.h.b16 %v91
  %v596 = vunpack.c.l.b16 %v92
  %v597 = vunpack.c.l.b16 %v93
  %v598 = vunpack.c.h.b16 %v93
  %v599 = vunpack.c.l.b16 %v94
  %v600 = vunpack.c.h.b16 %v94
  %v601 = vunpack.c.l.b16 %v95
  %v602 = vunpack.c.l.b16 %v96
  %v603 = vunpack.c.h.b16 %v96
  %v604 = vunpack.c.l.b16 %v97
  %v605 = vunpack.c.h.b16 %v97
  %v606 = vunpack.c.l.b16 %v98
  %v607 = vunpack.c.l.b16 %v99
  %v608 = vunpack.c.h.b16 %v99
  %v609 = vunpack.c.l.b16 %v100
  %v610 = vunpack.c.h.b16 %v100
  %v611 = vunpack.c.l.b16 %v101
  %v612 = vunpack.c.l.b16 %v102
  %v613 = vunpack.c.h.b16 %v102
  %v614 = vunpack.c.l.b16 %v103
  %v615 = vunpack.c.h.b16 %v103
  %v616 = vunpack.c.l.b16 %v104
  %v617 = vunpack.c.l.b16 %v105
  %v618 = vunpack.c.h.b16 %v105
  %v619 = vunpack.c.l.b16 %v106
  %v620 = vunpack.c.h.b16 %v106
  %v621 = vunpack.c.l.b16 %v107
  %v622 = vunpack.c.l.b16 %v108
  %v623 = vunpack.c.h.b16 %v108
  %v624 = vunpack.c.l.b16 %v109
  %v625 = vunpack.c.h.b16 %v109
  %v626 = vunpack.c.l.b16 %v110
  %v627 = vunpack.c.l.b16 %v111
  %v628 = vunpack.c.h.b16 %v111
  %v629 = vunpack.c.l.b16 %v112
  %v630 = vunpack.c.h.b16 %v112
  %v631 = vunpack.c.l.b16 %v113
  %v632 = vunpack.c.l.b16 %v114
  %v633 = vunpack.c.h.b16 %v114
  %v634 = vunpack.c.l.b16 %v115
  %v635 = vunpack.c.h.b16 %v115
  %v636 = vunpack.c.l.b16 %v116
  %v637 = vunpack.c.l.b16 %v117
  %v638 = vunpack.c.h.b16 %v117
  %v639 = vunpack.c.l.b16 %v118
  %v640 = vunpack.c.h.b16 %v118
  %v641 = vunpack.c.l.b16 %v119
  %v642 = vunpack.c.l.b16 %v120
  %v643 = vunpack.c.h.b16 %v120
  %v644 = vunpack.c.l.b16 %v121
  %v645 = vunpack.c.h.b16 %v121
  %v646 = vunpack.c.l.b16 %v122
  %v647 = vunpack.c.l.b16 %v123
  %v648 = vunpack.c.h.b16 %v123
  %v649 = vunpack.c.l.b16 %v124
  %v650 = vunpack.c.h.b16 %v124
  %v651 = vunpack.c.l.b16 %v125
  %v652 = vunpack.c.l.b16 %v126
  %v653 = vunpack.c.h.b16 %v126
  %v654 = vunpack.c.l.b16 %v127
  %v655 = vunpack.c.h.b16 %v127
  %v656 = vunpack.c.l.b16 %v128
  %v657 = vunpack.c.l.b16 %v129
  %v658 = vunpack.c.h.b16 %v129
  %v659 = vunpack.c.l.b16 %v130
  %v660 = vunpack.c.h.b16 %v130
  %v661 = vunpack.c.l.b16 %v131
  %v662 = vunpack.c.l.b16 %v132
  %v663 = vunpack.c.h.b16 %v132
  %v664 = vunpack.c.l.b16 %v133
  %v665 = vunpack.c.h.b16 %v133
  %v666 = vunpack.c.l.b16 %v134
  %v667 = vunpack.c.l.b16 %v135
  %v668 = vunpack.c.h.b16 %v135
  %v669 = vunpack.c.l.b16 %v136
  %v670 = vunpack.c.h.b16 %v136
  %v671 = vunpack.c.l.b16 %v137
  %v672 = vunpack.c.l.b16 %v138
  %v673 = vunpack.c.h.b16 %v138
  %v674 = vunpack.c.l.b16 %v139
  %v675 = vunpack.c.h.b16 %v139
  %v676 = vunpack.c.l.b16 %v140
  %v677 = vunpack.c.l.b16 %v141
  %v678 = vunpack.c.h.b16 %v141
  %v679 = vunpack.c.l.b16 %v142
  %v680 = vunpack.c.h.b16 %v142
  %v681 = vunpack.c.l.b16 %v143
  %v682 = vunpack.c.l.b16 %v144
  %v683 = vunpack.c.h.b16 %v144
  %v684 = vunpack.c.l.b16 %v145
  %v685 = vunpack.c.h.b16 %v145
  %v686 = vunpack.c.l.b16 %v146
  %v687 = vunpack.c.l.b16 %v147
  %v688 = vunpack.c.h.b16 %v147
  %v689 = vunpack.c.l.b16 %v148
  %v690 = vunpack.c.h.b16 %v148
  %v691 = vunpack.c.l.b16 %v149
  %v692 = vunpack.c.l.b16 %v150
  %v693 = vunpack.c.h.b16 %v150
  %v694 = vunpack.c.l.b16 %v151
  %v695 = vunpack.c.h.b16 %v151
  %v696 = vunpack.c.l.b16 %v152
  %v697 = vunpack.c.l.b16 %v153
  %v698 = vunpack.c.h.b16 %v153
  %v699 = vunpack.c.l.b16 %v154
  %v700 = vunpack.c.h.b16 %v154
  %v701 = vunpack.c.l.b16 %v155
  %v702 = vunpack.c.l.b16 %v156
  %v703 = vunpack.c.h.b16 %v156
  %v704 = vunpack.c.l.b16 %v157
  %v705 = vunpack.c.h.b16 %v157
  %v706 = vunpack.c.l.b16 %v158
  %v707 = vunpack.c.l.b16 %v159
  %v708 = vunpack.c.h.b16 %v159
  %v709 = vunpack.c.l.b16 %v160
  %v710 = vunpack.c.h.b16 %v160
  %v711 = vunpack.c.l.b16 %v161
  %v712 = vunpack.c.l.b16 %v162
  %v713 = vunpack.c.h.b16 %v162
  %v714 = vunpack.c.l.b16 %v163
  %v715 = vunpack.c.h.b16 %v163
  %v716 = vunpack.c.l.b16 %v164
  %v717 = vunpack.c.l.b16 %v165
  %v718 = vunpack.c.h.b16 %v165
  %v719 = vunpack.c.l.b16 %v166
  %v720 = vunpack.c.h.b16 %v166
  %v721 = vunpack.c.l.b16 %v167
  %v722 = vunpack.c.l.b16 %v168
  %v723 = vunpack.c.h.b16 %v168
  %v724 = vunpack.c.l.b16 %v169
  %v725 = vunpack.c.h.b16 %v169
  %v726 = vunpack.c.l.b16 %v170
  %v727 = vunpack.c.l.b16 %v171
  %v728 = vunpack.c.h.b16 %v171
  %v729 = vunpack.c.l.b16 %v172
  %v730 = vunpack.c.h.b16 %v172
  %v731 = vunpack.c.l.b16 %v173
  %v732 = vunpack.c.l.b16 %v174
  %v733 = vunpack.c.h.b16 %v174
  %v734 = vunpack.c.l.b16 %v175
  %v735 = vunpack.c.h.b16 %v175
  %v736 = vunpack.c.l.b16 %v176
  %v737 = vunpack.c.l.b16 %v177
  %v738 = vunpack.c.h.b16 %v177
  %v739 = vunpack.c.l.b16 %v178
  %v740 = vunpack.c.h.b16 %v178
  %v741 = vunpack.c.l.b16 %v179
  %v742 = vunpack.c.l.b16 %v180
  %v743 = vunpack.c.h.b16 %v180
  %v744 = vunpack.c.l.b16 %v181
  %v745 = vunpack.c.h.b16 %v181
  %v746 = vunpack.c.l.b16 %v182
  %v747 = vunpack.c.l.b16 %v183
  %v748 = vunpack.c.h.b16 %v183
  %v749 = vunpack.c.l.b16 %v184
  %v750 = vunpack.c.h.b16 %v184
  %v751 = vunpack.c.l.b16 %v185
  %v752 = vunpack.c.l.b16 %v186
  %v753 = vunpack.c.h.b16 %v186
  %v754 = vunpack.c.l.b16 %v187
  %v755 = vunpack.c.h.b16 %v187
  %v756 = vunpack.c.l.b16 %v188
  %v757 = vunpack.c.l.b16 %v189
  %v758 = vunpack.c.h.b16 %v189
  %v759 = vunpack.c.l.b16 %v190
  %v760 = vunpack.c.h.b16 %v190
  %v761 = vunpack.c.l.b16 %v191
  %v762 = vunpack.c.l.b16 %v192
  %v763 = vunpack.c.h.b16 %v192
  %v764 = vunpack.c.l.b16 %v193
  %v765 = vunpack.c.h.b16 %v193
  %v766 = vunpack.c.l.b16 %v194
  %v767 = vunpack.c.l.b16 %v195
  %v768 = vunpack.c.h.b16 %v195
  %v769 = vunpack.c.l.b16 %v196
  %v770 = vunpack.c.h.b16 %v196
  %v771 = vunpack.c.l.b16 %v197
  %v772 = vunpack.c.l.b16 %v198
  %v773 = vunpack.c.h.b16 %v198
  %v774 = vunpack.c.l.b16 %v199
  %v775 = vunpack.c.h.b16 %v199
  %v776 = vunpack.c.l.b16 %v200
  %v777 = vunpack.c.l.b16 %v201
  %v778 = vunpack.c.h.b16 %v201
  %v779 = vunpack.c.l.b16 %v202
  %v780 = vunpack.c.h.b16 %v202
  %v781 = vunpack.c.l.b16 %v203
  %v782 = vunpack.c.l.b16 %v204
  %v783 = vunpack.c.h.b16 %v204
  %v784 = vunpack.c.l.b16 %v205
  %v785 = vunpack.c.h.b16 %v205
  %v786 = vunpack.c.l.b16 %v206
  %v787 = vunpack.c.l.b16 %v207
  %v788 = vunpack.c.h.b16 %v207
  %v789 = vunpack.c.l.b16 %v208
  %v790 = vunpack.c.h.b16 %v208
  %v791 = vunpack.c.l.b16 %v209
  %v792 = vunpack.c.l.b16 %v210
  %v793 = vunpack.c.h.b16 %v210
  %v794 = vunpack.c.l.b16 %v211
  %v795 = vunpack.c.h.b16 %v211
  %v796 = vunpack.c.l.b16 %v212
  %v797 = vpack.c.b16 %v482, %v477
  %v798 = vpack.c.b16 %v483, %v478
  %v799 = vpack.c.b16 %v484, %v479
  %v800 = vpack.c.b16 %v485, %v480
  %v801 = vpack.c.b16 %v486, %v481
  %v802 = vpack.c.b16 %v492, %v487
  %v803 = vpack.c.b16 %v493, %v488
  %v804 = vpack.c.b16 %v494, %v489
  %v805 = vpack.c.b16 %v495, %v490
  %v806 = vpack.c.b16 %v496, %v491
  %v807 = vpack.c.b16 %v502, %v497
  %v808 = vpack.c.b16 %v503, %v498
  %v809 = vpack.c.b16 %v504, %v499
  %v810 = vpack.c.b16 %v505, %v500
  %v811 = vpack.c.b16 %v506, %v501
  %v812 = vpack.c.b16 %v512, %v507
  %v813 = vpack.c.b16 %v513, %v508
  %v814 = vpack.c.b16 %v514, %v509
  %v815 = vpack.c.b16 %v515, %v510
  %v816 = vpack.c.b16 %v516, %v511
  %v817 = vpack.c.b16 %v522, %v517
  %v818 = vpack.c.b16 %v523, %v518
  %v819 = vpack.c.b16 %v524, %v519
  %v820 = vpack.c.b16 %v525, %v520
  %v821 = vpack.c.b16 %v526, %v521
  %v822 = vpack.c.b16 %v532, %v527
  %v823 = vpack.c.b16 %v533, %v528
  %v824 = vpack.c.b16 %v534, %v529
  %v825 = vpack.c.b16 %v535, %v530
  %v826 = vpack.c.b16 %v536, %v531
  %v827 = vpack.c.b16 %v542, %v537
  %v828 = vpack.c.b16 %v543, %v538
  %v829 = vpack.c.b16 %v544, %v539
  %v830 = vpack.c.b16 %v545, %v540
  %v831 = vpack.c.b16 %v546, %v541
  %v832 = vpack.c.b16 %v552, %v547
  %v833 = vpack.c.b16 %v553, %v548
  %v834 = vpack.c.b16 %v554, %v549
  %v835 = vpack.c.b16 %v555, %v550
  %v836 = vpack.c.b16 %v556, %v551
  %v837 = vpack.c.b16 %v562, %v557
  %v838 = vpack.c.b16 %v563, %v558
  %v839 = vpack.c.b16 %v564, %v559
  %v840 = vpack.c.b16 %v565, %v560
  %v841 = vpack.c.b16 %v566, %v561
  %v842 = vpack.c.b16 %v572, %v567
  %v843 = vpack.c.b16 %v573, %v568
  %v844 = vpack.c.b16 %v574, %v569
  %v845 = vpack.c.b16 %v575, %v570
  %v846 = vpack.c.b16 %v576, %v571
  %v847 = vpack.c.b16 %v582, %v577
  %v848 = vpack.c.b16 %v583, %v578
  %v849 = vpack.c.b16 %v584, %v579
  %v850 = vpack.c.b16 %v585, %v580
  %v851 = vpack.c.b16 %v586, %v581
  %v852 = vpack.c.b16 %v592, %v587
  %v853 = vpack.c.b16 %v593, %v588
  %v854 = vpack.c.b16 %v594, %v589
  %v855 = vpack.c.b16 %v595, %v590
  %v856 = vpack.c.b16 %v596, %v591
  %v857 = vpack.c.b16 %v602, %v597
  %v858 = vpack.c.b16 %v603, %v598
  %v859 = vpack.c.b16 %v604, %v599
  %v860 = vpack.c.b16 %v605, %v600
  %v861 = vpack.c.b16 %v606, %v601
  %v862 = vpack.c.b16 %v612, %v607
  %v863 = vpack.c.b16 %v613, %v608
  %v864 = vpack.c.b16 %v614, %v609
  %v865 = vpack.c.b16 %v615, %v610
  %v866 = vpack.c.b16 %v616, %v611
  %v867 = vpack.c.b16 %v622, %v617
  %v868 = vpack.c.b16 %v623, %v618
  %v869 = vpack.c.b16 %v624, %v619
  %v870 = vpack.c.b16 %v625, %v620
  %v871 = vpack.c.b16 %v626, %v621
  %v872 = vpack.c.b16 %v632, %v627
  %v873 = vpack.c.b16 %v633, %v628
  %v874 = vpack.c.b16 %v634, %v629
  %v875 = vpack.c.b16 %v635, %v630
  %v876 = vpack.c.b16 %v636, %v631
  %v877 = vpack.c.b16 %v642, %v637
  %v878 = vpack.c.b16 %v643, %v638
  %v879 = vpack.c.b16 %v644, %v639
  %v880 = vpack.c.b16 %v645, %v640
  %v881 = vpack.c.b16 %v646, %v641
  %v882 = vpack.c.b16 %v652, %v647
  %v883 = vpack.c.b16 %v653, %v648
  %v884 = vpack.c.b16 %v654, %v649
  %v885 = vpack.c.b16 %v655, %v650
  %v886 = vpack.c.b16 %v656, %v651
  %v887 = vpack.c.b16 %v662, %v657
  %v888 = vpack.c.b16 %v663, %v658
  %v889 = vpack.c.b16 %v664, %v659
  %v890 = vpack.c.b16 %v665, %v660
  %v891 = vpack.c.b16 %v666, %v661
  %v892 = vpack.c.b16 %v672, %v667
  %v893 = vpack.c.b16 %v673, %v668
  %v894 = vpack.c.b16 %v674, %v669
  %v895 = vpack.c.b16 %v675, %v670
  %v896 = vpack.c.b16 %v676, %v671
  %v897 = vpack.c.b16 %v682, %v677
  %v898 = vpack.c.b16 %v683, %v678
  %v899 = vpack.c.b16 %v684, %v679
  %v900 = vpack.c.b16 %v685, %v680
  %v901 = vpack.c.b16 %v686, %v681
  %v902 = vpack.c.b16 %v692, %v687
  %v903 = vpack.c.b16 %v693, %v688
  %v904 = vpack.c.b16 %v694, %v689
  %v905 = vpack.c.b16 %v695, %v690
  %v906 = vpack.c.b16 %v696, %v691
  %v907 = vpack.c.b16 %v702, %v697
  %v908 = vpack.c.b16 %v703, %v698
  %v909 = vpack.c.b16 %v704, %v699
  %v910 = vpack.c.b16 %v705, %v700
  %v911 = vpack.c.b16 %v706, %v701
  %v912 = vpack.c.b16 %v712, %v707
  %v913 = vpack.c.b16 %v713, %v708
  %v914 = vpack.c.b16 %v714, %v709
  %v915 = vpack.c.b16 %v715, %v710
  %v916 = vpack.c.b16 %v716, %v711
  %v917 = vpack.c.b16 %v722, %v717
  %v918 = vpack.c.b16 %v723, %v718
  %v919 = vpack.c.b16 %v724, %v719
  %v920 = vpack.c.b16 %v725, %v720
  %v921 = vpack.c.b16 %v726, %v721
  %v922 = vpack.c.b16 %v732, %v727
  %v923 = vpack.c.b16 %v733, %v728
  %v924 = vpack.c.b16 %v734, %v729
  %v925 = vpack.c.b16 %v735, %v730
  %v926 = vpack.c.b16 %v736, %v731
  %v927 = vpack.c.b16 %v742, %v737
  %v928 = vpack.c.b16 %v743, %v738
  %v929 = vpack.c.b16 %v744, %v739
  %v930 = vpack.c.b16 %v745, %v740
  %v931 = vpack.c.b16 %v746, %v741
  %v932 = vpack.c.b16 %v752, %v747
  %v933 = vpack.c.b16 %v753, %v748
  %v934 = vpack.c.b16 %v754, %v749
  %v935 = vpack.c.b16 %v755, %v750
  %v936 = vpack.c.b16 %v756, %v751
  %v937 = vpack.c.b16 %v762, %v757
  %v938 = vpack.c.b16 %v763, %v758
  %v939 = vpack.c.b16 %v764, %v759
  %v940 = vpack.c.b16 %v765, %v760
  %v941 = vpack.c.b16 %v766, %v761
  %v942 = vpack.c.b16 %v772, %v767
  %v943 = vpack.c.b16 %v773, %v768
  %v944 = vpack.c.b16 %v774, %v769
  %v945 = vpack.c.b16 %v775, %v770
  %v946 = vpack.c.b16 %v776, %v771
  %v947 = vpack.c.b16 %v782, %v777
  %v948 = vpack.c.b16 %v783, %v778
  %v949 = vpack.c.b16 %v784, %v779
  %v950 = vpack.c.b16 %v785, %v780
  %v951 = vpack.c.b16 %v786, %v781
  %v952 = vpack.c.b16 %v792, %v787
  %v953 = vpack.c.b16 %v793, %v788
  %v954 = vpack.c.b16 %v794, %v789
  %v955 = vpack.c.b16 %v795, %v790
  %v956 = vpack.c.b16 %v796, %v791
  %v1157 = vunpack.c.l.b16 %v213
  %v1158 = vunpack.c.l.b16 %v214
  %v1159 = vunpack.c.l.b16 %v215
  %v1160 = vunpack.c.l.b16 %v216
  %v1161 = vunpack.c.l.b16 %v217
  %v1162 = vunpack.c.l.b16 %v218
  %v1163 = vunpack.c.l.b16 %v219
  %v1164 = vunpack.c.l.b16 %v220
  %v1165 = vunpack.c.l.b16 %v221
  %v1166 = vunpack.c.l.b16 %v222
  %v1167 = vunpack.c.l.b16 %v223
  %v1168 = vunpack.c.l.b16 %v224
  %v1169 = vunpack.c.l.b16 %v225
  %v1170 = vunpack.c.l.b16 %v226
  %v1171 = vunpack.c.l.b16 %v227
  %v1172 = vunpack.c.l.b16 %v228
  %v1173 = vunpack.c.l.b16 %v229
  %v1174 = vunpack.c.l.b16 %v230
  %v1175 = vunpack.c.l.b16 %v231
  %v1176 = vunpack.c.l.b16 %v232
  %v1177 = vunpack.c.l.b16 %v233
  %v1178 = vunpack.c.l.b16 %v234
  %v1179 = vunpack.c.l.b16 %v235
  %v1180 = vunpack.c.l.b16 %v236
  %v1181 = vunpack.c.l.b16 %v237
  %v1182 = vunpack.c.l.b16 %v238
  %v1183 = vunpack.c.l.b16 %v239
  %v1184 = vunpack.c.l.b16 %v240
  %v1185 = vunpack.c.l.b16 %v241
  %v1186 = vunpack.c.l.b16 %v242
  %v1187 = vunpack.c.l.b16 %v243
  %v1188 = vunpack.c.l.b16 %v244
  %v1189 = vunpack.c.l.b16 %v245
  %v1190 = vunpack.c.l.b16 %v246
  %v1191 = vunpack.c.l.b16 %v247
  %v1192 = vunpack.c.l.b16 %v248
  %v1193 = vunpack.c.l.b16 %v249
  %v1194 = vunpack.c.l.b16 %v250
  %v1195 = vunpack.c.l.b16 %v251
  %v1196 = vunpack.c.l.b16 %v252
  %v1197 = vunpack.c.l.b16 %v253
  %v1198 = vunpack.c.l.b16 %v254
  %v1199 = vunpack.c.l.b16 %v255
  %v1200 = vunpack.c.l.b16 %v256
  %v1201 = vunpack.c.l.b16 %v257
  %v1202 = vunpack.c.l.b16 %v258
  %v1203 = vunpack.c.l.b16 %v259
  %v1204 = vunpack.c.l.b16 %v260
  %v1205 = vunpack.c.l.b16 %v261
  %v1206 = vunpack.c.l.b16 %v262
  %v1207 = vunpack.c.l.b16 %v263
  %v1208 = vunpack.c.l.b16 %v264
  %v1209 = vunpack.c.l.b16 %v265
  %v1210 = vunpack.c.l.b16 %v266
  %v1211 = vunpack.c.l.b16 %v267
  %v1212 = vunpack.c.l.b16 %v268
  %v1213 = vunpack.c.l.b16 %v269
  %v1214 = vunpack.c.l.b16 %v270
  %v1215 = vunpack.c.l.b16 %v271
  %v1216 = vunpack.c.l.b16 %v272
  %v1217 = vunpack.c.l.b16 %v273
  %v1218 = vunpack.c.l.b16 %v274
  %v1219 = vunpack.c.l.b16 %v275
  %v1220 = vunpack.c.l.b16 %v276
  %v1221 = vunpack.c.l.b16 %v277
  %v1222 = vunpack.c.l.b16 %v278
  %v1223 = vunpack.c.l.b16 %v279
  %v1224 = vunpack.c.l.b16 %v280
  %v1225 = vunpack.c.l.b16 %v281
  %v1226 = vunpack.c.l.b16 %v282
  %v1227 = vunpack.c.l.b16 %v283
  %v1228 = vunpack.c.l.b16 %v284
  %v1229 = vpack.c.b16 %v1158, %v1157
  %v1230 = vpack.c.b16 %v1160, %v1159
  %v1231 = vpack.c.b16 %v1162, %v1161
  %v1232 = vpack.c.b16 %v1164, %v1163
  %v1233 = vpack.c.b16 %v1166, %v1165
  %v1234 = vpack.c.b16 %v1168, %v1167
  %v1235 = vpack.c.b16 %v1170, %v1169
  %v1236 = vpack.c.b16 %v1172, %v1171
  %v1237 = vpack.c.b16 %v1174, %v1173
  %v1238 = vpack.c.b16 %v1176, %v1175
  %v1239 = vpack.c.b16 %v1178, %v1177
  %v1240 = vpack.c.b16 %v1180, %v1179
  %v1241 = vpack.c.b16 %v1182, %v1181
  %v1242 = vpack.c.b16 %v1184, %v1183
  %v1243 = vpack.c.b16 %v1186, %v1185
  %v1244 = vpack.c.b16 %v1188, %v1187
  %v1245 = vpack.c.b16 %v1190, %v1189
  %v1246 = vpack.c.b16 %v1192, %v1191
  %v1247 = vpack.c.b16 %v1194, %v1193
  %v1248 = vpack.c.b16 %v1196, %v1195
  %v1249 = vpack.c.b16 %v1198, %v1197
  %v1250 = vpack.c.b16 %v1200, %v1199
  %v1251 = vpack.c.b16 %v1202, %v1201
  %v1252 = vpack.c.b16 %v1204, %v1203
  %v1253 = vpack.c.b16 %v1206, %v1205
  %v1254 = vpack.c.b16 %v1208, %v1207
  %v1255 = vpack.c.b16 %v1210, %v1209
  %v1256 = vpack.c.b16 %v1212, %v1211
  %v1257 = vpack.c.b16 %v1214, %v1213
  %v1258 = vpack.c.b16 %v1216, %v1215
  %v1259 = vpack.c.b16 %v1218, %v1217
  %v1260 = vpack.c.b16 %v1220, %v1219
  %v1261 = vpack.c.b16 %v1222, %v1221
  %v1262 = vpack.c.b16 %v1224, %v1223
  %v1263 = vpack.c.b16 %v1226, %v1225
  %v1264 = vpack.c.b16 %v1228, %v1227
  %vm1301 = vcmask 523264
  %v1303 = vsel %vm1301, %v801, 0
  %v1306 = vsel %vm1301, %v806, 0
  %v1309 = vsel %vm1301, %v811, 0
  %v1312 = vsel %vm1301, %v816, 0
  %v1315 = vsel %vm1301, %v821, 0
  %v1318 = vsel %vm1301, %v826, 0
  %v1321 = vsel %vm1301, %v831, 0
  %v1324 = vsel %vm1301, %v836, 0
  %v1327 = vsel %vm1301, %v841, 0
  %v1330 = vsel %vm1301, %v846, 0
  %v1333 = vsel %vm1301, %v851, 0
  %v1336 = vsel %vm1301, %v856, 0
  %v1339 = vsel %vm1301, %v861, 0
  %v1342 = vsel %vm1301, %v866, 0
  %v1345 = vsel %vm1301, %v871, 0
  %v1348 = vsel %vm1301, %v876, 0
  %v1351 = vsel %vm1301, %v881, 0
  %v1354 = vsel %vm1301, %v886, 0
  %v1357 = vsel %vm1301, %v891, 0
  %v1360 = vsel %vm1301, %v896, 0
  %v1363 = vsel %vm1301, %v901, 0
  %v1366 = vsel %vm1301, %v906, 0
  %v1369 = vsel %vm1301, %v911, 0
  %v1372 = vsel %vm1301, %v916, 0
  %v1375 = vsel %vm1301, %v921, 0
  %v1378 = vsel %vm1301, %v926, 0
  %v1381 = vsel %vm1301, %v931, 0
  %v1384 = vsel %vm1301, %v936, 0
  %v1387 = vsel %vm1301, %v941, 0
  %v1390 = vsel %vm1301, %v946, 0
  %v1393 = vsel %vm1301, %v951, 0
  %v1396 = vsel %vm1301, %v956, 0
  %1398 = vmatprep.subr.bf16.mxu0 0
  %1399 = vmatpush1.bf16.msra.mxu0 %v1229
  %1400 = vmatprep.subr.bf16.mxu0 0
  %1401 = vmatpush1.bf16.msra.mxu0 %v1230
  %1402 = vmatprep.subr.bf16.mxu0 0
  %1403 = vmatpush1.bf16.msra.mxu0 %v1231
  %1404 = vmatprep.subr.bf16.mxu0 0
  %1405 = vmatpush1.bf16.msra.mxu0 %v1232
  %1406 = vmatprep.subr.bf16.mxu0 0
  %1407 = vmatpush1.bf16.msra.mxu0 %v1233
  %1408 = vmatprep.subr.bf16.mxu0 0
  %1409 = vmatpush1.bf16.msra.mxu0 %v1234
  %1410 = vmatprep.subr.bf16.mxu0 0
  %1411 = vmatpush1.bf16.msra.mxu0 %v1235
  %1412 = vmatprep.subr.bf16.mxu0 0
  %1413 = vmatpush1.bf16.msra.mxu0 %v1236
  %1414 = vmatprep.subr.bf16.mxu0 0
  %1415 = vmatpush1.bf16.msra.mxu0 %v1237
  %1416 = vmatprep.subr.bf16.mxu0 0
  %1417 = vmatpush1.bf16.msra.mxu0 %v1238
  %1418 = vmatprep.subr.bf16.mxu0 0
  %1419 = vmatpush1.bf16.msra.mxu0 %v1239
  %1420 = vmatprep.subr.bf16.mxu0 0
  %1421 = vmatpush1.bf16.msra.mxu0 %v1240
  %1422 = vmatprep.subr.bf16.mxu0 0
  %1423 = vmatpush1.bf16.msra.mxu0 %v1241
  %1424 = vmatprep.subr.bf16.mxu0 0
  %1425 = vmatpush1.bf16.msra.mxu0 %v1242
  %1426 = vmatprep.subr.bf16.mxu0 0
  %1427 = vmatpush1.bf16.msra.mxu0 %v1243
  %1428 = vmatprep.subr.bf16.mxu0 0
  %1429 = vmatpush1.bf16.msra.mxu0 %v1244
  %1430 = vmatprep.mubr.bf16.mxu0 %v798
  %1431 = vmatmul.mubr.bf16.gmra.mrb[0].mxu0 %v797
  %v1432 = vpop.f32.mrb[0].mxu0
  %v1433 = vadd.f32 0.0, %v1432
  %v1434 = vpop.f32.mrb[0].mxu0
  %v1435 = vpop.f32.mrb[0].mxu0
  %v1436 = vadd.f32 0.0, %v1435
  %v1437 = vpop.f32.mrb[0].mxu0
  %1438 = vmatprep.mubr.bf16.mxu0 %v803
  %1439 = vmatmul.mubr.bf16.gmra.mrb[0].mxu0 %v802
  %v1440 = vpop.f32.mrb[0].mxu0
  %v1441 = vadd.f32 0.0, %v1440
  %v1442 = vpop.f32.mrb[0].mxu0
  %v1443 = vpop.f32.mrb[0].mxu0
  %v1444 = vadd.f32 0.0, %v1443
  %v1445 = vpop.f32.mrb[0].mxu0
  %1446 = vmatprep.mubr.bf16.mxu0 %v808
  %1447 = vmatmul.mubr.bf16.gmra.mrb[0].mxu0 %v807
  %v1448 = vpop.f32.mrb[0].mxu0
  %v1449 = vadd.f32 0.0, %v1448
  %v1450 = vpop.f32.mrb[0].mxu0
  %v1451 = vpop.f32.mrb[0].mxu0
  %v1452 = vadd.f32 0.0, %v1451
  %v1453 = vpop.f32.mrb[0].mxu0
  %1454 = vmatprep.mubr.bf16.mxu0 %v813
  %1455 = vmatmul.mubr.bf16.gmra.mrb[0].mxu0 %v812
  %v1456 = vpop.f32.mrb[0].mxu0
  %v1457 = vadd.f32 0.0, %v1456
  %v1458 = vpop.f32.mrb[0].mxu0
  %v1459 = vpop.f32.mrb[0].mxu0
  %v1460 = vadd.f32 0.0, %v1459
  %v1461 = vpop.f32.mrb[0].mxu0
  %1462 = vmatprep.mubr.bf16.mxu0 %v818
  %1463 = vmatmul.mubr.bf16.gmra.mrb[0].mxu0 %v817
  %v1464 = vpop.f32.mrb[0].mxu0
  %v1465 = vadd.f32 0.0, %v1464
  %v1466 = vpop.f32.mrb[0].mxu0
  %v1467 = vpop.f32.mrb[0].mxu0
  %v1468 = vadd.f32 0.0, %v1467
  %v1469 = vpop.f32.mrb[0].mxu0
  %1470 = vmatprep.mubr.bf16.mxu0 %v823
  %1471 = vmatmul.mubr.bf16.gmra.mrb[0].mxu0 %v822
  %v1472 = vpop.f32.mrb[0].mxu0
  %v1473 = vadd.f32 0.0, %v1472
  %v1474 = vpop.f32.mrb[0].mxu0
  %v1475 = vpop.f32.mrb[0].mxu0
  %v1476 = vadd.f32 0.0, %v1475
  %v1477 = vpop.f32.mrb[0].mxu0
  %1478 = vmatprep.mubr.bf16.mxu0 %v828
  %1479 = vmatmul.mubr.bf16.gmra.mrb[0].mxu0 %v827
  %v1480 = vpop.f32.mrb[0].mxu0
  %v1481 = vadd.f32 0.0, %v1480
  %v1482 = vpop.f32.mrb[0].mxu0
  %v1483 = vpop.f32.mrb[0].mxu0
  %v1484 = vadd.f32 0.0, %v1483
  %v1485 = vpop.f32.mrb[0].mxu0
  %1486 = vmatprep.mubr.bf16.mxu0 %v833
  %1487 = vmatmul.mubr.bf16.gmra.mrb[0].mxu0 %v832
  %v1488 = vpop.f32.mrb[0].mxu0
  %v1489 = vadd.f32 0.0, %v1488
  %v1490 = vpop.f32.mrb[0].mxu0
  %v1491 = vpop.f32.mrb[0].mxu0
  %v1492 = vadd.f32 0.0, %v1491
  %v1493 = vpop.f32.mrb[0].mxu0
  %1494 = vmatprep.mubr.bf16.mxu0 %v838
  %1495 = vmatmul.mubr.bf16.gmra.mrb[0].mxu0 %v837
  %v1496 = vpop.f32.mrb[0].mxu0
  %v1497 = vadd.f32 0.0, %v1496
  %v1498 = vpop.f32.mrb[0].mxu0
  %v1499 = vpop.f32.mrb[0].mxu0
  %v1500 = vadd.f32 0.0, %v1499
  %v1501 = vpop.f32.mrb[0].mxu0
  %1502 = vmatprep.mubr.bf16.mxu0 %v843
  %1503 = vmatmul.mubr.bf16.gmra.mrb[0].mxu0 %v842
  %v1504 = vpop.f32.mrb[0].mxu0
  %v1505 = vadd.f32 0.0, %v1504
  %v1506 = vpop.f32.mrb[0].mxu0
  %v1507 = vpop.f32.mrb[0].mxu0
  %v1508 = vadd.f32 0.0, %v1507
  %v1509 = vpop.f32.mrb[0].mxu0
  %1510 = vmatprep.mubr.bf16.mxu0 %v848
  %1511 = vmatmul.mubr.bf16.gmra.mrb[0].mxu0 %v847
  %v1512 = vpop.f32.mrb[0].mxu0
  %v1513 = vadd.f32 0.0, %v1512
  %v1514 = vpop.f32.mrb[0].mxu0
  %v1515 = vpop.f32.mrb[0].mxu0
  %v1516 = vadd.f32 0.0, %v1515
  %v1517 = vpop.f32.mrb[0].mxu0
  %1518 = vmatprep.mubr.bf16.mxu0 %v853
  %1519 = vmatmul.mubr.bf16.gmra.mrb[0].mxu0 %v852
  %v1520 = vpop.f32.mrb[0].mxu0
  %v1521 = vadd.f32 0.0, %v1520
  %v1522 = vpop.f32.mrb[0].mxu0
  %v1523 = vpop.f32.mrb[0].mxu0
  %v1524 = vadd.f32 0.0, %v1523
  %v1525 = vpop.f32.mrb[0].mxu0
  %1526 = vmatprep.mubr.bf16.mxu0 %v858
  %1527 = vmatmul.mubr.bf16.gmra.mrb[0].mxu0 %v857
  %v1528 = vpop.f32.mrb[0].mxu0
  %v1529 = vadd.f32 0.0, %v1528
  %v1530 = vpop.f32.mrb[0].mxu0
  %v1531 = vpop.f32.mrb[0].mxu0
  %v1532 = vadd.f32 0.0, %v1531
  %v1533 = vpop.f32.mrb[0].mxu0
  %1534 = vmatprep.mubr.bf16.mxu0 %v863
  %1535 = vmatmul.mubr.bf16.gmra.mrb[0].mxu0 %v862
  %v1536 = vpop.f32.mrb[0].mxu0
  %v1537 = vadd.f32 0.0, %v1536
  %v1538 = vpop.f32.mrb[0].mxu0
  %v1539 = vpop.f32.mrb[0].mxu0
  %v1540 = vadd.f32 0.0, %v1539
  %v1541 = vpop.f32.mrb[0].mxu0
  %1542 = vmatprep.mubr.bf16.mxu0 %v868
  %1543 = vmatmul.mubr.bf16.gmra.mrb[0].mxu0 %v867
  %v1544 = vpop.f32.mrb[0].mxu0
  %v1545 = vadd.f32 0.0, %v1544
  %v1546 = vpop.f32.mrb[0].mxu0
  %v1547 = vpop.f32.mrb[0].mxu0
  %v1548 = vadd.f32 0.0, %v1547
  %v1549 = vpop.f32.mrb[0].mxu0
  %1550 = vmatprep.mubr.bf16.mxu0 %v873
  %1551 = vmatmul.mubr.bf16.gmra.mrb[0].mxu0 %v872
  %v1552 = vpop.f32.mrb[0].mxu0
  %v1553 = vadd.f32 0.0, %v1552
  %v1554 = vpop.f32.mrb[0].mxu0
  %v1555 = vpop.f32.mrb[0].mxu0
  %v1556 = vadd.f32 0.0, %v1555
  %v1557 = vpop.f32.mrb[0].mxu0
  %1558 = vmatprep.mubr.bf16.mxu0 %v878
  %1559 = vmatmul.mubr.bf16.gmra.mrb[0].mxu0 %v877
  %v1560 = vpop.f32.mrb[0].mxu0
  %v1561 = vadd.f32 0.0, %v1560
  %v1562 = vpop.f32.mrb[0].mxu0
  %v1563 = vpop.f32.mrb[0].mxu0
  %v1564 = vadd.f32 0.0, %v1563
  %v1565 = vpop.f32.mrb[0].mxu0
  %1566 = vmatprep.mubr.bf16.mxu0 %v883
  %1567 = vmatmul.mubr.bf16.gmra.mrb[0].mxu0 %v882
  %v1568 = vpop.f32.mrb[0].mxu0
  %v1569 = vadd.f32 0.0, %v1568
  %v1570 = vpop.f32.mrb[0].mxu0
  %v1571 = vpop.f32.mrb[0].mxu0
  %v1572 = vadd.f32 0.0, %v1571
  %v1573 = vpop.f32.mrb[0].mxu0
  %1574 = vmatprep.mubr.bf16.mxu0 %v888
  %1575 = vmatmul.mubr.bf16.gmra.mrb[0].mxu0 %v887
  %v1576 = vpop.f32.mrb[0].mxu0
  %v1577 = vadd.f32 0.0, %v1576
  %v1578 = vpop.f32.mrb[0].mxu0
  %v1579 = vpop.f32.mrb[0].mxu0
  %v1580 = vadd.f32 0.0, %v1579
  %v1581 = vpop.f32.mrb[0].mxu0
  %1582 = vmatprep.mubr.bf16.mxu0 %v893
  %1583 = vmatmul.mubr.bf16.gmra.mrb[0].mxu0 %v892
  %v1584 = vpop.f32.mrb[0].mxu0
  %v1585 = vadd.f32 0.0, %v1584
  %v1586 = vpop.f32.mrb[0].mxu0
  %v1587 = vpop.f32.mrb[0].mxu0
  %v1588 = vadd.f32 0.0, %v1587
  %v1589 = vpop.f32.mrb[0].mxu0
  %1590 = vmatprep.mubr.bf16.mxu0 %v898
  %1591 = vmatmul.mubr.bf16.gmra.mrb[0].mxu0 %v897
  %v1592 = vpop.f32.mrb[0].mxu0
  %v1593 = vadd.f32 0.0, %v1592
  %v1594 = vpop.f32.mrb[0].mxu0
  %v1595 = vpop.f32.mrb[0].mxu0
  %v1596 = vadd.f32 0.0, %v1595
  %v1597 = vpop.f32.mrb[0].mxu0
  %1598 = vmatprep.mubr.bf16.mxu0 %v903
  %1599 = vmatmul.mubr.bf16.gmra.mrb[0].mxu0 %v902
  %v1600 = vpop.f32.mrb[0].mxu0
  %v1601 = vadd.f32 0.0, %v1600
  %v1602 = vpop.f32.mrb[0].mxu0
  %v1603 = vpop.f32.mrb[0].mxu0
  %v1604 = vadd.f32 0.0, %v1603
  %v1605 = vpop.f32.mrb[0].mxu0
  %1606 = vmatprep.mubr.bf16.mxu0 %v908
  %1607 = vmatmul.mubr.bf16.gmra.mrb[0].mxu0 %v907
  %v1608 = vpop.f32.mrb[0].mxu0
  %v1609 = vadd.f32 0.0, %v1608
  %v1610 = vpop.f32.mrb[0].mxu0
  %v1611 = vpop.f32.mrb[0].mxu0
  %v1612 = vadd.f32 0.0, %v1611
  %v1613 = vpop.f32.mrb[0].mxu0
  %1614 = vmatprep.mubr.bf16.mxu0 %v913
  %1615 = vmatmul.mubr.bf16.gmra.mrb[0].mxu0 %v912
  %v1616 = vpop.f32.mrb[0].mxu0
  %v1617 = vadd.f32 0.0, %v1616
  %v1618 = vpop.f32.mrb[0].mxu0
  %v1619 = vpop.f32.mrb[0].mxu0
  %v1620 = vadd.f32 0.0, %v1619
  %v1621 = vpop.f32.mrb[0].mxu0
  %1622 = vmatprep.mubr.bf16.mxu0 %v918
  %1623 = vmatmul.mubr.bf16.gmra.mrb[0].mxu0 %v917
  %v1624 = vpop.f32.mrb[0].mxu0
  %v1625 = vadd.f32 0.0, %v1624
  %v1626 = vpop.f32.mrb[0].mxu0
  %v1627 = vpop.f32.mrb[0].mxu0
  %v1628 = vadd.f32 0.0, %v1627
  %v1629 = vpop.f32.mrb[0].mxu0
  %1630 = vmatprep.mubr.bf16.mxu0 %v923
  %1631 = vmatmul.mubr.bf16.gmra.mrb[0].mxu0 %v922
  %v1632 = vpop.f32.mrb[0].mxu0
  %v1633 = vadd.f32 0.0, %v1632
  %v1634 = vpop.f32.mrb[0].mxu0
  %v1635 = vpop.f32.mrb[0].mxu0
  %v1636 = vadd.f32 0.0, %v1635
  %v1637 = vpop.f32.mrb[0].mxu0
  %1638 = vmatprep.mubr.bf16.mxu0 %v928
  %1639 = vmatmul.mubr.bf16.gmra.mrb[0].mxu0 %v927
  %v1640 = vpop.f32.mrb[0].mxu0
  %v1641 = vadd.f32 0.0, %v1640
  %v1642 = vpop.f32.mrb[0].mxu0
  %v1643 = vpop.f32.mrb[0].mxu0
  %v1644 = vadd.f32 0.0, %v1643
  %v1645 = vpop.f32.mrb[0].mxu0
  %1646 = vmatprep.mubr.bf16.mxu0 %v933
  %1647 = vmatmul.mubr.bf16.gmra.mrb[0].mxu0 %v932
  %v1648 = vpop.f32.mrb[0].mxu0
  %v1649 = vadd.f32 0.0, %v1648
  %v1650 = vpop.f32.mrb[0].mxu0
  %v1651 = vpop.f32.mrb[0].mxu0
  %v1652 = vadd.f32 0.0, %v1651
  %v1653 = vpop.f32.mrb[0].mxu0
  %1654 = vmatprep.mubr.bf16.mxu0 %v938
  %1655 = vmatmul.mubr.bf16.gmra.mrb[0].mxu0 %v937
  %v1656 = vpop.f32.mrb[0].mxu0
  %v1657 = vadd.f32 0.0, %v1656
  %v1658 = vpop.f32.mrb[0].mxu0
  %v1659 = vpop.f32.mrb[0].mxu0
  %v1660 = vadd.f32 0.0, %v1659
  %v1661 = vpop.f32.mrb[0].mxu0
  %1662 = vmatprep.mubr.bf16.mxu0 %v943
  %1663 = vmatmul.mubr.bf16.gmra.mrb[0].mxu0 %v942
  %v1664 = vpop.f32.mrb[0].mxu0
  %v1665 = vadd.f32 0.0, %v1664
  %v1666 = vpop.f32.mrb[0].mxu0
  %v1667 = vpop.f32.mrb[0].mxu0
  %v1668 = vadd.f32 0.0, %v1667
  %v1669 = vpop.f32.mrb[0].mxu0
  %1670 = vmatprep.mubr.bf16.mxu0 %v948
  %1671 = vmatmul.mubr.bf16.gmra.mrb[0].mxu0 %v947
  %v1672 = vpop.f32.mrb[0].mxu0
  %v1673 = vadd.f32 0.0, %v1672
  %v1674 = vpop.f32.mrb[0].mxu0
  %v1675 = vpop.f32.mrb[0].mxu0
  %v1676 = vadd.f32 0.0, %v1675
  %v1677 = vpop.f32.mrb[0].mxu0
  %1678 = vmatprep.mubr.bf16.mxu0 %v953
  %1679 = vmatmul.mubr.bf16.gmra.mrb[0].mxu0 %v952
  %v1680 = vpop.f32.mrb[0].mxu0
  %v1681 = vadd.f32 0.0, %v1680
  %v1682 = vpop.f32.mrb[0].mxu0
  %v1683 = vpop.f32.mrb[0].mxu0
  %v1684 = vadd.f32 0.0, %v1683
  %v1685 = vpop.f32.mrb[0].mxu0
  %1686 = vdwg.mxu0
  %1687 = vmatprep.subr.bf16.mxu0 0
  %1688 = vmatpush1.bf16.msra.mxu0 %v1245
  %1689 = vmatprep.subr.bf16.mxu0 0
  %1690 = vmatpush1.bf16.msra.mxu0 %v1246
  %1691 = vmatprep.subr.bf16.mxu0 0
  %1692 = vmatpush1.bf16.msra.mxu0 %v1247
  %1693 = vmatprep.subr.bf16.mxu0 0
  %1694 = vmatpush1.bf16.msra.mxu0 %v1248
  %1695 = vmatprep.subr.bf16.mxu0 0
  %1696 = vmatpush1.bf16.msra.mxu0 %v1249
  %1697 = vmatprep.subr.bf16.mxu0 0
  %1698 = vmatpush1.bf16.msra.mxu0 %v1250
  %1699 = vmatprep.subr.bf16.mxu0 0
  %1700 = vmatpush1.bf16.msra.mxu0 %v1251
  %1701 = vmatprep.subr.bf16.mxu0 0
  %1702 = vmatpush1.bf16.msra.mxu0 %v1252
  %1703 = vmatprep.subr.bf16.mxu0 0
  %1704 = vmatpush1.bf16.msra.mxu0 %v1253
  %1705 = vmatprep.subr.bf16.mxu0 0
  %1706 = vmatpush1.bf16.msra.mxu0 %v1254
  %1707 = vmatprep.subr.bf16.mxu0 0
  %1708 = vmatpush1.bf16.msra.mxu0 %v1255
  %1709 = vmatprep.subr.bf16.mxu0 0
  %1710 = vmatpush1.bf16.msra.mxu0 %v1256
  %1711 = vmatprep.subr.bf16.mxu0 0
  %1712 = vmatpush1.bf16.msra.mxu0 %v1257
  %1713 = vmatprep.subr.bf16.mxu0 0
  %1714 = vmatpush1.bf16.msra.mxu0 %v1258
  %1715 = vmatprep.subr.bf16.mxu0 0
  %1716 = vmatpush1.bf16.msra.mxu0 %v1259
  %1717 = vmatprep.subr.bf16.mxu0 0
  %1718 = vmatpush1.bf16.msra.mxu0 %v1260
  %1719 = vmatprep.mubr.bf16.mxu0 %v800
  %1720 = vmatmul.mubr.bf16.gmra.mrb[0].mxu0 %v799
  %v1721 = vpop.f32.mrb[0].mxu0
  %v1722 = vadd.f32 %v1433, %v1721
  %v1723 = vpop.f32.mrb[0].mxu0
  %v1724 = vpop.f32.mrb[0].mxu0
  %v1725 = vadd.f32 %v1436, %v1724
  %v1726 = vpop.f32.mrb[0].mxu0
  %1727 = vmatprep.mubr.bf16.mxu0 %v805
  %1728 = vmatmul.mubr.bf16.gmra.mrb[0].mxu0 %v804
  %v1729 = vpop.f32.mrb[0].mxu0
  %v1730 = vadd.f32 %v1441, %v1729
  %v1731 = vpop.f32.mrb[0].mxu0
  %v1732 = vpop.f32.mrb[0].mxu0
  %v1733 = vadd.f32 %v1444, %v1732
  %v1734 = vpop.f32.mrb[0].mxu0
  %1735 = vmatprep.mubr.bf16.mxu0 %v810
  %1736 = vmatmul.mubr.bf16.gmra.mrb[0].mxu0 %v809
  %v1737 = vpop.f32.mrb[0].mxu0
  %v1738 = vadd.f32 %v1449, %v1737
  %v1739 = vpop.f32.mrb[0].mxu0
  %v1740 = vpop.f32.mrb[0].mxu0
  %v1741 = vadd.f32 %v1452, %v1740
  %v1742 = vpop.f32.mrb[0].mxu0
  %1743 = vmatprep.mubr.bf16.mxu0 %v815
  %1744 = vmatmul.mubr.bf16.gmra.mrb[0].mxu0 %v814
  %v1745 = vpop.f32.mrb[0].mxu0
  %v1746 = vadd.f32 %v1457, %v1745
  %v1747 = vpop.f32.mrb[0].mxu0
  %v1748 = vpop.f32.mrb[0].mxu0
  %v1749 = vadd.f32 %v1460, %v1748
  %v1750 = vpop.f32.mrb[0].mxu0
  %1751 = vmatprep.mubr.bf16.mxu0 %v820
  %1752 = vmatmul.mubr.bf16.gmra.mrb[0].mxu0 %v819
  %v1753 = vpop.f32.mrb[0].mxu0
  %v1754 = vadd.f32 %v1465, %v1753
  %v1755 = vpop.f32.mrb[0].mxu0
  %v1756 = vpop.f32.mrb[0].mxu0
  %v1757 = vadd.f32 %v1468, %v1756
  %v1758 = vpop.f32.mrb[0].mxu0
  %1759 = vmatprep.mubr.bf16.mxu0 %v825
  %1760 = vmatmul.mubr.bf16.gmra.mrb[0].mxu0 %v824
  %v1761 = vpop.f32.mrb[0].mxu0
  %v1762 = vadd.f32 %v1473, %v1761
  %v1763 = vpop.f32.mrb[0].mxu0
  %v1764 = vpop.f32.mrb[0].mxu0
  %v1765 = vadd.f32 %v1476, %v1764
  %v1766 = vpop.f32.mrb[0].mxu0
  %1767 = vmatprep.mubr.bf16.mxu0 %v830
  %1768 = vmatmul.mubr.bf16.gmra.mrb[0].mxu0 %v829
  %v1769 = vpop.f32.mrb[0].mxu0
  %v1770 = vadd.f32 %v1481, %v1769
  %v1771 = vpop.f32.mrb[0].mxu0
  %v1772 = vpop.f32.mrb[0].mxu0
  %v1773 = vadd.f32 %v1484, %v1772
  %v1774 = vpop.f32.mrb[0].mxu0
  %1775 = vmatprep.mubr.bf16.mxu0 %v835
  %1776 = vmatmul.mubr.bf16.gmra.mrb[0].mxu0 %v834
  %v1777 = vpop.f32.mrb[0].mxu0
  %v1778 = vadd.f32 %v1489, %v1777
  %v1779 = vpop.f32.mrb[0].mxu0
  %v1780 = vpop.f32.mrb[0].mxu0
  %v1781 = vadd.f32 %v1492, %v1780
  %v1782 = vpop.f32.mrb[0].mxu0
  %1783 = vmatprep.mubr.bf16.mxu0 %v840
  %1784 = vmatmul.mubr.bf16.gmra.mrb[0].mxu0 %v839
  %v1785 = vpop.f32.mrb[0].mxu0
  %v1786 = vadd.f32 %v1497, %v1785
  %v1787 = vpop.f32.mrb[0].mxu0
  %v1788 = vpop.f32.mrb[0].mxu0
  %v1789 = vadd.f32 %v1500, %v1788
  %v1790 = vpop.f32.mrb[0].mxu0
  %1791 = vmatprep.mubr.bf16.mxu0 %v845
  %1792 = vmatmul.mubr.bf16.gmra.mrb[0].mxu0 %v844
  %v1793 = vpop.f32.mrb[0].mxu0
  %v1794 = vadd.f32 %v1505, %v1793
  %v1795 = vpop.f32.mrb[0].mxu0
  %v1796 = vpop.f32.mrb[0].mxu0
  %v1797 = vadd.f32 %v1508, %v1796
  %v1798 = vpop.f32.mrb[0].mxu0
  %1799 = vmatprep.mubr.bf16.mxu0 %v850
  %1800 = vmatmul.mubr.bf16.gmra.mrb[0].mxu0 %v849
  %v1801 = vpop.f32.mrb[0].mxu0
  %v1802 = vadd.f32 %v1513, %v1801
  %v1803 = vpop.f32.mrb[0].mxu0
  %v1804 = vpop.f32.mrb[0].mxu0
  %v1805 = vadd.f32 %v1516, %v1804
  %v1806 = vpop.f32.mrb[0].mxu0
  %1807 = vmatprep.mubr.bf16.mxu0 %v855
  %1808 = vmatmul.mubr.bf16.gmra.mrb[0].mxu0 %v854
  %v1809 = vpop.f32.mrb[0].mxu0
  %v1810 = vadd.f32 %v1521, %v1809
  %v1811 = vpop.f32.mrb[0].mxu0
  %v1812 = vpop.f32.mrb[0].mxu0
  %v1813 = vadd.f32 %v1524, %v1812
  %v1814 = vpop.f32.mrb[0].mxu0
  %1815 = vmatprep.mubr.bf16.mxu0 %v860
  %1816 = vmatmul.mubr.bf16.gmra.mrb[0].mxu0 %v859
  %v1817 = vpop.f32.mrb[0].mxu0
  %v1818 = vadd.f32 %v1529, %v1817
  %v1819 = vpop.f32.mrb[0].mxu0
  %v1820 = vpop.f32.mrb[0].mxu0
  %v1821 = vadd.f32 %v1532, %v1820
  %v1822 = vpop.f32.mrb[0].mxu0
  %1823 = vmatprep.mubr.bf16.mxu0 %v865
  %1824 = vmatmul.mubr.bf16.gmra.mrb[0].mxu0 %v864
  %v1825 = vpop.f32.mrb[0].mxu0
  %v1826 = vadd.f32 %v1537, %v1825
  %v1827 = vpop.f32.mrb[0].mxu0
  %v1828 = vpop.f32.mrb[0].mxu0
  %v1829 = vadd.f32 %v1540, %v1828
  %v1830 = vpop.f32.mrb[0].mxu0
  %1831 = vmatprep.mubr.bf16.mxu0 %v870
  %1832 = vmatmul.mubr.bf16.gmra.mrb[0].mxu0 %v869
  %v1833 = vpop.f32.mrb[0].mxu0
  %v1834 = vadd.f32 %v1545, %v1833
  %v1835 = vpop.f32.mrb[0].mxu0
  %v1836 = vpop.f32.mrb[0].mxu0
  %v1837 = vadd.f32 %v1548, %v1836
  %v1838 = vpop.f32.mrb[0].mxu0
  %1839 = vmatprep.mubr.bf16.mxu0 %v875
  %1840 = vmatmul.mubr.bf16.gmra.mrb[0].mxu0 %v874
  %v1841 = vpop.f32.mrb[0].mxu0
  %v1842 = vadd.f32 %v1553, %v1841
  %v1843 = vpop.f32.mrb[0].mxu0
  %v1844 = vpop.f32.mrb[0].mxu0
  %v1845 = vadd.f32 %v1556, %v1844
  %v1846 = vpop.f32.mrb[0].mxu0
  %1847 = vmatprep.mubr.bf16.mxu0 %v880
  %1848 = vmatmul.mubr.bf16.gmra.mrb[0].mxu0 %v879
  %v1849 = vpop.f32.mrb[0].mxu0
  %v1850 = vadd.f32 %v1561, %v1849
  %v1851 = vpop.f32.mrb[0].mxu0
  %v1852 = vpop.f32.mrb[0].mxu0
  %v1853 = vadd.f32 %v1564, %v1852
  %v1854 = vpop.f32.mrb[0].mxu0
  %1855 = vmatprep.mubr.bf16.mxu0 %v885
  %1856 = vmatmul.mubr.bf16.gmra.mrb[0].mxu0 %v884
  %v1857 = vpop.f32.mrb[0].mxu0
  %v1858 = vadd.f32 %v1569, %v1857
  %v1859 = vpop.f32.mrb[0].mxu0
  %v1860 = vpop.f32.mrb[0].mxu0
  %v1861 = vadd.f32 %v1572, %v1860
  %v1862 = vpop.f32.mrb[0].mxu0
  %1863 = vmatprep.mubr.bf16.mxu0 %v890
  %1864 = vmatmul.mubr.bf16.gmra.mrb[0].mxu0 %v889
  %v1865 = vpop.f32.mrb[0].mxu0
  %v1866 = vadd.f32 %v1577, %v1865
  %v1867 = vpop.f32.mrb[0].mxu0
  %v1868 = vpop.f32.mrb[0].mxu0
  %v1869 = vadd.f32 %v1580, %v1868
  %v1870 = vpop.f32.mrb[0].mxu0
  %1871 = vmatprep.mubr.bf16.mxu0 %v895
  %1872 = vmatmul.mubr.bf16.gmra.mrb[0].mxu0 %v894
  %v1873 = vpop.f32.mrb[0].mxu0
  %v1874 = vadd.f32 %v1585, %v1873
  %v1875 = vpop.f32.mrb[0].mxu0
  %v1876 = vpop.f32.mrb[0].mxu0
  %v1877 = vadd.f32 %v1588, %v1876
  %v1878 = vpop.f32.mrb[0].mxu0
  %1879 = vmatprep.mubr.bf16.mxu0 %v900
  %1880 = vmatmul.mubr.bf16.gmra.mrb[0].mxu0 %v899
  %v1881 = vpop.f32.mrb[0].mxu0
  %v1882 = vadd.f32 %v1593, %v1881
  %v1883 = vpop.f32.mrb[0].mxu0
  %v1884 = vpop.f32.mrb[0].mxu0
  %v1885 = vadd.f32 %v1596, %v1884
  %v1886 = vpop.f32.mrb[0].mxu0
  %1887 = vmatprep.mubr.bf16.mxu0 %v905
  %1888 = vmatmul.mubr.bf16.gmra.mrb[0].mxu0 %v904
  %v1889 = vpop.f32.mrb[0].mxu0
  %v1890 = vadd.f32 %v1601, %v1889
  %v1891 = vpop.f32.mrb[0].mxu0
  %v1892 = vpop.f32.mrb[0].mxu0
  %v1893 = vadd.f32 %v1604, %v1892
  %v1894 = vpop.f32.mrb[0].mxu0
  %1895 = vmatprep.mubr.bf16.mxu0 %v910
  %1896 = vmatmul.mubr.bf16.gmra.mrb[0].mxu0 %v909
  %v1897 = vpop.f32.mrb[0].mxu0
  %v1898 = vadd.f32 %v1609, %v1897
  %v1899 = vpop.f32.mrb[0].mxu0
  %v1900 = vpop.f32.mrb[0].mxu0
  %v1901 = vadd.f32 %v1612, %v1900
  %v1902 = vpop.f32.mrb[0].mxu0
  %1903 = vmatprep.mubr.bf16.mxu0 %v915
  %1904 = vmatmul.mubr.bf16.gmra.mrb[0].mxu0 %v914
  %v1905 = vpop.f32.mrb[0].mxu0
  %v1906 = vadd.f32 %v1617, %v1905
  %v1907 = vpop.f32.mrb[0].mxu0
  %v1908 = vpop.f32.mrb[0].mxu0
  %v1909 = vadd.f32 %v1620, %v1908
  %v1910 = vpop.f32.mrb[0].mxu0
  %1911 = vmatprep.mubr.bf16.mxu0 %v920
  %1912 = vmatmul.mubr.bf16.gmra.mrb[0].mxu0 %v919
  %v1913 = vpop.f32.mrb[0].mxu0
  %v1914 = vadd.f32 %v1625, %v1913
  %v1915 = vpop.f32.mrb[0].mxu0
  %v1916 = vpop.f32.mrb[0].mxu0
  %v1917 = vadd.f32 %v1628, %v1916
  %v1918 = vpop.f32.mrb[0].mxu0
  %1919 = vmatprep.mubr.bf16.mxu0 %v925
  %1920 = vmatmul.mubr.bf16.gmra.mrb[0].mxu0 %v924
  %v1921 = vpop.f32.mrb[0].mxu0
  %v1922 = vadd.f32 %v1633, %v1921
  %v1923 = vpop.f32.mrb[0].mxu0
  %v1924 = vpop.f32.mrb[0].mxu0
  %v1925 = vadd.f32 %v1636, %v1924
  %v1926 = vpop.f32.mrb[0].mxu0
  %1927 = vmatprep.mubr.bf16.mxu0 %v930
  %1928 = vmatmul.mubr.bf16.gmra.mrb[0].mxu0 %v929
  %v1929 = vpop.f32.mrb[0].mxu0
  %v1930 = vadd.f32 %v1641, %v1929
  %v1931 = vpop.f32.mrb[0].mxu0
  %v1932 = vpop.f32.mrb[0].mxu0
  %v1933 = vadd.f32 %v1644, %v1932
  %v1934 = vpop.f32.mrb[0].mxu0
  %1935 = vmatprep.mubr.bf16.mxu0 %v935
  %1936 = vmatmul.mubr.bf16.gmra.mrb[0].mxu0 %v934
  %v1937 = vpop.f32.mrb[0].mxu0
  %v1938 = vadd.f32 %v1649, %v1937
  %v1939 = vpop.f32.mrb[0].mxu0
  %v1940 = vpop.f32.mrb[0].mxu0
  %v1941 = vadd.f32 %v1652, %v1940
  %v1942 = vpop.f32.mrb[0].mxu0
  %1943 = vmatprep.mubr.bf16.mxu0 %v940
  %1944 = vmatmul.mubr.bf16.gmra.mrb[0].mxu0 %v939
  %v1945 = vpop.f32.mrb[0].mxu0
  %v1946 = vadd.f32 %v1657, %v1945
  %v1947 = vpop.f32.mrb[0].mxu0
  %v1948 = vpop.f32.mrb[0].mxu0
  %v1949 = vadd.f32 %v1660, %v1948
  %v1950 = vpop.f32.mrb[0].mxu0
  %1951 = vmatprep.mubr.bf16.mxu0 %v945
  %1952 = vmatmul.mubr.bf16.gmra.mrb[0].mxu0 %v944
  %v1953 = vpop.f32.mrb[0].mxu0
  %v1954 = vadd.f32 %v1665, %v1953
  %v1955 = vpop.f32.mrb[0].mxu0
  %v1956 = vpop.f32.mrb[0].mxu0
  %v1957 = vadd.f32 %v1668, %v1956
  %v1958 = vpop.f32.mrb[0].mxu0
  %1959 = vmatprep.mubr.bf16.mxu0 %v950
  %1960 = vmatmul.mubr.bf16.gmra.mrb[0].mxu0 %v949
  %v1961 = vpop.f32.mrb[0].mxu0
  %v1962 = vadd.f32 %v1673, %v1961
  %v1963 = vpop.f32.mrb[0].mxu0
  %v1964 = vpop.f32.mrb[0].mxu0
  %v1965 = vadd.f32 %v1676, %v1964
  %v1966 = vpop.f32.mrb[0].mxu0
  %1967 = vmatprep.mubr.bf16.mxu0 %v955
  %1968 = vmatmul.mubr.bf16.gmra.mrb[0].mxu0 %v954
  %v1969 = vpop.f32.mrb[0].mxu0
  %v1970 = vadd.f32 %v1681, %v1969
  %v1971 = vpop.f32.mrb[0].mxu0
  %v1972 = vpop.f32.mrb[0].mxu0
  %v1973 = vadd.f32 %v1684, %v1972
  %v1974 = vpop.f32.mrb[0].mxu0
  %1975 = vdwg.mxu0
  %1976 = vmatprep.subr.bf16.mxu0 0
  %1977 = vmatpush1.bf16.msra.mxu0 %v1261
  %1978 = vmatprep.subr.bf16.mxu0 0
  %1979 = vmatpush1.bf16.msra.mxu0 %v1262
  %1980 = vmatprep.subr.bf16.mxu0 0
  %1981 = vmatpush1.bf16.msra.mxu0 %v1263
  %1982 = vmatprep.subr.bf16.mxu0 0
  %1983 = vmatpush1.bf16.msra.mxu0 %v1264
  %1984 = vmatprep.subr.bf16.mxu0 0
  %1985 = vmatpush1.bf16.msra.mxu0 0
  %1986 = vmatprep.subr.bf16.mxu0 0
  %1987 = vmatpush1.bf16.msra.mxu0 0
  %1988 = vmatprep.subr.bf16.mxu0 0
  %1989 = vmatpush1.bf16.msra.mxu0 0
  %1990 = vmatprep.subr.bf16.mxu0 0
  %1991 = vmatpush1.bf16.msra.mxu0 0
  %1992 = vmatprep.subr.bf16.mxu0 0
  %1993 = vmatpush1.bf16.msra.mxu0 0
  %1994 = vmatprep.subr.bf16.mxu0 0
  %1995 = vmatpush1.bf16.msra.mxu0 0
  %1996 = vmatprep.subr.bf16.mxu0 0
  %1997 = vmatpush1.bf16.msra.mxu0 0
  %1998 = vmatprep.subr.bf16.mxu0 0
  %1999 = vmatpush1.bf16.msra.mxu0 0
  %2000 = vmatprep.subr.bf16.mxu0 0
  %2001 = vmatpush1.bf16.msra.mxu0 0
  %2002 = vmatprep.subr.bf16.mxu0 0
  %2003 = vmatpush1.bf16.msra.mxu0 0
  %2004 = vmatprep.subr.bf16.mxu0 0
  %2005 = vmatpush1.bf16.msra.mxu0 0
  %2006 = vmatprep.subr.bf16.mxu0 0
  %2007 = vmatpush1.bf16.msra.mxu0 0
  %2008 = vmatprep.mubr.bf16.mxu0 0
  %2009 = vmatmul.mubr.bf16.gmra.mrb[0].mxu0 %v1303
  %v2010 = vpop.f32.mrb[0].mxu0
  %v2011 = vadd.f32 %v1722, %v2010
  %v2012 = vpop.f32.mrb[0].mxu0
  %v2013 = vpop.f32.mrb[0].mxu0
  %v2014 = vadd.f32 %v1725, %v2013
  %v2015 = vpop.f32.mrb[0].mxu0
  %2016 = vmatprep.mubr.bf16.mxu0 0
  %2017 = vmatmul.mubr.bf16.gmra.mrb[0].mxu0 %v1306
  %v2018 = vpop.f32.mrb[0].mxu0
  %v2019 = vadd.f32 %v1730, %v2018
  %v2020 = vpop.f32.mrb[0].mxu0
  %v2021 = vpop.f32.mrb[0].mxu0
  %v2022 = vadd.f32 %v1733, %v2021
  %v2023 = vpop.f32.mrb[0].mxu0
  %2024 = vmatprep.mubr.bf16.mxu0 0
  %2025 = vmatmul.mubr.bf16.gmra.mrb[0].mxu0 %v1309
  %v2026 = vpop.f32.mrb[0].mxu0
  %v2027 = vadd.f32 %v1738, %v2026
  %v2028 = vpop.f32.mrb[0].mxu0
  %v2029 = vpop.f32.mrb[0].mxu0
  %v2030 = vadd.f32 %v1741, %v2029
  %v2031 = vpop.f32.mrb[0].mxu0
  %2032 = vmatprep.mubr.bf16.mxu0 0
  %2033 = vmatmul.mubr.bf16.gmra.mrb[0].mxu0 %v1312
  %v2034 = vpop.f32.mrb[0].mxu0
  %v2035 = vadd.f32 %v1746, %v2034
  %v2036 = vpop.f32.mrb[0].mxu0
  %v2037 = vpop.f32.mrb[0].mxu0
  %v2038 = vadd.f32 %v1749, %v2037
  %v2039 = vpop.f32.mrb[0].mxu0
  %2040 = vmatprep.mubr.bf16.mxu0 0
  %2041 = vmatmul.mubr.bf16.gmra.mrb[0].mxu0 %v1315
  %v2042 = vpop.f32.mrb[0].mxu0
  %v2043 = vadd.f32 %v1754, %v2042
  %v2044 = vpop.f32.mrb[0].mxu0
  %v2045 = vpop.f32.mrb[0].mxu0
  %v2046 = vadd.f32 %v1757, %v2045
  %v2047 = vpop.f32.mrb[0].mxu0
  %2048 = vmatprep.mubr.bf16.mxu0 0
  %2049 = vmatmul.mubr.bf16.gmra.mrb[0].mxu0 %v1318
  %v2050 = vpop.f32.mrb[0].mxu0
  %v2051 = vadd.f32 %v1762, %v2050
  %v2052 = vpop.f32.mrb[0].mxu0
  %v2053 = vpop.f32.mrb[0].mxu0
  %v2054 = vadd.f32 %v1765, %v2053
  %v2055 = vpop.f32.mrb[0].mxu0
  %2056 = vmatprep.mubr.bf16.mxu0 0
  %2057 = vmatmul.mubr.bf16.gmra.mrb[0].mxu0 %v1321
  %v2058 = vpop.f32.mrb[0].mxu0
  %v2059 = vadd.f32 %v1770, %v2058
  %v2060 = vpop.f32.mrb[0].mxu0
  %v2061 = vpop.f32.mrb[0].mxu0
  %v2062 = vadd.f32 %v1773, %v2061
  %v2063 = vpop.f32.mrb[0].mxu0
  %2064 = vmatprep.mubr.bf16.mxu0 0
  %2065 = vmatmul.mubr.bf16.gmra.mrb[0].mxu0 %v1324
  %v2066 = vpop.f32.mrb[0].mxu0
  %v2067 = vadd.f32 %v1778, %v2066
  %v2068 = vpop.f32.mrb[0].mxu0
  %v2069 = vpop.f32.mrb[0].mxu0
  %v2070 = vadd.f32 %v1781, %v2069
  %v2071 = vpop.f32.mrb[0].mxu0
  %2072 = vmatprep.mubr.bf16.mxu0 0
  %2073 = vmatmul.mubr.bf16.gmra.mrb[0].mxu0 %v1327
  %v2074 = vpop.f32.mrb[0].mxu0
  %v2075 = vadd.f32 %v1786, %v2074
  %v2076 = vpop.f32.mrb[0].mxu0
  %v2077 = vpop.f32.mrb[0].mxu0
  %v2078 = vadd.f32 %v1789, %v2077
  %v2079 = vpop.f32.mrb[0].mxu0
  %2080 = vmatprep.mubr.bf16.mxu0 0
  %2081 = vmatmul.mubr.bf16.gmra.mrb[0].mxu0 %v1330
  %v2082 = vpop.f32.mrb[0].mxu0
  %v2083 = vadd.f32 %v1794, %v2082
  %v2084 = vpop.f32.mrb[0].mxu0
  %v2085 = vpop.f32.mrb[0].mxu0
  %v2086 = vadd.f32 %v1797, %v2085
  %v2087 = vpop.f32.mrb[0].mxu0
  %2088 = vmatprep.mubr.bf16.mxu0 0
  %2089 = vmatmul.mubr.bf16.gmra.mrb[0].mxu0 %v1333
  %v2090 = vpop.f32.mrb[0].mxu0
  %v2091 = vadd.f32 %v1802, %v2090
  %v2092 = vpop.f32.mrb[0].mxu0
  %v2093 = vpop.f32.mrb[0].mxu0
  %v2094 = vadd.f32 %v1805, %v2093
  %v2095 = vpop.f32.mrb[0].mxu0
  %2096 = vmatprep.mubr.bf16.mxu0 0
  %2097 = vmatmul.mubr.bf16.gmra.mrb[0].mxu0 %v1336
  %v2098 = vpop.f32.mrb[0].mxu0
  %v2099 = vadd.f32 %v1810, %v2098
  %v2100 = vpop.f32.mrb[0].mxu0
  %v2101 = vpop.f32.mrb[0].mxu0
  %v2102 = vadd.f32 %v1813, %v2101
  %v2103 = vpop.f32.mrb[0].mxu0
  %2104 = vmatprep.mubr.bf16.mxu0 0
  %2105 = vmatmul.mubr.bf16.gmra.mrb[0].mxu0 %v1339
  %v2106 = vpop.f32.mrb[0].mxu0
  %v2107 = vadd.f32 %v1818, %v2106
  %v2108 = vpop.f32.mrb[0].mxu0
  %v2109 = vpop.f32.mrb[0].mxu0
  %v2110 = vadd.f32 %v1821, %v2109
  %v2111 = vpop.f32.mrb[0].mxu0
  %2112 = vmatprep.mubr.bf16.mxu0 0
  %2113 = vmatmul.mubr.bf16.gmra.mrb[0].mxu0 %v1342
  %v2114 = vpop.f32.mrb[0].mxu0
  %v2115 = vadd.f32 %v1826, %v2114
  %v2116 = vpop.f32.mrb[0].mxu0
  %v2117 = vpop.f32.mrb[0].mxu0
  %v2118 = vadd.f32 %v1829, %v2117
  %v2119 = vpop.f32.mrb[0].mxu0
  %2120 = vmatprep.mubr.bf16.mxu0 0
  %2121 = vmatmul.mubr.bf16.gmra.mrb[0].mxu0 %v1345
  %v2122 = vpop.f32.mrb[0].mxu0
  %v2123 = vadd.f32 %v1834, %v2122
  %v2124 = vpop.f32.mrb[0].mxu0
  %v2125 = vpop.f32.mrb[0].mxu0
  %v2126 = vadd.f32 %v1837, %v2125
  %v2127 = vpop.f32.mrb[0].mxu0
  %2128 = vmatprep.mubr.bf16.mxu0 0
  %2129 = vmatmul.mubr.bf16.gmra.mrb[0].mxu0 %v1348
  %v2130 = vpop.f32.mrb[0].mxu0
  %v2131 = vadd.f32 %v1842, %v2130
  %v2132 = vpop.f32.mrb[0].mxu0
  %v2133 = vpop.f32.mrb[0].mxu0
  %v2134 = vadd.f32 %v1845, %v2133
  %v2135 = vpop.f32.mrb[0].mxu0
  %2136 = vmatprep.mubr.bf16.mxu0 0
  %2137 = vmatmul.mubr.bf16.gmra.mrb[0].mxu0 %v1351
  %v2138 = vpop.f32.mrb[0].mxu0
  %v2139 = vadd.f32 %v1850, %v2138
  %v2140 = vpop.f32.mrb[0].mxu0
  %v2141 = vpop.f32.mrb[0].mxu0
  %v2142 = vadd.f32 %v1853, %v2141
  %v2143 = vpop.f32.mrb[0].mxu0
  %2144 = vmatprep.mubr.bf16.mxu0 0
  %2145 = vmatmul.mubr.bf16.gmra.mrb[0].mxu0 %v1354
  %v2146 = vpop.f32.mrb[0].mxu0
  %v2147 = vadd.f32 %v1858, %v2146
  %v2148 = vpop.f32.mrb[0].mxu0
  %v2149 = vpop.f32.mrb[0].mxu0
  %v2150 = vadd.f32 %v1861, %v2149
  %v2151 = vpop.f32.mrb[0].mxu0
  %2152 = vmatprep.mubr.bf16.mxu0 0
  %2153 = vmatmul.mubr.bf16.gmra.mrb[0].mxu0 %v1357
  %v2154 = vpop.f32.mrb[0].mxu0
  %v2155 = vadd.f32 %v1866, %v2154
  %v2156 = vpop.f32.mrb[0].mxu0
  %v2157 = vpop.f32.mrb[0].mxu0
  %v2158 = vadd.f32 %v1869, %v2157
  %v2159 = vpop.f32.mrb[0].mxu0
  %2160 = vmatprep.mubr.bf16.mxu0 0
  %2161 = vmatmul.mubr.bf16.gmra.mrb[0].mxu0 %v1360
  %v2162 = vpop.f32.mrb[0].mxu0
  %v2163 = vadd.f32 %v1874, %v2162
  %v2164 = vpop.f32.mrb[0].mxu0
  %v2165 = vpop.f32.mrb[0].mxu0
  %v2166 = vadd.f32 %v1877, %v2165
  %v2167 = vpop.f32.mrb[0].mxu0
  %2168 = vmatprep.mubr.bf16.mxu0 0
  %2169 = vmatmul.mubr.bf16.gmra.mrb[0].mxu0 %v1363
  %v2170 = vpop.f32.mrb[0].mxu0
  %v2171 = vadd.f32 %v1882, %v2170
  %v2172 = vpop.f32.mrb[0].mxu0
  %v2173 = vpop.f32.mrb[0].mxu0
  %v2174 = vadd.f32 %v1885, %v2173
  %v2175 = vpop.f32.mrb[0].mxu0
  %2176 = vmatprep.mubr.bf16.mxu0 0
  %2177 = vmatmul.mubr.bf16.gmra.mrb[0].mxu0 %v1366
  %v2178 = vpop.f32.mrb[0].mxu0
  %v2179 = vadd.f32 %v1890, %v2178
  %v2180 = vpop.f32.mrb[0].mxu0
  %v2181 = vpop.f32.mrb[0].mxu0
  %v2182 = vadd.f32 %v1893, %v2181
  %v2183 = vpop.f32.mrb[0].mxu0
  %2184 = vmatprep.mubr.bf16.mxu0 0
  %2185 = vmatmul.mubr.bf16.gmra.mrb[0].mxu0 %v1369
  %v2186 = vpop.f32.mrb[0].mxu0
  %v2187 = vadd.f32 %v1898, %v2186
  %v2188 = vpop.f32.mrb[0].mxu0
  %v2189 = vpop.f32.mrb[0].mxu0
  %v2190 = vadd.f32 %v1901, %v2189
  %v2191 = vpop.f32.mrb[0].mxu0
  %2192 = vmatprep.mubr.bf16.mxu0 0
  %2193 = vmatmul.mubr.bf16.gmra.mrb[0].mxu0 %v1372
  %v2194 = vpop.f32.mrb[0].mxu0
  %v2195 = vadd.f32 %v1906, %v2194
  %v2196 = vpop.f32.mrb[0].mxu0
  %v2197 = vpop.f32.mrb[0].mxu0
  %v2198 = vadd.f32 %v1909, %v2197
  %v2199 = vpop.f32.mrb[0].mxu0
  %2200 = vmatprep.mubr.bf16.mxu0 0
  %2201 = vmatmul.mubr.bf16.gmra.mrb[0].mxu0 %v1375
  %v2202 = vpop.f32.mrb[0].mxu0
  %v2203 = vadd.f32 %v1914, %v2202
  %v2204 = vpop.f32.mrb[0].mxu0
  %v2205 = vpop.f32.mrb[0].mxu0
  %v2206 = vadd.f32 %v1917, %v2205
  %v2207 = vpop.f32.mrb[0].mxu0
  %2208 = vmatprep.mubr.bf16.mxu0 0
  %2209 = vmatmul.mubr.bf16.gmra.mrb[0].mxu0 %v1378
  %v2210 = vpop.f32.mrb[0].mxu0
  %v2211 = vadd.f32 %v1922, %v2210
  %v2212 = vpop.f32.mrb[0].mxu0
  %v2213 = vpop.f32.mrb[0].mxu0
  %v2214 = vadd.f32 %v1925, %v2213
  %v2215 = vpop.f32.mrb[0].mxu0
  %2216 = vmatprep.mubr.bf16.mxu0 0
  %2217 = vmatmul.mubr.bf16.gmra.mrb[0].mxu0 %v1381
  %v2218 = vpop.f32.mrb[0].mxu0
  %v2219 = vadd.f32 %v1930, %v2218
  %v2220 = vpop.f32.mrb[0].mxu0
  %v2221 = vpop.f32.mrb[0].mxu0
  %v2222 = vadd.f32 %v1933, %v2221
  %v2223 = vpop.f32.mrb[0].mxu0
  %2224 = vmatprep.mubr.bf16.mxu0 0
  %2225 = vmatmul.mubr.bf16.gmra.mrb[0].mxu0 %v1384
  %v2226 = vpop.f32.mrb[0].mxu0
  %v2227 = vadd.f32 %v1938, %v2226
  %v2228 = vpop.f32.mrb[0].mxu0
  %v2229 = vpop.f32.mrb[0].mxu0
  %v2230 = vadd.f32 %v1941, %v2229
  %v2231 = vpop.f32.mrb[0].mxu0
  %2232 = vmatprep.mubr.bf16.mxu0 0
  %2233 = vmatmul.mubr.bf16.gmra.mrb[0].mxu0 %v1387
  %v2234 = vpop.f32.mrb[0].mxu0
  %v2235 = vadd.f32 %v1946, %v2234
  %v2236 = vpop.f32.mrb[0].mxu0
  %v2237 = vpop.f32.mrb[0].mxu0
  %v2238 = vadd.f32 %v1949, %v2237
  %v2239 = vpop.f32.mrb[0].mxu0
  %2240 = vmatprep.mubr.bf16.mxu0 0
  %2241 = vmatmul.mubr.bf16.gmra.mrb[0].mxu0 %v1390
  %v2242 = vpop.f32.mrb[0].mxu0
  %v2243 = vadd.f32 %v1954, %v2242
  %v2244 = vpop.f32.mrb[0].mxu0
  %v2245 = vpop.f32.mrb[0].mxu0
  %v2246 = vadd.f32 %v1957, %v2245
  %v2247 = vpop.f32.mrb[0].mxu0
  %2248 = vmatprep.mubr.bf16.mxu0 0
  %2249 = vmatmul.mubr.bf16.gmra.mrb[0].mxu0 %v1393
  %v2250 = vpop.f32.mrb[0].mxu0
  %v2251 = vadd.f32 %v1962, %v2250
  %v2252 = vpop.f32.mrb[0].mxu0
  %v2253 = vpop.f32.mrb[0].mxu0
  %v2254 = vadd.f32 %v1965, %v2253
  %v2255 = vpop.f32.mrb[0].mxu0
  %2256 = vmatprep.mubr.bf16.mxu0 0
  %2257 = vmatmul.mubr.bf16.gmra.mrb[0].mxu0 %v1396
  %v2258 = vpop.f32.mrb[0].mxu0
  %v2259 = vadd.f32 %v1970, %v2258
  %v2260 = vpop.f32.mrb[0].mxu0
  %v2261 = vpop.f32.mrb[0].mxu0
  %v2262 = vadd.f32 %v1973, %v2261
  %v2263 = vpop.f32.mrb[0].mxu0
  %2264 = vdwg.mxu0
  %v2265 = vld [vmem:[%s2] sm:$0x1]
  %v2267 = vlaneseq
  %v2268 = vshrl.u32 %v2267, 7
  %v2269 = vsub.s32 0, %v2268
  %v2270 = vrot.slane %v2265, %v2269
  %v2272 = vmul.f32 %v2011, %v2270
  %v2273 = vmul.f32 %v2014, %v2270
  %v2274 = vmul.f32 %v2019, %v2270
  %v2275 = vmul.f32 %v2022, %v2270
  %v2276 = vmul.f32 %v2027, %v2270
  %v2277 = vmul.f32 %v2030, %v2270
  %v2278 = vmul.f32 %v2035, %v2270
  %v2279 = vmul.f32 %v2038, %v2270
  %v2280 = vmul.f32 %v2043, %v2270
  %v2281 = vmul.f32 %v2046, %v2270
  %v2282 = vmul.f32 %v2051, %v2270
  %v2283 = vmul.f32 %v2054, %v2270
  %v2284 = vmul.f32 %v2059, %v2270
  %v2285 = vmul.f32 %v2062, %v2270
  %v2286 = vmul.f32 %v2067, %v2270
  %v2287 = vmul.f32 %v2070, %v2270
  %v2288 = vmul.f32 %v2075, %v2270
  %v2289 = vmul.f32 %v2078, %v2270
  %v2290 = vmul.f32 %v2083, %v2270
  %v2291 = vmul.f32 %v2086, %v2270
  %v2292 = vmul.f32 %v2091, %v2270
  %v2293 = vmul.f32 %v2094, %v2270
  %v2294 = vmul.f32 %v2099, %v2270
  %v2295 = vmul.f32 %v2102, %v2270
  %v2296 = vmul.f32 %v2107, %v2270
  %v2297 = vmul.f32 %v2110, %v2270
  %v2298 = vmul.f32 %v2115, %v2270
  %v2299 = vmul.f32 %v2118, %v2270
  %v2300 = vmul.f32 %v2123, %v2270
  %v2301 = vmul.f32 %v2126, %v2270
  %v2302 = vmul.f32 %v2131, %v2270
  %v2303 = vmul.f32 %v2134, %v2270
  %v2304 = vmul.f32 %v2139, %v2270
  %v2305 = vmul.f32 %v2142, %v2270
  %v2306 = vmul.f32 %v2147, %v2270
  %v2307 = vmul.f32 %v2150, %v2270
  %v2308 = vmul.f32 %v2155, %v2270
  %v2309 = vmul.f32 %v2158, %v2270
  %v2310 = vmul.f32 %v2163, %v2270
  %v2311 = vmul.f32 %v2166, %v2270
  %v2312 = vmul.f32 %v2171, %v2270
  %v2313 = vmul.f32 %v2174, %v2270
  %v2314 = vmul.f32 %v2179, %v2270
  %v2315 = vmul.f32 %v2182, %v2270
  %v2316 = vmul.f32 %v2187, %v2270
  %v2317 = vmul.f32 %v2190, %v2270
  %v2318 = vmul.f32 %v2195, %v2270
  %v2319 = vmul.f32 %v2198, %v2270
  %v2320 = vmul.f32 %v2203, %v2270
  %v2321 = vmul.f32 %v2206, %v2270
  %v2322 = vmul.f32 %v2211, %v2270
  %v2323 = vmul.f32 %v2214, %v2270
  %v2324 = vmul.f32 %v2219, %v2270
  %v2325 = vmul.f32 %v2222, %v2270
  %v2326 = vmul.f32 %v2227, %v2270
  %v2327 = vmul.f32 %v2230, %v2270
  %v2328 = vmul.f32 %v2235, %v2270
  %v2329 = vmul.f32 %v2238, %v2270
  %v2330 = vmul.f32 %v2243, %v2270
  %v2331 = vmul.f32 %v2246, %v2270
  %v2332 = vmul.f32 %v2251, %v2270
  %v2333 = vmul.f32 %v2254, %v2270
  %v2334 = vmul.f32 %v2259, %v2270
  %v2335 = vmul.f32 %v2262, %v2270
  %v2336 = vld [vmem:[%s3] sm:$0x1]
  %v2338 = vlaneseq
  %v2339 = vshrl.u32 %v2338, 7
  %v2340 = vsub.s32 0, %v2339
  %v2341 = vrot.slane %v2336, %v2340
  %v2343 = vadd.f32 %v2272, %v2341
  %v2344 = vadd.f32 %v2273, %v2341
  %v2345 = vadd.f32 %v2274, %v2341
  %v2346 = vadd.f32 %v2275, %v2341
  %v2347 = vadd.f32 %v2276, %v2341
  %v2348 = vadd.f32 %v2277, %v2341
  %v2349 = vadd.f32 %v2278, %v2341
  %v2350 = vadd.f32 %v2279, %v2341
  %v2351 = vadd.f32 %v2280, %v2341
  %v2352 = vadd.f32 %v2281, %v2341
  %v2353 = vadd.f32 %v2282, %v2341
  %v2354 = vadd.f32 %v2283, %v2341
  %v2355 = vadd.f32 %v2284, %v2341
  %v2356 = vadd.f32 %v2285, %v2341
  %v2357 = vadd.f32 %v2286, %v2341
  %v2358 = vadd.f32 %v2287, %v2341
  %v2359 = vadd.f32 %v2288, %v2341
  %v2360 = vadd.f32 %v2289, %v2341
  %v2361 = vadd.f32 %v2290, %v2341
  %v2362 = vadd.f32 %v2291, %v2341
  %v2363 = vadd.f32 %v2292, %v2341
  %v2364 = vadd.f32 %v2293, %v2341
  %v2365 = vadd.f32 %v2294, %v2341
  %v2366 = vadd.f32 %v2295, %v2341
  %v2367 = vadd.f32 %v2296, %v2341
  %v2368 = vadd.f32 %v2297, %v2341
  %v2369 = vadd.f32 %v2298, %v2341
  %v2370 = vadd.f32 %v2299, %v2341
  %v2371 = vadd.f32 %v2300, %v2341
  %v2372 = vadd.f32 %v2301, %v2341
  %v2373 = vadd.f32 %v2302, %v2341
  %v2374 = vadd.f32 %v2303, %v2341
  %v2375 = vadd.f32 %v2304, %v2341
  %v2376 = vadd.f32 %v2305, %v2341
  %v2377 = vadd.f32 %v2306, %v2341
  %v2378 = vadd.f32 %v2307, %v2341
  %v2379 = vadd.f32 %v2308, %v2341
  %v2380 = vadd.f32 %v2309, %v2341
  %v2381 = vadd.f32 %v2310, %v2341
  %v2382 = vadd.f32 %v2311, %v2341
  %v2383 = vadd.f32 %v2312, %v2341
  %v2384 = vadd.f32 %v2313, %v2341
  %v2385 = vadd.f32 %v2314, %v2341
  %v2386 = vadd.f32 %v2315, %v2341
  %v2387 = vadd.f32 %v2316, %v2341
  %v2388 = vadd.f32 %v2317, %v2341
  %v2389 = vadd.f32 %v2318, %v2341
  %v2390 = vadd.f32 %v2319, %v2341
  %v2391 = vadd.f32 %v2320, %v2341
  %v2392 = vadd.f32 %v2321, %v2341
  %v2393 = vadd.f32 %v2322, %v2341
  %v2394 = vadd.f32 %v2323, %v2341
  %v2395 = vadd.f32 %v2324, %v2341
  %v2396 = vadd.f32 %v2325, %v2341
  %v2397 = vadd.f32 %v2326, %v2341
  %v2398 = vadd.f32 %v2327, %v2341
  %v2399 = vadd.f32 %v2328, %v2341
  %v2400 = vadd.f32 %v2329, %v2341
  %v2401 = vadd.f32 %v2330, %v2341
  %v2402 = vadd.f32 %v2331, %v2341
  %v2403 = vadd.f32 %v2332, %v2341
  %v2404 = vadd.f32 %v2333, %v2341
  %v2405 = vadd.f32 %v2334, %v2341
  %v2406 = vadd.f32 %v2335, %v2341
  %v2407 = vld [vmem:[%s4] sm:$0xff]
  %v2408 = vld [vmem:[%s4 + $0x8] sm:$0xff]
  %v2409 = vld [vmem:[%s4 + $0x10] sm:$0xff]
  %v2410 = vld [vmem:[%s4 + $0x18] sm:$0xff]
  %v2411 = vld [vmem:[%s4 + $0x20] sm:$0xff]
  %v2412 = vld [vmem:[%s4 + $0x28] sm:$0xff]
  %v2413 = vld [vmem:[%s4 + $0x30] sm:$0xff]
  %v2414 = vld [vmem:[%s4 + $0x38] sm:$0xff]
  %v2415 = vld [vmem:[%s4 + $0x40] sm:$0xff]
  %v2416 = vld [vmem:[%s4 + $0x48] sm:$0xff]
  %v2417 = vld [vmem:[%s4 + $0x50] sm:$0xff]
  %v2418 = vld [vmem:[%s4 + $0x58] sm:$0xff]
  %v2419 = vld [vmem:[%s4 + $0x60] sm:$0xff]
  %v2420 = vld [vmem:[%s4 + $0x68] sm:$0xff]
  %v2421 = vld [vmem:[%s4 + $0x70] sm:$0xff]
  %v2422 = vld [vmem:[%s4 + $0x78] sm:$0xff]
  %v2423 = vld [vmem:[%s4 + $0x80] sm:$0xff]
  %v2424 = vld [vmem:[%s4 + $0x88] sm:$0xff]
  %v2425 = vld [vmem:[%s4 + $0x90] sm:$0xff]
  %v2426 = vld [vmem:[%s4 + $0x98] sm:$0xff]
  %v2427 = vld [vmem:[%s4 + $0xa0] sm:$0xff]
  %v2428 = vld [vmem:[%s4 + $0xa8] sm:$0xff]
  %v2429 = vld [vmem:[%s4 + $0xb0] sm:$0xff]
  %v2430 = vld [vmem:[%s4 + $0xb8] sm:$0xff]
  %v2431 = vld [vmem:[%s4 + $0xc0] sm:$0xff]
  %v2432 = vld [vmem:[%s4 + $0xc8] sm:$0xff]
  %v2433 = vld [vmem:[%s4 + $0xd0] sm:$0xff]
  %v2434 = vld [vmem:[%s4 + $0xd8] sm:$0xff]
  %v2435 = vld [vmem:[%s4 + $0xe0] sm:$0xff]
  %v2436 = vld [vmem:[%s4 + $0xe8] sm:$0xff]
  %v2437 = vld [vmem:[%s4 + $0xf0] sm:$0xff]
  %v2438 = vld [vmem:[%s4 + $0xf8] sm:$0xff]
  %v2439 = vld [vmem:[%s4 + $0x100] sm:$0xff]
  %v2440 = vld [vmem:[%s4 + $0x108] sm:$0xff]
  %v2441 = vld [vmem:[%s4 + $0x110] sm:$0xff]
  %v2442 = vld [vmem:[%s4 + $0x118] sm:$0xff]
  %v2443 = vld [vmem:[%s4 + $0x120] sm:$0xff]
  %v2444 = vld [vmem:[%s4 + $0x128] sm:$0xff]
  %v2445 = vld [vmem:[%s4 + $0x130] sm:$0xff]
  %v2446 = vld [vmem:[%s4 + $0x138] sm:$0xff]
  %v2447 = vld [vmem:[%s4 + $0x140] sm:$0xff]
  %v2448 = vld [vmem:[%s4 + $0x148] sm:$0xff]
  %v2449 = vld [vmem:[%s4 + $0x150] sm:$0xff]
  %v2450 = vld [vmem:[%s4 + $0x158] sm:$0xff]
  %v2451 = vld [vmem:[%s4 + $0x160] sm:$0xff]
  %v2452 = vld [vmem:[%s4 + $0x168] sm:$0xff]
  %v2453 = vld [vmem:[%s4 + $0x170] sm:$0xff]
  %v2454 = vld [vmem:[%s4 + $0x178] sm:$0xff]
  %v2455 = vld [vmem:[%s4 + $0x180] sm:$0xff]
  %v2456 = vld [vmem:[%s4 + $0x188] sm:$0xff]
  %v2457 = vld [vmem:[%s4 + $0x190] sm:$0xff]
  %v2458 = vld [vmem:[%s4 + $0x198] sm:$0xff]
  %v2459 = vld [vmem:[%s4 + $0x1a0] sm:$0xff]
  %v2460 = vld [vmem:[%s4 + $0x1a8] sm:$0xff]
  %v2461 = vld [vmem:[%s4 + $0x1b0] sm:$0xff]
  %v2462 = vld [vmem:[%s4 + $0x1b8] sm:$0xff]
  %v2463 = vld [vmem:[%s4 + $0x1c0] sm:$0xff]
  %v2464 = vld [vmem:[%s4 + $0x1c8] sm:$0xff]
  %v2465 = vld [vmem:[%s4 + $0x1d0] sm:$0xff]
  %v2466 = vld [vmem:[%s4 + $0x1d8] sm:$0xff]
  %v2467 = vld [vmem:[%s4 + $0x1e0] sm:$0xff]
  %v2468 = vld [vmem:[%s4 + $0x1e8] sm:$0xff]
  %v2469 = vld [vmem:[%s4 + $0x1f0] sm:$0xff]
  %v2470 = vld [vmem:[%s4 + $0x1f8] sm:$0xff]
  %v2471 = vadd.f32 %v2343, %v2407
  %v2472 = vadd.f32 %v2344, %v2408
  %v2473 = vadd.f32 %v2345, %v2409
  %v2474 = vadd.f32 %v2346, %v2410
  %v2475 = vadd.f32 %v2347, %v2411
  %v2476 = vadd.f32 %v2348, %v2412
  %v2477 = vadd.f32 %v2349, %v2413
  %v2478 = vadd.f32 %v2350, %v2414
  %v2479 = vadd.f32 %v2351, %v2415
  %v2480 = vadd.f32 %v2352, %v2416
  %v2481 = vadd.f32 %v2353, %v2417
  %v2482 = vadd.f32 %v2354, %v2418
  %v2483 = vadd.f32 %v2355, %v2419
  %v2484 = vadd.f32 %v2356, %v2420
  %v2485 = vadd.f32 %v2357, %v2421
  %v2486 = vadd.f32 %v2358, %v2422
  %v2487 = vadd.f32 %v2359, %v2423
  %v2488 = vadd.f32 %v2360, %v2424
  %v2489 = vadd.f32 %v2361, %v2425
  %v2490 = vadd.f32 %v2362, %v2426
  %v2491 = vadd.f32 %v2363, %v2427
  %v2492 = vadd.f32 %v2364, %v2428
  %v2493 = vadd.f32 %v2365, %v2429
  %v2494 = vadd.f32 %v2366, %v2430
  %v2495 = vadd.f32 %v2367, %v2431
  %v2496 = vadd.f32 %v2368, %v2432
  %v2497 = vadd.f32 %v2369, %v2433
  %v2498 = vadd.f32 %v2370, %v2434
  %v2499 = vadd.f32 %v2371, %v2435
  %v2500 = vadd.f32 %v2372, %v2436
  %v2501 = vadd.f32 %v2373, %v2437
  %v2502 = vadd.f32 %v2374, %v2438
  %v2503 = vadd.f32 %v2375, %v2439
  %v2504 = vadd.f32 %v2376, %v2440
  %v2505 = vadd.f32 %v2377, %v2441
  %v2506 = vadd.f32 %v2378, %v2442
  %v2507 = vadd.f32 %v2379, %v2443
  %v2508 = vadd.f32 %v2380, %v2444
  %v2509 = vadd.f32 %v2381, %v2445
  %v2510 = vadd.f32 %v2382, %v2446
  %v2511 = vadd.f32 %v2383, %v2447
  %v2512 = vadd.f32 %v2384, %v2448
  %v2513 = vadd.f32 %v2385, %v2449
  %v2514 = vadd.f32 %v2386, %v2450
  %v2515 = vadd.f32 %v2387, %v2451
  %v2516 = vadd.f32 %v2388, %v2452
  %v2517 = vadd.f32 %v2389, %v2453
  %v2518 = vadd.f32 %v2390, %v2454
  %v2519 = vadd.f32 %v2391, %v2455
  %v2520 = vadd.f32 %v2392, %v2456
  %v2521 = vadd.f32 %v2393, %v2457
  %v2522 = vadd.f32 %v2394, %v2458
  %v2523 = vadd.f32 %v2395, %v2459
  %v2524 = vadd.f32 %v2396, %v2460
  %v2525 = vadd.f32 %v2397, %v2461
  %v2526 = vadd.f32 %v2398, %v2462
  %v2527 = vadd.f32 %v2399, %v2463
  %v2528 = vadd.f32 %v2400, %v2464
  %v2529 = vadd.f32 %v2401, %v2465
  %v2530 = vadd.f32 %v2402, %v2466
  %v2531 = vadd.f32 %v2403, %v2467
  %v2532 = vadd.f32 %v2404, %v2468
  %v2533 = vadd.f32 %v2405, %v2469
  %v2534 = vadd.f32 %v2406, %v2470
  %v2535 = vmax.f32 %v2471, 0.0
  %v2536 = vmax.f32 %v2472, 0.0
  %v2537 = vmax.f32 %v2473, 0.0
  %v2538 = vmax.f32 %v2474, 0.0
  %v2539 = vmax.f32 %v2475, 0.0
  %v2540 = vmax.f32 %v2476, 0.0
  %v2541 = vmax.f32 %v2477, 0.0
  %v2542 = vmax.f32 %v2478, 0.0
  %v2543 = vmax.f32 %v2479, 0.0
  %v2544 = vmax.f32 %v2480, 0.0
  %v2545 = vmax.f32 %v2481, 0.0
  %v2546 = vmax.f32 %v2482, 0.0
  %v2547 = vmax.f32 %v2483, 0.0
  %v2548 = vmax.f32 %v2484, 0.0
  %v2549 = vmax.f32 %v2485, 0.0
  %v2550 = vmax.f32 %v2486, 0.0
  %v2551 = vmax.f32 %v2487, 0.0
  %v2552 = vmax.f32 %v2488, 0.0
  %v2553 = vmax.f32 %v2489, 0.0
  %v2554 = vmax.f32 %v2490, 0.0
  %v2555 = vmax.f32 %v2491, 0.0
  %v2556 = vmax.f32 %v2492, 0.0
  %v2557 = vmax.f32 %v2493, 0.0
  %v2558 = vmax.f32 %v2494, 0.0
  %v2559 = vmax.f32 %v2495, 0.0
  %v2560 = vmax.f32 %v2496, 0.0
  %v2561 = vmax.f32 %v2497, 0.0
  %v2562 = vmax.f32 %v2498, 0.0
  %v2563 = vmax.f32 %v2499, 0.0
  %v2564 = vmax.f32 %v2500, 0.0
  %v2565 = vmax.f32 %v2501, 0.0
  %v2566 = vmax.f32 %v2502, 0.0
  %v2567 = vmax.f32 %v2503, 0.0
  %v2568 = vmax.f32 %v2504, 0.0
  %v2569 = vmax.f32 %v2505, 0.0
  %v2570 = vmax.f32 %v2506, 0.0
  %v2571 = vmax.f32 %v2507, 0.0
  %v2572 = vmax.f32 %v2508, 0.0
  %v2573 = vmax.f32 %v2509, 0.0
  %v2574 = vmax.f32 %v2510, 0.0
  %v2575 = vmax.f32 %v2511, 0.0
  %v2576 = vmax.f32 %v2512, 0.0
  %v2577 = vmax.f32 %v2513, 0.0
  %v2578 = vmax.f32 %v2514, 0.0
  %v2579 = vmax.f32 %v2515, 0.0
  %v2580 = vmax.f32 %v2516, 0.0
  %v2581 = vmax.f32 %v2517, 0.0
  %v2582 = vmax.f32 %v2518, 0.0
  %v2583 = vmax.f32 %v2519, 0.0
  %v2584 = vmax.f32 %v2520, 0.0
  %v2585 = vmax.f32 %v2521, 0.0
  %v2586 = vmax.f32 %v2522, 0.0
  %v2587 = vmax.f32 %v2523, 0.0
  %v2588 = vmax.f32 %v2524, 0.0
  %v2589 = vmax.f32 %v2525, 0.0
  %v2590 = vmax.f32 %v2526, 0.0
  %v2591 = vmax.f32 %v2527, 0.0
  %v2592 = vmax.f32 %v2528, 0.0
  %v2593 = vmax.f32 %v2529, 0.0
  %v2594 = vmax.f32 %v2530, 0.0
  %v2595 = vmax.f32 %v2531, 0.0
  %v2596 = vmax.f32 %v2532, 0.0
  %v2597 = vmax.f32 %v2533, 0.0
  %v2598 = vmax.f32 %v2534, 0.0
  %2599 = vst.msk [vmem:[%s5] sm:$0xff] %vm1301, %v2535
  %2600 = vst.msk [vmem:[%s5 + $0x8] sm:$0xff] %vm1301, %v2536
  %2601 = vst.msk [vmem:[%s5 + $0x10] sm:$0xff] %vm1301, %v2537
  %2602 = vst.msk [vmem:[%s5 + $0x18] sm:$0xff] %vm1301, %v2538
  %2603 = vst.msk [vmem:[%s5 + $0x20] sm:$0xff] %vm1301, %v2539
  %2604 = vst.msk [vmem:[%s5 + $0x28] sm:$0xff] %vm1301, %v2540
  %2605 = vst.msk [vmem:[%s5 + $0x30] sm:$0xff] %vm1301, %v2541
  %2606 = vst.msk [vmem:[%s5 + $0x38] sm:$0xff] %vm1301, %v2542
  %2607 = vst.msk [vmem:[%s5 + $0x40] sm:$0xff] %vm1301, %v2543
  %2608 = vst.msk [vmem:[%s5 + $0x48] sm:$0xff] %vm1301, %v2544
  %2609 = vst.msk [vmem:[%s5 + $0x50] sm:$0xff] %vm1301, %v2545
  %2610 = vst.msk [vmem:[%s5 + $0x58] sm:$0xff] %vm1301, %v2546
  %2611 = vst.msk [vmem:[%s5 + $0x60] sm:$0xff] %vm1301, %v2547
  %2612 = vst.msk [vmem:[%s5 + $0x68] sm:$0xff] %vm1301, %v2548
  %2613 = vst.msk [vmem:[%s5 + $0x70] sm:$0xff] %vm1301, %v2549
  %2614 = vst.msk [vmem:[%s5 + $0x78] sm:$0xff] %vm1301, %v2550
  %2615 = vst.msk [vmem:[%s5 + $0x80] sm:$0xff] %vm1301, %v2551
  %2616 = vst.msk [vmem:[%s5 + $0x88] sm:$0xff] %vm1301, %v2552
  %2617 = vst.msk [vmem:[%s5 + $0x90] sm:$0xff] %vm1301, %v2553
  %2618 = vst.msk [vmem:[%s5 + $0x98] sm:$0xff] %vm1301, %v2554
  %2619 = vst.msk [vmem:[%s5 + $0xa0] sm:$0xff] %vm1301, %v2555
  %2620 = vst.msk [vmem:[%s5 + $0xa8] sm:$0xff] %vm1301, %v2556
  %2621 = vst.msk [vmem:[%s5 + $0xb0] sm:$0xff] %vm1301, %v2557
  %2622 = vst.msk [vmem:[%s5 + $0xb8] sm:$0xff] %vm1301, %v2558
  %2623 = vst.msk [vmem:[%s5 + $0xc0] sm:$0xff] %vm1301, %v2559
  %2624 = vst.msk [vmem:[%s5 + $0xc8] sm:$0xff] %vm1301, %v2560
  %2625 = vst.msk [vmem:[%s5 + $0xd0] sm:$0xff] %vm1301, %v2561
  %2626 = vst.msk [vmem:[%s5 + $0xd8] sm:$0xff] %vm1301, %v2562
  %2627 = vst.msk [vmem:[%s5 + $0xe0] sm:$0xff] %vm1301, %v2563
  %2628 = vst.msk [vmem:[%s5 + $0xe8] sm:$0xff] %vm1301, %v2564
  %2629 = vst.msk [vmem:[%s5 + $0xf0] sm:$0xff] %vm1301, %v2565
  %2630 = vst.msk [vmem:[%s5 + $0xf8] sm:$0xff] %vm1301, %v2566
  %2631 = vst.msk [vmem:[%s5 + $0x100] sm:$0xff] %vm1301, %v2567
  %2632 = vst.msk [vmem:[%s5 + $0x108] sm:$0xff] %vm1301, %v2568
  %2633 = vst.msk [vmem:[%s5 + $0x110] sm:$0xff] %vm1301, %v2569
  %2634 = vst.msk [vmem:[%s5 + $0x118] sm:$0xff] %vm1301, %v2570
  %2635 = vst.msk [vmem:[%s5 + $0x120] sm:$0xff] %vm1301, %v2571
  %2636 = vst.msk [vmem:[%s5 + $0x128] sm:$0xff] %vm1301, %v2572
  %2637 = vst.msk [vmem:[%s5 + $0x130] sm:$0xff] %vm1301, %v2573
  %2638 = vst.msk [vmem:[%s5 + $0x138] sm:$0xff] %vm1301, %v2574
  %2639 = vst.msk [vmem:[%s5 + $0x140] sm:$0xff] %vm1301, %v2575
  %2640 = vst.msk [vmem:[%s5 + $0x148] sm:$0xff] %vm1301, %v2576
  %2641 = vst.msk [vmem:[%s5 + $0x150] sm:$0xff] %vm1301, %v2577
  %2642 = vst.msk [vmem:[%s5 + $0x158] sm:$0xff] %vm1301, %v2578
  %2643 = vst.msk [vmem:[%s5 + $0x160] sm:$0xff] %vm1301, %v2579
  %2644 = vst.msk [vmem:[%s5 + $0x168] sm:$0xff] %vm1301, %v2580
  %2645 = vst.msk [vmem:[%s5 + $0x170] sm:$0xff] %vm1301, %v2581
  %2646 = vst.msk [vmem:[%s5 + $0x178] sm:$0xff] %vm1301, %v2582
  %2647 = vst.msk [vmem:[%s5 + $0x180] sm:$0xff] %vm1301, %v2583
  %2648 = vst.msk [vmem:[%s5 + $0x188] sm:$0xff] %vm1301, %v2584
  %2649 = vst.msk [vmem:[%s5 + $0x190] sm:$0xff] %vm1301, %v2585
  %2650 = vst.msk [vmem:[%s5 + $0x198] sm:$0xff] %vm1301, %v2586
  %2651 = vst.msk [vmem:[%s5 + $0x1a0] sm:$0xff] %vm1301, %v2587
  %2652 = vst.msk [vmem:[%s5 + $0x1a8] sm:$0xff] %vm1301, %v2588
  %2653 = vst.msk [vmem:[%s5 + $0x1b0] sm:$0xff] %vm1301, %v2589
  %2654 = vst.msk [vmem:[%s5 + $0x1b8] sm:$0xff] %vm1301, %v2590
  %2655 = vst.msk [vmem:[%s5 + $0x1c0] sm:$0xff] %vm1301, %v2591
  %2656 = vst.msk [vmem:[%s5 + $0x1c8] sm:$0xff] %vm1301, %v2592
  %2657 = vst.msk [vmem:[%s5 + $0x1d0] sm:$0xff] %vm1301, %v2593
  %2658 = vst.msk [vmem:[%s5 + $0x1d8] sm:$0xff] %vm1301, %v2594
  %2659 = vst.msk [vmem:[%s5 + $0x1e0] sm:$0xff] %vm1301, %v2595
  %2660 = vst.msk [vmem:[%s5 + $0x1e8] sm:$0xff] %vm1301, %v2596
  %2661 = vst.msk [vmem:[%s5 + $0x1f0] sm:$0xff] %vm1301, %v2597
  %2662 = vst.msk [vmem:[%s5 + $0x1f8] sm:$0xff] %vm1301, %v2598
  // Predicated region
  $region22: #{cnn_forward.9} parent=0 // pred_check
    _
  $region23: #{cnn_forward.9} parent=0 // pred_check_branch
    %2664 = sbr.rel (0) target = $region25
  $region24: #{cnn_forward.9} parent=0 // pred_region
    _
  $region25: #{cnn_forward.9} parent=0 // pred_fallthru
    _
  // Predicated region
  $region26: #{cnn_forward.9} parent=0 // pred_check
    _
  $region27: #{cnn_forward.9} parent=0 // pred_check_branch
    %2666 = sbr.rel (0) target = $region29
  $region28: #{cnn_forward.9} parent=0 // pred_region
    _
  $region29: #{cnn_forward.9} parent=0 // pred_fallthru
    _

// kernel: cnn_forward.10
$region0: #{cnn_forward.10}
  #allocation0 [shape = 'u32[]', space=smem, size = 0x4, offset = 0x4, fixed_abs, tag = 'smem constant byte address 0x4 - core index']
  #allocation1 [shape = 'u32[144,128]{1,0:T(1,128)}', space=vmem, size = 0x12000, scoped, tag = 'internal scratch']
  %s0 = inlined_call_operand.vmem [shape: bf16[128,576], index: 0, kind: input, shape index: {}]
  %s1 = inlined_call_operand.vmem [shape: bf16[576,128], index: 1, kind: input, shape index: {}]
  %s2 = inlined_call_operand.vmem [shape: f32[1,128], index: 2, kind: input, shape index: {}]
  %s3 = inlined_call_operand.vmem [shape: f32[1,128], index: 3, kind: input, shape index: {}]
  %s4 = inlined_call_operand.vmem [shape: f32[128,128], index: 4, kind: output, shape index: {}]
  %s5 = sld [smem:[#allocation0]]
  $region26: #{cnn_forward.10} parent=0
    _
  %s7 = ssub.s32 1, %s5
  %s8 = scalar_select 0, %s7, %s5
  // Predicated region
  $region2: #{cnn_forward.10} parent=0 // pred_check
    _
  $region3: #{cnn_forward.10} parent=0 // pred_check_branch
    %10 = sbr.rel (0) target = $region5
  $region4: #{cnn_forward.10} parent=0 // pred_region
    _
  $region5: #{cnn_forward.10} parent=0 // pred_fallthru
    _
  // Predicated region
  $region6: #{cnn_forward.10} parent=0 // pred_check
    _
  $region7: #{cnn_forward.10} parent=0 // pred_check_branch
    %12 = sbr.rel (0) target = $region9
  $region8: #{cnn_forward.10} parent=0 // pred_region
    _
  $region9: #{cnn_forward.10} parent=0 // pred_fallthru
    _
  // Predicated region
  $region10: #{cnn_forward.10} parent=0 // pred_check
    _
  $region11: #{cnn_forward.10} parent=0 // pred_check_branch
    %14 = sbr.rel (0) target = $region13
  $region12: #{cnn_forward.10} parent=0 // pred_region
    _
  $region13: #{cnn_forward.10} parent=0 // pred_fallthru
    _
  // Predicated region
  $region14: #{cnn_forward.10} parent=0 // pred_check
    _
  $region15: #{cnn_forward.10} parent=0 // pred_check_branch
    %16 = sbr.rel (0) target = $region17
  $region16: #{cnn_forward.10} parent=0 // pred_region
    _
  $region17: #{cnn_forward.10} parent=0 // pred_fallthru
    _
  %v18 = vld [vmem:[%s0] sm:$0xff]
  %v19 = vld [vmem:[%s0 + $0x8] sm:$0xff]
  %v20 = vld [vmem:[%s0 + $0x10] sm:$0xf]
  %v21 = vld [vmem:[%s0 + $0x14] sm:$0xff]
  %v22 = vld [vmem:[%s0 + $0x1c] sm:$0xff]
  %v23 = vld [vmem:[%s0 + $0x24] sm:$0xf]
  %v24 = vld [vmem:[%s0 + $0x28] sm:$0xff]
  %v25 = vld [vmem:[%s0 + $0x30] sm:$0xff]
  %v26 = vld [vmem:[%s0 + $0x38] sm:$0xf]
  %v27 = vld [vmem:[%s0 + $0x3c] sm:$0xff]
  %v28 = vld [vmem:[%s0 + $0x44] sm:$0xff]
  %v29 = vld [vmem:[%s0 + $0x4c] sm:$0xf]
  %v30 = vld [vmem:[%s0 + $0x50] sm:$0xff]
  %v31 = vld [vmem:[%s0 + $0x58] sm:$0xff]
  %v32 = vld [vmem:[%s0 + $0x60] sm:$0xf]
  %v33 = vld [vmem:[%s0 + $0x64] sm:$0xff]
  %v34 = vld [vmem:[%s0 + $0x6c] sm:$0xff]
  %v35 = vld [vmem:[%s0 + $0x74] sm:$0xf]
  %v36 = vld [vmem:[%s0 + $0x78] sm:$0xff]
  %v37 = vld [vmem:[%s0 + $0x80] sm:$0xff]
  %v38 = vld [vmem:[%s0 + $0x88] sm:$0xf]
  %v39 = vld [vmem:[%s0 + $0x8c] sm:$0xff]
  %v40 = vld [vmem:[%s0 + $0x94] sm:$0xff]
  %v41 = vld [vmem:[%s0 + $0x9c] sm:$0xf]
  %v42 = vld [vmem:[%s0 + $0xa0] sm:$0xff]
  %v43 = vld [vmem:[%s0 + $0xa8] sm:$0xff]
  %v44 = vld [vmem:[%s0 + $0xb0] sm:$0xf]
  %v45 = vld [vmem:[%s0 + $0xb4] sm:$0xff]
  %v46 = vld [vmem:[%s0 + $0xbc] sm:$0xff]
  %v47 = vld [vmem:[%s0 + $0xc4] sm:$0xf]
  %v48 = vld [vmem:[%s0 + $0xc8] sm:$0xff]
  %v49 = vld [vmem:[%s0 + $0xd0] sm:$0xff]
  %v50 = vld [vmem:[%s0 + $0xd8] sm:$0xf]
  %v51 = vld [vmem:[%s0 + $0xdc] sm:$0xff]
  %v52 = vld [vmem:[%s0 + $0xe4] sm:$0xff]
  %v53 = vld [vmem:[%s0 + $0xec] sm:$0xf]
  %v54 = vld [vmem:[%s0 + $0xf0] sm:$0xff]
  %v55 = vld [vmem:[%s0 + $0xf8] sm:$0xff]
  %v56 = vld [vmem:[%s0 + $0x100] sm:$0xf]
  %v57 = vld [vmem:[%s0 + $0x104] sm:$0xff]
  %v58 = vld [vmem:[%s0 + $0x10c] sm:$0xff]
  %v59 = vld [vmem:[%s0 + $0x114] sm:$0xf]
  %v60 = vld [vmem:[%s0 + $0x118] sm:$0xff]
  %v61 = vld [vmem:[%s0 + $0x120] sm:$0xff]
  %v62 = vld [vmem:[%s0 + $0x128] sm:$0xf]
  %v63 = vld [vmem:[%s0 + $0x12c] sm:$0xff]
  %v64 = vld [vmem:[%s0 + $0x134] sm:$0xff]
  %v65 = vld [vmem:[%s0 + $0x13c] sm:$0xf]
  %v66 = vld [vmem:[%s1] sm:$0xf]
  %v67 = vld [vmem:[%s1 + $0x4] sm:$0xf]
  %v68 = vld [vmem:[%s1 + $0x8] sm:$0xf]
  %v69 = vld [vmem:[%s1 + $0xc] sm:$0xf]
  %v70 = vld [vmem:[%s1 + $0x10] sm:$0xf]
  %v71 = vld [vmem:[%s1 + $0x14] sm:$0xf]
  %v72 = vld [vmem:[%s1 + $0x18] sm:$0xf]
  %v73 = vld [vmem:[%s1 + $0x1c] sm:$0xf]
  %v74 = vld [vmem:[%s1 + $0x20] sm:$0xf]
  %v75 = vld [vmem:[%s1 + $0x24] sm:$0xf]
  %v76 = vld [vmem:[%s1 + $0x28] sm:$0xf]
  %v77 = vld [vmem:[%s1 + $0x2c] sm:$0xf]
  %v78 = vld [vmem:[%s1 + $0x30] sm:$0xf]
  %v79 = vld [vmem:[%s1 + $0x34] sm:$0xf]
  %v80 = vld [vmem:[%s1 + $0x38] sm:$0xf]
  %v81 = vld [vmem:[%s1 + $0x3c] sm:$0xf]
  %v82 = vld [vmem:[%s1 + $0x40] sm:$0xf]
  %v83 = vld [vmem:[%s1 + $0x44] sm:$0xf]
  %v84 = vld [vmem:[%s1 + $0x48] sm:$0xf]
  %v85 = vld [vmem:[%s1 + $0x4c] sm:$0xf]
  %v86 = vld [vmem:[%s1 + $0x50] sm:$0xf]
  %v87 = vld [vmem:[%s1 + $0x54] sm:$0xf]
  %v88 = vld [vmem:[%s1 + $0x58] sm:$0xf]
  %v89 = vld [vmem:[%s1 + $0x5c] sm:$0xf]
  %v90 = vld [vmem:[%s1 + $0x60] sm:$0xf]
  %v91 = vld [vmem:[%s1 + $0x64] sm:$0xf]
  %v92 = vld [vmem:[%s1 + $0x68] sm:$0xf]
  %v93 = vld [vmem:[%s1 + $0x6c] sm:$0xf]
  %v94 = vld [vmem:[%s1 + $0x70] sm:$0xf]
  %v95 = vld [vmem:[%s1 + $0x74] sm:$0xf]
  %v96 = vld [vmem:[%s1 + $0x78] sm:$0xf]
  %v97 = vld [vmem:[%s1 + $0x7c] sm:$0xf]
  %v98 = vld [vmem:[%s1 + $0x80] sm:$0xf]
  %v99 = vld [vmem:[%s1 + $0x84] sm:$0xf]
  %v100 = vld [vmem:[%s1 + $0x88] sm:$0xf]
  %v101 = vld [vmem:[%s1 + $0x8c] sm:$0xf]
  %v102 = vld [vmem:[%s1 + $0x90] sm:$0xf]
  %v103 = vld [vmem:[%s1 + $0x94] sm:$0xf]
  %v104 = vld [vmem:[%s1 + $0x98] sm:$0xf]
  %v105 = vld [vmem:[%s1 + $0x9c] sm:$0xf]
  %v106 = vld [vmem:[%s1 + $0xa0] sm:$0xf]
  %v107 = vld [vmem:[%s1 + $0xa4] sm:$0xf]
  %v108 = vld [vmem:[%s1 + $0xa8] sm:$0xf]
  %v109 = vld [vmem:[%s1 + $0xac] sm:$0xf]
  %v110 = vld [vmem:[%s1 + $0xb0] sm:$0xf]
  %v111 = vld [vmem:[%s1 + $0xb4] sm:$0xf]
  %v112 = vld [vmem:[%s1 + $0xb8] sm:$0xf]
  %v113 = vld [vmem:[%s1 + $0xbc] sm:$0xf]
  %v114 = vld [vmem:[%s1 + $0xc0] sm:$0xf]
  %v115 = vld [vmem:[%s1 + $0xc4] sm:$0xf]
  %v116 = vld [vmem:[%s1 + $0xc8] sm:$0xf]
  %v117 = vld [vmem:[%s1 + $0xcc] sm:$0xf]
  %v118 = vld [vmem:[%s1 + $0xd0] sm:$0xf]
  %v119 = vld [vmem:[%s1 + $0xd4] sm:$0xf]
  %v120 = vld [vmem:[%s1 + $0xd8] sm:$0xf]
  %v121 = vld [vmem:[%s1 + $0xdc] sm:$0xf]
  %v122 = vld [vmem:[%s1 + $0xe0] sm:$0xf]
  %v123 = vld [vmem:[%s1 + $0xe4] sm:$0xf]
  %v124 = vld [vmem:[%s1 + $0xe8] sm:$0xf]
  %v125 = vld [vmem:[%s1 + $0xec] sm:$0xf]
  %v126 = vld [vmem:[%s1 + $0xf0] sm:$0xf]
  %v127 = vld [vmem:[%s1 + $0xf4] sm:$0xf]
  %v128 = vld [vmem:[%s1 + $0xf8] sm:$0xf]
  %v129 = vld [vmem:[%s1 + $0xfc] sm:$0xf]
  %v130 = vld [vmem:[%s1 + $0x100] sm:$0xf]
  %v131 = vld [vmem:[%s1 + $0x104] sm:$0xf]
  %v132 = vld [vmem:[%s1 + $0x108] sm:$0xf]
  %v133 = vld [vmem:[%s1 + $0x10c] sm:$0xf]
  %v134 = vld [vmem:[%s1 + $0x110] sm:$0xf]
  %v135 = vld [vmem:[%s1 + $0x114] sm:$0xf]
  %v136 = vld [vmem:[%s1 + $0x118] sm:$0xf]
  %v137 = vld [vmem:[%s1 + $0x11c] sm:$0xf]
  %v186 = vunpack.c.l.b16 %v18
  %v187 = vunpack.c.h.b16 %v18
  %v188 = vunpack.c.l.b16 %v19
  %v189 = vunpack.c.h.b16 %v19
  %v190 = vunpack.c.l.b16 %v20
  %v191 = vunpack.c.l.b16 %v21
  %v192 = vunpack.c.h.b16 %v21
  %v193 = vunpack.c.l.b16 %v22
  %v194 = vunpack.c.h.b16 %v22
  %v195 = vunpack.c.l.b16 %v23
  %v196 = vunpack.c.l.b16 %v24
  %v197 = vunpack.c.h.b16 %v24
  %v198 = vunpack.c.l.b16 %v25
  %v199 = vunpack.c.h.b16 %v25
  %v200 = vunpack.c.l.b16 %v26
  %v201 = vunpack.c.l.b16 %v27
  %v202 = vunpack.c.h.b16 %v27
  %v203 = vunpack.c.l.b16 %v28
  %v204 = vunpack.c.h.b16 %v28
  %v205 = vunpack.c.l.b16 %v29
  %v206 = vunpack.c.l.b16 %v30
  %v207 = vunpack.c.h.b16 %v30
  %v208 = vunpack.c.l.b16 %v31
  %v209 = vunpack.c.h.b16 %v31
  %v210 = vunpack.c.l.b16 %v32
  %v211 = vunpack.c.l.b16 %v33
  %v212 = vunpack.c.h.b16 %v33
  %v213 = vunpack.c.l.b16 %v34
  %v214 = vunpack.c.h.b16 %v34
  %v215 = vunpack.c.l.b16 %v35
  %v216 = vunpack.c.l.b16 %v36
  %v217 = vunpack.c.h.b16 %v36
  %v218 = vunpack.c.l.b16 %v37
  %v219 = vunpack.c.h.b16 %v37
  %v220 = vunpack.c.l.b16 %v38
  %v221 = vunpack.c.l.b16 %v39
  %v222 = vunpack.c.h.b16 %v39
  %v223 = vunpack.c.l.b16 %v40
  %v224 = vunpack.c.h.b16 %v40
  %v225 = vunpack.c.l.b16 %v41
  %v226 = vunpack.c.l.b16 %v42
  %v227 = vunpack.c.h.b16 %v42
  %v228 = vunpack.c.l.b16 %v43
  %v229 = vunpack.c.h.b16 %v43
  %v230 = vunpack.c.l.b16 %v44
  %v231 = vunpack.c.l.b16 %v45
  %v232 = vunpack.c.h.b16 %v45
  %v233 = vunpack.c.l.b16 %v46
  %v234 = vunpack.c.h.b16 %v46
  %v235 = vunpack.c.l.b16 %v47
  %v236 = vunpack.c.l.b16 %v48
  %v237 = vunpack.c.h.b16 %v48
  %v238 = vunpack.c.l.b16 %v49
  %v239 = vunpack.c.h.b16 %v49
  %v240 = vunpack.c.l.b16 %v50
  %v241 = vunpack.c.l.b16 %v51
  %v242 = vunpack.c.h.b16 %v51
  %v243 = vunpack.c.l.b16 %v52
  %v244 = vunpack.c.h.b16 %v52
  %v245 = vunpack.c.l.b16 %v53
  %v246 = vunpack.c.l.b16 %v54
  %v247 = vunpack.c.h.b16 %v54
  %v248 = vunpack.c.l.b16 %v55
  %v249 = vunpack.c.h.b16 %v55
  %v250 = vunpack.c.l.b16 %v56
  %v251 = vunpack.c.l.b16 %v57
  %v252 = vunpack.c.h.b16 %v57
  %v253 = vunpack.c.l.b16 %v58
  %v254 = vunpack.c.h.b16 %v58
  %v255 = vunpack.c.l.b16 %v59
  %v256 = vunpack.c.l.b16 %v60
  %v257 = vunpack.c.h.b16 %v60
  %v258 = vunpack.c.l.b16 %v61
  %v259 = vunpack.c.h.b16 %v61
  %v260 = vunpack.c.l.b16 %v62
  %v261 = vunpack.c.l.b16 %v63
  %v262 = vunpack.c.h.b16 %v63
  %v263 = vunpack.c.l.b16 %v64
  %v264 = vunpack.c.h.b16 %v64
  %v265 = vunpack.c.l.b16 %v65
  %v266 = vpack.c.b16 %v191, %v186
  %v267 = vpack.c.b16 %v192, %v187
  %v268 = vpack.c.b16 %v193, %v188
  %v269 = vpack.c.b16 %v194, %v189
  %v270 = vpack.c.b16 %v195, %v190
  %v271 = vpack.c.b16 %v201, %v196
  %v272 = vpack.c.b16 %v202, %v197
  %v273 = vpack.c.b16 %v203, %v198
  %v274 = vpack.c.b16 %v204, %v199
  %v275 = vpack.c.b16 %v205, %v200
  %v276 = vpack.c.b16 %v211, %v206
  %v277 = vpack.c.b16 %v212, %v207
  %v278 = vpack.c.b16 %v213, %v208
  %v279 = vpack.c.b16 %v214, %v209
  %v280 = vpack.c.b16 %v215, %v210
  %v281 = vpack.c.b16 %v221, %v216
  %v282 = vpack.c.b16 %v222, %v217
  %v283 = vpack.c.b16 %v223, %v218
  %v284 = vpack.c.b16 %v224, %v219
  %v285 = vpack.c.b16 %v225, %v220
  %v286 = vpack.c.b16 %v231, %v226
  %v287 = vpack.c.b16 %v232, %v227
  %v288 = vpack.c.b16 %v233, %v228
  %v289 = vpack.c.b16 %v234, %v229
  %v290 = vpack.c.b16 %v235, %v230
  %v291 = vpack.c.b16 %v241, %v236
  %v292 = vpack.c.b16 %v242, %v237
  %v293 = vpack.c.b16 %v243, %v238
  %v294 = vpack.c.b16 %v244, %v239
  %v295 = vpack.c.b16 %v245, %v240
  %v296 = vpack.c.b16 %v251, %v246
  %v297 = vpack.c.b16 %v252, %v247
  %v298 = vpack.c.b16 %v253, %v248
  %v299 = vpack.c.b16 %v254, %v249
  %v300 = vpack.c.b16 %v255, %v250
  %v301 = vpack.c.b16 %v261, %v256
  %v302 = vpack.c.b16 %v262, %v257
  %v303 = vpack.c.b16 %v263, %v258
  %v304 = vpack.c.b16 %v264, %v259
  %v305 = vpack.c.b16 %v265, %v260
  %v410 = vunpack.c.l.b16 %v66
  %v411 = vunpack.c.l.b16 %v67
  %v412 = vunpack.c.l.b16 %v68
  %v413 = vunpack.c.l.b16 %v69
  %v414 = vunpack.c.l.b16 %v70
  %v415 = vunpack.c.l.b16 %v71
  %v416 = vunpack.c.l.b16 %v72
  %v417 = vunpack.c.l.b16 %v73
  %v418 = vunpack.c.l.b16 %v74
  %v419 = vunpack.c.l.b16 %v75
  %v420 = vunpack.c.l.b16 %v76
  %v421 = vunpack.c.l.b16 %v77
  %v422 = vunpack.c.l.b16 %v78
  %v423 = vunpack.c.l.b16 %v79
  %v424 = vunpack.c.l.b16 %v80
  %v425 = vunpack.c.l.b16 %v81
  %v426 = vunpack.c.l.b16 %v82
  %v427 = vunpack.c.l.b16 %v83
  %v428 = vunpack.c.l.b16 %v84
  %v429 = vunpack.c.l.b16 %v85
  %v430 = vunpack.c.l.b16 %v86
  %v431 = vunpack.c.l.b16 %v87
  %v432 = vunpack.c.l.b16 %v88
  %v433 = vunpack.c.l.b16 %v89
  %v434 = vunpack.c.l.b16 %v90
  %v435 = vunpack.c.l.b16 %v91
  %v436 = vunpack.c.l.b16 %v92
  %v437 = vunpack.c.l.b16 %v93
  %v438 = vunpack.c.l.b16 %v94
  %v439 = vunpack.c.l.b16 %v95
  %v440 = vunpack.c.l.b16 %v96
  %v441 = vunpack.c.l.b16 %v97
  %v442 = vunpack.c.l.b16 %v98
  %v443 = vunpack.c.l.b16 %v99
  %v444 = vunpack.c.l.b16 %v100
  %v445 = vunpack.c.l.b16 %v101
  %v446 = vunpack.c.l.b16 %v102
  %v447 = vunpack.c.l.b16 %v103
  %v448 = vunpack.c.l.b16 %v104
  %v449 = vunpack.c.l.b16 %v105
  %v450 = vunpack.c.l.b16 %v106
  %v451 = vunpack.c.l.b16 %v107
  %v452 = vunpack.c.l.b16 %v108
  %v453 = vunpack.c.l.b16 %v109
  %v454 = vunpack.c.l.b16 %v110
  %v455 = vunpack.c.l.b16 %v111
  %v456 = vunpack.c.l.b16 %v112
  %v457 = vunpack.c.l.b16 %v113
  %v458 = vunpack.c.l.b16 %v114
  %v459 = vunpack.c.l.b16 %v115
  %v460 = vunpack.c.l.b16 %v116
  %v461 = vunpack.c.l.b16 %v117
  %v462 = vunpack.c.l.b16 %v118
  %v463 = vunpack.c.l.b16 %v119
  %v464 = vunpack.c.l.b16 %v120
  %v465 = vunpack.c.l.b16 %v121
  %v466 = vunpack.c.l.b16 %v122
  %v467 = vunpack.c.l.b16 %v123
  %v468 = vunpack.c.l.b16 %v124
  %v469 = vunpack.c.l.b16 %v125
  %v470 = vunpack.c.l.b16 %v126
  %v471 = vunpack.c.l.b16 %v127
  %v472 = vunpack.c.l.b16 %v128
  %v473 = vunpack.c.l.b16 %v129
  %v474 = vunpack.c.l.b16 %v130
  %v475 = vunpack.c.l.b16 %v131
  %v476 = vunpack.c.l.b16 %v132
  %v477 = vunpack.c.l.b16 %v133
  %v478 = vunpack.c.l.b16 %v134
  %v479 = vunpack.c.l.b16 %v135
  %v480 = vunpack.c.l.b16 %v136
  %v481 = vunpack.c.l.b16 %v137
  %v482 = vpack.c.b16 %v411, %v410
  %v483 = vpack.c.b16 %v413, %v412
  %v484 = vpack.c.b16 %v415, %v414
  %v485 = vpack.c.b16 %v417, %v416
  %v486 = vpack.c.b16 %v419, %v418
  %v487 = vpack.c.b16 %v421, %v420
  %v488 = vpack.c.b16 %v423, %v422
  %v489 = vpack.c.b16 %v425, %v424
  %v490 = vpack.c.b16 %v427, %v426
  %v491 = vpack.c.b16 %v429, %v428
  %v492 = vpack.c.b16 %v431, %v430
  %v493 = vpack.c.b16 %v433, %v432
  %v494 = vpack.c.b16 %v435, %v434
  %v495 = vpack.c.b16 %v437, %v436
  %v496 = vpack.c.b16 %v439, %v438
  %v497 = vpack.c.b16 %v441, %v440
  %v498 = vpack.c.b16 %v443, %v442
  %v499 = vpack.c.b16 %v445, %v444
  %v500 = vpack.c.b16 %v447, %v446
  %v501 = vpack.c.b16 %v449, %v448
  %v502 = vpack.c.b16 %v451, %v450
  %v503 = vpack.c.b16 %v453, %v452
  %v504 = vpack.c.b16 %v455, %v454
  %v505 = vpack.c.b16 %v457, %v456
  %v506 = vpack.c.b16 %v459, %v458
  %v507 = vpack.c.b16 %v461, %v460
  %v508 = vpack.c.b16 %v463, %v462
  %v509 = vpack.c.b16 %v465, %v464
  %v510 = vpack.c.b16 %v467, %v466
  %v511 = vpack.c.b16 %v469, %v468
  %v512 = vpack.c.b16 %v471, %v470
  %v513 = vpack.c.b16 %v473, %v472
  %v514 = vpack.c.b16 %v475, %v474
  %v515 = vpack.c.b16 %v477, %v476
  %v516 = vpack.c.b16 %v479, %v478
  %v517 = vpack.c.b16 %v481, %v480
  %vm554 = vcmask 523264
  %v556 = vsel %vm554, %v270, 0
  %v559 = vsel %vm554, %v275, 0
  %v562 = vsel %vm554, %v280, 0
  %v565 = vsel %vm554, %v285, 0
  %v568 = vsel %vm554, %v290, 0
  %v571 = vsel %vm554, %v295, 0
  %v574 = vsel %vm554, %v300, 0
  %v577 = vsel %vm554, %v305, 0
  %579 = vmatprep.subr.bf16.mxu0 0
  %580 = vmatpush1.bf16.msra.mxu0 %v482
  %581 = vmatprep.subr.bf16.mxu0 0
  %582 = vmatpush1.bf16.msra.mxu0 %v483
  %583 = vmatprep.subr.bf16.mxu0 0
  %584 = vmatpush1.bf16.msra.mxu0 %v484
  %585 = vmatprep.subr.bf16.mxu0 0
  %586 = vmatpush1.bf16.msra.mxu0 %v485
  %587 = vmatprep.subr.bf16.mxu0 0
  %588 = vmatpush1.bf16.msra.mxu0 %v486
  %589 = vmatprep.subr.bf16.mxu0 0
  %590 = vmatpush1.bf16.msra.mxu0 %v487
  %591 = vmatprep.subr.bf16.mxu0 0
  %592 = vmatpush1.bf16.msra.mxu0 %v488
  %593 = vmatprep.subr.bf16.mxu0 0
  %594 = vmatpush1.bf16.msra.mxu0 %v489
  %595 = vmatprep.subr.bf16.mxu0 0
  %596 = vmatpush1.bf16.msra.mxu0 %v490
  %597 = vmatprep.subr.bf16.mxu0 0
  %598 = vmatpush1.bf16.msra.mxu0 %v491
  %599 = vmatprep.subr.bf16.mxu0 0
  %600 = vmatpush1.bf16.msra.mxu0 %v492
  %601 = vmatprep.subr.bf16.mxu0 0
  %602 = vmatpush1.bf16.msra.mxu0 %v493
  %603 = vmatprep.subr.bf16.mxu0 0
  %604 = vmatpush1.bf16.msra.mxu0 %v494
  %605 = vmatprep.subr.bf16.mxu0 0
  %606 = vmatpush1.bf16.msra.mxu0 %v495
  %607 = vmatprep.subr.bf16.mxu0 0
  %608 = vmatpush1.bf16.msra.mxu0 %v496
  %609 = vmatprep.subr.bf16.mxu0 0
  %610 = vmatpush1.bf16.msra.mxu0 %v497
  %611 = vmatprep.mubr.bf16.mxu0 %v267
  %612 = vmatmul.mubr.bf16.gmra.mrb[0].mxu0 %v266
  %v613 = vpop.f32.mrb[0].mxu0
  %v614 = vadd.f32 0.0, %v613
  %v615 = vpop.f32.mrb[0].mxu0
  %v616 = vpop.f32.mrb[0].mxu0
  %v617 = vadd.f32 0.0, %v616
  %v618 = vpop.f32.mrb[0].mxu0
  %619 = vmatprep.mubr.bf16.mxu0 %v272
  %620 = vmatmul.mubr.bf16.gmra.mrb[0].mxu0 %v271
  %v621 = vpop.f32.mrb[0].mxu0
  %v622 = vadd.f32 0.0, %v621
  %v623 = vpop.f32.mrb[0].mxu0
  %v624 = vpop.f32.mrb[0].mxu0
  %v625 = vadd.f32 0.0, %v624
  %v626 = vpop.f32.mrb[0].mxu0
  %627 = vmatprep.mubr.bf16.mxu0 %v277
  %628 = vmatmul.mubr.bf16.gmra.mrb[0].mxu0 %v276
  %v629 = vpop.f32.mrb[0].mxu0
  %v630 = vadd.f32 0.0, %v629
  %v631 = vpop.f32.mrb[0].mxu0
  %v632 = vpop.f32.mrb[0].mxu0
  %v633 = vadd.f32 0.0, %v632
  %v634 = vpop.f32.mrb[0].mxu0
  %635 = vmatprep.mubr.bf16.mxu0 %v282
  %636 = vmatmul.mubr.bf16.gmra.mrb[0].mxu0 %v281
  %v637 = vpop.f32.mrb[0].mxu0
  %v638 = vadd.f32 0.0, %v637
  %v639 = vpop.f32.mrb[0].mxu0
  %v640 = vpop.f32.mrb[0].mxu0
  %v641 = vadd.f32 0.0, %v640
  %v642 = vpop.f32.mrb[0].mxu0
  %643 = vmatprep.mubr.bf16.mxu0 %v287
  %644 = vmatmul.mubr.bf16.gmra.mrb[0].mxu0 %v286
  %v645 = vpop.f32.mrb[0].mxu0
  %v646 = vadd.f32 0.0, %v645
  %v647 = vpop.f32.mrb[0].mxu0
  %v648 = vpop.f32.mrb[0].mxu0
  %v649 = vadd.f32 0.0, %v648
  %v650 = vpop.f32.mrb[0].mxu0
  %651 = vmatprep.mubr.bf16.mxu0 %v292
  %652 = vmatmul.mubr.bf16.gmra.mrb[0].mxu0 %v291
  %v653 = vpop.f32.mrb[0].mxu0
  %v654 = vadd.f32 0.0, %v653
  %v655 = vpop.f32.mrb[0].mxu0
  %v656 = vpop.f32.mrb[0].mxu0
  %v657 = vadd.f32 0.0, %v656
  %v658 = vpop.f32.mrb[0].mxu0
  %659 = vmatprep.mubr.bf16.mxu0 %v297
  %660 = vmatmul.mubr.bf16.gmra.mrb[0].mxu0 %v296
  %v661 = vpop.f32.mrb[0].mxu0
  %v662 = vadd.f32 0.0, %v661
  %v663 = vpop.f32.mrb[0].mxu0
  %v664 = vpop.f32.mrb[0].mxu0
  %v665 = vadd.f32 0.0, %v664
  %v666 = vpop.f32.mrb[0].mxu0
  %667 = vmatprep.mubr.bf16.mxu0 %v302
  %668 = vmatmul.mubr.bf16.gmra.mrb[0].mxu0 %v301
  %v669 = vpop.f32.mrb[0].mxu0
  %v670 = vadd.f32 0.0, %v669
  %v671 = vpop.f32.mrb[0].mxu0
  %v672 = vpop.f32.mrb[0].mxu0
  %v673 = vadd.f32 0.0, %v672
  %v674 = vpop.f32.mrb[0].mxu0
  %675 = vdwg.mxu0
  %676 = vmatprep.subr.bf16.mxu0 0
  %677 = vmatpush1.bf16.msra.mxu0 %v498
  %678 = vmatprep.subr.bf16.mxu0 0
  %679 = vmatpush1.bf16.msra.mxu0 %v499
  %680 = vmatprep.subr.bf16.mxu0 0
  %681 = vmatpush1.bf16.msra.mxu0 %v500
  %682 = vmatprep.subr.bf16.mxu0 0
  %683 = vmatpush1.bf16.msra.mxu0 %v501
  %684 = vmatprep.subr.bf16.mxu0 0
  %685 = vmatpush1.bf16.msra.mxu0 %v502
  %686 = vmatprep.subr.bf16.mxu0 0
  %687 = vmatpush1.bf16.msra.mxu0 %v503
  %688 = vmatprep.subr.bf16.mxu0 0
  %689 = vmatpush1.bf16.msra.mxu0 %v504
  %690 = vmatprep.subr.bf16.mxu0 0
  %691 = vmatpush1.bf16.msra.mxu0 %v505
  %692 = vmatprep.subr.bf16.mxu0 0
  %693 = vmatpush1.bf16.msra.mxu0 %v506
  %694 = vmatprep.subr.bf16.mxu0 0
  %695 = vmatpush1.bf16.msra.mxu0 %v507
  %696 = vmatprep.subr.bf16.mxu0 0
  %697 = vmatpush1.bf16.msra.mxu0 %v508
  %698 = vmatprep.subr.bf16.mxu0 0
  %699 = vmatpush1.bf16.msra.mxu0 %v509
  %700 = vmatprep.subr.bf16.mxu0 0
  %701 = vmatpush1.bf16.msra.mxu0 %v510
  %702 = vmatprep.subr.bf16.mxu0 0
  %703 = vmatpush1.bf16.msra.mxu0 %v511
  %704 = vmatprep.subr.bf16.mxu0 0
  %705 = vmatpush1.bf16.msra.mxu0 %v512
  %706 = vmatprep.subr.bf16.mxu0 0
  %707 = vmatpush1.bf16.msra.mxu0 %v513
  %708 = vmatprep.mubr.bf16.mxu0 %v269
  %709 = vmatmul.mubr.bf16.gmra.mrb[0].mxu0 %v268
  %v710 = vpop.f32.mrb[0].mxu0
  %v711 = vadd.f32 %v614, %v710
  %v712 = vpop.f32.mrb[0].mxu0
  %v713 = vpop.f32.mrb[0].mxu0
  %v714 = vadd.f32 %v617, %v713
  %v715 = vpop.f32.mrb[0].mxu0
  %716 = vmatprep.mubr.bf16.mxu0 %v274
  %717 = vmatmul.mubr.bf16.gmra.mrb[0].mxu0 %v273
  %v718 = vpop.f32.mrb[0].mxu0
  %v719 = vadd.f32 %v622, %v718
  %v720 = vpop.f32.mrb[0].mxu0
  %v721 = vpop.f32.mrb[0].mxu0
  %v722 = vadd.f32 %v625, %v721
  %v723 = vpop.f32.mrb[0].mxu0
  %724 = vmatprep.mubr.bf16.mxu0 %v279
  %725 = vmatmul.mubr.bf16.gmra.mrb[0].mxu0 %v278
  %v726 = vpop.f32.mrb[0].mxu0
  %v727 = vadd.f32 %v630, %v726
  %v728 = vpop.f32.mrb[0].mxu0
  %v729 = vpop.f32.mrb[0].mxu0
  %v730 = vadd.f32 %v633, %v729
  %v731 = vpop.f32.mrb[0].mxu0
  %732 = vmatprep.mubr.bf16.mxu0 %v284
  %733 = vmatmul.mubr.bf16.gmra.mrb[0].mxu0 %v283
  %v734 = vpop.f32.mrb[0].mxu0
  %v735 = vadd.f32 %v638, %v734
  %v736 = vpop.f32.mrb[0].mxu0
  %v737 = vpop.f32.mrb[0].mxu0
  %v738 = vadd.f32 %v641, %v737
  %v739 = vpop.f32.mrb[0].mxu0
  %740 = vmatprep.mubr.bf16.mxu0 %v289
  %741 = vmatmul.mubr.bf16.gmra.mrb[0].mxu0 %v288
  %v742 = vpop.f32.mrb[0].mxu0
  %v743 = vadd.f32 %v646, %v742
  %v744 = vpop.f32.mrb[0].mxu0
  %v745 = vpop.f32.mrb[0].mxu0
  %v746 = vadd.f32 %v649, %v745
  %v747 = vpop.f32.mrb[0].mxu0
  %748 = vmatprep.mubr.bf16.mxu0 %v294
  %749 = vmatmul.mubr.bf16.gmra.mrb[0].mxu0 %v293
  %v750 = vpop.f32.mrb[0].mxu0
  %v751 = vadd.f32 %v654, %v750
  %v752 = vpop.f32.mrb[0].mxu0
  %v753 = vpop.f32.mrb[0].mxu0
  %v754 = vadd.f32 %v657, %v753
  %v755 = vpop.f32.mrb[0].mxu0
  %756 = vmatprep.mubr.bf16.mxu0 %v299
  %757 = vmatmul.mubr.bf16.gmra.mrb[0].mxu0 %v298
  %v758 = vpop.f32.mrb[0].mxu0
  %v759 = vadd.f32 %v662, %v758
  %v760 = vpop.f32.mrb[0].mxu0
  %v761 = vpop.f32.mrb[0].mxu0
  %v762 = vadd.f32 %v665, %v761
  %v763 = vpop.f32.mrb[0].mxu0
  %764 = vmatprep.mubr.bf16.mxu0 %v304
  %765 = vmatmul.mubr.bf16.gmra.mrb[0].mxu0 %v303
  %v766 = vpop.f32.mrb[0].mxu0
  %v767 = vadd.f32 %v670, %v766
  %v768 = vpop.f32.mrb[0].mxu0
  %v769 = vpop.f32.mrb[0].mxu0
  %v770 = vadd.f32 %v673, %v769
  %v771 = vpop.f32.mrb[0].mxu0
  %772 = vdwg.mxu0
  %773 = vmatprep.subr.bf16.mxu0 0
  %774 = vmatpush1.bf16.msra.mxu0 %v514
  %775 = vmatprep.subr.bf16.mxu0 0
  %776 = vmatpush1.bf16.msra.mxu0 %v515
  %777 = vmatprep.subr.bf16.mxu0 0
  %778 = vmatpush1.bf16.msra.mxu0 %v516
  %779 = vmatprep.subr.bf16.mxu0 0
  %780 = vmatpush1.bf16.msra.mxu0 %v517
  %781 = vmatprep.subr.bf16.mxu0 0
  %782 = vmatpush1.bf16.msra.mxu0 0
  %783 = vmatprep.subr.bf16.mxu0 0
  %784 = vmatpush1.bf16.msra.mxu0 0
  %785 = vmatprep.subr.bf16.mxu0 0
  %786 = vmatpush1.bf16.msra.mxu0 0
  %787 = vmatprep.subr.bf16.mxu0 0
  %788 = vmatpush1.bf16.msra.mxu0 0
  %789 = vmatprep.subr.bf16.mxu0 0
  %790 = vmatpush1.bf16.msra.mxu0 0
  %791 = vmatprep.subr.bf16.mxu0 0
  %792 = vmatpush1.bf16.msra.mxu0 0
  %793 = vmatprep.subr.bf16.mxu0 0
  %794 = vmatpush1.bf16.msra.mxu0 0
  %795 = vmatprep.subr.bf16.mxu0 0
  %796 = vmatpush1.bf16.msra.mxu0 0
  %797 = vmatprep.subr.bf16.mxu0 0
  %798 = vmatpush1.bf16.msra.mxu0 0
  %799 = vmatprep.subr.bf16.mxu0 0
  %800 = vmatpush1.bf16.msra.mxu0 0
  %801 = vmatprep.subr.bf16.mxu0 0
  %802 = vmatpush1.bf16.msra.mxu0 0
  %803 = vmatprep.subr.bf16.mxu0 0
  %804 = vmatpush1.bf16.msra.mxu0 0
  %805 = vmatprep.mubr.bf16.mxu0 0
  %806 = vmatmul.mubr.bf16.gmra.mrb[0].mxu0 %v556
  %v807 = vpop.f32.mrb[0].mxu0
  %v808 = vadd.f32 %v711, %v807
  %v809 = vpop.f32.mrb[0].mxu0
  %v810 = vpop.f32.mrb[0].mxu0
  %v811 = vadd.f32 %v714, %v810
  %v812 = vpop.f32.mrb[0].mxu0
  %813 = vmatprep.mubr.bf16.mxu0 0
  %814 = vmatmul.mubr.bf16.gmra.mrb[0].mxu0 %v559
  %v815 = vpop.f32.mrb[0].mxu0
  %v816 = vadd.f32 %v719, %v815
  %v817 = vpop.f32.mrb[0].mxu0
  %v818 = vpop.f32.mrb[0].mxu0
  %v819 = vadd.f32 %v722, %v818
  %v820 = vpop.f32.mrb[0].mxu0
  %821 = vmatprep.mubr.bf16.mxu0 0
  %822 = vmatmul.mubr.bf16.gmra.mrb[0].mxu0 %v562
  %v823 = vpop.f32.mrb[0].mxu0
  %v824 = vadd.f32 %v727, %v823
  %v825 = vpop.f32.mrb[0].mxu0
  %v826 = vpop.f32.mrb[0].mxu0
  %v827 = vadd.f32 %v730, %v826
  %v828 = vpop.f32.mrb[0].mxu0
  %829 = vmatprep.mubr.bf16.mxu0 0
  %830 = vmatmul.mubr.bf16.gmra.mrb[0].mxu0 %v565
  %v831 = vpop.f32.mrb[0].mxu0
  %v832 = vadd.f32 %v735, %v831
  %v833 = vpop.f32.mrb[0].mxu0
  %v834 = vpop.f32.mrb[0].mxu0
  %v835 = vadd.f32 %v738, %v834
  %v836 = vpop.f32.mrb[0].mxu0
  %837 = vmatprep.mubr.bf16.mxu0 0
  %838 = vmatmul.mubr.bf16.gmra.mrb[0].mxu0 %v568
  %v839 = vpop.f32.mrb[0].mxu0
  %v840 = vadd.f32 %v743, %v839
  %v841 = vpop.f32.mrb[0].mxu0
  %v842 = vpop.f32.mrb[0].mxu0
  %v843 = vadd.f32 %v746, %v842
  %v844 = vpop.f32.mrb[0].mxu0
  %845 = vmatprep.mubr.bf16.mxu0 0
  %846 = vmatmul.mubr.bf16.gmra.mrb[0].mxu0 %v571
  %v847 = vpop.f32.mrb[0].mxu0
  %v848 = vadd.f32 %v751, %v847
  %v849 = vpop.f32.mrb[0].mxu0
  %v850 = vpop.f32.mrb[0].mxu0
  %v851 = vadd.f32 %v754, %v850
  %v852 = vpop.f32.mrb[0].mxu0
  %853 = vmatprep.mubr.bf16.mxu0 0
  %854 = vmatmul.mubr.bf16.gmra.mrb[0].mxu0 %v574
  %v855 = vpop.f32.mrb[0].mxu0
  %v856 = vadd.f32 %v759, %v855
  %v857 = vpop.f32.mrb[0].mxu0
  %v858 = vpop.f32.mrb[0].mxu0
  %v859 = vadd.f32 %v762, %v858
  %v860 = vpop.f32.mrb[0].mxu0
  %861 = vmatprep.mubr.bf16.mxu0 0
  %862 = vmatmul.mubr.bf16.gmra.mrb[0].mxu0 %v577
  %v863 = vpop.f32.mrb[0].mxu0
  %v864 = vadd.f32 %v767, %v863
  %v865 = vpop.f32.mrb[0].mxu0
  %v866 = vpop.f32.mrb[0].mxu0
  %v867 = vadd.f32 %v770, %v866
  %v868 = vpop.f32.mrb[0].mxu0
  %869 = vdwg.mxu0
  %v870 = vld [vmem:[%s2] sm:$0x1]
  %v872 = vlaneseq
  %v873 = vshrl.u32 %v872, 7
  %v874 = vsub.s32 0, %v873
  %v875 = vrot.slane %v870, %v874
  %v877 = vmul.f32 %v808, %v875
  %v878 = vmul.f32 %v811, %v875
  %v879 = vmul.f32 %v816, %v875
  %v880 = vmul.f32 %v819, %v875
  %v881 = vmul.f32 %v824, %v875
  %v882 = vmul.f32 %v827, %v875
  %v883 = vmul.f32 %v832, %v875
  %v884 = vmul.f32 %v835, %v875
  %v885 = vmul.f32 %v840, %v875
  %v886 = vmul.f32 %v843, %v875
  %v887 = vmul.f32 %v848, %v875
  %v888 = vmul.f32 %v851, %v875
  %v889 = vmul.f32 %v856, %v875
  %v890 = vmul.f32 %v859, %v875
  %v891 = vmul.f32 %v864, %v875
  %v892 = vmul.f32 %v867, %v875
  %v893 = vld [vmem:[%s3] sm:$0x1]
  %v895 = vlaneseq
  %v896 = vshrl.u32 %v895, 7
  %v897 = vsub.s32 0, %v896
  %v898 = vrot.slane %v893, %v897
  %v900 = vadd.f32 %v877, %v898
  %v901 = vadd.f32 %v878, %v898
  %v902 = vadd.f32 %v879, %v898
  %v903 = vadd.f32 %v880, %v898
  %v904 = vadd.f32 %v881, %v898
  %v905 = vadd.f32 %v882, %v898
  %v906 = vadd.f32 %v883, %v898
  %v907 = vadd.f32 %v884, %v898
  %v908 = vadd.f32 %v885, %v898
  %v909 = vadd.f32 %v886, %v898
  %v910 = vadd.f32 %v887, %v898
  %v911 = vadd.f32 %v888, %v898
  %v912 = vadd.f32 %v889, %v898
  %v913 = vadd.f32 %v890, %v898
  %v914 = vadd.f32 %v891, %v898
  %v915 = vadd.f32 %v892, %v898
  %v916 = vmax.f32 %v900, 0.0
  %v917 = vmax.f32 %v901, 0.0
  %v918 = vmax.f32 %v902, 0.0
  %v919 = vmax.f32 %v903, 0.0
  %v920 = vmax.f32 %v904, 0.0
  %v921 = vmax.f32 %v905, 0.0
  %v922 = vmax.f32 %v906, 0.0
  %v923 = vmax.f32 %v907, 0.0
  %v924 = vmax.f32 %v908, 0.0
  %v925 = vmax.f32 %v909, 0.0
  %v926 = vmax.f32 %v910, 0.0
  %v927 = vmax.f32 %v911, 0.0
  %v928 = vmax.f32 %v912, 0.0
  %v929 = vmax.f32 %v913, 0.0
  %v930 = vmax.f32 %v914, 0.0
  %v931 = vmax.f32 %v915, 0.0
  %932 = vst [vmem:[%s4] sm:$0xff] %v916
  %933 = vst [vmem:[%s4 + $0x8] sm:$0xff] %v917
  %934 = vst [vmem:[%s4 + $0x10] sm:$0xff] %v918
  %935 = vst [vmem:[%s4 + $0x18] sm:$0xff] %v919
  %936 = vst [vmem:[%s4 + $0x20] sm:$0xff] %v920
  %937 = vst [vmem:[%s4 + $0x28] sm:$0xff] %v921
  %938 = vst [vmem:[%s4 + $0x30] sm:$0xff] %v922
  %939 = vst [vmem:[%s4 + $0x38] sm:$0xff] %v923
  %940 = vst [vmem:[%s4 + $0x40] sm:$0xff] %v924
  %941 = vst [vmem:[%s4 + $0x48] sm:$0xff] %v925
  %942 = vst [vmem:[%s4 + $0x50] sm:$0xff] %v926
  %943 = vst [vmem:[%s4 + $0x58] sm:$0xff] %v927
  %944 = vst [vmem:[%s4 + $0x60] sm:$0xff] %v928
  %945 = vst [vmem:[%s4 + $0x68] sm:$0xff] %v929
  %946 = vst [vmem:[%s4 + $0x70] sm:$0xff] %v930
  %947 = vst [vmem:[%s4 + $0x78] sm:$0xff] %v931
  // Predicated region
  $region18: #{cnn_forward.10} parent=0 // pred_check
    _
  $region19: #{cnn_forward.10} parent=0 // pred_check_branch
    %949 = sbr.rel (0) target = $region21
  $region20: #{cnn_forward.10} parent=0 // pred_region
    _
  $region21: #{cnn_forward.10} parent=0 // pred_fallthru
    _
  // Predicated region
  $region22: #{cnn_forward.10} parent=0 // pred_check
    _
  $region23: #{cnn_forward.10} parent=0 // pred_check_branch
    %951 = sbr.rel (0) target = $region25
  $region24: #{cnn_forward.10} parent=0 // pred_region
    _
  $region25: #{cnn_forward.10} parent=0 // pred_fallthru
    _

// kernel: cnn_forward.11
$region0: #{cnn_forward.11}
  #allocation0 [shape = 'u32[]', space=smem, size = 0x4, offset = 0x4, fixed_abs, tag = 'smem constant byte address 0x4 - core index']
  #allocation1 [shape = 'u32[144,128]{1,0:T(1,128)}', space=vmem, size = 0x12000, scoped, tag = 'internal scratch']
  %s0 = inlined_call_operand.vmem [shape: bf16[128,64], index: 0, kind: input, shape index: {}]
  %s1 = inlined_call_operand.vmem [shape: bf16[64,128], index: 1, kind: input, shape index: {}]
  %s2 = inlined_call_operand.vmem [shape: f32[1,128], index: 2, kind: input, shape index: {}]
  %s3 = inlined_call_operand.vmem [shape: f32[1,128], index: 3, kind: input, shape index: {}]
  %s4 = inlined_call_operand.vmem [shape: f32[128,128], index: 4, kind: output, shape index: {}]
  %s5 = sld [smem:[#allocation0]]
  $region26: #{cnn_forward.11} parent=0
    _
  %s7 = ssub.s32 1, %s5
  %s8 = scalar_select 0, %s7, %s5
  // Predicated region
  $region2: #{cnn_forward.11} parent=0 // pred_check
    _
  $region3: #{cnn_forward.11} parent=0 // pred_check_branch
    %10 = sbr.rel (0) target = $region5
  $region4: #{cnn_forward.11} parent=0 // pred_region
    _
  $region5: #{cnn_forward.11} parent=0 // pred_fallthru
    _
  // Predicated region
  $region6: #{cnn_forward.11} parent=0 // pred_check
    _
  $region7: #{cnn_forward.11} parent=0 // pred_check_branch
    %12 = sbr.rel (0) target = $region9
  $region8: #{cnn_forward.11} parent=0 // pred_region
    _
  $region9: #{cnn_forward.11} parent=0 // pred_fallthru
    _
  // Predicated region
  $region10: #{cnn_forward.11} parent=0 // pred_check
    _
  $region11: #{cnn_forward.11} parent=0 // pred_check_branch
    %14 = sbr.rel (0) target = $region13
  $region12: #{cnn_forward.11} parent=0 // pred_region
    _
  $region13: #{cnn_forward.11} parent=0 // pred_fallthru
    _
  // Predicated region
  $region14: #{cnn_forward.11} parent=0 // pred_check
    _
  $region15: #{cnn_forward.11} parent=0 // pred_check_branch
    %16 = sbr.rel (0) target = $region17
  $region16: #{cnn_forward.11} parent=0 // pred_region
    _
  $region17: #{cnn_forward.11} parent=0 // pred_fallthru
    _
  %v18 = vld [vmem:[%s0] sm:$0xf]
  %v19 = vld [vmem:[%s0 + $0x4] sm:$0xf]
  %v20 = vld [vmem:[%s0 + $0x8] sm:$0xf]
  %v21 = vld [vmem:[%s0 + $0xc] sm:$0xf]
  %v22 = vld [vmem:[%s0 + $0x10] sm:$0xf]
  %v23 = vld [vmem:[%s0 + $0x14] sm:$0xf]
  %v24 = vld [vmem:[%s0 + $0x18] sm:$0xf]
  %v25 = vld [vmem:[%s0 + $0x1c] sm:$0xf]
  %v26 = vld [vmem:[%s0 + $0x20] sm:$0xf]
  %v27 = vld [vmem:[%s0 + $0x24] sm:$0xf]
  %v28 = vld [vmem:[%s0 + $0x28] sm:$0xf]
  %v29 = vld [vmem:[%s0 + $0x2c] sm:$0xf]
  %v30 = vld [vmem:[%s0 + $0x30] sm:$0xf]
  %v31 = vld [vmem:[%s0 + $0x34] sm:$0xf]
  %v32 = vld [vmem:[%s0 + $0x38] sm:$0xf]
  %v33 = vld [vmem:[%s0 + $0x3c] sm:$0xf]
  %v34 = vld [vmem:[%s1] sm:$0xf]
  %v35 = vld [vmem:[%s1 + $0x4] sm:$0xf]
  %v36 = vld [vmem:[%s1 + $0x8] sm:$0xf]
  %v37 = vld [vmem:[%s1 + $0xc] sm:$0xf]
  %v38 = vld [vmem:[%s1 + $0x10] sm:$0xf]
  %v39 = vld [vmem:[%s1 + $0x14] sm:$0xf]
  %v40 = vld [vmem:[%s1 + $0x18] sm:$0xf]
  %v41 = vld [vmem:[%s1 + $0x1c] sm:$0xf]
  %v58 = vunpack.c.l.b16 %v18
  %v59 = vunpack.c.l.b16 %v19
  %v60 = vunpack.c.l.b16 %v20
  %v61 = vunpack.c.l.b16 %v21
  %v62 = vunpack.c.l.b16 %v22
  %v63 = vunpack.c.l.b16 %v23
  %v64 = vunpack.c.l.b16 %v24
  %v65 = vunpack.c.l.b16 %v25
  %v66 = vunpack.c.l.b16 %v26
  %v67 = vunpack.c.l.b16 %v27
  %v68 = vunpack.c.l.b16 %v28
  %v69 = vunpack.c.l.b16 %v29
  %v70 = vunpack.c.l.b16 %v30
  %v71 = vunpack.c.l.b16 %v31
  %v72 = vunpack.c.l.b16 %v32
  %v73 = vunpack.c.l.b16 %v33
  %v74 = vpack.c.b16 %v59, %v58
  %v75 = vpack.c.b16 %v61, %v60
  %v76 = vpack.c.b16 %v63, %v62
  %v77 = vpack.c.b16 %v65, %v64
  %v78 = vpack.c.b16 %v67, %v66
  %v79 = vpack.c.b16 %v69, %v68
  %v80 = vpack.c.b16 %v71, %v70
  %v81 = vpack.c.b16 %v73, %v72
  %v90 = vunpack.c.l.b16 %v34
  %v91 = vunpack.c.l.b16 %v35
  %v92 = vunpack.c.l.b16 %v36
  %v93 = vunpack.c.l.b16 %v37
  %v94 = vunpack.c.l.b16 %v38
  %v95 = vunpack.c.l.b16 %v39
  %v96 = vunpack.c.l.b16 %v40
  %v97 = vunpack.c.l.b16 %v41
  %v98 = vpack.c.b16 %v91, %v90
  %v99 = vpack.c.b16 %v93, %v92
  %v100 = vpack.c.b16 %v95, %v94
  %v101 = vpack.c.b16 %v97, %v96
  %vm106 = vcmask 523264
  %v108 = vsel %vm106, %v74, 0
  %v111 = vsel %vm106, %v75, 0
  %v114 = vsel %vm106, %v76, 0
  %v117 = vsel %vm106, %v77, 0
  %v120 = vsel %vm106, %v78, 0
  %v123 = vsel %vm106, %v79, 0
  %v126 = vsel %vm106, %v80, 0
  %v129 = vsel %vm106, %v81, 0
  %131 = vmatprep.subr.bf16.mxu0 0
  %132 = vmatpush1.bf16.msra.mxu0 %v98
  %133 = vmatprep.subr.bf16.mxu0 0
  %134 = vmatpush1.bf16.msra.mxu0 %v99
  %135 = vmatprep.subr.bf16.mxu0 0
  %136 = vmatpush1.bf16.msra.mxu0 %v100
  %137 = vmatprep.subr.bf16.mxu0 0
  %138 = vmatpush1.bf16.msra.mxu0 %v101
  %139 = vmatprep.subr.bf16.mxu0 0
  %140 = vmatpush1.bf16.msra.mxu0 0
  %141 = vmatprep.subr.bf16.mxu0 0
  %142 = vmatpush1.bf16.msra.mxu0 0
  %143 = vmatprep.subr.bf16.mxu0 0
  %144 = vmatpush1.bf16.msra.mxu0 0
  %145 = vmatprep.subr.bf16.mxu0 0
  %146 = vmatpush1.bf16.msra.mxu0 0
  %147 = vmatprep.subr.bf16.mxu0 0
  %148 = vmatpush1.bf16.msra.mxu0 0
  %149 = vmatprep.subr.bf16.mxu0 0
  %150 = vmatpush1.bf16.msra.mxu0 0
  %151 = vmatprep.subr.bf16.mxu0 0
  %152 = vmatpush1.bf16.msra.mxu0 0
  %153 = vmatprep.subr.bf16.mxu0 0
  %154 = vmatpush1.bf16.msra.mxu0 0
  %155 = vmatprep.subr.bf16.mxu0 0
  %156 = vmatpush1.bf16.msra.mxu0 0
  %157 = vmatprep.subr.bf16.mxu0 0
  %158 = vmatpush1.bf16.msra.mxu0 0
  %159 = vmatprep.subr.bf16.mxu0 0
  %160 = vmatpush1.bf16.msra.mxu0 0
  %161 = vmatprep.subr.bf16.mxu0 0
  %162 = vmatpush1.bf16.msra.mxu0 0
  %163 = vmatprep.mubr.bf16.mxu0 0
  %164 = vmatmul.mubr.bf16.gmra.mrb[0].mxu0 %v108
  %v165 = vpop.f32.mrb[0].mxu0
  %v166 = vadd.f32 0.0, %v165
  %v167 = vpop.f32.mrb[0].mxu0
  %v168 = vpop.f32.mrb[0].mxu0
  %v169 = vadd.f32 0.0, %v168
  %v170 = vpop.f32.mrb[0].mxu0
  %171 = vmatprep.mubr.bf16.mxu0 0
  %172 = vmatmul.mubr.bf16.gmra.mrb[0].mxu0 %v111
  %v173 = vpop.f32.mrb[0].mxu0
  %v174 = vadd.f32 0.0, %v173
  %v175 = vpop.f32.mrb[0].mxu0
  %v176 = vpop.f32.mrb[0].mxu0
  %v177 = vadd.f32 0.0, %v176
  %v178 = vpop.f32.mrb[0].mxu0
  %179 = vmatprep.mubr.bf16.mxu0 0
  %180 = vmatmul.mubr.bf16.gmra.mrb[0].mxu0 %v114
  %v181 = vpop.f32.mrb[0].mxu0
  %v182 = vadd.f32 0.0, %v181
  %v183 = vpop.f32.mrb[0].mxu0
  %v184 = vpop.f32.mrb[0].mxu0
  %v185 = vadd.f32 0.0, %v184
  %v186 = vpop.f32.mrb[0].mxu0
  %187 = vmatprep.mubr.bf16.mxu0 0
  %188 = vmatmul.mubr.bf16.gmra.mrb[0].mxu0 %v117
  %v189 = vpop.f32.mrb[0].mxu0
  %v190 = vadd.f32 0.0, %v189
  %v191 = vpop.f32.mrb[0].mxu0
  %v192 = vpop.f32.mrb[0].mxu0
  %v193 = vadd.f32 0.0, %v192
  %v194 = vpop.f32.mrb[0].mxu0
  %195 = vmatprep.mubr.bf16.mxu0 0
  %196 = vmatmul.mubr.bf16.gmra.mrb[0].mxu0 %v120
  %v197 = vpop.f32.mrb[0].mxu0
  %v198 = vadd.f32 0.0, %v197
  %v199 = vpop.f32.mrb[0].mxu0
  %v200 = vpop.f32.mrb[0].mxu0
  %v201 = vadd.f32 0.0, %v200
  %v202 = vpop.f32.mrb[0].mxu0
  %203 = vmatprep.mubr.bf16.mxu0 0
  %204 = vmatmul.mubr.bf16.gmra.mrb[0].mxu0 %v123
  %v205 = vpop.f32.mrb[0].mxu0
  %v206 = vadd.f32 0.0, %v205
  %v207 = vpop.f32.mrb[0].mxu0
  %v208 = vpop.f32.mrb[0].mxu0
  %v209 = vadd.f32 0.0, %v208
  %v210 = vpop.f32.mrb[0].mxu0
  %211 = vmatprep.mubr.bf16.mxu0 0
  %212 = vmatmul.mubr.bf16.gmra.mrb[0].mxu0 %v126
  %v213 = vpop.f32.mrb[0].mxu0
  %v214 = vadd.f32 0.0, %v213
  %v215 = vpop.f32.mrb[0].mxu0
  %v216 = vpop.f32.mrb[0].mxu0
  %v217 = vadd.f32 0.0, %v216
  %v218 = vpop.f32.mrb[0].mxu0
  %219 = vmatprep.mubr.bf16.mxu0 0
  %220 = vmatmul.mubr.bf16.gmra.mrb[0].mxu0 %v129
  %v221 = vpop.f32.mrb[0].mxu0
  %v222 = vadd.f32 0.0, %v221
  %v223 = vpop.f32.mrb[0].mxu0
  %v224 = vpop.f32.mrb[0].mxu0
  %v225 = vadd.f32 0.0, %v224
  %v226 = vpop.f32.mrb[0].mxu0
  %227 = vdwg.mxu0
  %v228 = vld [vmem:[%s2] sm:$0x1]
  %v230 = vlaneseq
  %v231 = vshrl.u32 %v230, 7
  %v232 = vsub.s32 0, %v231
  %v233 = vrot.slane %v228, %v232
  %v235 = vmul.f32 %v166, %v233
  %v236 = vmul.f32 %v169, %v233
  %v237 = vmul.f32 %v174, %v233
  %v238 = vmul.f32 %v177, %v233
  %v239 = vmul.f32 %v182, %v233
  %v240 = vmul.f32 %v185, %v233
  %v241 = vmul.f32 %v190, %v233
  %v242 = vmul.f32 %v193, %v233
  %v243 = vmul.f32 %v198, %v233
  %v244 = vmul.f32 %v201, %v233
  %v245 = vmul.f32 %v206, %v233
  %v246 = vmul.f32 %v209, %v233
  %v247 = vmul.f32 %v214, %v233
  %v248 = vmul.f32 %v217, %v233
  %v249 = vmul.f32 %v222, %v233
  %v250 = vmul.f32 %v225, %v233
  %v251 = vld [vmem:[%s3] sm:$0x1]
  %v253 = vlaneseq
  %v254 = vshrl.u32 %v253, 7
  %v255 = vsub.s32 0, %v254
  %v256 = vrot.slane %v251, %v255
  %v258 = vadd.f32 %v235, %v256
  %v259 = vadd.f32 %v236, %v256
  %v260 = vadd.f32 %v237, %v256
  %v261 = vadd.f32 %v238, %v256
  %v262 = vadd.f32 %v239, %v256
  %v263 = vadd.f32 %v240, %v256
  %v264 = vadd.f32 %v241, %v256
  %v265 = vadd.f32 %v242, %v256
  %v266 = vadd.f32 %v243, %v256
  %v267 = vadd.f32 %v244, %v256
  %v268 = vadd.f32 %v245, %v256
  %v269 = vadd.f32 %v246, %v256
  %v270 = vadd.f32 %v247, %v256
  %v271 = vadd.f32 %v248, %v256
  %v272 = vadd.f32 %v249, %v256
  %v273 = vadd.f32 %v250, %v256
  %274 = vst [vmem:[%s4] sm:$0xff] %v258
  %275 = vst [vmem:[%s4 + $0x8] sm:$0xff] %v259
  %276 = vst [vmem:[%s4 + $0x10] sm:$0xff] %v260
  %277 = vst [vmem:[%s4 + $0x18] sm:$0xff] %v261
  %278 = vst [vmem:[%s4 + $0x20] sm:$0xff] %v262
  %279 = vst [vmem:[%s4 + $0x28] sm:$0xff] %v263
  %280 = vst [vmem:[%s4 + $0x30] sm:$0xff] %v264
  %281 = vst [vmem:[%s4 + $0x38] sm:$0xff] %v265
  %282 = vst [vmem:[%s4 + $0x40] sm:$0xff] %v266
  %283 = vst [vmem:[%s4 + $0x48] sm:$0xff] %v267
  %284 = vst [vmem:[%s4 + $0x50] sm:$0xff] %v268
  %285 = vst [vmem:[%s4 + $0x58] sm:$0xff] %v269
  %286 = vst [vmem:[%s4 + $0x60] sm:$0xff] %v270
  %287 = vst [vmem:[%s4 + $0x68] sm:$0xff] %v271
  %288 = vst [vmem:[%s4 + $0x70] sm:$0xff] %v272
  %289 = vst [vmem:[%s4 + $0x78] sm:$0xff] %v273
  // Predicated region
  $region18: #{cnn_forward.11} parent=0 // pred_check
    _
  $region19: #{cnn_forward.11} parent=0 // pred_check_branch
    %291 = sbr.rel (0) target = $region21
  $region20: #{cnn_forward.11} parent=0 // pred_region
    _
  $region21: #{cnn_forward.11} parent=0 // pred_fallthru
    _
  // Predicated region
  $region22: #{cnn_forward.11} parent=0 // pred_check
    _
  $region23: #{cnn_forward.11} parent=0 // pred_check_branch
    %293 = sbr.rel (0) target = $region25
  $region24: #{cnn_forward.11} parent=0 // pred_region
    _
  $region25: #{cnn_forward.11} parent=0 // pred_fallthru
    _

// kernel: cnn_forward.13
$region0: #{cnn_forward.13}
  #allocation0 [shape = 'u32[]', space=smem, size = 0x4, offset = 0x4, fixed_abs, tag = 'smem constant byte address 0x4 - core index']
  #allocation1 [shape = 'u32[144,128]{1,0:T(1,128)}', space=vmem, size = 0x12000, scoped, tag = 'internal scratch']
  %s0 = inlined_call_operand.vmem [shape: f32[2,64,128], index: 0, kind: input, shape index: {}]
  %s1 = inlined_call_operand.vmem [shape: f32[1,128], index: 1, kind: input, shape index: {}]
  %s2 = inlined_call_operand.vmem [shape: f32[1,128], index: 2, kind: input, shape index: {}]
  %s3 = inlined_call_operand.vmem [shape: f32[128,10], index: 3, kind: input, shape index: {}]
  %s4 = inlined_call_operand.vmem [shape: f32[1,10], index: 4, kind: input, shape index: {}]
  %s5 = inlined_call_operand.vmem [shape: s32[2,1], index: 5, kind: output, shape index: {}]
  %s6 = sld [smem:[#allocation0]]
  $region30: #{cnn_forward.13} parent=0
    _
  %s8 = ssub.s32 1, %s6
  %s9 = scalar_select 0, %s8, %s6
  // Predicated region
  $region2: #{cnn_forward.13} parent=0 // pred_check
    _
  $region3: #{cnn_forward.13} parent=0 // pred_check_branch
    %11 = sbr.rel (0) target = $region5
  $region4: #{cnn_forward.13} parent=0 // pred_region
    _
  $region5: #{cnn_forward.13} parent=0 // pred_fallthru
    _
  // Predicated region
  $region6: #{cnn_forward.13} parent=0 // pred_check
    _
  $region7: #{cnn_forward.13} parent=0 // pred_check_branch
    %13 = sbr.rel (0) target = $region9
  $region8: #{cnn_forward.13} parent=0 // pred_region
    _
  $region9: #{cnn_forward.13} parent=0 // pred_fallthru
    _
  // Predicated region
  $region10: #{cnn_forward.13} parent=0 // pred_check
    _
  $region11: #{cnn_forward.13} parent=0 // pred_check_branch
    %15 = sbr.rel (0) target = $region13
  $region12: #{cnn_forward.13} parent=0 // pred_region
    _
  $region13: #{cnn_forward.13} parent=0 // pred_fallthru
    _
  // Predicated region
  $region14: #{cnn_forward.13} parent=0 // pred_check
    _
  $region15: #{cnn_forward.13} parent=0 // pred_check_branch
    %17 = sbr.rel (0) target = $region17
  $region16: #{cnn_forward.13} parent=0 // pred_region
    _
  $region17: #{cnn_forward.13} parent=0 // pred_fallthru
    _
  // Predicated region
  $region18: #{cnn_forward.13} parent=0 // pred_check
    _
  $region19: #{cnn_forward.13} parent=0 // pred_check_branch
    %19 = sbr.rel (0) target = $region21
  $region20: #{cnn_forward.13} parent=0 // pred_region
    _
  $region21: #{cnn_forward.13} parent=0 // pred_fallthru
    _
  %v20 = vld [vmem:[%s0] sm:$0xff]
  %v21 = vld [vmem:[%s0 + $0x8] sm:$0xff]
  %v22 = vld [vmem:[%s0 + $0x10] sm:$0xff]
  %v23 = vld [vmem:[%s0 + $0x18] sm:$0xff]
  %v24 = vld [vmem:[%s0 + $0x20] sm:$0xff]
  %v25 = vld [vmem:[%s0 + $0x28] sm:$0xff]
  %v26 = vld [vmem:[%s0 + $0x30] sm:$0xff]
  %v27 = vld [vmem:[%s0 + $0x38] sm:$0xff]
  %v28 = vld [vmem:[%s0 + $0x40] sm:$0xff]
  %v29 = vld [vmem:[%s0 + $0x48] sm:$0xff]
  %v30 = vld [vmem:[%s0 + $0x50] sm:$0xff]
  %v31 = vld [vmem:[%s0 + $0x58] sm:$0xff]
  %v32 = vld [vmem:[%s0 + $0x60] sm:$0xff]
  %v33 = vld [vmem:[%s0 + $0x68] sm:$0xff]
  %v34 = vld [vmem:[%s0 + $0x70] sm:$0xff]
  %v35 = vld [vmem:[%s0 + $0x78] sm:$0xff]
  %v36 = vadd.f32 %v20, %v21
  %v37 = vadd.f32 %v36, %v22
  %v38 = vadd.f32 %v37, %v23
  %v39 = vadd.f32 %v38, %v24
  %v40 = vadd.f32 %v39, %v25
  %v41 = vadd.f32 %v40, %v26
  %v42 = vadd.f32 %v41, %v27
  %v43 = vrot.slane %v42, 4
  %v44 = vadd.f32 %v42, %v43
  %v45 = vrot.slane %v44, 2
  %v46 = vadd.f32 %v44, %v45
  %v47 = vrot.slane %v46, 1
  %v48 = vadd.f32 %v46, %v47
  %v49 = vadd.f32 %v28, %v29
  %v50 = vadd.f32 %v49, %v30
  %v51 = vadd.f32 %v50, %v31
  %v52 = vadd.f32 %v51, %v32
  %v53 = vadd.f32 %v52, %v33
  %v54 = vadd.f32 %v53, %v34
  %v55 = vadd.f32 %v54, %v35
  %v56 = vrot.slane %v55, 4
  %v57 = vadd.f32 %v55, %v56
  %v58 = vrot.slane %v57, 2
  %v59 = vadd.f32 %v57, %v58
  %v60 = vrot.slane %v59, 1
  %v61 = vadd.f32 %v59, %v60
  %v62 = vrcp.pop 64.0
  %v63 = vmul.f32 %v48, %v62
  %v64 = vmul.f32 %v61, %v62
  %v65 = vld [vmem:[%s1] sm:$0x1]
  %v67 = vlaneseq
  %v68 = vshrl.u32 %v67, 7
  %v69 = vsub.s32 0, %v68
  %v70 = vrot.slane %v65, %v69
  %v72 = vmul.f32 %v63, %v70
  %v73 = vmul.f32 %v64, %v70
  %v74 = vld [vmem:[%s2] sm:$0x1]
  %v76 = vlaneseq
  %v77 = vshrl.u32 %v76, 7
  %v78 = vsub.s32 0, %v77
  %v79 = vrot.slane %v74, %v78
  %v81 = vadd.f32 %v72, %v79
  %v82 = vadd.f32 %v73, %v79
  %v83 = vmax.f32 %v81, 0.0
  %v84 = vmax.f32 %v82, 0.0
  %v85 = vld [vmem:[%s3] sm:$0xff]
  %v86 = vld [vmem:[%s3 + $0x8] sm:$0xff]
  %v87 = vld [vmem:[%s3 + $0x10] sm:$0xff]
  %v88 = vld [vmem:[%s3 + $0x18] sm:$0xff]
  %v89 = vld [vmem:[%s3 + $0x20] sm:$0xff]
  %v90 = vld [vmem:[%s3 + $0x28] sm:$0xff]
  %v91 = vld [vmem:[%s3 + $0x30] sm:$0xff]
  %v92 = vld [vmem:[%s3 + $0x38] sm:$0xff]
  %v93 = vld [vmem:[%s3 + $0x40] sm:$0xff]
  %v94 = vld [vmem:[%s3 + $0x48] sm:$0xff]
  %v95 = vld [vmem:[%s3 + $0x50] sm:$0xff]
  %v96 = vld [vmem:[%s3 + $0x58] sm:$0xff]
  %v97 = vld [vmem:[%s3 + $0x60] sm:$0xff]
  %v98 = vld [vmem:[%s3 + $0x68] sm:$0xff]
  %v99 = vld [vmem:[%s3 + $0x70] sm:$0xff]
  %v100 = vld [vmem:[%s3 + $0x78] sm:$0xff]
  %v101 = vld [vmem:[%s4] sm:$0x1]
  %v103 = vlaneseq
  %v104 = vshrl.u32 %v103, 7
  %v105 = vsub.s32 0, %v104
  %v106 = vrot.slane %v101, %v105
  %v110 = vrot.slane %v84, 7
  %vm111 = vcmask 1041409
  %v112 = vsel %vm111, %v110, %v83
  %114 = vmatprep.subr.mxu0 0.0
  %115 = vmatpush1.msra.mxu0 %v85
  %116 = vmatprep.subr.mxu0 0.0
  %117 = vmatpush1.msra.mxu0 %v86
  %118 = vmatprep.subr.mxu0 0.0
  %119 = vmatpush1.msra.mxu0 %v87
  %120 = vmatprep.subr.mxu0 0.0
  %121 = vmatpush1.msra.mxu0 %v88
  %122 = vmatprep.subr.mxu0 0.0
  %123 = vmatpush1.msra.mxu0 %v89
  %124 = vmatprep.subr.mxu0 0.0
  %125 = vmatpush1.msra.mxu0 %v90
  %126 = vmatprep.subr.mxu0 0.0
  %127 = vmatpush1.msra.mxu0 %v91
  %128 = vmatprep.subr.mxu0 0.0
  %129 = vmatpush1.msra.mxu0 %v92
  %130 = vmatprep.subr.mxu0 0.0
  %131 = vmatpush1.msra.mxu0 %v93
  %132 = vmatprep.subr.mxu0 0.0
  %133 = vmatpush1.msra.mxu0 %v94
  %134 = vmatprep.subr.mxu0 0.0
  %135 = vmatpush1.msra.mxu0 %v95
  %136 = vmatprep.subr.mxu0 0.0
  %137 = vmatpush1.msra.mxu0 %v96
  %138 = vmatprep.subr.mxu0 0.0
  %139 = vmatpush1.msra.mxu0 %v97
  %140 = vmatprep.subr.mxu0 0.0
  %141 = vmatpush1.msra.mxu0 %v98
  %142 = vmatprep.subr.mxu0 0.0
  %143 = vmatpush1.msra.mxu0 %v99
  %144 = vmatprep.subr.mxu0 0.0
  %145 = vmatpush1.msra.mxu0 %v100
  %146 = vmatprep.subr.mxu0 0.0
  %147 = vmatpush1.msra.mxu0 0.0
  %148 = vmatprep.subr.mxu0 0.0
  %149 = vmatpush1.msra.mxu0 0.0
  %150 = vmatprep.subr.mxu0 0.0
  %151 = vmatpush1.msra.mxu0 0.0
  %152 = vmatprep.subr.mxu0 0.0
  %153 = vmatpush1.msra.mxu0 0.0
  %154 = vmatprep.subr.mxu0 0.0
  %155 = vmatpush1.msra.mxu0 0.0
  %156 = vmatprep.subr.mxu0 0.0
  %157 = vmatpush1.msra.mxu0 0.0
  %158 = vmatprep.subr.mxu0 0.0
  %159 = vmatpush1.msra.mxu0 0.0
  %160 = vmatprep.subr.mxu0 0.0
  %161 = vmatpush1.msra.mxu0 0.0
  %162 = vmatprep.subr.mxu0 0.0
  %163 = vmatpush1.msra.mxu0 0.0
  %164 = vmatprep.subr.mxu0 0.0
  %165 = vmatpush1.msra.mxu0 0.0
  %166 = vmatprep.subr.mxu0 0.0
  %167 = vmatpush1.msra.mxu0 0.0
  %168 = vmatprep.subr.mxu0 0.0
  %169 = vmatpush1.msra.mxu0 0.0
  %170 = vmatprep.subr.mxu0 0.0
  %171 = vmatpush1.msra.mxu0 0.0
  %172 = vmatprep.subr.mxu0 0.0
  %173 = vmatpush1.msra.mxu0 0.0
  %174 = vmatprep.subr.mxu0 0.0
  %175 = vmatpush1.msra.mxu0 0.0
  %176 = vmatprep.subr.mxu0 0.0
  %177 = vmatpush1.msra.mxu0 0.0
  %178 = vmatprep.mubr.f32.mxu0 0.0
  %179 = vmatmul.mubr.f32.gmra.mrb[0].mxu0 %v112
  %v180 = vpop.f32.mrb[0].mxu0
  %v181 = vadd.f32 %v106, %v180
  %v182 = vpop.f32.mrb[0].mxu0
  %183 = vdwg.mxu0
  %vm184 = vcmask 74752
  %v185 = vsel %vm184, %v181, -inf
  %186 = vmax.xlane.f32.xlu0 %v185
  %v187 = vpop.xlane.xlu0 %186
  %v188 = vsub.f32 %v181, %v187
  %v189 = vmul.f32 %v188, 1.442695
  %v190 = vpow.pop %v189
  %v191 = vsel %vm184, %v190, 0.0
  %192 = vadd.xlane.f32.xlu0 %v191
  %v193 = vpop.xlane.xlu0 %192
  %v194 = vlog2.pop %v193
  %v195 = vmul.f32 %v194, 0.6931472
  %v196 = vadd.f32 %v187, %v195
  %v197 = vsub.f32 %v181, %v196
  %v198 = vlaneseq
  %v199 = vand.u32 %v198, 127
  %v200 = vsel %vm184, %v197, -inf
  %201 = vmax.xlane.f32.xlu0 %v200
  %v202 = vpop.xlane.xlu0 %201
  %vm203 = vcmp.ge.f32.partialorder %v197, %v202
  %v204 = vsel %vm203, %v199, 10
  %v205 = vsel %vm184, %v204, 2147483647
  %v206 = vand.u32 %v205, 65535
  %v207 = vshra.s32 %v205, 16
  %v208 = vcvt.s32.f32 %v206
  %v209 = vcvt.s32.f32 %v207
  %210 = vmin.xlane.f32.xlu0 %v209
  %v211 = vpop.xlane.xlu0 %210
  %vm212 = vcmp.eq.f32.partialorder %v209, %v211
  %v213 = vsel %vm212, %v208, inf
  %214 = vmin.xlane.f32.xlu0 %v213
  %v215 = vpop.xlane.xlu0 %214
  %v216 = vcvt.f32.s32 %v215
  %v217 = vcvt.f32.s32 %v211
  %v218 = vshll.u32 %v217, 16
  %v219 = vadd.s32 %v218, %v216
  %vm220 = vcmask 1024
  %221 = vst.msk [vmem:[%s5] sm:$0x3] %vm220, %v219
  // Predicated region
  $region22: #{cnn_forward.13} parent=0 // pred_check
    _
  $region23: #{cnn_forward.13} parent=0 // pred_check_branch
    %223 = sbr.rel (0) target = $region25
  $region24: #{cnn_forward.13} parent=0 // pred_region
    _
  $region25: #{cnn_forward.13} parent=0 // pred_fallthru
    _
  // Predicated region
  $region26: #{cnn_forward.13} parent=0 // pred_check
    _
  $region27: #{cnn_forward.13} parent=0 // pred_check_branch
    %225 = sbr.rel (0) target = $region29
  $region28: #{cnn_forward.13} parent=0 // pred_region
    _
  $region29: #{cnn_forward.13} parent=0 // pred_fallthru
    _

// kernel: cnn_forward.12
$region0: #{cnn_forward.12}
  #allocation0 [shape = 'u32[]', space=smem, size = 0x4, offset = 0x4, fixed_abs, tag = 'smem constant byte address 0x4 - core index']
  #allocation1 [shape = 'u32[144,128]{1,0:T(1,128)}', space=vmem, size = 0x12000, scoped, tag = 'internal scratch']
  %s0 = inlined_call_operand.vmem [shape: bf16[128,1152], index: 0, kind: input, shape index: {}]
  %s1 = inlined_call_operand.vmem [shape: bf16[1152,128], index: 1, kind: input, shape index: {}]
  %s2 = inlined_call_operand.vmem [shape: f32[1,128], index: 2, kind: input, shape index: {}]
  %s3 = inlined_call_operand.vmem [shape: f32[1,128], index: 3, kind: input, shape index: {}]
  %s4 = inlined_call_operand.vmem [shape: f32[128,128], index: 4, kind: input, shape index: {}]
  %s5 = inlined_call_operand.vmem [shape: f32[128,128], index: 5, kind: output, shape index: {}]
  %s6 = sld [smem:[#allocation0]]
  $region30: #{cnn_forward.12} parent=0
    _
  %s8 = ssub.s32 1, %s6
  %s9 = scalar_select 0, %s8, %s6
  // Predicated region
  $region2: #{cnn_forward.12} parent=0 // pred_check
    _
  $region3: #{cnn_forward.12} parent=0 // pred_check_branch
    %11 = sbr.rel (0) target = $region5
  $region4: #{cnn_forward.12} parent=0 // pred_region
    _
  $region5: #{cnn_forward.12} parent=0 // pred_fallthru
    _
  // Predicated region
  $region6: #{cnn_forward.12} parent=0 // pred_check
    _
  $region7: #{cnn_forward.12} parent=0 // pred_check_branch
    %13 = sbr.rel (0) target = $region9
  $region8: #{cnn_forward.12} parent=0 // pred_region
    _
  $region9: #{cnn_forward.12} parent=0 // pred_fallthru
    _
  // Predicated region
  $region10: #{cnn_forward.12} parent=0 // pred_check
    _
  $region11: #{cnn_forward.12} parent=0 // pred_check_branch
    %15 = sbr.rel (0) target = $region13
  $region12: #{cnn_forward.12} parent=0 // pred_region
    _
  $region13: #{cnn_forward.12} parent=0 // pred_fallthru
    _
  // Predicated region
  $region14: #{cnn_forward.12} parent=0 // pred_check
    _
  $region15: #{cnn_forward.12} parent=0 // pred_check_branch
    %17 = sbr.rel (0) target = $region17
  $region16: #{cnn_forward.12} parent=0 // pred_region
    _
  $region17: #{cnn_forward.12} parent=0 // pred_fallthru
    _
  // Predicated region
  $region18: #{cnn_forward.12} parent=0 // pred_check
    _
  $region19: #{cnn_forward.12} parent=0 // pred_check_branch
    %19 = sbr.rel (0) target = $region21
  $region20: #{cnn_forward.12} parent=0 // pred_region
    _
  $region21: #{cnn_forward.12} parent=0 // pred_fallthru
    _
  %v21 = vld [vmem:[%s0] sm:$0xff]
  %v22 = vld [vmem:[%s0 + $0x8] sm:$0xff]
  %v23 = vld [vmem:[%s0 + $0x10] sm:$0xff]
  %v24 = vld [vmem:[%s0 + $0x18] sm:$0xff]
  %v25 = vld [vmem:[%s0 + $0x20] sm:$0xf]
  %v26 = vld [vmem:[%s0 + $0x24] sm:$0xff]
  %v27 = vld [vmem:[%s0 + $0x2c] sm:$0xff]
  %v28 = vld [vmem:[%s0 + $0x34] sm:$0xff]
  %v29 = vld [vmem:[%s0 + $0x3c] sm:$0xff]
  %v30 = vld [vmem:[%s0 + $0x44] sm:$0xf]
  %v31 = vld [vmem:[%s0 + $0x48] sm:$0xff]
  %v32 = vld [vmem:[%s0 + $0x50] sm:$0xff]
  %v33 = vld [vmem:[%s0 + $0x58] sm:$0xff]
  %v34 = vld [vmem:[%s0 + $0x60] sm:$0xff]
  %v35 = vld [vmem:[%s0 + $0x68] sm:$0xf]
  %v36 = vld [vmem:[%s0 + $0x6c] sm:$0xff]
  %v37 = vld [vmem:[%s0 + $0x74] sm:$0xff]
  %v38 = vld [vmem:[%s0 + $0x7c] sm:$0xff]
  %v39 = vld [vmem:[%s0 + $0x84] sm:$0xff]
  %v40 = vld [vmem:[%s0 + $0x8c] sm:$0xf]
  %v41 = vld [vmem:[%s0 + $0x90] sm:$0xff]
  %v42 = vld [vmem:[%s0 + $0x98] sm:$0xff]
  %v43 = vld [vmem:[%s0 + $0xa0] sm:$0xff]
  %v44 = vld [vmem:[%s0 + $0xa8] sm:$0xff]
  %v45 = vld [vmem:[%s0 + $0xb0] sm:$0xf]
  %v46 = vld [vmem:[%s0 + $0xb4] sm:$0xff]
  %v47 = vld [vmem:[%s0 + $0xbc] sm:$0xff]
  %v48 = vld [vmem:[%s0 + $0xc4] sm:$0xff]
  %v49 = vld [vmem:[%s0 + $0xcc] sm:$0xff]
  %v50 = vld [vmem:[%s0 + $0xd4] sm:$0xf]
  %v51 = vld [vmem:[%s0 + $0xd8] sm:$0xff]
  %v52 = vld [vmem:[%s0 + $0xe0] sm:$0xff]
  %v53 = vld [vmem:[%s0 + $0xe8] sm:$0xff]
  %v54 = vld [vmem:[%s0 + $0xf0] sm:$0xff]
  %v55 = vld [vmem:[%s0 + $0xf8] sm:$0xf]
  %v56 = vld [vmem:[%s0 + $0xfc] sm:$0xff]
  %v57 = vld [vmem:[%s0 + $0x104] sm:$0xff]
  %v58 = vld [vmem:[%s0 + $0x10c] sm:$0xff]
  %v59 = vld [vmem:[%s0 + $0x114] sm:$0xff]
  %v60 = vld [vmem:[%s0 + $0x11c] sm:$0xf]
  %v61 = vld [vmem:[%s0 + $0x120] sm:$0xff]
  %v62 = vld [vmem:[%s0 + $0x128] sm:$0xff]
  %v63 = vld [vmem:[%s0 + $0x130] sm:$0xff]
  %v64 = vld [vmem:[%s0 + $0x138] sm:$0xff]
  %v65 = vld [vmem:[%s0 + $0x140] sm:$0xf]
  %v66 = vld [vmem:[%s0 + $0x144] sm:$0xff]
  %v67 = vld [vmem:[%s0 + $0x14c] sm:$0xff]
  %v68 = vld [vmem:[%s0 + $0x154] sm:$0xff]
  %v69 = vld [vmem:[%s0 + $0x15c] sm:$0xff]
  %v70 = vld [vmem:[%s0 + $0x164] sm:$0xf]
  %v71 = vld [vmem:[%s0 + $0x168] sm:$0xff]
  %v72 = vld [vmem:[%s0 + $0x170] sm:$0xff]
  %v73 = vld [vmem:[%s0 + $0x178] sm:$0xff]
  %v74 = vld [vmem:[%s0 + $0x180] sm:$0xff]
  %v75 = vld [vmem:[%s0 + $0x188] sm:$0xf]
  %v76 = vld [vmem:[%s0 + $0x18c] sm:$0xff]
  %v77 = vld [vmem:[%s0 + $0x194] sm:$0xff]
  %v78 = vld [vmem:[%s0 + $0x19c] sm:$0xff]
  %v79 = vld [vmem:[%s0 + $0x1a4] sm:$0xff]
  %v80 = vld [vmem:[%s0 + $0x1ac] sm:$0xf]
  %v81 = vld [vmem:[%s0 + $0x1b0] sm:$0xff]
  %v82 = vld [vmem:[%s0 + $0x1b8] sm:$0xff]
  %v83 = vld [vmem:[%s0 + $0x1c0] sm:$0xff]
  %v84 = vld [vmem:[%s0 + $0x1c8] sm:$0xff]
  %v85 = vld [vmem:[%s0 + $0x1d0] sm:$0xf]
  %v86 = vld [vmem:[%s0 + $0x1d4] sm:$0xff]
  %v87 = vld [vmem:[%s0 + $0x1dc] sm:$0xff]
  %v88 = vld [vmem:[%s0 + $0x1e4] sm:$0xff]
  %v89 = vld [vmem:[%s0 + $0x1ec] sm:$0xff]
  %v90 = vld [vmem:[%s0 + $0x1f4] sm:$0xf]
  %v91 = vld [vmem:[%s0 + $0x1f8] sm:$0xff]
  %v92 = vld [vmem:[%s0 + $0x200] sm:$0xff]
  %v93 = vld [vmem:[%s0 + $0x208] sm:$0xff]
  %v94 = vld [vmem:[%s0 + $0x210] sm:$0xff]
  %v95 = vld [vmem:[%s0 + $0x218] sm:$0xf]
  %v96 = vld [vmem:[%s0 + $0x21c] sm:$0xff]
  %v97 = vld [vmem:[%s0 + $0x224] sm:$0xff]
  %v98 = vld [vmem:[%s0 + $0x22c] sm:$0xff]
  %v99 = vld [vmem:[%s0 + $0x234] sm:$0xff]
  %v100 = vld [vmem:[%s0 + $0x23c] sm:$0xf]
  %v101 = vld [vmem:[%s1] sm:$0xf]
  %v102 = vld [vmem:[%s1 + $0x4] sm:$0xf]
  %v103 = vld [vmem:[%s1 + $0x8] sm:$0xf]
  %v104 = vld [vmem:[%s1 + $0xc] sm:$0xf]
  %v105 = vld [vmem:[%s1 + $0x10] sm:$0xf]
  %v106 = vld [vmem:[%s1 + $0x14] sm:$0xf]
  %v107 = vld [vmem:[%s1 + $0x18] sm:$0xf]
  %v108 = vld [vmem:[%s1 + $0x1c] sm:$0xf]
  %v109 = vld [vmem:[%s1 + $0x20] sm:$0xf]
  %v110 = vld [vmem:[%s1 + $0x24] sm:$0xf]
  %v111 = vld [vmem:[%s1 + $0x28] sm:$0xf]
  %v112 = vld [vmem:[%s1 + $0x2c] sm:$0xf]
  %v113 = vld [vmem:[%s1 + $0x30] sm:$0xf]
  %v114 = vld [vmem:[%s1 + $0x34] sm:$0xf]
  %v115 = vld [vmem:[%s1 + $0x38] sm:$0xf]
  %v116 = vld [vmem:[%s1 + $0x3c] sm:$0xf]
  %v117 = vld [vmem:[%s1 + $0x40] sm:$0xf]
  %v118 = vld [vmem:[%s1 + $0x44] sm:$0xf]
  %v119 = vld [vmem:[%s1 + $0x48] sm:$0xf]
  %v120 = vld [vmem:[%s1 + $0x4c] sm:$0xf]
  %v121 = vld [vmem:[%s1 + $0x50] sm:$0xf]
  %v122 = vld [vmem:[%s1 + $0x54] sm:$0xf]
  %v123 = vld [vmem:[%s1 + $0x58] sm:$0xf]
  %v124 = vld [vmem:[%s1 + $0x5c] sm:$0xf]
  %v125 = vld [vmem:[%s1 + $0x60] sm:$0xf]
  %v126 = vld [vmem:[%s1 + $0x64] sm:$0xf]
  %v127 = vld [vmem:[%s1 + $0x68] sm:$0xf]
  %v128 = vld [vmem:[%s1 + $0x6c] sm:$0xf]
  %v129 = vld [vmem:[%s1 + $0x70] sm:$0xf]
  %v130 = vld [vmem:[%s1 + $0x74] sm:$0xf]
  %v131 = vld [vmem:[%s1 + $0x78] sm:$0xf]
  %v132 = vld [vmem:[%s1 + $0x7c] sm:$0xf]
  %v133 = vld [vmem:[%s1 + $0x80] sm:$0xf]
  %v134 = vld [vmem:[%s1 + $0x84] sm:$0xf]
  %v135 = vld [vmem:[%s1 + $0x88] sm:$0xf]
  %v136 = vld [vmem:[%s1 + $0x8c] sm:$0xf]
  %v137 = vld [vmem:[%s1 + $0x90] sm:$0xf]
  %v138 = vld [vmem:[%s1 + $0x94] sm:$0xf]
  %v139 = vld [vmem:[%s1 + $0x98] sm:$0xf]
  %v140 = vld [vmem:[%s1 + $0x9c] sm:$0xf]
  %v141 = vld [vmem:[%s1 + $0xa0] sm:$0xf]
  %v142 = vld [vmem:[%s1 + $0xa4] sm:$0xf]
  %v143 = vld [vmem:[%s1 + $0xa8] sm:$0xf]
  %v144 = vld [vmem:[%s1 + $0xac] sm:$0xf]
  %v145 = vld [vmem:[%s1 + $0xb0] sm:$0xf]
  %v146 = vld [vmem:[%s1 + $0xb4] sm:$0xf]
  %v147 = vld [vmem:[%s1 + $0xb8] sm:$0xf]
  %v148 = vld [vmem:[%s1 + $0xbc] sm:$0xf]
  %v149 = vld [vmem:[%s1 + $0xc0] sm:$0xf]
  %v150 = vld [vmem:[%s1 + $0xc4] sm:$0xf]
  %v151 = vld [vmem:[%s1 + $0xc8] sm:$0xf]
  %v152 = vld [vmem:[%s1 + $0xcc] sm:$0xf]
  %v153 = vld [vmem:[%s1 + $0xd0] sm:$0xf]
  %v154 = vld [vmem:[%s1 + $0xd4] sm:$0xf]
  %v155 = vld [vmem:[%s1 + $0xd8] sm:$0xf]
  %v156 = vld [vmem:[%s1 + $0xdc] sm:$0xf]
  %v157 = vld [vmem:[%s1 + $0xe0] sm:$0xf]
  %v158 = vld [vmem:[%s1 + $0xe4] sm:$0xf]
  %v159 = vld [vmem:[%s1 + $0xe8] sm:$0xf]
  %v160 = vld [vmem:[%s1 + $0xec] sm:$0xf]
  %v161 = vld [vmem:[%s1 + $0xf0] sm:$0xf]
  %v162 = vld [vmem:[%s1 + $0xf4] sm:$0xf]
  %v163 = vld [vmem:[%s1 + $0xf8] sm:$0xf]
  %v164 = vld [vmem:[%s1 + $0xfc] sm:$0xf]
  %v165 = vld [vmem:[%s1 + $0x100] sm:$0xf]
  %v166 = vld [vmem:[%s1 + $0x104] sm:$0xf]
  %v167 = vld [vmem:[%s1 + $0x108] sm:$0xf]
  %v168 = vld [vmem:[%s1 + $0x10c] sm:$0xf]
  %v169 = vld [vmem:[%s1 + $0x110] sm:$0xf]
  %v170 = vld [vmem:[%s1 + $0x114] sm:$0xf]
  %v171 = vld [vmem:[%s1 + $0x118] sm:$0xf]
  %v172 = vld [vmem:[%s1 + $0x11c] sm:$0xf]
  %v173 = vld [vmem:[%s1 + $0x120] sm:$0xf]
  %v174 = vld [vmem:[%s1 + $0x124] sm:$0xf]
  %v175 = vld [vmem:[%s1 + $0x128] sm:$0xf]
  %v176 = vld [vmem:[%s1 + $0x12c] sm:$0xf]
  %v177 = vld [vmem:[%s1 + $0x130] sm:$0xf]
  %v178 = vld [vmem:[%s1 + $0x134] sm:$0xf]
  %v179 = vld [vmem:[%s1 + $0x138] sm:$0xf]
  %v180 = vld [vmem:[%s1 + $0x13c] sm:$0xf]
  %v181 = vld [vmem:[%s1 + $0x140] sm:$0xf]
  %v182 = vld [vmem:[%s1 + $0x144] sm:$0xf]
  %v183 = vld [vmem:[%s1 + $0x148] sm:$0xf]
  %v184 = vld [vmem:[%s1 + $0x14c] sm:$0xf]
  %v185 = vld [vmem:[%s1 + $0x150] sm:$0xf]
  %v186 = vld [vmem:[%s1 + $0x154] sm:$0xf]
  %v187 = vld [vmem:[%s1 + $0x158] sm:$0xf]
  %v188 = vld [vmem:[%s1 + $0x15c] sm:$0xf]
  %v189 = vld [vmem:[%s1 + $0x160] sm:$0xf]
  %v190 = vld [vmem:[%s1 + $0x164] sm:$0xf]
  %v191 = vld [vmem:[%s1 + $0x168] sm:$0xf]
  %v192 = vld [vmem:[%s1 + $0x16c] sm:$0xf]
  %v193 = vld [vmem:[%s1 + $0x170] sm:$0xf]
  %v194 = vld [vmem:[%s1 + $0x174] sm:$0xf]
  %v195 = vld [vmem:[%s1 + $0x178] sm:$0xf]
  %v196 = vld [vmem:[%s1 + $0x17c] sm:$0xf]
  %v197 = vld [vmem:[%s1 + $0x180] sm:$0xf]
  %v198 = vld [vmem:[%s1 + $0x184] sm:$0xf]
  %v199 = vld [vmem:[%s1 + $0x188] sm:$0xf]
  %v200 = vld [vmem:[%s1 + $0x18c] sm:$0xf]
  %v201 = vld [vmem:[%s1 + $0x190] sm:$0xf]
  %v202 = vld [vmem:[%s1 + $0x194] sm:$0xf]
  %v203 = vld [vmem:[%s1 + $0x198] sm:$0xf]
  %v204 = vld [vmem:[%s1 + $0x19c] sm:$0xf]
  %v205 = vld [vmem:[%s1 + $0x1a0] sm:$0xf]
  %v206 = vld [vmem:[%s1 + $0x1a4] sm:$0xf]
  %v207 = vld [vmem:[%s1 + $0x1a8] sm:$0xf]
  %v208 = vld [vmem:[%s1 + $0x1ac] sm:$0xf]
  %v209 = vld [vmem:[%s1 + $0x1b0] sm:$0xf]
  %v210 = vld [vmem:[%s1 + $0x1b4] sm:$0xf]
  %v211 = vld [vmem:[%s1 + $0x1b8] sm:$0xf]
  %v212 = vld [vmem:[%s1 + $0x1bc] sm:$0xf]
  %v213 = vld [vmem:[%s1 + $0x1c0] sm:$0xf]
  %v214 = vld [vmem:[%s1 + $0x1c4] sm:$0xf]
  %v215 = vld [vmem:[%s1 + $0x1c8] sm:$0xf]
  %v216 = vld [vmem:[%s1 + $0x1cc] sm:$0xf]
  %v217 = vld [vmem:[%s1 + $0x1d0] sm:$0xf]
  %v218 = vld [vmem:[%s1 + $0x1d4] sm:$0xf]
  %v219 = vld [vmem:[%s1 + $0x1d8] sm:$0xf]
  %v220 = vld [vmem:[%s1 + $0x1dc] sm:$0xf]
  %v221 = vld [vmem:[%s1 + $0x1e0] sm:$0xf]
  %v222 = vld [vmem:[%s1 + $0x1e4] sm:$0xf]
  %v223 = vld [vmem:[%s1 + $0x1e8] sm:$0xf]
  %v224 = vld [vmem:[%s1 + $0x1ec] sm:$0xf]
  %v225 = vld [vmem:[%s1 + $0x1f0] sm:$0xf]
  %v226 = vld [vmem:[%s1 + $0x1f4] sm:$0xf]
  %v227 = vld [vmem:[%s1 + $0x1f8] sm:$0xf]
  %v228 = vld [vmem:[%s1 + $0x1fc] sm:$0xf]
  %v229 = vld [vmem:[%s1 + $0x200] sm:$0xf]
  %v230 = vld [vmem:[%s1 + $0x204] sm:$0xf]
  %v231 = vld [vmem:[%s1 + $0x208] sm:$0xf]
  %v232 = vld [vmem:[%s1 + $0x20c] sm:$0xf]
  %v233 = vld [vmem:[%s1 + $0x210] sm:$0xf]
  %v234 = vld [vmem:[%s1 + $0x214] sm:$0xf]
  %v235 = vld [vmem:[%s1 + $0x218] sm:$0xf]
  %v236 = vld [vmem:[%s1 + $0x21c] sm:$0xf]
  %v237 = vld [vmem:[%s1 + $0x220] sm:$0xf]
  %v238 = vld [vmem:[%s1 + $0x224] sm:$0xf]
  %v239 = vld [vmem:[%s1 + $0x228] sm:$0xf]
  %v240 = vld [vmem:[%s1 + $0x22c] sm:$0xf]
  %v241 = vld [vmem:[%s1 + $0x230] sm:$0xf]
  %v242 = vld [vmem:[%s1 + $0x234] sm:$0xf]
  %v243 = vld [vmem:[%s1 + $0x238] sm:$0xf]
  %v244 = vld [vmem:[%s1 + $0x23c] sm:$0xf]
  %v325 = vunpack.c.l.b16 %v21
  %v326 = vunpack.c.h.b16 %v21
  %v327 = vunpack.c.l.b16 %v22
  %v328 = vunpack.c.h.b16 %v22
  %v329 = vunpack.c.l.b16 %v23
  %v330 = vunpack.c.h.b16 %v23
  %v331 = vunpack.c.l.b16 %v24
  %v332 = vunpack.c.h.b16 %v24
  %v333 = vunpack.c.l.b16 %v25
  %v334 = vunpack.c.l.b16 %v26
  %v335 = vunpack.c.h.b16 %v26
  %v336 = vunpack.c.l.b16 %v27
  %v337 = vunpack.c.h.b16 %v27
  %v338 = vunpack.c.l.b16 %v28
  %v339 = vunpack.c.h.b16 %v28
  %v340 = vunpack.c.l.b16 %v29
  %v341 = vunpack.c.h.b16 %v29
  %v342 = vunpack.c.l.b16 %v30
  %v343 = vunpack.c.l.b16 %v31
  %v344 = vunpack.c.h.b16 %v31
  %v345 = vunpack.c.l.b16 %v32
  %v346 = vunpack.c.h.b16 %v32
  %v347 = vunpack.c.l.b16 %v33
  %v348 = vunpack.c.h.b16 %v33
  %v349 = vunpack.c.l.b16 %v34
  %v350 = vunpack.c.h.b16 %v34
  %v351 = vunpack.c.l.b16 %v35
  %v352 = vunpack.c.l.b16 %v36
  %v353 = vunpack.c.h.b16 %v36
  %v354 = vunpack.c.l.b16 %v37
  %v355 = vunpack.c.h.b16 %v37
  %v356 = vunpack.c.l.b16 %v38
  %v357 = vunpack.c.h.b16 %v38
  %v358 = vunpack.c.l.b16 %v39
  %v359 = vunpack.c.h.b16 %v39
  %v360 = vunpack.c.l.b16 %v40
  %v361 = vunpack.c.l.b16 %v41
  %v362 = vunpack.c.h.b16 %v41
  %v363 = vunpack.c.l.b16 %v42
  %v364 = vunpack.c.h.b16 %v42
  %v365 = vunpack.c.l.b16 %v43
  %v366 = vunpack.c.h.b16 %v43
  %v367 = vunpack.c.l.b16 %v44
  %v368 = vunpack.c.h.b16 %v44
  %v369 = vunpack.c.l.b16 %v45
  %v370 = vunpack.c.l.b16 %v46
  %v371 = vunpack.c.h.b16 %v46
  %v372 = vunpack.c.l.b16 %v47
  %v373 = vunpack.c.h.b16 %v47
  %v374 = vunpack.c.l.b16 %v48
  %v375 = vunpack.c.h.b16 %v48
  %v376 = vunpack.c.l.b16 %v49
  %v377 = vunpack.c.h.b16 %v49
  %v378 = vunpack.c.l.b16 %v50
  %v379 = vunpack.c.l.b16 %v51
  %v380 = vunpack.c.h.b16 %v51
  %v381 = vunpack.c.l.b16 %v52
  %v382 = vunpack.c.h.b16 %v52
  %v383 = vunpack.c.l.b16 %v53
  %v384 = vunpack.c.h.b16 %v53
  %v385 = vunpack.c.l.b16 %v54
  %v386 = vunpack.c.h.b16 %v54
  %v387 = vunpack.c.l.b16 %v55
  %v388 = vunpack.c.l.b16 %v56
  %v389 = vunpack.c.h.b16 %v56
  %v390 = vunpack.c.l.b16 %v57
  %v391 = vunpack.c.h.b16 %v57
  %v392 = vunpack.c.l.b16 %v58
  %v393 = vunpack.c.h.b16 %v58
  %v394 = vunpack.c.l.b16 %v59
  %v395 = vunpack.c.h.b16 %v59
  %v396 = vunpack.c.l.b16 %v60
  %v397 = vunpack.c.l.b16 %v61
  %v398 = vunpack.c.h.b16 %v61
  %v399 = vunpack.c.l.b16 %v62
  %v400 = vunpack.c.h.b16 %v62
  %v401 = vunpack.c.l.b16 %v63
  %v402 = vunpack.c.h.b16 %v63
  %v403 = vunpack.c.l.b16 %v64
  %v404 = vunpack.c.h.b16 %v64
  %v405 = vunpack.c.l.b16 %v65
  %v406 = vunpack.c.l.b16 %v66
  %v407 = vunpack.c.h.b16 %v66
  %v408 = vunpack.c.l.b16 %v67
  %v409 = vunpack.c.h.b16 %v67
  %v410 = vunpack.c.l.b16 %v68
  %v411 = vunpack.c.h.b16 %v68
  %v412 = vunpack.c.l.b16 %v69
  %v413 = vunpack.c.h.b16 %v69
  %v414 = vunpack.c.l.b16 %v70
  %v415 = vunpack.c.l.b16 %v71
  %v416 = vunpack.c.h.b16 %v71
  %v417 = vunpack.c.l.b16 %v72
  %v418 = vunpack.c.h.b16 %v72
  %v419 = vunpack.c.l.b16 %v73
  %v420 = vunpack.c.h.b16 %v73
  %v421 = vunpack.c.l.b16 %v74
  %v422 = vunpack.c.h.b16 %v74
  %v423 = vunpack.c.l.b16 %v75
  %v424 = vunpack.c.l.b16 %v76
  %v425 = vunpack.c.h.b16 %v76
  %v426 = vunpack.c.l.b16 %v77
  %v427 = vunpack.c.h.b16 %v77
  %v428 = vunpack.c.l.b16 %v78
  %v429 = vunpack.c.h.b16 %v78
  %v430 = vunpack.c.l.b16 %v79
  %v431 = vunpack.c.h.b16 %v79
  %v432 = vunpack.c.l.b16 %v80
  %v433 = vunpack.c.l.b16 %v81
  %v434 = vunpack.c.h.b16 %v81
  %v435 = vunpack.c.l.b16 %v82
  %v436 = vunpack.c.h.b16 %v82
  %v437 = vunpack.c.l.b16 %v83
  %v438 = vunpack.c.h.b16 %v83
  %v439 = vunpack.c.l.b16 %v84
  %v440 = vunpack.c.h.b16 %v84
  %v441 = vunpack.c.l.b16 %v85
  %v442 = vunpack.c.l.b16 %v86
  %v443 = vunpack.c.h.b16 %v86
  %v444 = vunpack.c.l.b16 %v87
  %v445 = vunpack.c.h.b16 %v87
  %v446 = vunpack.c.l.b16 %v88
  %v447 = vunpack.c.h.b16 %v88
  %v448 = vunpack.c.l.b16 %v89
  %v449 = vunpack.c.h.b16 %v89
  %v450 = vunpack.c.l.b16 %v90
  %v451 = vunpack.c.l.b16 %v91
  %v452 = vunpack.c.h.b16 %v91
  %v453 = vunpack.c.l.b16 %v92
  %v454 = vunpack.c.h.b16 %v92
  %v455 = vunpack.c.l.b16 %v93
  %v456 = vunpack.c.h.b16 %v93
  %v457 = vunpack.c.l.b16 %v94
  %v458 = vunpack.c.h.b16 %v94
  %v459 = vunpack.c.l.b16 %v95
  %v460 = vunpack.c.l.b16 %v96
  %v461 = vunpack.c.h.b16 %v96
  %v462 = vunpack.c.l.b16 %v97
  %v463 = vunpack.c.h.b16 %v97
  %v464 = vunpack.c.l.b16 %v98
  %v465 = vunpack.c.h.b16 %v98
  %v466 = vunpack.c.l.b16 %v99
  %v467 = vunpack.c.h.b16 %v99
  %v468 = vunpack.c.l.b16 %v100
  %v469 = vpack.c.b16 %v334, %v325
  %v470 = vpack.c.b16 %v335, %v326
  %v471 = vpack.c.b16 %v336, %v327
  %v472 = vpack.c.b16 %v337, %v328
  %v473 = vpack.c.b16 %v338, %v329
  %v474 = vpack.c.b16 %v339, %v330
  %v475 = vpack.c.b16 %v340, %v331
  %v476 = vpack.c.b16 %v341, %v332
  %v477 = vpack.c.b16 %v342, %v333
  %v478 = vpack.c.b16 %v352, %v343
  %v479 = vpack.c.b16 %v353, %v344
  %v480 = vpack.c.b16 %v354, %v345
  %v481 = vpack.c.b16 %v355, %v346
  %v482 = vpack.c.b16 %v356, %v347
  %v483 = vpack.c.b16 %v357, %v348
  %v484 = vpack.c.b16 %v358, %v349
  %v485 = vpack.c.b16 %v359, %v350
  %v486 = vpack.c.b16 %v360, %v351
  %v487 = vpack.c.b16 %v370, %v361
  %v488 = vpack.c.b16 %v371, %v362
  %v489 = vpack.c.b16 %v372, %v363
  %v490 = vpack.c.b16 %v373, %v364
  %v491 = vpack.c.b16 %v374, %v365
  %v492 = vpack.c.b16 %v375, %v366
  %v493 = vpack.c.b16 %v376, %v367
  %v494 = vpack.c.b16 %v377, %v368
  %v495 = vpack.c.b16 %v378, %v369
  %v496 = vpack.c.b16 %v388, %v379
  %v497 = vpack.c.b16 %v389, %v380
  %v498 = vpack.c.b16 %v390, %v381
  %v499 = vpack.c.b16 %v391, %v382
  %v500 = vpack.c.b16 %v392, %v383
  %v501 = vpack.c.b16 %v393, %v384
  %v502 = vpack.c.b16 %v394, %v385
  %v503 = vpack.c.b16 %v395, %v386
  %v504 = vpack.c.b16 %v396, %v387
  %v505 = vpack.c.b16 %v406, %v397
  %v506 = vpack.c.b16 %v407, %v398
  %v507 = vpack.c.b16 %v408, %v399
  %v508 = vpack.c.b16 %v409, %v400
  %v509 = vpack.c.b16 %v410, %v401
  %v510 = vpack.c.b16 %v411, %v402
  %v511 = vpack.c.b16 %v412, %v403
  %v512 = vpack.c.b16 %v413, %v404
  %v513 = vpack.c.b16 %v414, %v405
  %v514 = vpack.c.b16 %v424, %v415
  %v515 = vpack.c.b16 %v425, %v416
  %v516 = vpack.c.b16 %v426, %v417
  %v517 = vpack.c.b16 %v427, %v418
  %v518 = vpack.c.b16 %v428, %v419
  %v519 = vpack.c.b16 %v429, %v420
  %v520 = vpack.c.b16 %v430, %v421
  %v521 = vpack.c.b16 %v431, %v422
  %v522 = vpack.c.b16 %v432, %v423
  %v523 = vpack.c.b16 %v442, %v433
  %v524 = vpack.c.b16 %v443, %v434
  %v525 = vpack.c.b16 %v444, %v435
  %v526 = vpack.c.b16 %v445, %v436
  %v527 = vpack.c.b16 %v446, %v437
  %v528 = vpack.c.b16 %v447, %v438
  %v529 = vpack.c.b16 %v448, %v439
  %v530 = vpack.c.b16 %v449, %v440
  %v531 = vpack.c.b16 %v450, %v441
  %v532 = vpack.c.b16 %v460, %v451
  %v533 = vpack.c.b16 %v461, %v452
  %v534 = vpack.c.b16 %v462, %v453
  %v535 = vpack.c.b16 %v463, %v454
  %v536 = vpack.c.b16 %v464, %v455
  %v537 = vpack.c.b16 %v465, %v456
  %v538 = vpack.c.b16 %v466, %v457
  %v539 = vpack.c.b16 %v467, %v458
  %v540 = vpack.c.b16 %v468, %v459
  %v757 = vunpack.c.l.b16 %v101
  %v758 = vunpack.c.l.b16 %v102
  %v759 = vunpack.c.l.b16 %v103
  %v760 = vunpack.c.l.b16 %v104
  %v761 = vunpack.c.l.b16 %v105
  %v762 = vunpack.c.l.b16 %v106
  %v763 = vunpack.c.l.b16 %v107
  %v764 = vunpack.c.l.b16 %v108
  %v765 = vunpack.c.l.b16 %v109
  %v766 = vunpack.c.l.b16 %v110
  %v767 = vunpack.c.l.b16 %v111
  %v768 = vunpack.c.l.b16 %v112
  %v769 = vunpack.c.l.b16 %v113
  %v770 = vunpack.c.l.b16 %v114
  %v771 = vunpack.c.l.b16 %v115
  %v772 = vunpack.c.l.b16 %v116
  %v773 = vunpack.c.l.b16 %v117
  %v774 = vunpack.c.l.b16 %v118
  %v775 = vunpack.c.l.b16 %v119
  %v776 = vunpack.c.l.b16 %v120
  %v777 = vunpack.c.l.b16 %v121
  %v778 = vunpack.c.l.b16 %v122
  %v779 = vunpack.c.l.b16 %v123
  %v780 = vunpack.c.l.b16 %v124
  %v781 = vunpack.c.l.b16 %v125
  %v782 = vunpack.c.l.b16 %v126
  %v783 = vunpack.c.l.b16 %v127
  %v784 = vunpack.c.l.b16 %v128
  %v785 = vunpack.c.l.b16 %v129
  %v786 = vunpack.c.l.b16 %v130
  %v787 = vunpack.c.l.b16 %v131
  %v788 = vunpack.c.l.b16 %v132
  %v789 = vunpack.c.l.b16 %v133
  %v790 = vunpack.c.l.b16 %v134
  %v791 = vunpack.c.l.b16 %v135
  %v792 = vunpack.c.l.b16 %v136
  %v793 = vunpack.c.l.b16 %v137
  %v794 = vunpack.c.l.b16 %v138
  %v795 = vunpack.c.l.b16 %v139
  %v796 = vunpack.c.l.b16 %v140
  %v797 = vunpack.c.l.b16 %v141
  %v798 = vunpack.c.l.b16 %v142
  %v799 = vunpack.c.l.b16 %v143
  %v800 = vunpack.c.l.b16 %v144
  %v801 = vunpack.c.l.b16 %v145
  %v802 = vunpack.c.l.b16 %v146
  %v803 = vunpack.c.l.b16 %v147
  %v804 = vunpack.c.l.b16 %v148
  %v805 = vunpack.c.l.b16 %v149
  %v806 = vunpack.c.l.b16 %v150
  %v807 = vunpack.c.l.b16 %v151
  %v808 = vunpack.c.l.b16 %v152
  %v809 = vunpack.c.l.b16 %v153
  %v810 = vunpack.c.l.b16 %v154
  %v811 = vunpack.c.l.b16 %v155
  %v812 = vunpack.c.l.b16 %v156
  %v813 = vunpack.c.l.b16 %v157
  %v814 = vunpack.c.l.b16 %v158
  %v815 = vunpack.c.l.b16 %v159
  %v816 = vunpack.c.l.b16 %v160
  %v817 = vunpack.c.l.b16 %v161
  %v818 = vunpack.c.l.b16 %v162
  %v819 = vunpack.c.l.b16 %v163
  %v820 = vunpack.c.l.b16 %v164
  %v821 = vunpack.c.l.b16 %v165
  %v822 = vunpack.c.l.b16 %v166
  %v823 = vunpack.c.l.b16 %v167
  %v824 = vunpack.c.l.b16 %v168
  %v825 = vunpack.c.l.b16 %v169
  %v826 = vunpack.c.l.b16 %v170
  %v827 = vunpack.c.l.b16 %v171
  %v828 = vunpack.c.l.b16 %v172
  %v829 = vunpack.c.l.b16 %v173
  %v830 = vunpack.c.l.b16 %v174
  %v831 = vunpack.c.l.b16 %v175
  %v832 = vunpack.c.l.b16 %v176
  %v833 = vunpack.c.l.b16 %v177
  %v834 = vunpack.c.l.b16 %v178
  %v835 = vunpack.c.l.b16 %v179
  %v836 = vunpack.c.l.b16 %v180
  %v837 = vunpack.c.l.b16 %v181
  %v838 = vunpack.c.l.b16 %v182
  %v839 = vunpack.c.l.b16 %v183
  %v840 = vunpack.c.l.b16 %v184
  %v841 = vunpack.c.l.b16 %v185
  %v842 = vunpack.c.l.b16 %v186
  %v843 = vunpack.c.l.b16 %v187
  %v844 = vunpack.c.l.b16 %v188
  %v845 = vunpack.c.l.b16 %v189
  %v846 = vunpack.c.l.b16 %v190
  %v847 = vunpack.c.l.b16 %v191
  %v848 = vunpack.c.l.b16 %v192
  %v849 = vunpack.c.l.b16 %v193
  %v850 = vunpack.c.l.b16 %v194
  %v851 = vunpack.c.l.b16 %v195
  %v852 = vunpack.c.l.b16 %v196
  %v853 = vunpack.c.l.b16 %v197
  %v854 = vunpack.c.l.b16 %v198
  %v855 = vunpack.c.l.b16 %v199
  %v856 = vunpack.c.l.b16 %v200
  %v857 = vunpack.c.l.b16 %v201
  %v858 = vunpack.c.l.b16 %v202
  %v859 = vunpack.c.l.b16 %v203
  %v860 = vunpack.c.l.b16 %v204
  %v861 = vunpack.c.l.b16 %v205
  %v862 = vunpack.c.l.b16 %v206
  %v863 = vunpack.c.l.b16 %v207
  %v864 = vunpack.c.l.b16 %v208
  %v865 = vunpack.c.l.b16 %v209
  %v866 = vunpack.c.l.b16 %v210
  %v867 = vunpack.c.l.b16 %v211
  %v868 = vunpack.c.l.b16 %v212
  %v869 = vunpack.c.l.b16 %v213
  %v870 = vunpack.c.l.b16 %v214
  %v871 = vunpack.c.l.b16 %v215
  %v872 = vunpack.c.l.b16 %v216
  %v873 = vunpack.c.l.b16 %v217
  %v874 = vunpack.c.l.b16 %v218
  %v875 = vunpack.c.l.b16 %v219
  %v876 = vunpack.c.l.b16 %v220
  %v877 = vunpack.c.l.b16 %v221
  %v878 = vunpack.c.l.b16 %v222
  %v879 = vunpack.c.l.b16 %v223
  %v880 = vunpack.c.l.b16 %v224
  %v881 = vunpack.c.l.b16 %v225
  %v882 = vunpack.c.l.b16 %v226
  %v883 = vunpack.c.l.b16 %v227
  %v884 = vunpack.c.l.b16 %v228
  %v885 = vunpack.c.l.b16 %v229
  %v886 = vunpack.c.l.b16 %v230
  %v887 = vunpack.c.l.b16 %v231
  %v888 = vunpack.c.l.b16 %v232
  %v889 = vunpack.c.l.b16 %v233
  %v890 = vunpack.c.l.b16 %v234
  %v891 = vunpack.c.l.b16 %v235
  %v892 = vunpack.c.l.b16 %v236
  %v893 = vunpack.c.l.b16 %v237
  %v894 = vunpack.c.l.b16 %v238
  %v895 = vunpack.c.l.b16 %v239
  %v896 = vunpack.c.l.b16 %v240
  %v897 = vunpack.c.l.b16 %v241
  %v898 = vunpack.c.l.b16 %v242
  %v899 = vunpack.c.l.b16 %v243
  %v900 = vunpack.c.l.b16 %v244
  %v901 = vpack.c.b16 %v758, %v757
  %v902 = vpack.c.b16 %v760, %v759
  %v903 = vpack.c.b16 %v762, %v761
  %v904 = vpack.c.b16 %v764, %v763
  %v905 = vpack.c.b16 %v766, %v765
  %v906 = vpack.c.b16 %v768, %v767
  %v907 = vpack.c.b16 %v770, %v769
  %v908 = vpack.c.b16 %v772, %v771
  %v909 = vpack.c.b16 %v774, %v773
  %v910 = vpack.c.b16 %v776, %v775
  %v911 = vpack.c.b16 %v778, %v777
  %v912 = vpack.c.b16 %v780, %v779
  %v913 = vpack.c.b16 %v782, %v781
  %v914 = vpack.c.b16 %v784, %v783
  %v915 = vpack.c.b16 %v786, %v785
  %v916 = vpack.c.b16 %v788, %v787
  %v917 = vpack.c.b16 %v790, %v789
  %v918 = vpack.c.b16 %v792, %v791
  %v919 = vpack.c.b16 %v794, %v793
  %v920 = vpack.c.b16 %v796, %v795
  %v921 = vpack.c.b16 %v798, %v797
  %v922 = vpack.c.b16 %v800, %v799
  %v923 = vpack.c.b16 %v802, %v801
  %v924 = vpack.c.b16 %v804, %v803
  %v925 = vpack.c.b16 %v806, %v805
  %v926 = vpack.c.b16 %v808, %v807
  %v927 = vpack.c.b16 %v810, %v809
  %v928 = vpack.c.b16 %v812, %v811
  %v929 = vpack.c.b16 %v814, %v813
  %v930 = vpack.c.b16 %v816, %v815
  %v931 = vpack.c.b16 %v818, %v817
  %v932 = vpack.c.b16 %v820, %v819
  %v933 = vpack.c.b16 %v822, %v821
  %v934 = vpack.c.b16 %v824, %v823
  %v935 = vpack.c.b16 %v826, %v825
  %v936 = vpack.c.b16 %v828, %v827
  %v937 = vpack.c.b16 %v830, %v829
  %v938 = vpack.c.b16 %v832, %v831
  %v939 = vpack.c.b16 %v834, %v833
  %v940 = vpack.c.b16 %v836, %v835
  %v941 = vpack.c.b16 %v838, %v837
  %v942 = vpack.c.b16 %v840, %v839
  %v943 = vpack.c.b16 %v842, %v841
  %v944 = vpack.c.b16 %v844, %v843
  %v945 = vpack.c.b16 %v846, %v845
  %v946 = vpack.c.b16 %v848, %v847
  %v947 = vpack.c.b16 %v850, %v849
  %v948 = vpack.c.b16 %v852, %v851
  %v949 = vpack.c.b16 %v854, %v853
  %v950 = vpack.c.b16 %v856, %v855
  %v951 = vpack.c.b16 %v858, %v857
  %v952 = vpack.c.b16 %v860, %v859
  %v953 = vpack.c.b16 %v862, %v861
  %v954 = vpack.c.b16 %v864, %v863
  %v955 = vpack.c.b16 %v866, %v865
  %v956 = vpack.c.b16 %v868, %v867
  %v957 = vpack.c.b16 %v870, %v869
  %v958 = vpack.c.b16 %v872, %v871
  %v959 = vpack.c.b16 %v874, %v873
  %v960 = vpack.c.b16 %v876, %v875
  %v961 = vpack.c.b16 %v878, %v877
  %v962 = vpack.c.b16 %v880, %v879
  %v963 = vpack.c.b16 %v882, %v881
  %v964 = vpack.c.b16 %v884, %v883
  %v965 = vpack.c.b16 %v886, %v885
  %v966 = vpack.c.b16 %v888, %v887
  %v967 = vpack.c.b16 %v890, %v889
  %v968 = vpack.c.b16 %v892, %v891
  %v969 = vpack.c.b16 %v894, %v893
  %v970 = vpack.c.b16 %v896, %v895
  %v971 = vpack.c.b16 %v898, %v897
  %v972 = vpack.c.b16 %v900, %v899
  %1045 = vmatprep.subr.bf16.mxu0 0
  %1046 = vmatpush1.bf16.msra.mxu0 %v901
  %1047 = vmatprep.subr.bf16.mxu0 0
  %1048 = vmatpush1.bf16.msra.mxu0 %v902
  %1049 = vmatprep.subr.bf16.mxu0 0
  %1050 = vmatpush1.bf16.msra.mxu0 %v903
  %1051 = vmatprep.subr.bf16.mxu0 0
  %1052 = vmatpush1.bf16.msra.mxu0 %v904
  %1053 = vmatprep.subr.bf16.mxu0 0
  %1054 = vmatpush1.bf16.msra.mxu0 %v905
  %1055 = vmatprep.subr.bf16.mxu0 0
  %1056 = vmatpush1.bf16.msra.mxu0 %v906
  %1057 = vmatprep.subr.bf16.mxu0 0
  %1058 = vmatpush1.bf16.msra.mxu0 %v907
  %1059 = vmatprep.subr.bf16.mxu0 0
  %1060 = vmatpush1.bf16.msra.mxu0 %v908
  %1061 = vmatprep.subr.bf16.mxu0 0
  %1062 = vmatpush1.bf16.msra.mxu0 %v909
  %1063 = vmatprep.subr.bf16.mxu0 0
  %1064 = vmatpush1.bf16.msra.mxu0 %v910
  %1065 = vmatprep.subr.bf16.mxu0 0
  %1066 = vmatpush1.bf16.msra.mxu0 %v911
  %1067 = vmatprep.subr.bf16.mxu0 0
  %1068 = vmatpush1.bf16.msra.mxu0 %v912
  %1069 = vmatprep.subr.bf16.mxu0 0
  %1070 = vmatpush1.bf16.msra.mxu0 %v913
  %1071 = vmatprep.subr.bf16.mxu0 0
  %1072 = vmatpush1.bf16.msra.mxu0 %v914
  %1073 = vmatprep.subr.bf16.mxu0 0
  %1074 = vmatpush1.bf16.msra.mxu0 %v915
  %1075 = vmatprep.subr.bf16.mxu0 0
  %1076 = vmatpush1.bf16.msra.mxu0 %v916
  %1077 = vmatprep.mubr.bf16.mxu0 %v470
  %1078 = vmatmul.mubr.bf16.gmra.mrb[0].mxu0 %v469
  %v1079 = vpop.f32.mrb[0].mxu0
  %v1080 = vadd.f32 0.0, %v1079
  %v1081 = vpop.f32.mrb[0].mxu0
  %v1082 = vpop.f32.mrb[0].mxu0
  %v1083 = vadd.f32 0.0, %v1082
  %v1084 = vpop.f32.mrb[0].mxu0
  %1085 = vmatprep.mubr.bf16.mxu0 %v479
  %1086 = vmatmul.mubr.bf16.gmra.mrb[0].mxu0 %v478
  %v1087 = vpop.f32.mrb[0].mxu0
  %v1088 = vadd.f32 0.0, %v1087
  %v1089 = vpop.f32.mrb[0].mxu0
  %v1090 = vpop.f32.mrb[0].mxu0
  %v1091 = vadd.f32 0.0, %v1090
  %v1092 = vpop.f32.mrb[0].mxu0
  %1093 = vmatprep.mubr.bf16.mxu0 %v488
  %1094 = vmatmul.mubr.bf16.gmra.mrb[0].mxu0 %v487
  %v1095 = vpop.f32.mrb[0].mxu0
  %v1096 = vadd.f32 0.0, %v1095
  %v1097 = vpop.f32.mrb[0].mxu0
  %v1098 = vpop.f32.mrb[0].mxu0
  %v1099 = vadd.f32 0.0, %v1098
  %v1100 = vpop.f32.mrb[0].mxu0
  %1101 = vmatprep.mubr.bf16.mxu0 %v497
  %1102 = vmatmul.mubr.bf16.gmra.mrb[0].mxu0 %v496
  %v1103 = vpop.f32.mrb[0].mxu0
  %v1104 = vadd.f32 0.0, %v1103
  %v1105 = vpop.f32.mrb[0].mxu0
  %v1106 = vpop.f32.mrb[0].mxu0
  %v1107 = vadd.f32 0.0, %v1106
  %v1108 = vpop.f32.mrb[0].mxu0
  %1109 = vmatprep.mubr.bf16.mxu0 %v506
  %1110 = vmatmul.mubr.bf16.gmra.mrb[0].mxu0 %v505
  %v1111 = vpop.f32.mrb[0].mxu0
  %v1112 = vadd.f32 0.0, %v1111
  %v1113 = vpop.f32.mrb[0].mxu0
  %v1114 = vpop.f32.mrb[0].mxu0
  %v1115 = vadd.f32 0.0, %v1114
  %v1116 = vpop.f32.mrb[0].mxu0
  %1117 = vmatprep.mubr.bf16.mxu0 %v515
  %1118 = vmatmul.mubr.bf16.gmra.mrb[0].mxu0 %v514
  %v1119 = vpop.f32.mrb[0].mxu0
  %v1120 = vadd.f32 0.0, %v1119
  %v1121 = vpop.f32.mrb[0].mxu0
  %v1122 = vpop.f32.mrb[0].mxu0
  %v1123 = vadd.f32 0.0, %v1122
  %v1124 = vpop.f32.mrb[0].mxu0
  %1125 = vmatprep.mubr.bf16.mxu0 %v524
  %1126 = vmatmul.mubr.bf16.gmra.mrb[0].mxu0 %v523
  %v1127 = vpop.f32.mrb[0].mxu0
  %v1128 = vadd.f32 0.0, %v1127
  %v1129 = vpop.f32.mrb[0].mxu0
  %v1130 = vpop.f32.mrb[0].mxu0
  %v1131 = vadd.f32 0.0, %v1130
  %v1132 = vpop.f32.mrb[0].mxu0
  %1133 = vmatprep.mubr.bf16.mxu0 %v533
  %1134 = vmatmul.mubr.bf16.gmra.mrb[0].mxu0 %v532
  %v1135 = vpop.f32.mrb[0].mxu0
  %v1136 = vadd.f32 0.0, %v1135
  %v1137 = vpop.f32.mrb[0].mxu0
  %v1138 = vpop.f32.mrb[0].mxu0
  %v1139 = vadd.f32 0.0, %v1138
  %v1140 = vpop.f32.mrb[0].mxu0
  %1141 = vdwg.mxu0
  %1142 = vmatprep.subr.bf16.mxu0 0
  %1143 = vmatpush1.bf16.msra.mxu0 %v917
  %1144 = vmatprep.subr.bf16.mxu0 0
  %1145 = vmatpush1.bf16.msra.mxu0 %v918
  %1146 = vmatprep.subr.bf16.mxu0 0
  %1147 = vmatpush1.bf16.msra.mxu0 %v919
  %1148 = vmatprep.subr.bf16.mxu0 0
  %1149 = vmatpush1.bf16.msra.mxu0 %v920
  %1150 = vmatprep.subr.bf16.mxu0 0
  %1151 = vmatpush1.bf16.msra.mxu0 %v921
  %1152 = vmatprep.subr.bf16.mxu0 0
  %1153 = vmatpush1.bf16.msra.mxu0 %v922
  %1154 = vmatprep.subr.bf16.mxu0 0
  %1155 = vmatpush1.bf16.msra.mxu0 %v923
  %1156 = vmatprep.subr.bf16.mxu0 0
  %1157 = vmatpush1.bf16.msra.mxu0 %v924
  %1158 = vmatprep.subr.bf16.mxu0 0
  %1159 = vmatpush1.bf16.msra.mxu0 %v925
  %1160 = vmatprep.subr.bf16.mxu0 0
  %1161 = vmatpush1.bf16.msra.mxu0 %v926
  %1162 = vmatprep.subr.bf16.mxu0 0
  %1163 = vmatpush1.bf16.msra.mxu0 %v927
  %1164 = vmatprep.subr.bf16.mxu0 0
  %1165 = vmatpush1.bf16.msra.mxu0 %v928
  %1166 = vmatprep.subr.bf16.mxu0 0
  %1167 = vmatpush1.bf16.msra.mxu0 %v929
  %1168 = vmatprep.subr.bf16.mxu0 0
  %1169 = vmatpush1.bf16.msra.mxu0 %v930
  %1170 = vmatprep.subr.bf16.mxu0 0
  %1171 = vmatpush1.bf16.msra.mxu0 %v931
  %1172 = vmatprep.subr.bf16.mxu0 0
  %1173 = vmatpush1.bf16.msra.mxu0 %v932
  %1174 = vmatprep.mubr.bf16.mxu0 %v472
  %1175 = vmatmul.mubr.bf16.gmra.mrb[0].mxu0 %v471
  %v1176 = vpop.f32.mrb[0].mxu0
  %v1177 = vadd.f32 %v1080, %v1176
  %v1178 = vpop.f32.mrb[0].mxu0
  %v1179 = vpop.f32.mrb[0].mxu0
  %v1180 = vadd.f32 %v1083, %v1179
  %v1181 = vpop.f32.mrb[0].mxu0
  %1182 = vmatprep.mubr.bf16.mxu0 %v481
  %1183 = vmatmul.mubr.bf16.gmra.mrb[0].mxu0 %v480
  %v1184 = vpop.f32.mrb[0].mxu0
  %v1185 = vadd.f32 %v1088, %v1184
  %v1186 = vpop.f32.mrb[0].mxu0
  %v1187 = vpop.f32.mrb[0].mxu0
  %v1188 = vadd.f32 %v1091, %v1187
  %v1189 = vpop.f32.mrb[0].mxu0
  %1190 = vmatprep.mubr.bf16.mxu0 %v490
  %1191 = vmatmul.mubr.bf16.gmra.mrb[0].mxu0 %v489
  %v1192 = vpop.f32.mrb[0].mxu0
  %v1193 = vadd.f32 %v1096, %v1192
  %v1194 = vpop.f32.mrb[0].mxu0
  %v1195 = vpop.f32.mrb[0].mxu0
  %v1196 = vadd.f32 %v1099, %v1195
  %v1197 = vpop.f32.mrb[0].mxu0
  %1198 = vmatprep.mubr.bf16.mxu0 %v499
  %1199 = vmatmul.mubr.bf16.gmra.mrb[0].mxu0 %v498
  %v1200 = vpop.f32.mrb[0].mxu0
  %v1201 = vadd.f32 %v1104, %v1200
  %v1202 = vpop.f32.mrb[0].mxu0
  %v1203 = vpop.f32.mrb[0].mxu0
  %v1204 = vadd.f32 %v1107, %v1203
  %v1205 = vpop.f32.mrb[0].mxu0
  %1206 = vmatprep.mubr.bf16.mxu0 %v508
  %1207 = vmatmul.mubr.bf16.gmra.mrb[0].mxu0 %v507
  %v1208 = vpop.f32.mrb[0].mxu0
  %v1209 = vadd.f32 %v1112, %v1208
  %v1210 = vpop.f32.mrb[0].mxu0
  %v1211 = vpop.f32.mrb[0].mxu0
  %v1212 = vadd.f32 %v1115, %v1211
  %v1213 = vpop.f32.mrb[0].mxu0
  %1214 = vmatprep.mubr.bf16.mxu0 %v517
  %1215 = vmatmul.mubr.bf16.gmra.mrb[0].mxu0 %v516
  %v1216 = vpop.f32.mrb[0].mxu0
  %v1217 = vadd.f32 %v1120, %v1216
  %v1218 = vpop.f32.mrb[0].mxu0
  %v1219 = vpop.f32.mrb[0].mxu0
  %v1220 = vadd.f32 %v1123, %v1219
  %v1221 = vpop.f32.mrb[0].mxu0
  %1222 = vmatprep.mubr.bf16.mxu0 %v526
  %1223 = vmatmul.mubr.bf16.gmra.mrb[0].mxu0 %v525
  %v1224 = vpop.f32.mrb[0].mxu0
  %v1225 = vadd.f32 %v1128, %v1224
  %v1226 = vpop.f32.mrb[0].mxu0
  %v1227 = vpop.f32.mrb[0].mxu0
  %v1228 = vadd.f32 %v1131, %v1227
  %v1229 = vpop.f32.mrb[0].mxu0
  %1230 = vmatprep.mubr.bf16.mxu0 %v535
  %1231 = vmatmul.mubr.bf16.gmra.mrb[0].mxu0 %v534
  %v1232 = vpop.f32.mrb[0].mxu0
  %v1233 = vadd.f32 %v1136, %v1232
  %v1234 = vpop.f32.mrb[0].mxu0
  %v1235 = vpop.f32.mrb[0].mxu0
  %v1236 = vadd.f32 %v1139, %v1235
  %v1237 = vpop.f32.mrb[0].mxu0
  %1238 = vdwg.mxu0
  %1239 = vmatprep.subr.bf16.mxu0 0
  %1240 = vmatpush1.bf16.msra.mxu0 %v933
  %1241 = vmatprep.subr.bf16.mxu0 0
  %1242 = vmatpush1.bf16.msra.mxu0 %v934
  %1243 = vmatprep.subr.bf16.mxu0 0
  %1244 = vmatpush1.bf16.msra.mxu0 %v935
  %1245 = vmatprep.subr.bf16.mxu0 0
  %1246 = vmatpush1.bf16.msra.mxu0 %v936
  %1247 = vmatprep.subr.bf16.mxu0 0
  %1248 = vmatpush1.bf16.msra.mxu0 %v937
  %1249 = vmatprep.subr.bf16.mxu0 0
  %1250 = vmatpush1.bf16.msra.mxu0 %v938
  %1251 = vmatprep.subr.bf16.mxu0 0
  %1252 = vmatpush1.bf16.msra.mxu0 %v939
  %1253 = vmatprep.subr.bf16.mxu0 0
  %1254 = vmatpush1.bf16.msra.mxu0 %v940
  %1255 = vmatprep.subr.bf16.mxu0 0
  %1256 = vmatpush1.bf16.msra.mxu0 %v941
  %1257 = vmatprep.subr.bf16.mxu0 0
  %1258 = vmatpush1.bf16.msra.mxu0 %v942
  %1259 = vmatprep.subr.bf16.mxu0 0
  %1260 = vmatpush1.bf16.msra.mxu0 %v943
  %1261 = vmatprep.subr.bf16.mxu0 0
  %1262 = vmatpush1.bf16.msra.mxu0 %v944
  %1263 = vmatprep.subr.bf16.mxu0 0
  %1264 = vmatpush1.bf16.msra.mxu0 %v945
  %1265 = vmatprep.subr.bf16.mxu0 0
  %1266 = vmatpush1.bf16.msra.mxu0 %v946
  %1267 = vmatprep.subr.bf16.mxu0 0
  %1268 = vmatpush1.bf16.msra.mxu0 %v947
  %1269 = vmatprep.subr.bf16.mxu0 0
  %1270 = vmatpush1.bf16.msra.mxu0 %v948
  %1271 = vmatprep.mubr.bf16.mxu0 %v474
  %1272 = vmatmul.mubr.bf16.gmra.mrb[0].mxu0 %v473
  %v1273 = vpop.f32.mrb[0].mxu0
  %v1274 = vadd.f32 %v1177, %v1273
  %v1275 = vpop.f32.mrb[0].mxu0
  %v1276 = vpop.f32.mrb[0].mxu0
  %v1277 = vadd.f32 %v1180, %v1276
  %v1278 = vpop.f32.mrb[0].mxu0
  %1279 = vmatprep.mubr.bf16.mxu0 %v483
  %1280 = vmatmul.mubr.bf16.gmra.mrb[0].mxu0 %v482
  %v1281 = vpop.f32.mrb[0].mxu0
  %v1282 = vadd.f32 %v1185, %v1281
  %v1283 = vpop.f32.mrb[0].mxu0
  %v1284 = vpop.f32.mrb[0].mxu0
  %v1285 = vadd.f32 %v1188, %v1284
  %v1286 = vpop.f32.mrb[0].mxu0
  %1287 = vmatprep.mubr.bf16.mxu0 %v492
  %1288 = vmatmul.mubr.bf16.gmra.mrb[0].mxu0 %v491
  %v1289 = vpop.f32.mrb[0].mxu0
  %v1290 = vadd.f32 %v1193, %v1289
  %v1291 = vpop.f32.mrb[0].mxu0
  %v1292 = vpop.f32.mrb[0].mxu0
  %v1293 = vadd.f32 %v1196, %v1292
  %v1294 = vpop.f32.mrb[0].mxu0
  %1295 = vmatprep.mubr.bf16.mxu0 %v501
  %1296 = vmatmul.mubr.bf16.gmra.mrb[0].mxu0 %v500
  %v1297 = vpop.f32.mrb[0].mxu0
  %v1298 = vadd.f32 %v1201, %v1297
  %v1299 = vpop.f32.mrb[0].mxu0
  %v1300 = vpop.f32.mrb[0].mxu0
  %v1301 = vadd.f32 %v1204, %v1300
  %v1302 = vpop.f32.mrb[0].mxu0
  %1303 = vmatprep.mubr.bf16.mxu0 %v510
  %1304 = vmatmul.mubr.bf16.gmra.mrb[0].mxu0 %v509
  %v1305 = vpop.f32.mrb[0].mxu0
  %v1306 = vadd.f32 %v1209, %v1305
  %v1307 = vpop.f32.mrb[0].mxu0
  %v1308 = vpop.f32.mrb[0].mxu0
  %v1309 = vadd.f32 %v1212, %v1308
  %v1310 = vpop.f32.mrb[0].mxu0
  %1311 = vmatprep.mubr.bf16.mxu0 %v519
  %1312 = vmatmul.mubr.bf16.gmra.mrb[0].mxu0 %v518
  %v1313 = vpop.f32.mrb[0].mxu0
  %v1314 = vadd.f32 %v1217, %v1313
  %v1315 = vpop.f32.mrb[0].mxu0
  %v1316 = vpop.f32.mrb[0].mxu0
  %v1317 = vadd.f32 %v1220, %v1316
  %v1318 = vpop.f32.mrb[0].mxu0
  %1319 = vmatprep.mubr.bf16.mxu0 %v528
  %1320 = vmatmul.mubr.bf16.gmra.mrb[0].mxu0 %v527
  %v1321 = vpop.f32.mrb[0].mxu0
  %v1322 = vadd.f32 %v1225, %v1321
  %v1323 = vpop.f32.mrb[0].mxu0
  %v1324 = vpop.f32.mrb[0].mxu0
  %v1325 = vadd.f32 %v1228, %v1324
  %v1326 = vpop.f32.mrb[0].mxu0
  %1327 = vmatprep.mubr.bf16.mxu0 %v537
  %1328 = vmatmul.mubr.bf16.gmra.mrb[0].mxu0 %v536
  %v1329 = vpop.f32.mrb[0].mxu0
  %v1330 = vadd.f32 %v1233, %v1329
  %v1331 = vpop.f32.mrb[0].mxu0
  %v1332 = vpop.f32.mrb[0].mxu0
  %v1333 = vadd.f32 %v1236, %v1332
  %v1334 = vpop.f32.mrb[0].mxu0
  %1335 = vdwg.mxu0
  %1336 = vmatprep.subr.bf16.mxu0 0
  %1337 = vmatpush1.bf16.msra.mxu0 %v949
  %1338 = vmatprep.subr.bf16.mxu0 0
  %1339 = vmatpush1.bf16.msra.mxu0 %v950
  %1340 = vmatprep.subr.bf16.mxu0 0
  %1341 = vmatpush1.bf16.msra.mxu0 %v951
  %1342 = vmatprep.subr.bf16.mxu0 0
  %1343 = vmatpush1.bf16.msra.mxu0 %v952
  %1344 = vmatprep.subr.bf16.mxu0 0
  %1345 = vmatpush1.bf16.msra.mxu0 %v953
  %1346 = vmatprep.subr.bf16.mxu0 0
  %1347 = vmatpush1.bf16.msra.mxu0 %v954
  %1348 = vmatprep.subr.bf16.mxu0 0
  %1349 = vmatpush1.bf16.msra.mxu0 %v955
  %1350 = vmatprep.subr.bf16.mxu0 0
  %1351 = vmatpush1.bf16.msra.mxu0 %v956
  %1352 = vmatprep.subr.bf16.mxu0 0
  %1353 = vmatpush1.bf16.msra.mxu0 %v957
  %1354 = vmatprep.subr.bf16.mxu0 0
  %1355 = vmatpush1.bf16.msra.mxu0 %v958
  %1356 = vmatprep.subr.bf16.mxu0 0
  %1357 = vmatpush1.bf16.msra.mxu0 %v959
  %1358 = vmatprep.subr.bf16.mxu0 0
  %1359 = vmatpush1.bf16.msra.mxu0 %v960
  %1360 = vmatprep.subr.bf16.mxu0 0
  %1361 = vmatpush1.bf16.msra.mxu0 %v961
  %1362 = vmatprep.subr.bf16.mxu0 0
  %1363 = vmatpush1.bf16.msra.mxu0 %v962
  %1364 = vmatprep.subr.bf16.mxu0 0
  %1365 = vmatpush1.bf16.msra.mxu0 %v963
  %1366 = vmatprep.subr.bf16.mxu0 0
  %1367 = vmatpush1.bf16.msra.mxu0 %v964
  %1368 = vmatprep.mubr.bf16.mxu0 %v476
  %1369 = vmatmul.mubr.bf16.gmra.mrb[0].mxu0 %v475
  %v1370 = vpop.f32.mrb[0].mxu0
  %v1371 = vadd.f32 %v1274, %v1370
  %v1372 = vpop.f32.mrb[0].mxu0
  %v1373 = vpop.f32.mrb[0].mxu0
  %v1374 = vadd.f32 %v1277, %v1373
  %v1375 = vpop.f32.mrb[0].mxu0
  %1376 = vmatprep.mubr.bf16.mxu0 %v485
  %1377 = vmatmul.mubr.bf16.gmra.mrb[0].mxu0 %v484
  %v1378 = vpop.f32.mrb[0].mxu0
  %v1379 = vadd.f32 %v1282, %v1378
  %v1380 = vpop.f32.mrb[0].mxu0
  %v1381 = vpop.f32.mrb[0].mxu0
  %v1382 = vadd.f32 %v1285, %v1381
  %v1383 = vpop.f32.mrb[0].mxu0
  %1384 = vmatprep.mubr.bf16.mxu0 %v494
  %1385 = vmatmul.mubr.bf16.gmra.mrb[0].mxu0 %v493
  %v1386 = vpop.f32.mrb[0].mxu0
  %v1387 = vadd.f32 %v1290, %v1386
  %v1388 = vpop.f32.mrb[0].mxu0
  %v1389 = vpop.f32.mrb[0].mxu0
  %v1390 = vadd.f32 %v1293, %v1389
  %v1391 = vpop.f32.mrb[0].mxu0
  %1392 = vmatprep.mubr.bf16.mxu0 %v503
  %1393 = vmatmul.mubr.bf16.gmra.mrb[0].mxu0 %v502
  %v1394 = vpop.f32.mrb[0].mxu0
  %v1395 = vadd.f32 %v1298, %v1394
  %v1396 = vpop.f32.mrb[0].mxu0
  %v1397 = vpop.f32.mrb[0].mxu0
  %v1398 = vadd.f32 %v1301, %v1397
  %v1399 = vpop.f32.mrb[0].mxu0
  %1400 = vmatprep.mubr.bf16.mxu0 %v512
  %1401 = vmatmul.mubr.bf16.gmra.mrb[0].mxu0 %v511
  %v1402 = vpop.f32.mrb[0].mxu0
  %v1403 = vadd.f32 %v1306, %v1402
  %v1404 = vpop.f32.mrb[0].mxu0
  %v1405 = vpop.f32.mrb[0].mxu0
  %v1406 = vadd.f32 %v1309, %v1405
  %v1407 = vpop.f32.mrb[0].mxu0
  %1408 = vmatprep.mubr.bf16.mxu0 %v521
  %1409 = vmatmul.mubr.bf16.gmra.mrb[0].mxu0 %v520
  %v1410 = vpop.f32.mrb[0].mxu0
  %v1411 = vadd.f32 %v1314, %v1410
  %v1412 = vpop.f32.mrb[0].mxu0
  %v1413 = vpop.f32.mrb[0].mxu0
  %v1414 = vadd.f32 %v1317, %v1413
  %v1415 = vpop.f32.mrb[0].mxu0
  %1416 = vmatprep.mubr.bf16.mxu0 %v530
  %1417 = vmatmul.mubr.bf16.gmra.mrb[0].mxu0 %v529
  %v1418 = vpop.f32.mrb[0].mxu0
  %v1419 = vadd.f32 %v1322, %v1418
  %v1420 = vpop.f32.mrb[0].mxu0
  %v1421 = vpop.f32.mrb[0].mxu0
  %v1422 = vadd.f32 %v1325, %v1421
  %v1423 = vpop.f32.mrb[0].mxu0
  %1424 = vmatprep.mubr.bf16.mxu0 %v539
  %1425 = vmatmul.mubr.bf16.gmra.mrb[0].mxu0 %v538
  %v1426 = vpop.f32.mrb[0].mxu0
  %v1427 = vadd.f32 %v1330, %v1426
  %v1428 = vpop.f32.mrb[0].mxu0
  %v1429 = vpop.f32.mrb[0].mxu0
  %v1430 = vadd.f32 %v1333, %v1429
  %v1431 = vpop.f32.mrb[0].mxu0
  %1432 = vdwg.mxu0
  %1433 = vmatprep.subr.bf16.mxu0 0
  %1434 = vmatpush1.bf16.msra.mxu0 %v965
  %1435 = vmatprep.subr.bf16.mxu0 0
  %1436 = vmatpush1.bf16.msra.mxu0 %v966
  %1437 = vmatprep.subr.bf16.mxu0 0
  %1438 = vmatpush1.bf16.msra.mxu0 %v967
  %1439 = vmatprep.subr.bf16.mxu0 0
  %1440 = vmatpush1.bf16.msra.mxu0 %v968
  %1441 = vmatprep.subr.bf16.mxu0 0
  %1442 = vmatpush1.bf16.msra.mxu0 %v969
  %1443 = vmatprep.subr.bf16.mxu0 0
  %1444 = vmatpush1.bf16.msra.mxu0 %v970
  %1445 = vmatprep.subr.bf16.mxu0 0
  %1446 = vmatpush1.bf16.msra.mxu0 %v971
  %1447 = vmatprep.subr.bf16.mxu0 0
  %1448 = vmatpush1.bf16.msra.mxu0 %v972
  %1449 = vmatprep.subr.bf16.mxu0 0
  %1450 = vmatpush1.bf16.msra.mxu0 0
  %1451 = vmatprep.subr.bf16.mxu0 0
  %1452 = vmatpush1.bf16.msra.mxu0 0
  %1453 = vmatprep.subr.bf16.mxu0 0
  %1454 = vmatpush1.bf16.msra.mxu0 0
  %1455 = vmatprep.subr.bf16.mxu0 0
  %1456 = vmatpush1.bf16.msra.mxu0 0
  %1457 = vmatprep.subr.bf16.mxu0 0
  %1458 = vmatpush1.bf16.msra.mxu0 0
  %1459 = vmatprep.subr.bf16.mxu0 0
  %1460 = vmatpush1.bf16.msra.mxu0 0
  %1461 = vmatprep.subr.bf16.mxu0 0
  %1462 = vmatpush1.bf16.msra.mxu0 0
  %1463 = vmatprep.subr.bf16.mxu0 0
  %1464 = vmatpush1.bf16.msra.mxu0 0
  %1465 = vmatprep.mubr.bf16.mxu0 0
  %1466 = vmatmul.mubr.bf16.gmra.mrb[0].mxu0 %v477
  %v1467 = vpop.f32.mrb[0].mxu0
  %v1468 = vadd.f32 %v1371, %v1467
  %v1469 = vpop.f32.mrb[0].mxu0
  %v1470 = vpop.f32.mrb[0].mxu0
  %v1471 = vadd.f32 %v1374, %v1470
  %v1472 = vpop.f32.mrb[0].mxu0
  %1473 = vmatprep.mubr.bf16.mxu0 0
  %1474 = vmatmul.mubr.bf16.gmra.mrb[0].mxu0 %v486
  %v1475 = vpop.f32.mrb[0].mxu0
  %v1476 = vadd.f32 %v1379, %v1475
  %v1477 = vpop.f32.mrb[0].mxu0
  %v1478 = vpop.f32.mrb[0].mxu0
  %v1479 = vadd.f32 %v1382, %v1478
  %v1480 = vpop.f32.mrb[0].mxu0
  %1481 = vmatprep.mubr.bf16.mxu0 0
  %1482 = vmatmul.mubr.bf16.gmra.mrb[0].mxu0 %v495
  %v1483 = vpop.f32.mrb[0].mxu0
  %v1484 = vadd.f32 %v1387, %v1483
  %v1485 = vpop.f32.mrb[0].mxu0
  %v1486 = vpop.f32.mrb[0].mxu0
  %v1487 = vadd.f32 %v1390, %v1486
  %v1488 = vpop.f32.mrb[0].mxu0
  %1489 = vmatprep.mubr.bf16.mxu0 0
  %1490 = vmatmul.mubr.bf16.gmra.mrb[0].mxu0 %v504
  %v1491 = vpop.f32.mrb[0].mxu0
  %v1492 = vadd.f32 %v1395, %v1491
  %v1493 = vpop.f32.mrb[0].mxu0
  %v1494 = vpop.f32.mrb[0].mxu0
  %v1495 = vadd.f32 %v1398, %v1494
  %v1496 = vpop.f32.mrb[0].mxu0
  %1497 = vmatprep.mubr.bf16.mxu0 0
  %1498 = vmatmul.mubr.bf16.gmra.mrb[0].mxu0 %v513
  %v1499 = vpop.f32.mrb[0].mxu0
  %v1500 = vadd.f32 %v1403, %v1499
  %v1501 = vpop.f32.mrb[0].mxu0
  %v1502 = vpop.f32.mrb[0].mxu0
  %v1503 = vadd.f32 %v1406, %v1502
  %v1504 = vpop.f32.mrb[0].mxu0
  %1505 = vmatprep.mubr.bf16.mxu0 0
  %1506 = vmatmul.mubr.bf16.gmra.mrb[0].mxu0 %v522
  %v1507 = vpop.f32.mrb[0].mxu0
  %v1508 = vadd.f32 %v1411, %v1507
  %v1509 = vpop.f32.mrb[0].mxu0
  %v1510 = vpop.f32.mrb[0].mxu0
  %v1511 = vadd.f32 %v1414, %v1510
  %v1512 = vpop.f32.mrb[0].mxu0
  %1513 = vmatprep.mubr.bf16.mxu0 0
  %1514 = vmatmul.mubr.bf16.gmra.mrb[0].mxu0 %v531
  %v1515 = vpop.f32.mrb[0].mxu0
  %v1516 = vadd.f32 %v1419, %v1515
  %v1517 = vpop.f32.mrb[0].mxu0
  %v1518 = vpop.f32.mrb[0].mxu0
  %v1519 = vadd.f32 %v1422, %v1518
  %v1520 = vpop.f32.mrb[0].mxu0
  %1521 = vmatprep.mubr.bf16.mxu0 0
  %1522 = vmatmul.mubr.bf16.gmra.mrb[0].mxu0 %v540
  %v1523 = vpop.f32.mrb[0].mxu0
  %v1524 = vadd.f32 %v1427, %v1523
  %v1525 = vpop.f32.mrb[0].mxu0
  %v1526 = vpop.f32.mrb[0].mxu0
  %v1527 = vadd.f32 %v1430, %v1526
  %v1528 = vpop.f32.mrb[0].mxu0
  %1529 = vdwg.mxu0
  %v1530 = vld [vmem:[%s2] sm:$0x1]
  %v1532 = vlaneseq
  %v1533 = vshrl.u32 %v1532, 7
  %v1534 = vsub.s32 0, %v1533
  %v1535 = vrot.slane %v1530, %v1534
  %v1537 = vmul.f32 %v1468, %v1535
  %v1538 = vmul.f32 %v1471, %v1535
  %v1539 = vmul.f32 %v1476, %v1535
  %v1540 = vmul.f32 %v1479, %v1535
  %v1541 = vmul.f32 %v1484, %v1535
  %v1542 = vmul.f32 %v1487, %v1535
  %v1543 = vmul.f32 %v1492, %v1535
  %v1544 = vmul.f32 %v1495, %v1535
  %v1545 = vmul.f32 %v1500, %v1535
  %v1546 = vmul.f32 %v1503, %v1535
  %v1547 = vmul.f32 %v1508, %v1535
  %v1548 = vmul.f32 %v1511, %v1535
  %v1549 = vmul.f32 %v1516, %v1535
  %v1550 = vmul.f32 %v1519, %v1535
  %v1551 = vmul.f32 %v1524, %v1535
  %v1552 = vmul.f32 %v1527, %v1535
  %v1553 = vld [vmem:[%s3] sm:$0x1]
  %v1555 = vlaneseq
  %v1556 = vshrl.u32 %v1555, 7
  %v1557 = vsub.s32 0, %v1556
  %v1558 = vrot.slane %v1553, %v1557
  %v1560 = vadd.f32 %v1537, %v1558
  %v1561 = vadd.f32 %v1538, %v1558
  %v1562 = vadd.f32 %v1539, %v1558
  %v1563 = vadd.f32 %v1540, %v1558
  %v1564 = vadd.f32 %v1541, %v1558
  %v1565 = vadd.f32 %v1542, %v1558
  %v1566 = vadd.f32 %v1543, %v1558
  %v1567 = vadd.f32 %v1544, %v1558
  %v1568 = vadd.f32 %v1545, %v1558
  %v1569 = vadd.f32 %v1546, %v1558
  %v1570 = vadd.f32 %v1547, %v1558
  %v1571 = vadd.f32 %v1548, %v1558
  %v1572 = vadd.f32 %v1549, %v1558
  %v1573 = vadd.f32 %v1550, %v1558
  %v1574 = vadd.f32 %v1551, %v1558
  %v1575 = vadd.f32 %v1552, %v1558
  %v1576 = vld [vmem:[%s4] sm:$0xff]
  %v1577 = vld [vmem:[%s4 + $0x8] sm:$0xff]
  %v1578 = vld [vmem:[%s4 + $0x10] sm:$0xff]
  %v1579 = vld [vmem:[%s4 + $0x18] sm:$0xff]
  %v1580 = vld [vmem:[%s4 + $0x20] sm:$0xff]
  %v1581 = vld [vmem:[%s4 + $0x28] sm:$0xff]
  %v1582 = vld [vmem:[%s4 + $0x30] sm:$0xff]
  %v1583 = vld [vmem:[%s4 + $0x38] sm:$0xff]
  %v1584 = vld [vmem:[%s4 + $0x40] sm:$0xff]
  %v1585 = vld [vmem:[%s4 + $0x48] sm:$0xff]
  %v1586 = vld [vmem:[%s4 + $0x50] sm:$0xff]
  %v1587 = vld [vmem:[%s4 + $0x58] sm:$0xff]
  %v1588 = vld [vmem:[%s4 + $0x60] sm:$0xff]
  %v1589 = vld [vmem:[%s4 + $0x68] sm:$0xff]
  %v1590 = vld [vmem:[%s4 + $0x70] sm:$0xff]
  %v1591 = vld [vmem:[%s4 + $0x78] sm:$0xff]
  %v1592 = vadd.f32 %v1560, %v1576
  %v1593 = vadd.f32 %v1561, %v1577
  %v1594 = vadd.f32 %v1562, %v1578
  %v1595 = vadd.f32 %v1563, %v1579
  %v1596 = vadd.f32 %v1564, %v1580
  %v1597 = vadd.f32 %v1565, %v1581
  %v1598 = vadd.f32 %v1566, %v1582
  %v1599 = vadd.f32 %v1567, %v1583
  %v1600 = vadd.f32 %v1568, %v1584
  %v1601 = vadd.f32 %v1569, %v1585
  %v1602 = vadd.f32 %v1570, %v1586
  %v1603 = vadd.f32 %v1571, %v1587
  %v1604 = vadd.f32 %v1572, %v1588
  %v1605 = vadd.f32 %v1573, %v1589
  %v1606 = vadd.f32 %v1574, %v1590
  %v1607 = vadd.f32 %v1575, %v1591
  %v1608 = vmax.f32 %v1592, 0.0
  %v1609 = vmax.f32 %v1593, 0.0
  %v1610 = vmax.f32 %v1594, 0.0
  %v1611 = vmax.f32 %v1595, 0.0
  %v1612 = vmax.f32 %v1596, 0.0
  %v1613 = vmax.f32 %v1597, 0.0
  %v1614 = vmax.f32 %v1598, 0.0
  %v1615 = vmax.f32 %v1599, 0.0
  %v1616 = vmax.f32 %v1600, 0.0
  %v1617 = vmax.f32 %v1601, 0.0
  %v1618 = vmax.f32 %v1602, 0.0
  %v1619 = vmax.f32 %v1603, 0.0
  %v1620 = vmax.f32 %v1604, 0.0
  %v1621 = vmax.f32 %v1605, 0.0
  %v1622 = vmax.f32 %v1606, 0.0
  %v1623 = vmax.f32 %v1607, 0.0
  %1624 = vst [vmem:[%s5] sm:$0xff] %v1608
  %1625 = vst [vmem:[%s5 + $0x8] sm:$0xff] %v1609
  %1626 = vst [vmem:[%s5 + $0x10] sm:$0xff] %v1610
  %1627 = vst [vmem:[%s5 + $0x18] sm:$0xff] %v1611
  %1628 = vst [vmem:[%s5 + $0x20] sm:$0xff] %v1612
  %1629 = vst [vmem:[%s5 + $0x28] sm:$0xff] %v1613
  %1630 = vst [vmem:[%s5 + $0x30] sm:$0xff] %v1614
  %1631 = vst [vmem:[%s5 + $0x38] sm:$0xff] %v1615
  %1632 = vst [vmem:[%s5 + $0x40] sm:$0xff] %v1616
  %1633 = vst [vmem:[%s5 + $0x48] sm:$0xff] %v1617
  %1634 = vst [vmem:[%s5 + $0x50] sm:$0xff] %v1618
  %1635 = vst [vmem:[%s5 + $0x58] sm:$0xff] %v1619
  %1636 = vst [vmem:[%s5 + $0x60] sm:$0xff] %v1620
  %1637 = vst [vmem:[%s5 + $0x68] sm:$0xff] %v1621
  %1638 = vst [vmem:[%s5 + $0x70] sm:$0xff] %v1622
  %1639 = vst [vmem:[%s5 + $0x78] sm:$0xff] %v1623
  // Predicated region
  $region22: #{cnn_forward.12} parent=0 // pred_check
    _
  $region23: #{cnn_forward.12} parent=0 // pred_check_branch
    %1641 = sbr.rel (0) target = $region25
  $region24: #{cnn_forward.12} parent=0 // pred_region
    _
  $region25: #{cnn_forward.12} parent=0 // pred_fallthru
    _
  // Predicated region
  $region26: #{cnn_forward.12} parent=0 // pred_check
    _
  $region27: #{cnn_forward.12} parent=0 // pred_check_branch
    %1643 = sbr.rel (0) target = $region29
  $region28: #{cnn_forward.12} parent=0 // pred_region
    _
  $region29: #{cnn_forward.12} parent=0 // pred_fallthru
    _

</llo_original>
